<compile_context>
chip_gen: v6e
topology: v6e:2x2x1
jax: 0.10.0
libtpu: 0.0.40
codegen_flags: <defaults>
</compile_context>

<pallas_src>
import functools
import math

import numpy as np
import jax
import jax.numpy as jnp
from jax.experimental import pallas as pl
from jax.experimental.pallas import tpu as pltpu

# bf16 on the MXU inputs and as the activation/weight carry dtype; f32
# accumulation and f32 elementwise math inside the kernels.
MATMUL_DTYPE = jnp.bfloat16
ACT_DTYPE = jnp.bfloat16
WGT_DTYPE = jnp.bfloat16


# ----------------------------------------------------------------------------
# helpers
# ----------------------------------------------------------------------------
def _round_up(x, m):
    return ((x + m - 1) // m) * m


def _pick_block(dim, pref, align):
    """Largest divisor of `dim` that is <= pref and a multiple of `align`,
    falling back to the full dim (full-extent blocks are always legal)."""
    if dim <= pref:
        return dim
    for cand in range(pref, 0, -1):
        if dim % cand == 0 and cand % align == 0:
            return cand
    return dim


_VMEM_CAP = None


def _vmem_capacity_bytes():
    global _VMEM_CAP
    if _VMEM_CAP is None:
        try:
            _VMEM_CAP = int(pltpu.get_tpu_info().vmem_capacity_bytes)
        except Exception:
            _VMEM_CAP = 64 << 20  # conservative (v7x-sized) fallback
    return _VMEM_CAP


def _mosaic_params(dims, block_bytes):
    # Per-generation VMEM ceiling: ~75% of physical (≈96 MiB on v5e/v6e's
    # 128 MiB, ≈48 MiB on v7x's 64 MiB), never below the 32 MiB default, and
    # at least 2x the block footprint (double buffering) + margin.
    ceiling = max(min(int(0.75 * _vmem_capacity_bytes()), 100 << 20), 32 << 20)
    limit = int(min(max(2 * block_bytes + (4 << 20), 32 << 20), ceiling))
    return pltpu.CompilerParams(dimension_semantics=dims, vmem_limit_bytes=limit)


def _pick_frames_per_block(B, max_frames=8):
    """Batch frames per attention grid step while keeping >=2 grid steps
    (megacore / v7x dual TC) whenever possible."""
    best = 1
    for d in range(1, min(B, max_frames) + 1):
        if B % d == 0 and (B // d >= 2 or B == 1):
            best = d
    return best


# ----------------------------------------------------------------------------
# fused (LayerNorm ->) matmul (-> bias -> QuickGELU -> residual) kernel
# ----------------------------------------------------------------------------
def _fused_linear_kernel(*refs, has_ln, has_bias, has_res, activation):
    it = iter(refs)
    x_ref = next(it)
    w_ref = next(it)
    g_ref = bln_ref = b_ref = r_ref = None
    if has_ln:
        g_ref = next(it)
        bln_ref = next(it)
    if has_bias:
        b_ref = next(it)
    if has_res:
        r_ref = next(it)
    o_ref = next(it)

    if has_ln:                                   # LayerNorm prologue in f32
        x = x_ref[...].astype(jnp.float32)
        mu = jnp.mean(x, axis=-1, keepdims=True)
        xc = x - mu
        var = jnp.mean(xc * xc, axis=-1, keepdims=True)
        x = (xc * jax.lax.rsqrt(var + 1e-5) * g_ref[...].astype(jnp.float32)
             + bln_ref[...].astype(jnp.float32))
        xm = x.astype(MATMUL_DTYPE)
    else:
        xm = x_ref[...].astype(MATMUL_DTYPE)

    y = jnp.dot(xm, w_ref[...].astype(MATMUL_DTYPE),
                preferred_element_type=jnp.float32)
    if has_bias:
        y = y + b_ref[...].astype(jnp.float32)
    if activation == "quick_gelu":
        y = y * jax.nn.sigmoid(1.702 * y)
    if has_res:
        y = y + r_ref[...].astype(jnp.float32)
    o_ref[...] = y.astype(o_ref.dtype)


def fused_linear(x, w, b=None, *, ln=None, residual=None, activation=None,
                 bm_pref=256, out_dtype=ACT_DTYPE):
    """y = [LN](x) @ w [+ b] [QuickGELU] [+ residual].

    x: (M, K), w: (K, N).  Grid tiles M only ("parallel"); the (K, N) weight
    block has a constant index_map so it stays resident in VMEM across the
    grid (single HBM fetch), and K is whole so the LN prologue sees full rows.
    """
    M, K = x.shape
    K2, N = w.shape
    assert K == K2
    bm = _pick_block(M, bm_pref, 8)

    args = [x, w.astype(WGT_DTYPE)]
    in_specs = [
        pl.BlockSpec((bm, K), lambda i: (i, 0)),
        pl.BlockSpec((K, N), lambda i: (0, 0)),       # weight-resident
    ]
    has_ln = ln is not None
    if has_ln:
        g, bln = ln
        args += [g.reshape(1, K).astype(jnp.float32),
                 bln.reshape(1, K).astype(jnp.float32)]
        in_specs += [pl.BlockSpec((1, K), lambda i: (0, 0)),
                     pl.BlockSpec((1, K), lambda i: (0, 0))]
    has_bias = b is not None
    if has_bias:
        args.append(b.reshape(1, N).astype(jnp.float32))
        in_specs.append(pl.BlockSpec((1, N), lambda i: (0, 0)))
    has_res = residual is not None
    if has_res:
        args.append(residual)
        in_specs.append(pl.BlockSpec((bm, N), lambda i: (i, 0)))

    block_bytes = (bm * K * np.dtype(x.dtype).itemsize
                   + K * N * np.dtype(WGT_DTYPE).itemsize
                   + bm * N * np.dtype(out_dtype).itemsize
                   + (bm * N * np.dtype(residual.dtype).itemsize if has_res else 0)
                   + 4 * (2 * K + N))
    kernel = functools.partial(_fused_linear_kernel, has_ln=has_ln,
                               has_bias=has_bias, has_res=has_res,
                               activation=activation)
    return pl.pallas_call(
        kernel,
        out_shape=jax.ShapeDtypeStruct((M, N), out_dtype),
        grid=(M // bm,),
        in_specs=in_specs,
        out_specs=pl.BlockSpec((bm, N), lambda i: (i, 0)),
        compiler_params=_mosaic_params(("parallel",), block_bytes),
    )(*args)


# ----------------------------------------------------------------------------
# fused "cls concat + pos add + ln_pre + zero padding" kernel
# ----------------------------------------------------------------------------
def _embed_kernel(tok_ref, cls_ref, pos_cls_ref, pos_tok_ref, g_ref, b_ref, o_ref):
    n_tok = tok_ref.shape[1]
    lpad = o_ref.shape[1]
    E = o_ref.shape[2]
    g = g_ref[...].astype(jnp.float32)
    b = b_ref[...].astype(jnp.float32)

    def ln(v):
        mu = jnp.mean(v, axis=-1, keepdims=True)
        vc = v - mu
        var = jnp.mean(vc * vc, axis=-1, keepdims=True)
        return vc * jax.lax.rsqrt(var + 1e-5) * g + b

    x_cls = cls_ref[...].astype(jnp.float32) + pos_cls_ref[...].astype(jnp.float32)
    x_tok = tok_ref[0].astype(jnp.float32) + pos_tok_ref[...].astype(jnp.float32)
    o_ref[0, 0:1, :] = ln(x_cls).astype(o_ref.dtype)
    o_ref[0, 1:1 + n_tok, :] = ln(x_tok).astype(o_ref.dtype)
    # Keep pad rows exactly zero so they stay bounded through the blocks.
    o_ref[0, 1 + n_tok:lpad, :] = jnp.zeros((lpad - 1 - n_tok, E), o_ref.dtype)


def embed_pos_layernorm(tok, cls_token, pos_cls, pos_tok, g, b, *, Lp):
    """tok: (B, n_tok, E) -> LN([cls; tok] + pos) zero-padded to (B, Lp, E)."""
    B, n_tok, E = tok.shape
    block_bytes = (n_tok * E * np.dtype(tok.dtype).itemsize
                   + Lp * E * np.dtype(ACT_DTYPE).itemsize
                   + 4 * E * (n_tok + 4))
    return pl.pallas_call(
        _embed_kernel,
        out_shape=jax.ShapeDtypeStruct((B, Lp, E), ACT_DTYPE),
        grid=(B,),
        in_specs=[pl.BlockSpec((1, n_tok, E), lambda i: (i, 0, 0)),
                  pl.BlockSpec((1, E), lambda i: (0, 0)),
                  pl.BlockSpec((1, E), lambda i: (0, 0)),
                  pl.BlockSpec((n_tok, E), lambda i: (0, 0)),
                  pl.BlockSpec((1, E), lambda i: (0, 0)),
                  pl.BlockSpec((1, E), lambda i: (0, 0))],
        out_specs=pl.BlockSpec((1, Lp, E), lambda i: (i, 0, 0)),
        compiler_params=_mosaic_params(("parallel",), block_bytes),
    )(tok, cls_token, pos_cls, pos_tok, g, b)


# ----------------------------------------------------------------------------
# multi-head attention: grid over frame groups, heads looped in-kernel
# ----------------------------------------------------------------------------
def _attn_kernel(qkv_ref, o_ref, *, heads, head_dim, width, l_valid):
    bblk, lpad, _ = qkv_ref.shape
    col = jax.lax.broadcasted_iota(jnp.int32, (1, lpad), 1)
    key_mask = jnp.where(col < l_valid, 0.0, -1e30).astype(jnp.float32)

    for fb in range(bblk):                      # static frame loop within block
        outs = []
        for hh in range(heads):                 # static head loop; scale folded into Q proj
            lo = hh * head_dim
            q = qkv_ref[fb, :, lo:lo + head_dim]
            k = qkv_ref[fb, :, width + lo:width + lo + head_dim]
            v = qkv_ref[fb, :, 2 * width + lo:2 * width + lo + head_dim]

            s = jnp.dot(q.astype(MATMUL_DTYPE), k.astype(MATMUL_DTYPE).T,
                        preferred_element_type=jnp.float32) + key_mask     # (Lp, Lp)
            m = jnp.max(s, axis=-1, keepdims=True)
            p = jnp.exp(s - m)
            p = p * pl.reciprocal(jnp.sum(p, axis=-1, keepdims=True), approx=False)
            outs.append(jnp.dot(p.astype(MATMUL_DTYPE), v.astype(MATMUL_DTYPE),
                                preferred_element_type=jnp.float32))       # (Lp, Dh)
        # Single lane-dense (Lp, E) store instead of per-head partial stores.
        o_ref[fb] = jnp.concatenate(outs, axis=-1).astype(o_ref.dtype)


def mha_attention(qkv, heads, l_valid):
    """qkv: (B, L_pad, 3E) fused projections -> (B, L_pad, E) head-concat output."""
    B, Lp, threeE = qkv.shape
    E = threeE // 3
    Dh = E // heads
    bblk = _pick_frames_per_block(B)
    kernel = functools.partial(_attn_kernel, heads=heads, head_dim=Dh,
                               width=E, l_valid=l_valid)
    block_bytes = (bblk * (Lp * threeE + Lp * E) * np.dtype(qkv.dtype).itemsize
                   + 2 * Lp * Lp * 4)
    return pl.pallas_call(
        kernel,
        out_shape=jax.ShapeDtypeStruct((B, Lp, E), ACT_DTYPE),
        grid=(B // bblk,),
        in_specs=[pl.BlockSpec((bblk, Lp, threeE), lambda i: (i, 0, 0))],
        out_specs=pl.BlockSpec((bblk, Lp, E), lambda i: (i, 0, 0)),
        compiler_params=_mosaic_params(("parallel",), block_bytes),
    )(qkv)


# ----------------------------------------------------------------------------
# Transformer block / full ViT forward (Pallas-backed)
# ----------------------------------------------------------------------------
def residual_block(x, p, heads, l_valid):
    B, Lp, E = x.shape
    xf = x.reshape(B * Lp, E)

    # ln1 -> fused QKV projection (weight-resident, scale folded into Q)
    qkv = fused_linear(xf, p["in_proj_w"], p["in_proj_b"],
                       ln=(p["ln1_g"], p["ln1_b"]))
    # per-frame-group attention, heads looped in-kernel, lane-dense output
    attn = mha_attention(qkv.reshape(B, Lp, 3 * E), heads, l_valid)
    # out_proj with the residual add fused into the same kernel
    xf = fused_linear(attn.reshape(B * Lp, E), p["out_proj_w"],
                      p["out_proj_b"], residual=xf)
    # ln2 -> c_fc -> QuickGELU fused
    h = fused_linear(xf, p["fc_w"], p["fc_b"],
                     ln=(p["ln2_g"], p["ln2_b"]), activation="quick_gelu")
    # c_proj with the residual add fused
    xf = fused_linear(h, p["proj_w"], p["proj_b"], residual=xf)
    return xf.reshape(B, Lp, E)


def prepare_params(params, *, heads):
    """One-time layout prep: weights transposed to (K, N) and cast to bf16
    (no per-forward XLA transposes), 1/sqrt(Dh) folded into the Q rows of
    in_proj, conv kernel flattened, pos_embed split into cls/token rows,
    LayerNorm / bias params kept f32."""
    width = params["conv_w"].shape[0]
    dh = width // heads
    scale = 1.0 / math.sqrt(dh)

    def f32(a):
        return jnp.asarray(a, jnp.float32)

    prep = {
        "patch_w": params["conv_w"].reshape(width, -1).T.astype(WGT_DTYPE),
        "cls_token": f32(params["cls_token"]).reshape(1, width),
        "pos_cls": f32(params["pos_embed"][0:1]),
        "pos_tok": f32(params["pos_embed"][1:]),
        "ln_pre_g": f32(params["ln_pre_g"]).reshape(1, width),
        "ln_pre_b": f32(params["ln_pre_b"]).reshape(1, width),
        "ln_post_g": f32(params["ln_post_g"]),
        "ln_post_b": f32(params["ln_post_b"]),
        "projection": params["projection"].astype(WGT_DTYPE),
        "blocks": [],
    }
    qscale = jnp.concatenate([jnp.full((width,), scale, jnp.float32),
                              jnp.ones((2 * width,), jnp.float32)])
    for bp in params["blocks"]:
        prep["blocks"].append({
            "ln1_g": f32(bp["ln1_g"]), "ln1_b": f32(bp["ln1_b"]),
            "in_proj_w": (f32(bp["in_proj_w"]).T * qscale[None, :]).astype(WGT_DTYPE),
            "in_proj_b": f32(bp["in_proj_b"]) * qscale,
            "out_proj_w": bp["out_proj_w"].T.astype(WGT_DTYPE),
            "out_proj_b": f32(bp["out_proj_b"]),
            "ln2_g": f32(bp["ln2_g"]), "ln2_b": f32(bp["ln2_b"]),
            "fc_w": bp["fc_w"].T.astype(WGT_DTYPE),
            "fc_b": f32(bp["fc_b"]),
            "proj_w": bp["proj_w"].T.astype(WGT_DTYPE),
            "proj_b": f32(bp["proj_b"]),
        })
    return prep


def vit_forward(x, prep, *, patch_size, heads):
    bs, ts, c, h, w = x.shape
    B = bs * ts
    P = patch_size
    nH, nW = h // P, w // P
    width = prep["patch_w"].shape[1]
    n_tok = nH * nW
    L = n_tok + 1
    Lp = _round_up(L, 8)          # sublane-aligned padded sequence length

    # Patch extraction stays XLA glue, but in bf16 to halve the materialized
    # copy; flatten order (c, kh, kw) matches Conv2d(kernel=P, stride=P).
    # TODO(synk): fold the patch rearrangement into the patch-embed pallas_call
    # via an index_map over (B, nH) to avoid materializing it at all.
    xi = x.reshape(B, c, h, w).astype(ACT_DTYPE)
    patches = xi.reshape(B, c, nH, P, nW, P).transpose(0, 2, 4, 1, 3, 5)
    patches = patches.reshape(B * n_tok, c * P * P)
    tok = fused_linear(patches, prep["patch_w"])                 # (B*n_tok, width) bf16

    # cls concat + pos add + ln_pre + zero padding fused into one kernel.
    xt = embed_pos_layernorm(tok.reshape(B, n_tok, width), prep["cls_token"],
                             prep["pos_cls"], prep["pos_tok"],
                             prep["ln_pre_g"], prep["ln_pre_b"], Lp=Lp)

    for bp in prep["blocks"]:
        xt = residual_block(xt, bp, heads, l_valid=L)

    # ln_post fused into the final projection matmul (cls token only)
    cls_out = xt[:, 0, :]                                        # (B, width)
    out = fused_linear(cls_out, prep["projection"],
                       ln=(prep["ln_post_g"], prep["ln_post_b"]),
                       out_dtype=jnp.float32)
    return out.reshape(bs, ts, -1)


# ----------------------------------------------------------------------------
# Pure-JAX reference (for correctness check) — uses the original parameters
# ----------------------------------------------------------------------------
def _ln_ref(x, g, b):
    mu = x.mean(-1, keepdims=True)
    var = ((x - mu) ** 2).mean(-1, keepdims=True)
    return (x - mu) / jnp.sqrt(var + 1e-5) * g + b


def _quick_gelu(x):
    return x * jax.nn.sigmoid(1.702 * x)


def _block_ref(x, p, heads):
    B, L, E = x.shape
    Dh = E // heads
    h1 = _ln_ref(x, p["ln1_g"], p["ln1_b"])
    qkv = h1 @ p["in_proj_w"].T + p["in_proj_b"]
    q, k, v = jnp.split(qkv, 3, -1)

    def th(t):
        return t.reshape(B, L, heads, Dh).transpose(0, 2, 1, 3)

    q, k, v = th(q), th(k), th(v)
    s = jnp.einsum("bhld,bhmd->bhlm", q, k) / math.sqrt(Dh)
    a = jax.nn.softmax(s, -1)
    o = jnp.einsum("bhlm,bhmd->bhld", a, v).transpose(0, 2, 1, 3).reshape(B, L, E)
    x = x + o @ p["out_proj_w"].T + p["out_proj_b"]
    h2 = _ln_ref(x, p["ln2_g"], p["ln2_b"])
    m = _quick_gelu(h2 @ p["fc_w"].T + p["fc_b"]) @ p["proj_w"].T + p["proj_b"]
    return x + m


def vit_forward_ref(x, params, *, patch_size, heads):
    bs, ts, c, h, w = x.shape
    B = bs * ts
    P = patch_size
    nH, nW = h // P, w // P
    width = params["conv_w"].shape[0]
    xi = x.reshape(B, c, h, w)
    patches = xi.reshape(B, c, nH, P, nW, P).transpose(0, 2, 4, 1, 3, 5)
    patches = patches.reshape(B * nH * nW, c * P * P)
    tok = (patches @ params["conv_w"].reshape(width, c * P * P).T).reshape(B, nH * nW, width)
    cls = jnp.broadcast_to(params["cls_token"], (B, 1, width))
    xt = jnp.concatenate([cls, tok], axis=1) + params["pos_embed"][None]
    xt = _ln_ref(xt, params["ln_pre_g"], params["ln_pre_b"])
    for bp in params["blocks"]:
        xt = _block_ref(xt, bp, heads)
    cls_out = _ln_ref(xt[:, 0, :], params["ln_post_g"], params["ln_post_b"])
    return (cls_out @ params["projection"]).reshape(bs, ts, -1)


# ----------------------------------------------------------------------------
# Deterministic parameter init (shapes mirror the PyTorch __init__)
# ----------------------------------------------------------------------------
def init_params(key, *, width, layers, patch_size, output_dim):
    scale = width ** (-0.5)

    def nrm(k, shape, s=0.02):
        return s * jax.random.normal(k, shape, jnp.float32)

    keys = jax.random.split(key, 8)
    params = {
        "conv_w": nrm(keys[0], (width, 3, patch_size, patch_size)),
        "cls_token": scale * jax.random.normal(keys[1], (width,), jnp.float32),
        "pos_embed": scale * jax.random.normal(keys[2], (161, width), jnp.float32),
        "ln_pre_g": jnp.ones((width,), jnp.float32) + nrm(keys[3], (width,)),
        "ln_pre_b": nrm(keys[4], (width,)),
        "ln_post_g": jnp.ones((width,), jnp.float32) + nrm(keys[5], (width,)),
        "ln_post_b": nrm(keys[6], (width,)),
        "projection": scale * jax.random.normal(keys[7], (width, output_dim), jnp.float32),
        "blocks": [],
    }
    bkey = jax.random.fold_in(key, 1234)
    for i in range(layers):
        ks = jax.random.split(jax.random.fold_in(bkey, i), 10)
        params["blocks"].append({
            "ln1_g": jnp.ones((width,), jnp.float32) + nrm(ks[0], (width,)),
            "ln1_b": nrm(ks[1], (width,)),
            "in_proj_w": nrm(ks[2], (3 * width, width)),
            "in_proj_b": nrm(ks[3], (3 * width,)),
            "out_proj_w": nrm(ks[4], (width, width)),
            "out_proj_b": nrm(ks[5], (width,)),
            "ln2_g": jnp.ones((width,), jnp.float32) + nrm(ks[6], (width,)),
            "ln2_b": nrm(ks[7], (width,)),
            "fc_w": nrm(ks[8], (4 * width, width)),
            "fc_b": jnp.zeros((4 * width,), jnp.float32),
            "proj_w": nrm(ks[9], (width, 4 * width)),
            "proj_b": jnp.zeros((width,), jnp.float32),
        })
    return params


# ----------------------------------------------------------------------------
if __name__ == "__main__":
    # Small config.  Input H=160, W=256 with patch=16 gives 10*16=160 patches,
    # so seq len = 161 tokens, matching the fixed pos_embed shape (161, width).
    patch_size = 16
    width = 32
    layers = 2
    heads = 2
    output_dim = 16
    bs, ts = 2, 1
    H, W = 160, 256

    key = jax.random.PRNGKey(0)
    pkey, xkey = jax.random.split(key)
    params = init_params(pkey, width=width, layers=layers,
                         patch_size=patch_size, output_dim=output_dim)
    prep = prepare_params(params, heads=heads)          # one-time layout prep
    x = jax.random.normal(xkey, (bs, ts, 3, H, W), jnp.float32)

    vit_fn = jax.jit(functools.partial(vit_forward, patch_size=patch_size, heads=heads))
    out = vit_fn(x, prep)
    out = jax.block_until_ready(out)

    ref = vit_forward_ref(x, params, patch_size=patch_size, heads=heads)
    ref = jax.block_until_ready(ref)

    assert out.shape == (bs, ts, output_dim)
    assert bool(jnp.all(jnp.isfinite(out)))
    assert bool(jnp.allclose(out, ref, atol=5e-2, rtol=5e-2))

    print("KERNEL_OK")
</pallas_src>

<mosaic_0001>
module attributes {stable_mosaic.version = 11 : i64} {
  func.func @_fused_linear_kernel(%arg0: i32, %arg1: memref<160x768xbf16, #tpu.memory_space<vmem>>, %arg2: memref<768x32xbf16, #tpu.memory_space<vmem>>, %arg3: memref<160x32xbf16, #tpu.memory_space<vmem>>) attributes {dimension_semantics = [#tpu.dimension_semantics<parallel>], iteration_bounds = array<i64: 2>, scalar_prefetch = 0 : i64, scratch_operands = 0 : i64, tpu.core_type = #tpu.core_type<tc>, window_params = [{transform_indices = @transform_0, window_bounds = array<i64: 160, 768>}, {pipeline_mode = #tpu.pipeline_mode<synchronous>, transform_indices = @transform_1, window_bounds = array<i64: 768, 32>}, {transform_indices = @transform_2, window_bounds = array<i64: 160, 32>}]} {
    %c0 = arith.constant 0 : index
    %c0_0 = arith.constant 0 : index
    %0 = vector.load %arg1[%c0, %c0_0] : memref<160x768xbf16, #tpu.memory_space<vmem>>, vector<160x768xbf16>
    %c0_1 = arith.constant 0 : index
    %c0_2 = arith.constant 0 : index
    %1 = vector.load %arg2[%c0_1, %c0_2] : memref<768x32xbf16, #tpu.memory_space<vmem>>, vector<768x32xbf16>
    %cst = arith.constant dense<0.000000e+00> : vector<160x32xf32>
    %2 = tpu.matmul %0, %1, %cst {dimension_numbers = #tpu.dot_dimension_numbers<[1], [0], [0], [1], [0, 0, 1, 1], [], []>} : vector<160x768xbf16>, vector<768x32xbf16>, vector<160x32xf32> -> vector<160x32xf32>
    %3 = arith.truncf %2 : vector<160x32xf32> to vector<160x32xbf16>
    %c0_3 = arith.constant 0 : index
    %c0_4 = arith.constant 0 : index
    %4 = vector.load %arg3[%c0_3, %c0_4] : memref<160x32xbf16, #tpu.memory_space<vmem>>, vector<160x32xbf16>
    tpu.vector_store %arg3[%c0_3, %c0_4], %3 {strides = array<i32>} : memref<160x32xbf16, #tpu.memory_space<vmem>>, vector<160x32xbf16>,
    return
  }
  func.func @transform_0(%arg0: i32) -> (i32, i32) {
    %c0_i32 = arith.constant 0 : i32
    %c0_i32_0 = arith.constant 0 : i32
    return %arg0, %c0_i32 : i32, i32
  }
  func.func @transform_1(%arg0: i32) -> (i32, i32) {
    %c0_i32 = arith.constant 0 : i32
    %c0_i32_0 = arith.constant 0 : i32
    %c0_i32_1 = arith.constant 0 : i32
    return %c0_i32, %c0_i32_0 : i32, i32
  }
  func.func @transform_2(%arg0: i32) -> (i32, i32) {
    %c0_i32 = arith.constant 0 : i32
    %c0_i32_0 = arith.constant 0 : i32
    return %arg0, %c0_i32 : i32, i32
  }
}

module attributes {stable_mosaic.version = 11 : i64} {
  func.func @_embed_kernel(%arg0: i32, %arg1: memref<1x160x32xbf16, #tpu.memory_space<vmem>>, %arg2: memref<1x32xf32, #tpu.memory_space<vmem>>, %arg3: memref<1x32xf32, #tpu.memory_space<vmem>>, %arg4: memref<160x32xf32, #tpu.memory_space<vmem>>, %arg5: memref<1x32xf32, #tpu.memory_space<vmem>>, %arg6: memref<1x32xf32, #tpu.memory_space<vmem>>, %arg7: memref<1x168x32xbf16, #tpu.memory_space<vmem>>) attributes {dimension_semantics = [#tpu.dimension_semantics<parallel>], iteration_bounds = array<i64: 2>, scalar_prefetch = 0 : i64, scratch_operands = 0 : i64, tpu.core_type = #tpu.core_type<tc>, window_params = [{transform_indices = @transform_0, window_bounds = array<i64: 1, 160, 32>}, {pipeline_mode = #tpu.pipeline_mode<synchronous>, transform_indices = @transform_1, window_bounds = array<i64: 1, 32>}, {pipeline_mode = #tpu.pipeline_mode<synchronous>, transform_indices = @transform_2, window_bounds = array<i64: 1, 32>}, {pipeline_mode = #tpu.pipeline_mode<synchronous>, transform_indices = @transform_3, window_bounds = array<i64: 160, 32>}, {pipeline_mode = #tpu.pipeline_mode<synchronous>, transform_indices = @transform_4, window_bounds = array<i64: 1, 32>}, {pipeline_mode = #tpu.pipeline_mode<synchronous>, transform_indices = @transform_5, window_bounds = array<i64: 1, 32>}, {transform_indices = @transform_6, window_bounds = array<i64: 1, 168, 32>}]} {
    %c0 = arith.constant 0 : index
    %c0_0 = arith.constant 0 : index
    %0 = vector.load %arg5[%c0, %c0_0] : memref<1x32xf32, #tpu.memory_space<vmem>>, vector<1x32xf32>
    %c0_1 = arith.constant 0 : index
    %c0_2 = arith.constant 0 : index
    %1 = vector.load %arg6[%c0_1, %c0_2] : memref<1x32xf32, #tpu.memory_space<vmem>>, vector<1x32xf32>
    %c0_3 = arith.constant 0 : index
    %c0_4 = arith.constant 0 : index
    %2 = vector.load %arg2[%c0_3, %c0_4] : memref<1x32xf32, #tpu.memory_space<vmem>>, vector<1x32xf32>
    %c0_5 = arith.constant 0 : index
    %c0_6 = arith.constant 0 : index
    %3 = vector.load %arg3[%c0_5, %c0_6] : memref<1x32xf32, #tpu.memory_space<vmem>>, vector<1x32xf32>
    %4 = arith.addf %2, %3 : vector<1x32xf32>
    %c0_7 = arith.constant 0 : index
    %c0_8 = arith.constant 0 : index
    %c0_9 = arith.constant 0 : index
    %5 = vector.load %arg1[%c0_7, %c0_8, %c0_9] : memref<1x160x32xbf16, #tpu.memory_space<vmem>>, vector<1x160x32xbf16>
    %6 = vector.shape_cast %5 : vector<1x160x32xbf16> to vector<160x32xbf16>
    %7 = arith.extf %6 : vector<160x32xbf16> to vector<160x32xf32>
    %c0_10 = arith.constant 0 : index
    %c0_11 = arith.constant 0 : index
    %8 = vector.load %arg4[%c0_10, %c0_11] : memref<160x32xf32, #tpu.memory_space<vmem>>, vector<160x32xf32>
    %9 = arith.addf %7, %8 : vector<160x32xf32>
    %cst = arith.constant dense<0.000000e+00> : vector<1xf32>
    %10 = vector.multi_reduction <add>, %4, %cst [1] : vector<1x32xf32> to vector<1xf32>
    %11 = vector.shape_cast %10 : vector<1xf32> to vector<1x1xf32>
    %cst_12 = arith.constant 3.200000e+01 : f32
    %12 = vector.broadcast %cst_12 : f32 to vector<1x1xf32>
    %13 = arith.divf %11, %12 : vector<1x1xf32>
    %14 = vector.broadcast %13 : vector<1x1xf32> to vector<1x32xf32>
    %15 = arith.subf %4, %14 : vector<1x32xf32>
    %16 = arith.mulf %15, %15 : vector<1x32xf32>
    %cst_13 = arith.constant dense<0.000000e+00> : vector<1xf32>
    %17 = vector.multi_reduction <add>, %16, %cst_13 [1] : vector<1x32xf32> to vector<1xf32>
    %18 = vector.shape_cast %17 : vector<1xf32> to vector<1x1xf32>
    %cst_14 = arith.constant 3.200000e+01 : f32
    %19 = vector.broadcast %cst_14 : f32 to vector<1x1xf32>
    %20 = arith.divf %18, %19 : vector<1x1xf32>
    %cst_15 = arith.constant 9.99999974E-6 : f32
    %21 = vector.broadcast %cst_15 : f32 to vector<1x1xf32>
    %22 = arith.addf %20, %21 : vector<1x1xf32>
    %23 = math.rsqrt %22 : vector<1x1xf32>
    %24 = vector.broadcast %23 : vector<1x1xf32> to vector<1x32xf32>
    %25 = arith.mulf %15, %24 : vector<1x32xf32>
    %26 = arith.mulf %25, %0 : vector<1x32xf32>
    %27 = arith.addf %26, %1 : vector<1x32xf32>
    %28 = arith.truncf %27 : vector<1x32xf32> to vector<1x32xbf16>
    %c0_16 = arith.constant 0 : index
    %c0_17 = arith.constant 0 : index
    %c0_18 = arith.constant 0 : index
    %29 = vector.load %arg7[%c0_16, %c0_17, %c0_18] : memref<1x168x32xbf16, #tpu.memory_space<vmem>>, vector<1x1x32xbf16>
    %30 = vector.shape_cast %29 : vector<1x1x32xbf16> to vector<1x32xbf16>
    %31 = vector.shape_cast %28 : vector<1x32xbf16> to vector<1x1x32xbf16>
    tpu.vector_store %arg7[%c0_16, %c0_17, %c0_18], %31 {strides = array<i32>} : memref<1x168x32xbf16, #tpu.memory_space<vmem>>, vector<1x1x32xbf16>,
    %cst_19 = arith.constant dense<0.000000e+00> : vector<160xf32>
    %32 = vector.multi_reduction <add>, %9, %cst_19 [1] : vector<160x32xf32> to vector<160xf32>
    %33 = vector.shape_cast %32 : vector<160xf32> to vector<160x1xf32>
    %cst_20 = arith.constant 3.200000e+01 : f32
    %34 = vector.broadcast %cst_20 : f32 to vector<160x1xf32>
    %35 = arith.divf %33, %34 : vector<160x1xf32>
    %36 = vector.broadcast %35 : vector<160x1xf32> to vector<160x32xf32>
    %37 = arith.subf %9, %36 : vector<160x32xf32>
    %38 = arith.mulf %37, %37 : vector<160x32xf32>
    %cst_21 = arith.constant dense<0.000000e+00> : vector<160xf32>
    %39 = vector.multi_reduction <add>, %38, %cst_21 [1] : vector<160x32xf32> to vector<160xf32>
    %40 = vector.shape_cast %39 : vector<160xf32> to vector<160x1xf32>
    %cst_22 = arith.constant 3.200000e+01 : f32
    %41 = vector.broadcast %cst_22 : f32 to vector<160x1xf32>
    %42 = arith.divf %40, %41 : vector<160x1xf32>
    %cst_23 = arith.constant 9.99999974E-6 : f32
    %43 = vector.broadcast %cst_23 : f32 to vector<160x1xf32>
    %44 = arith.addf %42, %43 : vector<160x1xf32>
    %45 = math.rsqrt %44 : vector<160x1xf32>
    %46 = vector.broadcast %45 : vector<160x1xf32> to vector<160x32xf32>
    %47 = arith.mulf %37, %46 : vector<160x32xf32>
    %48 = vector.broadcast %0 : vector<1x32xf32> to vector<160x32xf32>
    %49 = arith.mulf %47, %48 : vector<160x32xf32>
    %50 = vector.broadcast %1 : vector<1x32xf32> to vector<160x32xf32>
    %51 = arith.addf %49, %50 : vector<160x32xf32>
    %52 = arith.truncf %51 : vector<160x32xf32> to vector<160x32xbf16>
    %c0_24 = arith.constant 0 : index
    %c1 = arith.constant 1 : index
    %c0_25 = arith.constant 0 : index
    %53 = vector.load %arg7[%c0_24, %c1, %c0_25] : memref<1x168x32xbf16, #tpu.memory_space<vmem>>, vector<1x160x32xbf16>
    %54 = vector.shape_cast %53 : vector<1x160x32xbf16> to vector<160x32xbf16>
    %55 = vector.shape_cast %52 : vector<160x32xbf16> to vector<1x160x32xbf16>
    tpu.vector_store %arg7[%c0_24, %c1, %c0_25], %55 {strides = array<i32>} : memref<1x168x32xbf16, #tpu.memory_space<vmem>>, vector<1x160x32xbf16>,
    %cst_26 = arith.constant 0.000000e+00 : bf16
    %56 = vector.broadcast %cst_26 : bf16 to vector<7x32xbf16>
    %c0_27 = arith.constant 0 : index
    %c161 = arith.constant 161 : index
    %c0_28 = arith.constant 0 : index
    %57 = vector.load %arg7[%c0_27, %c161, %c0_28] : memref<1x168x32xbf16, #tpu.memory_space<vmem>>, vector<1x7x32xbf16>
    %58 = vector.shape_cast %57 : vector<1x7x32xbf16> to vector<7x32xbf16>
    %59 = vector.shape_cast %56 : vector<7x32xbf16> to vector<1x7x32xbf16>
    tpu.vector_store %arg7[%c0_27, %c161, %c0_28], %59 {strides = array<i32>} : memref<1x168x32xbf16, #tpu.memory_space<vmem>>, vector<1x7x32xbf16>,
    return
  }
  func.func @transform_0(%arg0: i32) -> (i32, i32, i32) {
    %c0_i32 = arith.constant 0 : i32
    %c0_i32_0 = arith.constant 0 : i32
    %c0_i32_1 = arith.constant 0 : i32
    return %arg0, %c0_i32, %c0_i32_0 : i32, i32, i32
  }
  func.func @transform_1(%arg0: i32) -> (i32, i32) {
    %c0_i32 = arith.constant 0 : i32
    %c0_i32_0 = arith.constant 0 : i32
    %c0_i32_1 = arith.constant 0 : i32
    return %c0_i32, %c0_i32_0 : i32, i32
  }
  func.func @transform_2(%arg0: i32) -> (i32, i32) {
    %c0_i32 = arith.constant 0 : i32
    %c0_i32_0 = arith.constant 0 : i32
    %c0_i32_1 = arith.constant 0 : i32
    return %c0_i32, %c0_i32_0 : i32, i32
  }
  func.func @transform_3(%arg0: i32) -> (i32, i32) {
    %c0_i32 = arith.constant 0 : i32
    %c0_i32_0 = arith.constant 0 : i32
    %c0_i32_1 = arith.constant 0 : i32
    return %c0_i32, %c0_i32_0 : i32, i32
  }
  func.func @transform_4(%arg0: i32) -> (i32, i32) {
    %c0_i32 = arith.constant 0 : i32
    %c0_i32_0 = arith.constant 0 : i32
    %c0_i32_1 = arith.constant 0 : i32
    return %c0_i32, %c0_i32_0 : i32, i32
  }
  func.func @transform_5(%arg0: i32) -> (i32, i32) {
    %c0_i32 = arith.constant 0 : i32
    %c0_i32_0 = arith.constant 0 : i32
    %c0_i32_1 = arith.constant 0 : i32
    return %c0_i32, %c0_i32_0 : i32, i32
  }
  func.func @transform_6(%arg0: i32) -> (i32, i32, i32) {
    %c0_i32 = arith.constant 0 : i32
    %c0_i32_0 = arith.constant 0 : i32
    %c0_i32_1 = arith.constant 0 : i32
    return %arg0, %c0_i32, %c0_i32_0 : i32, i32, i32
  }
}

module attributes {stable_mosaic.version = 11 : i64} {
  func.func @_fused_linear_kernel(%arg0: i32, %arg1: memref<168x32xbf16, #tpu.memory_space<vmem>>, %arg2: memref<32x96xbf16, #tpu.memory_space<vmem>>, %arg3: memref<1x32xf32, #tpu.memory_space<vmem>>, %arg4: memref<1x32xf32, #tpu.memory_space<vmem>>, %arg5: memref<1x96xf32, #tpu.memory_space<vmem>>, %arg6: memref<168x96xbf16, #tpu.memory_space<vmem>>) attributes {dimension_semantics = [#tpu.dimension_semantics<parallel>], iteration_bounds = array<i64: 2>, scalar_prefetch = 0 : i64, scratch_operands = 0 : i64, tpu.core_type = #tpu.core_type<tc>, window_params = [{transform_indices = @transform_0, window_bounds = array<i64: 168, 32>}, {pipeline_mode = #tpu.pipeline_mode<synchronous>, transform_indices = @transform_1, window_bounds = array<i64: 32, 96>}, {pipeline_mode = #tpu.pipeline_mode<synchronous>, transform_indices = @transform_2, window_bounds = array<i64: 1, 32>}, {pipeline_mode = #tpu.pipeline_mode<synchronous>, transform_indices = @transform_3, window_bounds = array<i64: 1, 32>}, {pipeline_mode = #tpu.pipeline_mode<synchronous>, transform_indices = @transform_4, window_bounds = array<i64: 1, 96>}, {transform_indices = @transform_5, window_bounds = array<i64: 168, 96>}]} {
    %c0 = arith.constant 0 : index
    %c0_0 = arith.constant 0 : index
    %0 = vector.load %arg1[%c0, %c0_0] : memref<168x32xbf16, #tpu.memory_space<vmem>>, vector<168x32xbf16>
    %1 = arith.extf %0 : vector<168x32xbf16> to vector<168x32xf32>
    %cst = arith.constant dense<0.000000e+00> : vector<168xf32>
    %2 = vector.multi_reduction <add>, %1, %cst [1] : vector<168x32xf32> to vector<168xf32>
    %3 = vector.shape_cast %2 : vector<168xf32> to vector<168x1xf32>
    %cst_1 = arith.constant 3.200000e+01 : f32
    %4 = vector.broadcast %cst_1 : f32 to vector<168x1xf32>
    %5 = arith.divf %3, %4 : vector<168x1xf32>
    %6 = vector.broadcast %5 : vector<168x1xf32> to vector<168x32xf32>
    %7 = arith.subf %1, %6 : vector<168x32xf32>
    %8 = arith.mulf %7, %7 : vector<168x32xf32>
    %cst_2 = arith.constant dense<0.000000e+00> : vector<168xf32>
    %9 = vector.multi_reduction <add>, %8, %cst_2 [1] : vector<168x32xf32> to vector<168xf32>
    %10 = vector.shape_cast %9 : vector<168xf32> to vector<168x1xf32>
    %cst_3 = arith.constant 3.200000e+01 : f32
    %11 = vector.broadcast %cst_3 : f32 to vector<168x1xf32>
    %12 = arith.divf %10, %11 : vector<168x1xf32>
    %cst_4 = arith.constant 9.99999974E-6 : f32
    %13 = vector.broadcast %cst_4 : f32 to vector<168x1xf32>
    %14 = arith.addf %12, %13 : vector<168x1xf32>
    %15 = math.rsqrt %14 : vector<168x1xf32>
    %16 = vector.broadcast %15 : vector<168x1xf32> to vector<168x32xf32>
    %17 = arith.mulf %7, %16 : vector<168x32xf32>
    %c0_5 = arith.constant 0 : index
    %c0_6 = arith.constant 0 : index
    %18 = vector.load %arg3[%c0_5, %c0_6] : memref<1x32xf32, #tpu.memory_space<vmem>>, vector<1x32xf32>
    %19 = vector.broadcast %18 : vector<1x32xf32> to vector<168x32xf32>
    %20 = arith.mulf %17, %19 : vector<168x32xf32>
    %c0_7 = arith.constant 0 : index
    %c0_8 = arith.constant 0 : index
    %21 = vector.load %arg4[%c0_7, %c0_8] : memref<1x32xf32, #tpu.memory_space<vmem>>, vector<1x32xf32>
    %22 = vector.broadcast %21 : vector<1x32xf32> to vector<168x32xf32>
    %23 = arith.addf %20, %22 : vector<168x32xf32>
    %24 = arith.truncf %23 : vector<168x32xf32> to vector<168x32xbf16>
    %c0_9 = arith.constant 0 : index
    %c0_10 = arith.constant 0 : index
    %25 = vector.load %arg2[%c0_9, %c0_10] : memref<32x96xbf16, #tpu.memory_space<vmem>>, vector<32x96xbf16>
    %cst_11 = arith.constant dense<0.000000e+00> : vector<168x96xf32>
    %26 = tpu.matmul %24, %25, %cst_11 {dimension_numbers = #tpu.dot_dimension_numbers<[1], [0], [0], [1], [0, 0, 1, 1], [], []>} : vector<168x32xbf16>, vector<32x96xbf16>, vector<168x96xf32> -> vector<168x96xf32>
    %c0_12 = arith.constant 0 : index
    %c0_13 = arith.constant 0 : index
    %27 = vector.load %arg5[%c0_12, %c0_13] : memref<1x96xf32, #tpu.memory_space<vmem>>, vector<1x96xf32>
    %28 = vector.broadcast %27 : vector<1x96xf32> to vector<168x96xf32>
    %29 = arith.addf %26, %28 : vector<168x96xf32>
    %30 = arith.truncf %29 : vector<168x96xf32> to vector<168x96xbf16>
    %c0_14 = arith.constant 0 : index
    %c0_15 = arith.constant 0 : index
    %31 = vector.load %arg6[%c0_14, %c0_15] : memref<168x96xbf16, #tpu.memory_space<vmem>>, vector<168x96xbf16>
    tpu.vector_store %arg6[%c0_14, %c0_15], %30 {strides = array<i32>} : memref<168x96xbf16, #tpu.memory_space<vmem>>, vector<168x96xbf16>,
    return
  }
  func.func @transform_0(%arg0: i32) -> (i32, i32) {
    %c0_i32 = arith.constant 0 : i32
    %c0_i32_0 = arith.constant 0 : i32
    return %arg0, %c0_i32 : i32, i32
  }
  func.func @transform_1(%arg0: i32) -> (i32, i32) {
    %c0_i32 = arith.constant 0 : i32
    %c0_i32_0 = arith.constant 0 : i32
    %c0_i32_1 = arith.constant 0 : i32
    return %c0_i32, %c0_i32_0 : i32, i32
  }
  func.func @transform_2(%arg0: i32) -> (i32, i32) {
    %c0_i32 = arith.constant 0 : i32
    %c0_i32_0 = arith.constant 0 : i32
    %c0_i32_1 = arith.constant 0 : i32
    return %c0_i32, %c0_i32_0 : i32, i32
  }
  func.func @transform_3(%arg0: i32) -> (i32, i32) {
    %c0_i32 = arith.constant 0 : i32
    %c0_i32_0 = arith.constant 0 : i32
    %c0_i32_1 = arith.constant 0 : i32
    return %c0_i32, %c0_i32_0 : i32, i32
  }
  func.func @transform_4(%arg0: i32) -> (i32, i32) {
    %c0_i32 = arith.constant 0 : i32
    %c0_i32_0 = arith.constant 0 : i32
    %c0_i32_1 = arith.constant 0 : i32
    return %c0_i32, %c0_i32_0 : i32, i32
  }
  func.func @transform_5(%arg0: i32) -> (i32, i32) {
    %c0_i32 = arith.constant 0 : i32
    %c0_i32_0 = arith.constant 0 : i32
    return %arg0, %c0_i32 : i32, i32
  }
}

module attributes {stable_mosaic.version = 11 : i64} {
  func.func @_attn_kernel(%arg0: i32, %arg1: memref<1x168x96xbf16, #tpu.memory_space<vmem>>, %arg2: memref<1x168x32xbf16, #tpu.memory_space<vmem>>) attributes {dimension_semantics = [#tpu.dimension_semantics<parallel>], iteration_bounds = array<i64: 2>, scalar_prefetch = 0 : i64, scratch_operands = 0 : i64, tpu.core_type = #tpu.core_type<tc>, window_params = [{transform_indices = @transform_0, window_bounds = array<i64: 1, 168, 96>}, {transform_indices = @transform_1, window_bounds = array<i64: 1, 168, 32>}]} {
    %0 = tpu.iota {dimensions = array<i32: 1>} : vector<1x168xi32>
    %c161_i32 = arith.constant 161 : i32
    %1 = vector.broadcast %c161_i32 : i32 to vector<1x168xi32>
    %2 = arith.cmpi slt, %0, %1 : vector<1x168xi32>
    %cst = arith.constant 0.000000e+00 : f32
    %cst_0 = arith.constant -1.000000e+30 : f32
    %3 = vector.broadcast %cst : f32 to vector<1x168xf32>
    %4 = vector.broadcast %cst_0 : f32 to vector<1x168xf32>
    %5 = arith.select %2, %3, %4 : vector<1x168xi1>, vector<1x168xf32>
    %c0 = arith.constant 0 : index
    %c0_1 = arith.constant 0 : index
    %c0_2 = arith.constant 0 : index
    %6 = vector.load %arg1[%c0, %c0_1, %c0_2] : memref<1x168x96xbf16, #tpu.memory_space<vmem>>, vector<1x168x16xbf16>
    %7 = vector.shape_cast %6 : vector<1x168x16xbf16> to vector<168x16xbf16>
    %c0_3 = arith.constant 0 : index
    %c0_4 = arith.constant 0 : index
    %c32 = arith.constant 32 : index
    %8 = vector.load %arg1[%c0_3, %c0_4, %c32] : memref<1x168x96xbf16, #tpu.memory_space<vmem>>, vector<1x168x16xbf16>
    %9 = vector.shape_cast %8 : vector<1x168x16xbf16> to vector<168x16xbf16>
    %c0_5 = arith.constant 0 : index
    %c0_6 = arith.constant 0 : index
    %c64 = arith.constant 64 : index
    %10 = vector.load %arg1[%c0_5, %c0_6, %c64] : memref<1x168x96xbf16, #tpu.memory_space<vmem>>, vector<1x168x16xbf16>
    %11 = vector.shape_cast %10 : vector<1x168x16xbf16> to vector<168x16xbf16>
    %12 = tpu.transpose %9, [1, 0] : vector<168x16xbf16> -> vector<16x168xbf16>
    %cst_7 = arith.constant dense<0.000000e+00> : vector<168x168xf32>
    %13 = tpu.matmul %7, %12, %cst_7 {dimension_numbers = #tpu.dot_dimension_numbers<[1], [0], [0], [1], [0, 0, 1, 1], [], []>} : vector<168x16xbf16>, vector<16x168xbf16>, vector<168x168xf32> -> vector<168x168xf32>
    %14 = vector.broadcast %5 : vector<1x168xf32> to vector<168x168xf32>
    %15 = arith.addf %13, %14 : vector<168x168xf32>
    %cst_8 = arith.constant dense<0xFF800000> : vector<168xf32>
    %16 = vector.multi_reduction <maximumf>, %15, %cst_8 [1] : vector<168x168xf32> to vector<168xf32>
    %17 = vector.shape_cast %16 : vector<168xf32> to vector<168x1xf32>
    %18 = vector.broadcast %17 : vector<168x1xf32> to vector<168x168xf32>
    %19 = arith.subf %15, %18 : vector<168x168xf32>
    %20 = math.exp %19 : vector<168x168xf32>
    %cst_9 = arith.constant dense<0.000000e+00> : vector<168xf32>
    %21 = vector.multi_reduction <add>, %20, %cst_9 [1] : vector<168x168xf32> to vector<168xf32>
    %22 = vector.shape_cast %21 : vector<168xf32> to vector<168x1xf32>
    %23 = tpu.reciprocal %22 : vector<168x1xf32> -> vector<168x1xf32>
    %24 = vector.broadcast %23 : vector<168x1xf32> to vector<168x168xf32>
    %25 = arith.mulf %20, %24 : vector<168x168xf32>
    %26 = arith.truncf %25 : vector<168x168xf32> to vector<168x168xbf16>
    %cst_10 = arith.constant dense<0.000000e+00> : vector<168x16xf32>
    %27 = tpu.matmul %26, %11, %cst_10 {dimension_numbers = #tpu.dot_dimension_numbers<[1], [0], [0], [1], [0, 0, 1, 1], [], []>} : vector<168x168xbf16>, vector<168x16xbf16>, vector<168x16xf32> -> vector<168x16xf32>
    %c0_11 = arith.constant 0 : index
    %c0_12 = arith.constant 0 : index
    %c16 = arith.constant 16 : index
    %28 = vector.load %arg1[%c0_11, %c0_12, %c16] : memref<1x168x96xbf16, #tpu.memory_space<vmem>>, vector<1x168x16xbf16>
    %29 = vector.shape_cast %28 : vector<1x168x16xbf16> to vector<168x16xbf16>
    %c0_13 = arith.constant 0 : index
    %c0_14 = arith.constant 0 : index
    %c48 = arith.constant 48 : index
    %30 = vector.load %arg1[%c0_13, %c0_14, %c48] : memref<1x168x96xbf16, #tpu.memory_space<vmem>>, vector<1x168x16xbf16>
    %31 = vector.shape_cast %30 : vector<1x168x16xbf16> to vector<168x16xbf16>
    %c0_15 = arith.constant 0 : index
    %c0_16 = arith.constant 0 : index
    %c80 = arith.constant 80 : index
    %32 = vector.load %arg1[%c0_15, %c0_16, %c80] : memref<1x168x96xbf16, #tpu.memory_space<vmem>>, vector<1x168x16xbf16>
    %33 = vector.shape_cast %32 : vector<1x168x16xbf16> to vector<168x16xbf16>
    %34 = tpu.transpose %31, [1, 0] : vector<168x16xbf16> -> vector<16x168xbf16>
    %cst_17 = arith.constant dense<0.000000e+00> : vector<168x168xf32>
    %35 = tpu.matmul %29, %34, %cst_17 {dimension_numbers = #tpu.dot_dimension_numbers<[1], [0], [0], [1], [0, 0, 1, 1], [], []>} : vector<168x16xbf16>, vector<16x168xbf16>, vector<168x168xf32> -> vector<168x168xf32>
    %36 = vector.broadcast %5 : vector<1x168xf32> to vector<168x168xf32>
    %37 = arith.addf %35, %36 : vector<168x168xf32>
    %cst_18 = arith.constant dense<0xFF800000> : vector<168xf32>
    %38 = vector.multi_reduction <maximumf>, %37, %cst_18 [1] : vector<168x168xf32> to vector<168xf32>
    %39 = vector.shape_cast %38 : vector<168xf32> to vector<168x1xf32>
    %40 = vector.broadcast %39 : vector<168x1xf32> to vector<168x168xf32>
    %41 = arith.subf %37, %40 : vector<168x168xf32>
    %42 = math.exp %41 : vector<168x168xf32>
    %cst_19 = arith.constant dense<0.000000e+00> : vector<168xf32>
    %43 = vector.multi_reduction <add>, %42, %cst_19 [1] : vector<168x168xf32> to vector<168xf32>
    %44 = vector.shape_cast %43 : vector<168xf32> to vector<168x1xf32>
    %45 = tpu.reciprocal %44 : vector<168x1xf32> -> vector<168x1xf32>
    %46 = vector.broadcast %45 : vector<168x1xf32> to vector<168x168xf32>
    %47 = arith.mulf %42, %46 : vector<168x168xf32>
    %48 = arith.truncf %47 : vector<168x168xf32> to vector<168x168xbf16>
    %cst_20 = arith.constant dense<0.000000e+00> : vector<168x16xf32>
    %49 = tpu.matmul %48, %33, %cst_20 {dimension_numbers = #tpu.dot_dimension_numbers<[1], [0], [0], [1], [0, 0, 1, 1], [], []>} : vector<168x168xbf16>, vector<168x16xbf16>, vector<168x16xf32> -> vector<168x16xf32>
    %50 = tpu.concatenate %27, %49 in 1 : vector<168x16xf32>, vector<168x16xf32> -> vector<168x32xf32>
    %51 = arith.truncf %50 : vector<168x32xf32> to vector<168x32xbf16>
    %c0_21 = arith.constant 0 : index
    %c0_22 = arith.constant 0 : index
    %c0_23 = arith.constant 0 : index
    %52 = vector.load %arg2[%c0_21, %c0_22, %c0_23] : memref<1x168x32xbf16, #tpu.memory_space<vmem>>, vector<1x168x32xbf16>
    %53 = vector.shape_cast %52 : vector<1x168x32xbf16> to vector<168x32xbf16>
    %54 = vector.shape_cast %51 : vector<168x32xbf16> to vector<1x168x32xbf16>
    tpu.vector_store %arg2[%c0_21, %c0_22, %c0_23], %54 {strides = array<i32>} : memref<1x168x32xbf16, #tpu.memory_space<vmem>>, vector<1x168x32xbf16>,
    return
  }
  func.func @transform_0(%arg0: i32) -> (i32, i32, i32) {
    %c0_i32 = arith.constant 0 : i32
    %c0_i32_0 = arith.constant 0 : i32
    %c0_i32_1 = arith.constant 0 : i32
    return %arg0, %c0_i32, %c0_i32_0 : i32, i32, i32
  }
  func.func @transform_1(%arg0: i32) -> (i32, i32, i32) {
    %c0_i32 = arith.constant 0 : i32
    %c0_i32_0 = arith.constant 0 : i32
    %c0_i32_1 = arith.constant 0 : i32
    return %arg0, %c0_i32, %c0_i32_0 : i32, i32, i32
  }
}

module attributes {stable_mosaic.version = 11 : i64} {
  func.func @_fused_linear_kernel(%arg0: i32, %arg1: memref<168x32xbf16, #tpu.memory_space<vmem>>, %arg2: memref<32x32xbf16, #tpu.memory_space<vmem>>, %arg3: memref<1x32xf32, #tpu.memory_space<vmem>>, %arg4: memref<168x32xbf16, #tpu.memory_space<vmem>>, %arg5: memref<168x32xbf16, #tpu.memory_space<vmem>>) attributes {dimension_semantics = [#tpu.dimension_semantics<parallel>], iteration_bounds = array<i64: 2>, scalar_prefetch = 0 : i64, scratch_operands = 0 : i64, tpu.core_type = #tpu.core_type<tc>, window_params = [{transform_indices = @transform_0, window_bounds = array<i64: 168, 32>}, {pipeline_mode = #tpu.pipeline_mode<synchronous>, transform_indices = @transform_1, window_bounds = array<i64: 32, 32>}, {pipeline_mode = #tpu.pipeline_mode<synchronous>, transform_indices = @transform_2, window_bounds = array<i64: 1, 32>}, {transform_indices = @transform_3, window_bounds = array<i64: 168, 32>}, {transform_indices = @transform_4, window_bounds = array<i64: 168, 32>}]} {
    %c0 = arith.constant 0 : index
    %c0_0 = arith.constant 0 : index
    %0 = vector.load %arg1[%c0, %c0_0] : memref<168x32xbf16, #tpu.memory_space<vmem>>, vector<168x32xbf16>
    %c0_1 = arith.constant 0 : index
    %c0_2 = arith.constant 0 : index
    %1 = vector.load %arg2[%c0_1, %c0_2] : memref<32x32xbf16, #tpu.memory_space<vmem>>, vector<32x32xbf16>
    %cst = arith.constant dense<0.000000e+00> : vector<168x32xf32>
    %2 = tpu.matmul %0, %1, %cst {dimension_numbers = #tpu.dot_dimension_numbers<[1], [0], [0], [1], [0, 0, 1, 1], [], []>} : vector<168x32xbf16>, vector<32x32xbf16>, vector<168x32xf32> -> vector<168x32xf32>
    %c0_3 = arith.constant 0 : index
    %c0_4 = arith.constant 0 : index
    %3 = vector.load %arg3[%c0_3, %c0_4] : memref<1x32xf32, #tpu.memory_space<vmem>>, vector<1x32xf32>
    %4 = vector.broadcast %3 : vector<1x32xf32> to vector<168x32xf32>
    %5 = arith.addf %2, %4 : vector<168x32xf32>
    %c0_5 = arith.constant 0 : index
    %c0_6 = arith.constant 0 : index
    %6 = vector.load %arg4[%c0_5, %c0_6] : memref<168x32xbf16, #tpu.memory_space<vmem>>, vector<168x32xbf16>
    %7 = arith.extf %6 : vector<168x32xbf16> to vector<168x32xf32>
    %8 = arith.addf %5, %7 : vector<168x32xf32>
    %9 = arith.truncf %8 : vector<168x32xf32> to vector<168x32xbf16>
    %c0_7 = arith.constant 0 : index
    %c0_8 = arith.constant 0 : index
    %10 = vector.load %arg5[%c0_7, %c0_8] : memref<168x32xbf16, #tpu.memory_space<vmem>>, vector<168x32xbf16>
    tpu.vector_store %arg5[%c0_7, %c0_8], %9 {strides = array<i32>} : memref<168x32xbf16, #tpu.memory_space<vmem>>, vector<168x32xbf16>,
    return
  }
  func.func @transform_0(%arg0: i32) -> (i32, i32) {
    %c0_i32 = arith.constant 0 : i32
    %c0_i32_0 = arith.constant 0 : i32
    return %arg0, %c0_i32 : i32, i32
  }
  func.func @transform_1(%arg0: i32) -> (i32, i32) {
    %c0_i32 = arith.constant 0 : i32
    %c0_i32_0 = arith.constant 0 : i32
    %c0_i32_1 = arith.constant 0 : i32
    return %c0_i32, %c0_i32_0 : i32, i32
  }
  func.func @transform_2(%arg0: i32) -> (i32, i32) {
    %c0_i32 = arith.constant 0 : i32
    %c0_i32_0 = arith.constant 0 : i32
    %c0_i32_1 = arith.constant 0 : i32
    return %c0_i32, %c0_i32_0 : i32, i32
  }
  func.func @transform_3(%arg0: i32) -> (i32, i32) {
    %c0_i32 = arith.constant 0 : i32
    %c0_i32_0 = arith.constant 0 : i32
    return %arg0, %c0_i32 : i32, i32
  }
  func.func @transform_4(%arg0: i32) -> (i32, i32) {
    %c0_i32 = arith.constant 0 : i32
    %c0_i32_0 = arith.constant 0 : i32
    return %arg0, %c0_i32 : i32, i32
  }
}

module attributes {stable_mosaic.version = 11 : i64} {
  func.func @_fused_linear_kernel(%arg0: i32, %arg1: memref<168x32xbf16, #tpu.memory_space<vmem>>, %arg2: memref<32x128xbf16, #tpu.memory_space<vmem>>, %arg3: memref<1x32xf32, #tpu.memory_space<vmem>>, %arg4: memref<1x32xf32, #tpu.memory_space<vmem>>, %arg5: memref<1x128xf32, #tpu.memory_space<vmem>>, %arg6: memref<168x128xbf16, #tpu.memory_space<vmem>>) attributes {dimension_semantics = [#tpu.dimension_semantics<parallel>], iteration_bounds = array<i64: 2>, scalar_prefetch = 0 : i64, scratch_operands = 0 : i64, tpu.core_type = #tpu.core_type<tc>, window_params = [{transform_indices = @transform_0, window_bounds = array<i64: 168, 32>}, {pipeline_mode = #tpu.pipeline_mode<synchronous>, transform_indices = @transform_1, window_bounds = array<i64: 32, 128>}, {pipeline_mode = #tpu.pipeline_mode<synchronous>, transform_indices = @transform_2, window_bounds = array<i64: 1, 32>}, {pipeline_mode = #tpu.pipeline_mode<synchronous>, transform_indices = @transform_3, window_bounds = array<i64: 1, 32>}, {pipeline_mode = #tpu.pipeline_mode<synchronous>, transform_indices = @transform_4, window_bounds = array<i64: 1, 128>}, {transform_indices = @transform_5, window_bounds = array<i64: 168, 128>}]} {
    %c0 = arith.constant 0 : index
    %c0_0 = arith.constant 0 : index
    %0 = vector.load %arg1[%c0, %c0_0] : memref<168x32xbf16, #tpu.memory_space<vmem>>, vector<168x32xbf16>
    %1 = arith.extf %0 : vector<168x32xbf16> to vector<168x32xf32>
    %cst = arith.constant dense<0.000000e+00> : vector<168xf32>
    %2 = vector.multi_reduction <add>, %1, %cst [1] : vector<168x32xf32> to vector<168xf32>
    %3 = vector.shape_cast %2 : vector<168xf32> to vector<168x1xf32>
    %cst_1 = arith.constant 3.200000e+01 : f32
    %4 = vector.broadcast %cst_1 : f32 to vector<168x1xf32>
    %5 = arith.divf %3, %4 : vector<168x1xf32>
    %6 = vector.broadcast %5 : vector<168x1xf32> to vector<168x32xf32>
    %7 = arith.subf %1, %6 : vector<168x32xf32>
    %8 = arith.mulf %7, %7 : vector<168x32xf32>
    %cst_2 = arith.constant dense<0.000000e+00> : vector<168xf32>
    %9 = vector.multi_reduction <add>, %8, %cst_2 [1] : vector<168x32xf32> to vector<168xf32>
    %10 = vector.shape_cast %9 : vector<168xf32> to vector<168x1xf32>
    %cst_3 = arith.constant 3.200000e+01 : f32
    %11 = vector.broadcast %cst_3 : f32 to vector<168x1xf32>
    %12 = arith.divf %10, %11 : vector<168x1xf32>
    %cst_4 = arith.constant 9.99999974E-6 : f32
    %13 = vector.broadcast %cst_4 : f32 to vector<168x1xf32>
    %14 = arith.addf %12, %13 : vector<168x1xf32>
    %15 = math.rsqrt %14 : vector<168x1xf32>
    %16 = vector.broadcast %15 : vector<168x1xf32> to vector<168x32xf32>
    %17 = arith.mulf %7, %16 : vector<168x32xf32>
    %c0_5 = arith.constant 0 : index
    %c0_6 = arith.constant 0 : index
    %18 = vector.load %arg3[%c0_5, %c0_6] : memref<1x32xf32, #tpu.memory_space<vmem>>, vector<1x32xf32>
    %19 = vector.broadcast %18 : vector<1x32xf32> to vector<168x32xf32>
    %20 = arith.mulf %17, %19 : vector<168x32xf32>
    %c0_7 = arith.constant 0 : index
    %c0_8 = arith.constant 0 : index
    %21 = vector.load %arg4[%c0_7, %c0_8] : memref<1x32xf32, #tpu.memory_space<vmem>>, vector<1x32xf32>
    %22 = vector.broadcast %21 : vector<1x32xf32> to vector<168x32xf32>
    %23 = arith.addf %20, %22 : vector<168x32xf32>
    %24 = arith.truncf %23 : vector<168x32xf32> to vector<168x32xbf16>
    %c0_9 = arith.constant 0 : index
    %c0_10 = arith.constant 0 : index
    %25 = vector.load %arg2[%c0_9, %c0_10] : memref<32x128xbf16, #tpu.memory_space<vmem>>, vector<32x128xbf16>
    %cst_11 = arith.constant dense<0.000000e+00> : vector<168x128xf32>
    %26 = tpu.matmul %24, %25, %cst_11 {dimension_numbers = #tpu.dot_dimension_numbers<[1], [0], [0], [1], [0, 0, 1, 1], [], []>} : vector<168x32xbf16>, vector<32x128xbf16>, vector<168x128xf32> -> vector<168x128xf32>
    %c0_12 = arith.constant 0 : index
    %c0_13 = arith.constant 0 : index
    %27 = vector.load %arg5[%c0_12, %c0_13] : memref<1x128xf32, #tpu.memory_space<vmem>>, vector<1x128xf32>
    %28 = vector.broadcast %27 : vector<1x128xf32> to vector<168x128xf32>
    %29 = arith.addf %26, %28 : vector<168x128xf32>
    %cst_14 = arith.constant 1.702000e+00 : f32
    %30 = vector.broadcast %cst_14 : f32 to vector<168x128xf32>
    %31 = arith.mulf %30, %29 : vector<168x128xf32>
    %32 = arith.negf %31 : vector<168x128xf32>
    %33 = math.exp %32 : vector<168x128xf32>
    %cst_15 = arith.constant 1.000000e+00 : f32
    %34 = vector.broadcast %cst_15 : f32 to vector<168x128xf32>
    %35 = arith.addf %34, %33 : vector<168x128xf32>
    %36 = arith.divf %34, %35 : vector<168x128xf32>
    %37 = arith.mulf %29, %36 : vector<168x128xf32>
    %38 = arith.truncf %37 : vector<168x128xf32> to vector<168x128xbf16>
    %c0_16 = arith.constant 0 : index
    %c0_17 = arith.constant 0 : index
    %39 = vector.load %arg6[%c0_16, %c0_17] : memref<168x128xbf16, #tpu.memory_space<vmem>>, vector<168x128xbf16>
    tpu.vector_store %arg6[%c0_16, %c0_17], %38 {strides = array<i32>} : memref<168x128xbf16, #tpu.memory_space<vmem>>, vector<168x128xbf16>,
    return
  }
  func.func @transform_0(%arg0: i32) -> (i32, i32) {
    %c0_i32 = arith.constant 0 : i32
    %c0_i32_0 = arith.constant 0 : i32
    return %arg0, %c0_i32 : i32, i32
  }
  func.func @transform_1(%arg0: i32) -> (i32, i32) {
    %c0_i32 = arith.constant 0 : i32
    %c0_i32_0 = arith.constant 0 : i32
    %c0_i32_1 = arith.constant 0 : i32
    return %c0_i32, %c0_i32_0 : i32, i32
  }
  func.func @transform_2(%arg0: i32) -> (i32, i32) {
    %c0_i32 = arith.constant 0 : i32
    %c0_i32_0 = arith.constant 0 : i32
    %c0_i32_1 = arith.constant 0 : i32
    return %c0_i32, %c0_i32_0 : i32, i32
  }
  func.func @transform_3(%arg0: i32) -> (i32, i32) {
    %c0_i32 = arith.constant 0 : i32
    %c0_i32_0 = arith.constant 0 : i32
    %c0_i32_1 = arith.constant 0 : i32
    return %c0_i32, %c0_i32_0 : i32, i32
  }
  func.func @transform_4(%arg0: i32) -> (i32, i32) {
    %c0_i32 = arith.constant 0 : i32
    %c0_i32_0 = arith.constant 0 : i32
    %c0_i32_1 = arith.constant 0 : i32
    return %c0_i32, %c0_i32_0 : i32, i32
  }
  func.func @transform_5(%arg0: i32) -> (i32, i32) {
    %c0_i32 = arith.constant 0 : i32
    %c0_i32_0 = arith.constant 0 : i32
    return %arg0, %c0_i32 : i32, i32
  }
}

module attributes {stable_mosaic.version = 11 : i64} {
  func.func @_fused_linear_kernel(%arg0: i32, %arg1: memref<168x128xbf16, #tpu.memory_space<vmem>>, %arg2: memref<128x32xbf16, #tpu.memory_space<vmem>>, %arg3: memref<1x32xf32, #tpu.memory_space<vmem>>, %arg4: memref<168x32xbf16, #tpu.memory_space<vmem>>, %arg5: memref<168x32xbf16, #tpu.memory_space<vmem>>) attributes {dimension_semantics = [#tpu.dimension_semantics<parallel>], iteration_bounds = array<i64: 2>, scalar_prefetch = 0 : i64, scratch_operands = 0 : i64, tpu.core_type = #tpu.core_type<tc>, window_params = [{transform_indices = @transform_0, window_bounds = array<i64: 168, 128>}, {pipeline_mode = #tpu.pipeline_mode<synchronous>, transform_indices = @transform_1, window_bounds = array<i64: 128, 32>}, {pipeline_mode = #tpu.pipeline_mode<synchronous>, transform_indices = @transform_2, window_bounds = array<i64: 1, 32>}, {transform_indices = @transform_3, window_bounds = array<i64: 168, 32>}, {transform_indices = @transform_4, window_bounds = array<i64: 168, 32>}]} {
    %c0 = arith.constant 0 : index
    %c0_0 = arith.constant 0 : index
    %0 = vector.load %arg1[%c0, %c0_0] : memref<168x128xbf16, #tpu.memory_space<vmem>>, vector<168x128xbf16>
    %c0_1 = arith.constant 0 : index
    %c0_2 = arith.constant 0 : index
    %1 = vector.load %arg2[%c0_1, %c0_2] : memref<128x32xbf16, #tpu.memory_space<vmem>>, vector<128x32xbf16>
    %cst = arith.constant dense<0.000000e+00> : vector<168x32xf32>
    %2 = tpu.matmul %0, %1, %cst {dimension_numbers = #tpu.dot_dimension_numbers<[1], [0], [0], [1], [0, 0, 1, 1], [], []>} : vector<168x128xbf16>, vector<128x32xbf16>, vector<168x32xf32> -> vector<168x32xf32>
    %c0_3 = arith.constant 0 : index
    %c0_4 = arith.constant 0 : index
    %3 = vector.load %arg3[%c0_3, %c0_4] : memref<1x32xf32, #tpu.memory_space<vmem>>, vector<1x32xf32>
    %4 = vector.broadcast %3 : vector<1x32xf32> to vector<168x32xf32>
    %5 = arith.addf %2, %4 : vector<168x32xf32>
    %c0_5 = arith.constant 0 : index
    %c0_6 = arith.constant 0 : index
    %6 = vector.load %arg4[%c0_5, %c0_6] : memref<168x32xbf16, #tpu.memory_space<vmem>>, vector<168x32xbf16>
    %7 = arith.extf %6 : vector<168x32xbf16> to vector<168x32xf32>
    %8 = arith.addf %5, %7 : vector<168x32xf32>
    %9 = arith.truncf %8 : vector<168x32xf32> to vector<168x32xbf16>
    %c0_7 = arith.constant 0 : index
    %c0_8 = arith.constant 0 : index
    %10 = vector.load %arg5[%c0_7, %c0_8] : memref<168x32xbf16, #tpu.memory_space<vmem>>, vector<168x32xbf16>
    tpu.vector_store %arg5[%c0_7, %c0_8], %9 {strides = array<i32>} : memref<168x32xbf16, #tpu.memory_space<vmem>>, vector<168x32xbf16>,
    return
  }
  func.func @transform_0(%arg0: i32) -> (i32, i32) {
    %c0_i32 = arith.constant 0 : i32
    %c0_i32_0 = arith.constant 0 : i32
    return %arg0, %c0_i32 : i32, i32
  }
  func.func @transform_1(%arg0: i32) -> (i32, i32) {
    %c0_i32 = arith.constant 0 : i32
    %c0_i32_0 = arith.constant 0 : i32
    %c0_i32_1 = arith.constant 0 : i32
    return %c0_i32, %c0_i32_0 : i32, i32
  }
  func.func @transform_2(%arg0: i32) -> (i32, i32) {
    %c0_i32 = arith.constant 0 : i32
    %c0_i32_0 = arith.constant 0 : i32
    %c0_i32_1 = arith.constant 0 : i32
    return %c0_i32, %c0_i32_0 : i32, i32
  }
  func.func @transform_3(%arg0: i32) -> (i32, i32) {
    %c0_i32 = arith.constant 0 : i32
    %c0_i32_0 = arith.constant 0 : i32
    return %arg0, %c0_i32 : i32, i32
  }
  func.func @transform_4(%arg0: i32) -> (i32, i32) {
    %c0_i32 = arith.constant 0 : i32
    %c0_i32_0 = arith.constant 0 : i32
    return %arg0, %c0_i32 : i32, i32
  }
}

module attributes {stable_mosaic.version = 11 : i64} {
  func.func @_fused_linear_kernel(%arg0: i32, %arg1: memref<2x32xbf16, #tpu.memory_space<vmem>>, %arg2: memref<32x16xbf16, #tpu.memory_space<vmem>>, %arg3: memref<1x32xf32, #tpu.memory_space<vmem>>, %arg4: memref<1x32xf32, #tpu.memory_space<vmem>>, %arg5: memref<2x16xf32, #tpu.memory_space<vmem>>) attributes {dimension_semantics = [#tpu.dimension_semantics<parallel>], iteration_bounds = array<i64: 1>, scalar_prefetch = 0 : i64, scratch_operands = 0 : i64, tpu.core_type = #tpu.core_type<tc>, window_params = [{transform_indices = @transform_0, window_bounds = array<i64: 2, 32>}, {pipeline_mode = #tpu.pipeline_mode<synchronous>, transform_indices = @transform_1, window_bounds = array<i64: 32, 16>}, {pipeline_mode = #tpu.pipeline_mode<synchronous>, transform_indices = @transform_2, window_bounds = array<i64: 1, 32>}, {pipeline_mode = #tpu.pipeline_mode<synchronous>, transform_indices = @transform_3, window_bounds = array<i64: 1, 32>}, {transform_indices = @transform_4, window_bounds = array<i64: 2, 16>}]} {
    %c0 = arith.constant 0 : index
    %c0_0 = arith.constant 0 : index
    %0 = vector.load %arg1[%c0, %c0_0] : memref<2x32xbf16, #tpu.memory_space<vmem>>, vector<2x32xbf16>
    %1 = arith.extf %0 : vector<2x32xbf16> to vector<2x32xf32>
    %cst = arith.constant dense<0.000000e+00> : vector<2xf32>
    %2 = vector.multi_reduction <add>, %1, %cst [1] : vector<2x32xf32> to vector<2xf32>
    %3 = vector.shape_cast %2 : vector<2xf32> to vector<2x1xf32>
    %cst_1 = arith.constant 3.200000e+01 : f32
    %4 = vector.broadcast %cst_1 : f32 to vector<2x1xf32>
    %5 = arith.divf %3, %4 : vector<2x1xf32>
    %6 = vector.broadcast %5 : vector<2x1xf32> to vector<2x32xf32>
    %7 = arith.subf %1, %6 : vector<2x32xf32>
    %8 = arith.mulf %7, %7 : vector<2x32xf32>
    %cst_2 = arith.constant dense<0.000000e+00> : vector<2xf32>
    %9 = vector.multi_reduction <add>, %8, %cst_2 [1] : vector<2x32xf32> to vector<2xf32>
    %10 = vector.shape_cast %9 : vector<2xf32> to vector<2x1xf32>
    %cst_3 = arith.constant 3.200000e+01 : f32
    %11 = vector.broadcast %cst_3 : f32 to vector<2x1xf32>
    %12 = arith.divf %10, %11 : vector<2x1xf32>
    %cst_4 = arith.constant 9.99999974E-6 : f32
    %13 = vector.broadcast %cst_4 : f32 to vector<2x1xf32>
    %14 = arith.addf %12, %13 : vector<2x1xf32>
    %15 = math.rsqrt %14 : vector<2x1xf32>
    %16 = vector.broadcast %15 : vector<2x1xf32> to vector<2x32xf32>
    %17 = arith.mulf %7, %16 : vector<2x32xf32>
    %c0_5 = arith.constant 0 : index
    %c0_6 = arith.constant 0 : index
    %18 = vector.load %arg3[%c0_5, %c0_6] : memref<1x32xf32, #tpu.memory_space<vmem>>, vector<1x32xf32>
    %19 = vector.broadcast %18 : vector<1x32xf32> to vector<2x32xf32>
    %20 = arith.mulf %17, %19 : vector<2x32xf32>
    %c0_7 = arith.constant 0 : index
    %c0_8 = arith.constant 0 : index
    %21 = vector.load %arg4[%c0_7, %c0_8] : memref<1x32xf32, #tpu.memory_space<vmem>>, vector<1x32xf32>
    %22 = vector.broadcast %21 : vector<1x32xf32> to vector<2x32xf32>
    %23 = arith.addf %20, %22 : vector<2x32xf32>
    %24 = arith.truncf %23 : vector<2x32xf32> to vector<2x32xbf16>
    %c0_9 = arith.constant 0 : index
    %c0_10 = arith.constant 0 : index
    %25 = vector.load %arg2[%c0_9, %c0_10] : memref<32x16xbf16, #tpu.memory_space<vmem>>, vector<32x16xbf16>
    %cst_11 = arith.constant dense<0.000000e+00> : vector<2x16xf32>
    %26 = tpu.matmul %24, %25, %cst_11 {dimension_numbers = #tpu.dot_dimension_numbers<[1], [0], [0], [1], [0, 0, 1, 1], [], []>} : vector<2x32xbf16>, vector<32x16xbf16>, vector<2x16xf32> -> vector<2x16xf32>
    %c0_12 = arith.constant 0 : index
    %c0_13 = arith.constant 0 : index
    %27 = vector.load %arg5[%c0_12, %c0_13] : memref<2x16xf32, #tpu.memory_space<vmem>>, vector<2x16xf32>
    tpu.vector_store %arg5[%c0_12, %c0_13], %26 {strides = array<i32>} : memref<2x16xf32, #tpu.memory_space<vmem>>, vector<2x16xf32>,
    return
  }
  func.func @transform_0(%arg0: i32) -> (i32, i32) {
    %c0_i32 = arith.constant 0 : i32
    %c0_i32_0 = arith.constant 0 : i32
    return %arg0, %c0_i32 : i32, i32
  }
  func.func @transform_1(%arg0: i32) -> (i32, i32) {
    %c0_i32 = arith.constant 0 : i32
    %c0_i32_0 = arith.constant 0 : i32
    %c0_i32_1 = arith.constant 0 : i32
    return %c0_i32, %c0_i32_0 : i32, i32
  }
  func.func @transform_2(%arg0: i32) -> (i32, i32) {
    %c0_i32 = arith.constant 0 : i32
    %c0_i32_0 = arith.constant 0 : i32
    %c0_i32_1 = arith.constant 0 : i32
    return %c0_i32, %c0_i32_0 : i32, i32
  }
  func.func @transform_3(%arg0: i32) -> (i32, i32) {
    %c0_i32 = arith.constant 0 : i32
    %c0_i32_0 = arith.constant 0 : i32
    %c0_i32_1 = arith.constant 0 : i32
    return %c0_i32, %c0_i32_0 : i32, i32
  }
  func.func @transform_4(%arg0: i32) -> (i32, i32) {
    %c0_i32 = arith.constant 0 : i32
    %c0_i32_0 = arith.constant 0 : i32
    return %arg0, %c0_i32 : i32, i32
  }
}

</mosaic_0001>

<llo_original>
// kernel: vit_forward.13
$region0: #{vit_forward.13}
  #allocation0 [shape = 'u32[]', space=smem, size = 0x4, offset = 0x4, fixed_abs, tag = 'smem constant byte address 0x4 - core index']
  #allocation1 [shape = 'u32[144,128]{1,0:T(1,128)}', space=vmem, size = 0x12000, scoped, tag = 'internal scratch']
  %s0 = inlined_call_operand.vmem [shape: bf16[320,768], index: 0, kind: input, shape index: {}]
  %s1 = inlined_call_operand.vmem [shape: bf16[768,32], index: 1, kind: input, shape index: {}]
  %s2 = inlined_call_operand.vmem [shape: bf16[320,32], index: 2, kind: output, shape index: {}]
  %s3 = sld [smem:[#allocation0]]
  $region41: #{vit_forward.13} parent=0
    _
  %s5 = ssub.s32 1, %s3
  %s6 = scalar_select 0, %s5, %s3
  loop: start=0, step=1, limit=4
  $region2: #{vit_forward.13} parent=0 // loop_pre_header
    _
  $region3: #{vit_forward.13} parent=0 // loop_header
    %s8 = sphi 0, %s12
    %p9 = scmp.ge.s32.totalorder %s8, 4
    %s18 = sphi 0, %s20
    %s21 = sphi 0, %s18
    %s22 = sphi 0, %s21
    %s38 = sphi 0, %s22
    %s42 = sphi 0, %s42
    %s44 = sphi 0, %s42
    %s45 = sphi 0, %s44
    %s59 = sphi 0, %s45
    %s65 = sphi 0, %s67
    %s68 = sphi 0, %s65
    %s69 = sphi 0, %s68
    %s85 = sphi 0, %s69
  $region4: #{vit_forward.13} parent=0 // loop_header_branch
    %11 = sbr.rel (%p9) target = $region8
  $region5: #{vit_forward.13} parent=0 // loop_body
    %s13 = ssub.s32 %s8, 1
    %s14 = ssub.s32 %s8, 2
    %s15 = sadd.s32 %s8, 1
    %s16 = ssub.s32 %s8, %s15
    %p17 = scmp.eq.s32.totalorder %s16, 0
    %s19 = sadd.s32 %s18, 1
    %s20 = scalar_select %p17, %s18, %s19
    %p23 = pneg %p17
    %p24 = scmp.eq.s32.totalorder %s8, 1
    %p25 = por %p23, %p24
    %p26 = scmp.ne.s32.totalorder %s18, %s21
    %p27 = scmp.eq.s32.totalorder %s8, 0
    %p28 = por %p26, %p27
    %p29 = scmp.ne.s32.totalorder %s18, %s21
    %p30 = scmp.eq.s32.totalorder %s13, 1
    %p31 = por %p29, %p30
    %p32 = scmp.ne.s32.totalorder %s21, %s22
    %p33 = scmp.eq.s32.totalorder %s13, 0
    %p34 = por %p32, %p33
    %p35 = scmp.ne.s32.totalorder %s21, %s22
    %p36 = scmp.eq.s32.totalorder %s14, 1
    %p37 = por %p35, %p36
    %p39 = scmp.ne.s32.totalorder %s22, %s38
    %p40 = scmp.eq.s32.totalorder %s14, 0
    %p41 = por %p39, %p40
    %s43 = sadd.s32 %s42, 1
    %p46 = scmp.eq.s32.totalorder %s8, 1
    %p47 = scmp.ne.s32.totalorder %s42, %s44
    %p48 = scmp.eq.s32.totalorder %s8, 0
    %p49 = por %p47, %p48
    %p50 = scmp.ne.s32.totalorder %s42, %s44
    %p51 = scmp.eq.s32.totalorder %s13, 1
    %p52 = por %p50, %p51
    %p53 = scmp.ne.s32.totalorder %s44, %s45
    %p54 = scmp.eq.s32.totalorder %s13, 0
    %p55 = por %p53, %p54
    %p56 = scmp.ne.s32.totalorder %s44, %s45
    %p57 = scmp.eq.s32.totalorder %s14, 1
    %p58 = por %p56, %p57
    %p60 = scmp.ne.s32.totalorder %s45, %s59
    %p61 = scmp.eq.s32.totalorder %s14, 0
    %p62 = por %p60, %p61
    %s63 = ssub.s32 %s8, %s15
    %p64 = scmp.eq.s32.totalorder %s63, 0
    %s66 = sadd.s32 %s65, 1
    %s67 = scalar_select %p64, %s65, %s66
    %p70 = pneg %p64
    %p71 = scmp.eq.s32.totalorder %s8, 1
    %p72 = por %p70, %p71
    %p73 = scmp.ne.s32.totalorder %s65, %s68
    %p74 = scmp.eq.s32.totalorder %s8, 0
    %p75 = por %p73, %p74
    %p76 = scmp.ne.s32.totalorder %s65, %s68
    %p77 = scmp.eq.s32.totalorder %s13, 1
    %p78 = por %p76, %p77
    %p79 = scmp.ne.s32.totalorder %s68, %s69
    %p80 = scmp.eq.s32.totalorder %s13, 0
    %p81 = por %p79, %p80
    %p82 = scmp.ne.s32.totalorder %s68, %s69
    %p83 = scmp.eq.s32.totalorder %s14, 1
    %p84 = por %p82, %p83
    %p86 = scmp.ne.s32.totalorder %s69, %s85
    %p87 = scmp.eq.s32.totalorder %s14, 0
    %p88 = por %p86, %p87
    %p89 = scmp.le.s32.totalorder 1, %s8
    %p90 = scmp.lt.s32.totalorder %s8, 3
    %p91 = pnand %p89, %p90
    %p92 = pneg %p91
    // Predicated region
    $region9: #{vit_forward.13} parent=5 // pred_check
      _
    $region10: #{vit_forward.13} parent=5 // pred_check_branch
      %94 = sbr.rel (%p91) target = $region12
    $region11: #{vit_forward.13} parent=5 // pred_region
      %s95 = ssub.s32 %s8, 1
      // Predicated region
      $region13: #{vit_forward.13} parent=11 // pred_check
        %p96 = pneg %p55
      $region14: #{vit_forward.13} parent=11 // pred_check_branch
        %98 = sbr.rel (%p96) target = $region16
      $region15: #{vit_forward.13} parent=11 // pred_region
        _
      $region16: #{vit_forward.13} parent=11 // pred_fallthru
        _
    $region12: #{vit_forward.13} parent=5 // pred_fallthru
      _
    %p99 = scmp.lt.s32.totalorder %s8, 2
    // Predicated region
    $region17: #{vit_forward.13} parent=5 // pred_check
      %p100 = pneg %p99
    $region18: #{vit_forward.13} parent=5 // pred_check_branch
      %102 = sbr.rel (%p100) target = $region20
    $region19: #{vit_forward.13} parent=5 // pred_region
      // Predicated region
      $region21: #{vit_forward.13} parent=19 // pred_check
        %p103 = pneg %p28
      $region22: #{vit_forward.13} parent=19 // pred_check_branch
        %105 = sbr.rel (%p103) target = $region24
      $region23: #{vit_forward.13} parent=19 // pred_region
        %s106 = smul.u32 20, %s8
        %p107 = scmp.lt.s32.totalorder %s106, 39
        %s108 = scalar_select %p107, %s106, 39
        %s109 = smul.addr %s108, 6
        %s110 = smul.addr %s109, 4
        %s111 = scalar_lea.vmem %s0, %s110
        %s112 = smul.u32 20, %s8
      $region24: #{vit_forward.13} parent=19 // pred_fallthru
        _
    $region20: #{vit_forward.13} parent=5 // pred_fallthru
      _
    %p113 = scmp.le.s32.totalorder 1, %s8
    %p114 = scmp.lt.s32.totalorder %s8, 3
    %p115 = pnand %p113, %p114
    %p116 = pneg %p115
    // Predicated region
    $region25: #{vit_forward.13} parent=5 // pred_check
      _
    $region26: #{vit_forward.13} parent=5 // pred_check_branch
      %118 = sbr.rel (%p115) target = $region28
    $region27: #{vit_forward.13} parent=5 // pred_region
      %s119 = ssub.s32 %s8, 1
      %s120 = smul.u32 20, %s13
      %p121 = scmp.lt.s32.totalorder %s120, 39
      %s122 = scalar_select %p121, %s120, 39
      %s123 = smul.addr %s122, 6
      %s124 = smul.addr %s123, 4
      %s125 = scalar_lea.vmem %s0, %s124
      %p126 = pneg %p34
      %p127 = pneg %p31
      %p128 = pneg %p55
      %p129 = pneg %p52
      %p130 = pneg %p81
      %p131 = pneg %p78
      %s132 = smul.u32 20, %s13
      %p133 = scmp.lt.s32.totalorder %s132, 39
      %s134 = scalar_select %p133, %s132, 39
      %s135 = smul.addr %s134, 4
      %s136 = scalar_lea.vmem %s2, %s135
      %s137 = smul.u32 20, %s13
      %p138 = scmp.lt.s32.totalorder %s137, 39
      %s139 = scalar_select %p138, %s137, 39
      %s140 = smul.addr %s139, 6
      %s141 = smul.addr %s140, 4
      %s142 = scalar_lea.vmem %s0, %s141
      %s143 = smul.u32 20, %s13
      %s144 = smul.u32 20, %s13
      %p145 = scmp.lt.s32.totalorder %s144, 39
      %s146 = scalar_select %p145, %s144, 39
      %s147 = smul.addr %s146, 4
      %s148 = scalar_lea.vmem %s2, %s147
      %s149 = smul.u32 20, %s13
      %v151 = vld [vmem:[%s142] sm:$0xff]
      %v152 = vld [vmem:[%s142 + $0x8] sm:$0xff]
      %v153 = vld [vmem:[%s142 + $0x10] sm:$0xff]
      %v154 = vld [vmem:[%s142 + $0x18] sm:$0xff]
      %v155 = vld [vmem:[%s142 + $0x20] sm:$0xff]
      %v156 = vld [vmem:[%s142 + $0x28] sm:$0xff]
      %v157 = vld [vmem:[%s142 + $0x30] sm:$0xff]
      %v158 = vld [vmem:[%s142 + $0x38] sm:$0xff]
      %v159 = vld [vmem:[%s142 + $0x40] sm:$0xff]
      %v160 = vld [vmem:[%s142 + $0x48] sm:$0xff]
      %v161 = vld [vmem:[%s142 + $0x50] sm:$0xff]
      %v162 = vld [vmem:[%s142 + $0x58] sm:$0xff]
      %v163 = vld [vmem:[%s142 + $0x60] sm:$0xff]
      %v164 = vld [vmem:[%s142 + $0x68] sm:$0xff]
      %v165 = vld [vmem:[%s142 + $0x70] sm:$0xff]
      %v166 = vld [vmem:[%s142 + $0x78] sm:$0xff]
      %v167 = vld [vmem:[%s142 + $0x80] sm:$0xff]
      %v168 = vld [vmem:[%s142 + $0x88] sm:$0xff]
      %v169 = vld [vmem:[%s142 + $0x90] sm:$0xff]
      %v170 = vld [vmem:[%s142 + $0x98] sm:$0xff]
      %v171 = vld [vmem:[%s142 + $0xa0] sm:$0xff]
      %v172 = vld [vmem:[%s142 + $0xa8] sm:$0xff]
      %v173 = vld [vmem:[%s142 + $0xb0] sm:$0xff]
      %v174 = vld [vmem:[%s142 + $0xb8] sm:$0xff]
      %v175 = vld [vmem:[%s142 + $0xc0] sm:$0xff]
      %v176 = vld [vmem:[%s142 + $0xc8] sm:$0xff]
      %v177 = vld [vmem:[%s142 + $0xd0] sm:$0xff]
      %v178 = vld [vmem:[%s142 + $0xd8] sm:$0xff]
      %v179 = vld [vmem:[%s142 + $0xe0] sm:$0xff]
      %v180 = vld [vmem:[%s142 + $0xe8] sm:$0xff]
      %v181 = vld [vmem:[%s142 + $0xf0] sm:$0xff]
      %v182 = vld [vmem:[%s142 + $0xf8] sm:$0xff]
      %v183 = vld [vmem:[%s142 + $0x100] sm:$0xff]
      %v184 = vld [vmem:[%s142 + $0x108] sm:$0xff]
      %v185 = vld [vmem:[%s142 + $0x110] sm:$0xff]
      %v186 = vld [vmem:[%s142 + $0x118] sm:$0xff]
      %v187 = vld [vmem:[%s142 + $0x120] sm:$0xff]
      %v188 = vld [vmem:[%s142 + $0x128] sm:$0xff]
      %v189 = vld [vmem:[%s142 + $0x130] sm:$0xff]
      %v190 = vld [vmem:[%s142 + $0x138] sm:$0xff]
      %v191 = vld [vmem:[%s142 + $0x140] sm:$0xff]
      %v192 = vld [vmem:[%s142 + $0x148] sm:$0xff]
      %v193 = vld [vmem:[%s142 + $0x150] sm:$0xff]
      %v194 = vld [vmem:[%s142 + $0x158] sm:$0xff]
      %v195 = vld [vmem:[%s142 + $0x160] sm:$0xff]
      %v196 = vld [vmem:[%s142 + $0x168] sm:$0xff]
      %v197 = vld [vmem:[%s142 + $0x170] sm:$0xff]
      %v198 = vld [vmem:[%s142 + $0x178] sm:$0xff]
      %v199 = vld [vmem:[%s142 + $0x180] sm:$0xff]
      %v200 = vld [vmem:[%s142 + $0x188] sm:$0xff]
      %v201 = vld [vmem:[%s142 + $0x190] sm:$0xff]
      %v202 = vld [vmem:[%s142 + $0x198] sm:$0xff]
      %v203 = vld [vmem:[%s142 + $0x1a0] sm:$0xff]
      %v204 = vld [vmem:[%s142 + $0x1a8] sm:$0xff]
      %v205 = vld [vmem:[%s142 + $0x1b0] sm:$0xff]
      %v206 = vld [vmem:[%s142 + $0x1b8] sm:$0xff]
      %v207 = vld [vmem:[%s142 + $0x1c0] sm:$0xff]
      %v208 = vld [vmem:[%s142 + $0x1c8] sm:$0xff]
      %v209 = vld [vmem:[%s142 + $0x1d0] sm:$0xff]
      %v210 = vld [vmem:[%s142 + $0x1d8] sm:$0xff]
      %v211 = vld [vmem:[%s1] sm:$0xf]
      %v212 = vld [vmem:[%s1 + $0x4] sm:$0xf]
      %v213 = vld [vmem:[%s1 + $0x8] sm:$0xf]
      %v214 = vld [vmem:[%s1 + $0xc] sm:$0xf]
      %v215 = vld [vmem:[%s1 + $0x10] sm:$0xf]
      %v216 = vld [vmem:[%s1 + $0x14] sm:$0xf]
      %v217 = vld [vmem:[%s1 + $0x18] sm:$0xf]
      %v218 = vld [vmem:[%s1 + $0x1c] sm:$0xf]
      %v219 = vld [vmem:[%s1 + $0x20] sm:$0xf]
      %v220 = vld [vmem:[%s1 + $0x24] sm:$0xf]
      %v221 = vld [vmem:[%s1 + $0x28] sm:$0xf]
      %v222 = vld [vmem:[%s1 + $0x2c] sm:$0xf]
      %v223 = vld [vmem:[%s1 + $0x30] sm:$0xf]
      %v224 = vld [vmem:[%s1 + $0x34] sm:$0xf]
      %v225 = vld [vmem:[%s1 + $0x38] sm:$0xf]
      %v226 = vld [vmem:[%s1 + $0x3c] sm:$0xf]
      %v227 = vld [vmem:[%s1 + $0x40] sm:$0xf]
      %v228 = vld [vmem:[%s1 + $0x44] sm:$0xf]
      %v229 = vld [vmem:[%s1 + $0x48] sm:$0xf]
      %v230 = vld [vmem:[%s1 + $0x4c] sm:$0xf]
      %v231 = vld [vmem:[%s1 + $0x50] sm:$0xf]
      %v232 = vld [vmem:[%s1 + $0x54] sm:$0xf]
      %v233 = vld [vmem:[%s1 + $0x58] sm:$0xf]
      %v234 = vld [vmem:[%s1 + $0x5c] sm:$0xf]
      %v235 = vld [vmem:[%s1 + $0x60] sm:$0xf]
      %v236 = vld [vmem:[%s1 + $0x64] sm:$0xf]
      %v237 = vld [vmem:[%s1 + $0x68] sm:$0xf]
      %v238 = vld [vmem:[%s1 + $0x6c] sm:$0xf]
      %v239 = vld [vmem:[%s1 + $0x70] sm:$0xf]
      %v240 = vld [vmem:[%s1 + $0x74] sm:$0xf]
      %v241 = vld [vmem:[%s1 + $0x78] sm:$0xf]
      %v242 = vld [vmem:[%s1 + $0x7c] sm:$0xf]
      %v243 = vld [vmem:[%s1 + $0x80] sm:$0xf]
      %v244 = vld [vmem:[%s1 + $0x84] sm:$0xf]
      %v245 = vld [vmem:[%s1 + $0x88] sm:$0xf]
      %v246 = vld [vmem:[%s1 + $0x8c] sm:$0xf]
      %v247 = vld [vmem:[%s1 + $0x90] sm:$0xf]
      %v248 = vld [vmem:[%s1 + $0x94] sm:$0xf]
      %v249 = vld [vmem:[%s1 + $0x98] sm:$0xf]
      %v250 = vld [vmem:[%s1 + $0x9c] sm:$0xf]
      %v251 = vld [vmem:[%s1 + $0xa0] sm:$0xf]
      %v252 = vld [vmem:[%s1 + $0xa4] sm:$0xf]
      %v253 = vld [vmem:[%s1 + $0xa8] sm:$0xf]
      %v254 = vld [vmem:[%s1 + $0xac] sm:$0xf]
      %v255 = vld [vmem:[%s1 + $0xb0] sm:$0xf]
      %v256 = vld [vmem:[%s1 + $0xb4] sm:$0xf]
      %v257 = vld [vmem:[%s1 + $0xb8] sm:$0xf]
      %v258 = vld [vmem:[%s1 + $0xbc] sm:$0xf]
      %v259 = vld [vmem:[%s1 + $0xc0] sm:$0xf]
      %v260 = vld [vmem:[%s1 + $0xc4] sm:$0xf]
      %v261 = vld [vmem:[%s1 + $0xc8] sm:$0xf]
      %v262 = vld [vmem:[%s1 + $0xcc] sm:$0xf]
      %v263 = vld [vmem:[%s1 + $0xd0] sm:$0xf]
      %v264 = vld [vmem:[%s1 + $0xd4] sm:$0xf]
      %v265 = vld [vmem:[%s1 + $0xd8] sm:$0xf]
      %v266 = vld [vmem:[%s1 + $0xdc] sm:$0xf]
      %v267 = vld [vmem:[%s1 + $0xe0] sm:$0xf]
      %v268 = vld [vmem:[%s1 + $0xe4] sm:$0xf]
      %v269 = vld [vmem:[%s1 + $0xe8] sm:$0xf]
      %v270 = vld [vmem:[%s1 + $0xec] sm:$0xf]
      %v271 = vld [vmem:[%s1 + $0xf0] sm:$0xf]
      %v272 = vld [vmem:[%s1 + $0xf4] sm:$0xf]
      %v273 = vld [vmem:[%s1 + $0xf8] sm:$0xf]
      %v274 = vld [vmem:[%s1 + $0xfc] sm:$0xf]
      %v275 = vld [vmem:[%s1 + $0x100] sm:$0xf]
      %v276 = vld [vmem:[%s1 + $0x104] sm:$0xf]
      %v277 = vld [vmem:[%s1 + $0x108] sm:$0xf]
      %v278 = vld [vmem:[%s1 + $0x10c] sm:$0xf]
      %v279 = vld [vmem:[%s1 + $0x110] sm:$0xf]
      %v280 = vld [vmem:[%s1 + $0x114] sm:$0xf]
      %v281 = vld [vmem:[%s1 + $0x118] sm:$0xf]
      %v282 = vld [vmem:[%s1 + $0x11c] sm:$0xf]
      %v283 = vld [vmem:[%s1 + $0x120] sm:$0xf]
      %v284 = vld [vmem:[%s1 + $0x124] sm:$0xf]
      %v285 = vld [vmem:[%s1 + $0x128] sm:$0xf]
      %v286 = vld [vmem:[%s1 + $0x12c] sm:$0xf]
      %v287 = vld [vmem:[%s1 + $0x130] sm:$0xf]
      %v288 = vld [vmem:[%s1 + $0x134] sm:$0xf]
      %v289 = vld [vmem:[%s1 + $0x138] sm:$0xf]
      %v290 = vld [vmem:[%s1 + $0x13c] sm:$0xf]
      %v291 = vld [vmem:[%s1 + $0x140] sm:$0xf]
      %v292 = vld [vmem:[%s1 + $0x144] sm:$0xf]
      %v293 = vld [vmem:[%s1 + $0x148] sm:$0xf]
      %v294 = vld [vmem:[%s1 + $0x14c] sm:$0xf]
      %v295 = vld [vmem:[%s1 + $0x150] sm:$0xf]
      %v296 = vld [vmem:[%s1 + $0x154] sm:$0xf]
      %v297 = vld [vmem:[%s1 + $0x158] sm:$0xf]
      %v298 = vld [vmem:[%s1 + $0x15c] sm:$0xf]
      %v299 = vld [vmem:[%s1 + $0x160] sm:$0xf]
      %v300 = vld [vmem:[%s1 + $0x164] sm:$0xf]
      %v301 = vld [vmem:[%s1 + $0x168] sm:$0xf]
      %v302 = vld [vmem:[%s1 + $0x16c] sm:$0xf]
      %v303 = vld [vmem:[%s1 + $0x170] sm:$0xf]
      %v304 = vld [vmem:[%s1 + $0x174] sm:$0xf]
      %v305 = vld [vmem:[%s1 + $0x178] sm:$0xf]
      %v306 = vld [vmem:[%s1 + $0x17c] sm:$0xf]
      %v367 = vunpack.c.l.b16 %v151
      %v368 = vunpack.c.h.b16 %v151
      %v369 = vunpack.c.l.b16 %v152
      %v370 = vunpack.c.h.b16 %v152
      %v371 = vunpack.c.l.b16 %v153
      %v372 = vunpack.c.h.b16 %v153
      %v373 = vunpack.c.l.b16 %v154
      %v374 = vunpack.c.h.b16 %v154
      %v375 = vunpack.c.l.b16 %v155
      %v376 = vunpack.c.h.b16 %v155
      %v377 = vunpack.c.l.b16 %v156
      %v378 = vunpack.c.h.b16 %v156
      %v379 = vunpack.c.l.b16 %v157
      %v380 = vunpack.c.h.b16 %v157
      %v381 = vunpack.c.l.b16 %v158
      %v382 = vunpack.c.h.b16 %v158
      %v383 = vunpack.c.l.b16 %v159
      %v384 = vunpack.c.h.b16 %v159
      %v385 = vunpack.c.l.b16 %v160
      %v386 = vunpack.c.h.b16 %v160
      %v387 = vunpack.c.l.b16 %v161
      %v388 = vunpack.c.h.b16 %v161
      %v389 = vunpack.c.l.b16 %v162
      %v390 = vunpack.c.h.b16 %v162
      %v391 = vunpack.c.l.b16 %v163
      %v392 = vunpack.c.h.b16 %v163
      %v393 = vunpack.c.l.b16 %v164
      %v394 = vunpack.c.h.b16 %v164
      %v395 = vunpack.c.l.b16 %v165
      %v396 = vunpack.c.h.b16 %v165
      %v397 = vunpack.c.l.b16 %v166
      %v398 = vunpack.c.h.b16 %v166
      %v399 = vunpack.c.l.b16 %v167
      %v400 = vunpack.c.h.b16 %v167
      %v401 = vunpack.c.l.b16 %v168
      %v402 = vunpack.c.h.b16 %v168
      %v403 = vunpack.c.l.b16 %v169
      %v404 = vunpack.c.h.b16 %v169
      %v405 = vunpack.c.l.b16 %v170
      %v406 = vunpack.c.h.b16 %v170
      %v407 = vunpack.c.l.b16 %v171
      %v408 = vunpack.c.h.b16 %v171
      %v409 = vunpack.c.l.b16 %v172
      %v410 = vunpack.c.h.b16 %v172
      %v411 = vunpack.c.l.b16 %v173
      %v412 = vunpack.c.h.b16 %v173
      %v413 = vunpack.c.l.b16 %v174
      %v414 = vunpack.c.h.b16 %v174
      %v415 = vunpack.c.l.b16 %v175
      %v416 = vunpack.c.h.b16 %v175
      %v417 = vunpack.c.l.b16 %v176
      %v418 = vunpack.c.h.b16 %v176
      %v419 = vunpack.c.l.b16 %v177
      %v420 = vunpack.c.h.b16 %v177
      %v421 = vunpack.c.l.b16 %v178
      %v422 = vunpack.c.h.b16 %v178
      %v423 = vunpack.c.l.b16 %v179
      %v424 = vunpack.c.h.b16 %v179
      %v425 = vunpack.c.l.b16 %v180
      %v426 = vunpack.c.h.b16 %v180
      %v427 = vunpack.c.l.b16 %v181
      %v428 = vunpack.c.h.b16 %v181
      %v429 = vunpack.c.l.b16 %v182
      %v430 = vunpack.c.h.b16 %v182
      %v431 = vunpack.c.l.b16 %v183
      %v432 = vunpack.c.h.b16 %v183
      %v433 = vunpack.c.l.b16 %v184
      %v434 = vunpack.c.h.b16 %v184
      %v435 = vunpack.c.l.b16 %v185
      %v436 = vunpack.c.h.b16 %v185
      %v437 = vunpack.c.l.b16 %v186
      %v438 = vunpack.c.h.b16 %v186
      %v439 = vunpack.c.l.b16 %v187
      %v440 = vunpack.c.h.b16 %v187
      %v441 = vunpack.c.l.b16 %v188
      %v442 = vunpack.c.h.b16 %v188
      %v443 = vunpack.c.l.b16 %v189
      %v444 = vunpack.c.h.b16 %v189
      %v445 = vunpack.c.l.b16 %v190
      %v446 = vunpack.c.h.b16 %v190
      %v447 = vunpack.c.l.b16 %v191
      %v448 = vunpack.c.h.b16 %v191
      %v449 = vunpack.c.l.b16 %v192
      %v450 = vunpack.c.h.b16 %v192
      %v451 = vunpack.c.l.b16 %v193
      %v452 = vunpack.c.h.b16 %v193
      %v453 = vunpack.c.l.b16 %v194
      %v454 = vunpack.c.h.b16 %v194
      %v455 = vunpack.c.l.b16 %v195
      %v456 = vunpack.c.h.b16 %v195
      %v457 = vunpack.c.l.b16 %v196
      %v458 = vunpack.c.h.b16 %v196
      %v459 = vunpack.c.l.b16 %v197
      %v460 = vunpack.c.h.b16 %v197
      %v461 = vunpack.c.l.b16 %v198
      %v462 = vunpack.c.h.b16 %v198
      %v463 = vunpack.c.l.b16 %v199
      %v464 = vunpack.c.h.b16 %v199
      %v465 = vunpack.c.l.b16 %v200
      %v466 = vunpack.c.h.b16 %v200
      %v467 = vunpack.c.l.b16 %v201
      %v468 = vunpack.c.h.b16 %v201
      %v469 = vunpack.c.l.b16 %v202
      %v470 = vunpack.c.h.b16 %v202
      %v471 = vunpack.c.l.b16 %v203
      %v472 = vunpack.c.h.b16 %v203
      %v473 = vunpack.c.l.b16 %v204
      %v474 = vunpack.c.h.b16 %v204
      %v475 = vunpack.c.l.b16 %v205
      %v476 = vunpack.c.h.b16 %v205
      %v477 = vunpack.c.l.b16 %v206
      %v478 = vunpack.c.h.b16 %v206
      %v479 = vunpack.c.l.b16 %v207
      %v480 = vunpack.c.h.b16 %v207
      %v481 = vunpack.c.l.b16 %v208
      %v482 = vunpack.c.h.b16 %v208
      %v483 = vunpack.c.l.b16 %v209
      %v484 = vunpack.c.h.b16 %v209
      %v485 = vunpack.c.l.b16 %v210
      %v486 = vunpack.c.h.b16 %v210
      %v487 = vpack.c.b16 %v373, %v367
      %v488 = vpack.c.b16 %v374, %v368
      %v489 = vpack.c.b16 %v375, %v369
      %v490 = vpack.c.b16 %v376, %v370
      %v491 = vpack.c.b16 %v377, %v371
      %v492 = vpack.c.b16 %v378, %v372
      %v493 = vpack.c.b16 %v385, %v379
      %v494 = vpack.c.b16 %v386, %v380
      %v495 = vpack.c.b16 %v387, %v381
      %v496 = vpack.c.b16 %v388, %v382
      %v497 = vpack.c.b16 %v389, %v383
      %v498 = vpack.c.b16 %v390, %v384
      %v499 = vpack.c.b16 %v397, %v391
      %v500 = vpack.c.b16 %v398, %v392
      %v501 = vpack.c.b16 %v399, %v393
      %v502 = vpack.c.b16 %v400, %v394
      %v503 = vpack.c.b16 %v401, %v395
      %v504 = vpack.c.b16 %v402, %v396
      %v505 = vpack.c.b16 %v409, %v403
      %v506 = vpack.c.b16 %v410, %v404
      %v507 = vpack.c.b16 %v411, %v405
      %v508 = vpack.c.b16 %v412, %v406
      %v509 = vpack.c.b16 %v413, %v407
      %v510 = vpack.c.b16 %v414, %v408
      %v511 = vpack.c.b16 %v421, %v415
      %v512 = vpack.c.b16 %v422, %v416
      %v513 = vpack.c.b16 %v423, %v417
      %v514 = vpack.c.b16 %v424, %v418
      %v515 = vpack.c.b16 %v425, %v419
      %v516 = vpack.c.b16 %v426, %v420
      %v517 = vpack.c.b16 %v433, %v427
      %v518 = vpack.c.b16 %v434, %v428
      %v519 = vpack.c.b16 %v435, %v429
      %v520 = vpack.c.b16 %v436, %v430
      %v521 = vpack.c.b16 %v437, %v431
      %v522 = vpack.c.b16 %v438, %v432
      %v523 = vpack.c.b16 %v445, %v439
      %v524 = vpack.c.b16 %v446, %v440
      %v525 = vpack.c.b16 %v447, %v441
      %v526 = vpack.c.b16 %v448, %v442
      %v527 = vpack.c.b16 %v449, %v443
      %v528 = vpack.c.b16 %v450, %v444
      %v529 = vpack.c.b16 %v457, %v451
      %v530 = vpack.c.b16 %v458, %v452
      %v531 = vpack.c.b16 %v459, %v453
      %v532 = vpack.c.b16 %v460, %v454
      %v533 = vpack.c.b16 %v461, %v455
      %v534 = vpack.c.b16 %v462, %v456
      %v535 = vpack.c.b16 %v469, %v463
      %v536 = vpack.c.b16 %v470, %v464
      %v537 = vpack.c.b16 %v471, %v465
      %v538 = vpack.c.b16 %v472, %v466
      %v539 = vpack.c.b16 %v473, %v467
      %v540 = vpack.c.b16 %v474, %v468
      %v541 = vpack.c.b16 %v481, %v475
      %v542 = vpack.c.b16 %v482, %v476
      %v543 = vpack.c.b16 %v483, %v477
      %v544 = vpack.c.b16 %v484, %v478
      %v545 = vpack.c.b16 %v485, %v479
      %v546 = vpack.c.b16 %v486, %v480
      %v703 = vunpack.c.l.b16 %v211
      %v704 = vunpack.c.l.b16 %v212
      %v705 = vunpack.c.l.b16 %v213
      %v706 = vunpack.c.l.b16 %v214
      %v707 = vunpack.c.l.b16 %v215
      %v708 = vunpack.c.l.b16 %v216
      %v709 = vunpack.c.l.b16 %v217
      %v710 = vunpack.c.l.b16 %v218
      %v711 = vunpack.c.l.b16 %v219
      %v712 = vunpack.c.l.b16 %v220
      %v713 = vunpack.c.l.b16 %v221
      %v714 = vunpack.c.l.b16 %v222
      %v715 = vunpack.c.l.b16 %v223
      %v716 = vunpack.c.l.b16 %v224
      %v717 = vunpack.c.l.b16 %v225
      %v718 = vunpack.c.l.b16 %v226
      %v719 = vunpack.c.l.b16 %v227
      %v720 = vunpack.c.l.b16 %v228
      %v721 = vunpack.c.l.b16 %v229
      %v722 = vunpack.c.l.b16 %v230
      %v723 = vunpack.c.l.b16 %v231
      %v724 = vunpack.c.l.b16 %v232
      %v725 = vunpack.c.l.b16 %v233
      %v726 = vunpack.c.l.b16 %v234
      %v727 = vunpack.c.l.b16 %v235
      %v728 = vunpack.c.l.b16 %v236
      %v729 = vunpack.c.l.b16 %v237
      %v730 = vunpack.c.l.b16 %v238
      %v731 = vunpack.c.l.b16 %v239
      %v732 = vunpack.c.l.b16 %v240
      %v733 = vunpack.c.l.b16 %v241
      %v734 = vunpack.c.l.b16 %v242
      %v735 = vunpack.c.l.b16 %v243
      %v736 = vunpack.c.l.b16 %v244
      %v737 = vunpack.c.l.b16 %v245
      %v738 = vunpack.c.l.b16 %v246
      %v739 = vunpack.c.l.b16 %v247
      %v740 = vunpack.c.l.b16 %v248
      %v741 = vunpack.c.l.b16 %v249
      %v742 = vunpack.c.l.b16 %v250
      %v743 = vunpack.c.l.b16 %v251
      %v744 = vunpack.c.l.b16 %v252
      %v745 = vunpack.c.l.b16 %v253
      %v746 = vunpack.c.l.b16 %v254
      %v747 = vunpack.c.l.b16 %v255
      %v748 = vunpack.c.l.b16 %v256
      %v749 = vunpack.c.l.b16 %v257
      %v750 = vunpack.c.l.b16 %v258
      %v751 = vunpack.c.l.b16 %v259
      %v752 = vunpack.c.l.b16 %v260
      %v753 = vunpack.c.l.b16 %v261
      %v754 = vunpack.c.l.b16 %v262
      %v755 = vunpack.c.l.b16 %v263
      %v756 = vunpack.c.l.b16 %v264
      %v757 = vunpack.c.l.b16 %v265
      %v758 = vunpack.c.l.b16 %v266
      %v759 = vunpack.c.l.b16 %v267
      %v760 = vunpack.c.l.b16 %v268
      %v761 = vunpack.c.l.b16 %v269
      %v762 = vunpack.c.l.b16 %v270
      %v763 = vunpack.c.l.b16 %v271
      %v764 = vunpack.c.l.b16 %v272
      %v765 = vunpack.c.l.b16 %v273
      %v766 = vunpack.c.l.b16 %v274
      %v767 = vunpack.c.l.b16 %v275
      %v768 = vunpack.c.l.b16 %v276
      %v769 = vunpack.c.l.b16 %v277
      %v770 = vunpack.c.l.b16 %v278
      %v771 = vunpack.c.l.b16 %v279
      %v772 = vunpack.c.l.b16 %v280
      %v773 = vunpack.c.l.b16 %v281
      %v774 = vunpack.c.l.b16 %v282
      %v775 = vunpack.c.l.b16 %v283
      %v776 = vunpack.c.l.b16 %v284
      %v777 = vunpack.c.l.b16 %v285
      %v778 = vunpack.c.l.b16 %v286
      %v779 = vunpack.c.l.b16 %v287
      %v780 = vunpack.c.l.b16 %v288
      %v781 = vunpack.c.l.b16 %v289
      %v782 = vunpack.c.l.b16 %v290
      %v783 = vunpack.c.l.b16 %v291
      %v784 = vunpack.c.l.b16 %v292
      %v785 = vunpack.c.l.b16 %v293
      %v786 = vunpack.c.l.b16 %v294
      %v787 = vunpack.c.l.b16 %v295
      %v788 = vunpack.c.l.b16 %v296
      %v789 = vunpack.c.l.b16 %v297
      %v790 = vunpack.c.l.b16 %v298
      %v791 = vunpack.c.l.b16 %v299
      %v792 = vunpack.c.l.b16 %v300
      %v793 = vunpack.c.l.b16 %v301
      %v794 = vunpack.c.l.b16 %v302
      %v795 = vunpack.c.l.b16 %v303
      %v796 = vunpack.c.l.b16 %v304
      %v797 = vunpack.c.l.b16 %v305
      %v798 = vunpack.c.l.b16 %v306
      %v799 = vpack.c.b16 %v704, %v703
      %v800 = vpack.c.b16 %v706, %v705
      %v801 = vpack.c.b16 %v708, %v707
      %v802 = vpack.c.b16 %v710, %v709
      %v803 = vpack.c.b16 %v712, %v711
      %v804 = vpack.c.b16 %v714, %v713
      %v805 = vpack.c.b16 %v716, %v715
      %v806 = vpack.c.b16 %v718, %v717
      %v807 = vpack.c.b16 %v720, %v719
      %v808 = vpack.c.b16 %v722, %v721
      %v809 = vpack.c.b16 %v724, %v723
      %v810 = vpack.c.b16 %v726, %v725
      %v811 = vpack.c.b16 %v728, %v727
      %v812 = vpack.c.b16 %v730, %v729
      %v813 = vpack.c.b16 %v732, %v731
      %v814 = vpack.c.b16 %v734, %v733
      %v815 = vpack.c.b16 %v736, %v735
      %v816 = vpack.c.b16 %v738, %v737
      %v817 = vpack.c.b16 %v740, %v739
      %v818 = vpack.c.b16 %v742, %v741
      %v819 = vpack.c.b16 %v744, %v743
      %v820 = vpack.c.b16 %v746, %v745
      %v821 = vpack.c.b16 %v748, %v747
      %v822 = vpack.c.b16 %v750, %v749
      %v823 = vpack.c.b16 %v752, %v751
      %v824 = vpack.c.b16 %v754, %v753
      %v825 = vpack.c.b16 %v756, %v755
      %v826 = vpack.c.b16 %v758, %v757
      %v827 = vpack.c.b16 %v760, %v759
      %v828 = vpack.c.b16 %v762, %v761
      %v829 = vpack.c.b16 %v764, %v763
      %v830 = vpack.c.b16 %v766, %v765
      %v831 = vpack.c.b16 %v768, %v767
      %v832 = vpack.c.b16 %v770, %v769
      %v833 = vpack.c.b16 %v772, %v771
      %v834 = vpack.c.b16 %v774, %v773
      %v835 = vpack.c.b16 %v776, %v775
      %v836 = vpack.c.b16 %v778, %v777
      %v837 = vpack.c.b16 %v780, %v779
      %v838 = vpack.c.b16 %v782, %v781
      %v839 = vpack.c.b16 %v784, %v783
      %v840 = vpack.c.b16 %v786, %v785
      %v841 = vpack.c.b16 %v788, %v787
      %v842 = vpack.c.b16 %v790, %v789
      %v843 = vpack.c.b16 %v792, %v791
      %v844 = vpack.c.b16 %v794, %v793
      %v845 = vpack.c.b16 %v796, %v795
      %v846 = vpack.c.b16 %v798, %v797
      %895 = vmatprep.subr.bf16.mxu0 0
      %896 = vmatpush1.bf16.msra.mxu0 %v806
      %897 = vmatprep.subr.bf16.mxu0 0
      %898 = vmatpush1.bf16.msra.mxu0 %v805
      %899 = vmatprep.subr.bf16.mxu0 0
      %900 = vmatpush1.bf16.msra.mxu0 %v804
      %901 = vmatprep.subr.bf16.mxu0 0
      %902 = vmatpush1.bf16.msra.mxu0 %v803
      %903 = vmatprep.subr.bf16.mxu0 0
      %904 = vmatpush1.bf16.msra.mxu0 %v802
      %905 = vmatprep.subr.bf16.mxu0 0
      %906 = vmatpush1.bf16.msra.mxu0 %v801
      %907 = vmatprep.subr.bf16.mxu0 0
      %908 = vmatpush1.bf16.msra.mxu0 %v800
      %909 = vmatprep.subr.bf16.mxu0 0
      %910 = vmatpush1.bf16.msra.mxu0 %v799
      %911 = vmatprep.subr.bf16.mxu0 0
      %912 = vmatpush2.bf16.msra.mxu0 %v814
      %913 = vmatprep.subr.bf16.mxu0 0
      %914 = vmatpush2.bf16.msra.mxu0 %v813
      %915 = vmatprep.subr.bf16.mxu0 0
      %916 = vmatpush2.bf16.msra.mxu0 %v812
      %917 = vmatprep.subr.bf16.mxu0 0
      %918 = vmatpush2.bf16.msra.mxu0 %v811
      %919 = vmatprep.subr.bf16.mxu0 0
      %920 = vmatpush2.bf16.msra.mxu0 %v810
      %921 = vmatprep.subr.bf16.mxu0 0
      %922 = vmatpush2.bf16.msra.mxu0 %v809
      %923 = vmatprep.subr.bf16.mxu0 0
      %924 = vmatpush2.bf16.msra.mxu0 %v808
      %925 = vmatprep.subr.bf16.mxu0 0
      %926 = vmatpush2.bf16.msra.mxu0 %v807
      %927 = vmatprep.mubr.bf16.mxu0 %v488
      %928 = vmatmul.mubr.bf16.gmra.mxu0 %v487
      %v929 = vpop.f32.mrf.mxu0
      %v930 = vadd.f32 0.0, %v929
      %v931 = vpop.f32.mrf.mxu0
      %v932 = vpop.f32.mrf.mxu0
      %v933 = vadd.f32 0.0, %v932
      %v934 = vpop.f32.mrf.mxu0
      %935 = vmatprep.mubr.bf16.mxu0 %v494
      %936 = vmatmul.mubr.bf16.gmra.mxu0 %v493
      %v937 = vpop.f32.mrf.mxu0
      %v938 = vadd.f32 0.0, %v937
      %v939 = vpop.f32.mrf.mxu0
      %v940 = vpop.f32.mrf.mxu0
      %v941 = vadd.f32 0.0, %v940
      %v942 = vpop.f32.mrf.mxu0
      %943 = vmatprep.mubr.bf16.mxu0 %v500
      %944 = vmatmul.mubr.bf16.gmra.mxu0 %v499
      %v945 = vpop.f32.mrf.mxu0
      %v946 = vadd.f32 0.0, %v945
      %v947 = vpop.f32.mrf.mxu0
      %v948 = vpop.f32.mrf.mxu0
      %v949 = vadd.f32 0.0, %v948
      %v950 = vpop.f32.mrf.mxu0
      %951 = vmatprep.mubr.bf16.mxu0 %v506
      %952 = vmatmul.mubr.bf16.gmra.mxu0 %v505
      %v953 = vpop.f32.mrf.mxu0
      %v954 = vadd.f32 0.0, %v953
      %v955 = vpop.f32.mrf.mxu0
      %v956 = vpop.f32.mrf.mxu0
      %v957 = vadd.f32 0.0, %v956
      %v958 = vpop.f32.mrf.mxu0
      %959 = vmatprep.mubr.bf16.mxu0 %v512
      %960 = vmatmul.mubr.bf16.gmra.mxu0 %v511
      %v961 = vpop.f32.mrf.mxu0
      %v962 = vadd.f32 0.0, %v961
      %v963 = vpop.f32.mrf.mxu0
      %v964 = vpop.f32.mrf.mxu0
      %v965 = vadd.f32 0.0, %v964
      %v966 = vpop.f32.mrf.mxu0
      %967 = vmatprep.mubr.bf16.mxu0 %v518
      %968 = vmatmul.mubr.bf16.gmra.mxu0 %v517
      %v969 = vpop.f32.mrf.mxu0
      %v970 = vadd.f32 0.0, %v969
      %v971 = vpop.f32.mrf.mxu0
      %v972 = vpop.f32.mrf.mxu0
      %v973 = vadd.f32 0.0, %v972
      %v974 = vpop.f32.mrf.mxu0
      %975 = vmatprep.mubr.bf16.mxu0 %v524
      %976 = vmatmul.mubr.bf16.gmra.mxu0 %v523
      %v977 = vpop.f32.mrf.mxu0
      %v978 = vadd.f32 0.0, %v977
      %v979 = vpop.f32.mrf.mxu0
      %v980 = vpop.f32.mrf.mxu0
      %v981 = vadd.f32 0.0, %v980
      %v982 = vpop.f32.mrf.mxu0
      %983 = vmatprep.mubr.bf16.mxu0 %v530
      %984 = vmatmul.mubr.bf16.gmra.mxu0 %v529
      %v985 = vpop.f32.mrf.mxu0
      %v986 = vadd.f32 0.0, %v985
      %v987 = vpop.f32.mrf.mxu0
      %v988 = vpop.f32.mrf.mxu0
      %v989 = vadd.f32 0.0, %v988
      %v990 = vpop.f32.mrf.mxu0
      %991 = vmatprep.mubr.bf16.mxu0 %v536
      %992 = vmatmul.mubr.bf16.gmra.mxu0 %v535
      %v993 = vpop.f32.mrf.mxu0
      %v994 = vadd.f32 0.0, %v993
      %v995 = vpop.f32.mrf.mxu0
      %v996 = vpop.f32.mrf.mxu0
      %v997 = vadd.f32 0.0, %v996
      %v998 = vpop.f32.mrf.mxu0
      %999 = vmatprep.mubr.bf16.mxu0 %v542
      %1000 = vmatmul.mubr.bf16.gmra.mxu0 %v541
      %v1001 = vpop.f32.mrf.mxu0
      %v1002 = vadd.f32 0.0, %v1001
      %v1003 = vpop.f32.mrf.mxu0
      %v1004 = vpop.f32.mrf.mxu0
      %v1005 = vadd.f32 0.0, %v1004
      %v1006 = vpop.f32.mrf.mxu0
      %1007 = vdwg.mxu0
      %1008 = vmatprep.subr.bf16.mxu0 0
      %1009 = vmatpush1.bf16.msra.mxu0 %v822
      %1010 = vmatprep.subr.bf16.mxu0 0
      %1011 = vmatpush1.bf16.msra.mxu0 %v821
      %1012 = vmatprep.subr.bf16.mxu0 0
      %1013 = vmatpush1.bf16.msra.mxu0 %v820
      %1014 = vmatprep.subr.bf16.mxu0 0
      %1015 = vmatpush1.bf16.msra.mxu0 %v819
      %1016 = vmatprep.subr.bf16.mxu0 0
      %1017 = vmatpush1.bf16.msra.mxu0 %v818
      %1018 = vmatprep.subr.bf16.mxu0 0
      %1019 = vmatpush1.bf16.msra.mxu0 %v817
      %1020 = vmatprep.subr.bf16.mxu0 0
      %1021 = vmatpush1.bf16.msra.mxu0 %v816
      %1022 = vmatprep.subr.bf16.mxu0 0
      %1023 = vmatpush1.bf16.msra.mxu0 %v815
      %1024 = vmatprep.subr.bf16.mxu0 0
      %1025 = vmatpush2.bf16.msra.mxu0 %v830
      %1026 = vmatprep.subr.bf16.mxu0 0
      %1027 = vmatpush2.bf16.msra.mxu0 %v829
      %1028 = vmatprep.subr.bf16.mxu0 0
      %1029 = vmatpush2.bf16.msra.mxu0 %v828
      %1030 = vmatprep.subr.bf16.mxu0 0
      %1031 = vmatpush2.bf16.msra.mxu0 %v827
      %1032 = vmatprep.subr.bf16.mxu0 0
      %1033 = vmatpush2.bf16.msra.mxu0 %v826
      %1034 = vmatprep.subr.bf16.mxu0 0
      %1035 = vmatpush2.bf16.msra.mxu0 %v825
      %1036 = vmatprep.subr.bf16.mxu0 0
      %1037 = vmatpush2.bf16.msra.mxu0 %v824
      %1038 = vmatprep.subr.bf16.mxu0 0
      %1039 = vmatpush2.bf16.msra.mxu0 %v823
      %1040 = vmatprep.mubr.bf16.mxu0 %v490
      %1041 = vmatmul.mubr.bf16.gmra.mxu0 %v489
      %v1042 = vpop.f32.mrf.mxu0
      %v1043 = vadd.f32 %v930, %v1042
      %v1044 = vpop.f32.mrf.mxu0
      %v1045 = vpop.f32.mrf.mxu0
      %v1046 = vadd.f32 %v933, %v1045
      %v1047 = vpop.f32.mrf.mxu0
      %1048 = vmatprep.mubr.bf16.mxu0 %v496
      %1049 = vmatmul.mubr.bf16.gmra.mxu0 %v495
      %v1050 = vpop.f32.mrf.mxu0
      %v1051 = vadd.f32 %v938, %v1050
      %v1052 = vpop.f32.mrf.mxu0
      %v1053 = vpop.f32.mrf.mxu0
      %v1054 = vadd.f32 %v941, %v1053
      %v1055 = vpop.f32.mrf.mxu0
      %1056 = vmatprep.mubr.bf16.mxu0 %v502
      %1057 = vmatmul.mubr.bf16.gmra.mxu0 %v501
      %v1058 = vpop.f32.mrf.mxu0
      %v1059 = vadd.f32 %v946, %v1058
      %v1060 = vpop.f32.mrf.mxu0
      %v1061 = vpop.f32.mrf.mxu0
      %v1062 = vadd.f32 %v949, %v1061
      %v1063 = vpop.f32.mrf.mxu0
      %1064 = vmatprep.mubr.bf16.mxu0 %v508
      %1065 = vmatmul.mubr.bf16.gmra.mxu0 %v507
      %v1066 = vpop.f32.mrf.mxu0
      %v1067 = vadd.f32 %v954, %v1066
      %v1068 = vpop.f32.mrf.mxu0
      %v1069 = vpop.f32.mrf.mxu0
      %v1070 = vadd.f32 %v957, %v1069
      %v1071 = vpop.f32.mrf.mxu0
      %1072 = vmatprep.mubr.bf16.mxu0 %v514
      %1073 = vmatmul.mubr.bf16.gmra.mxu0 %v513
      %v1074 = vpop.f32.mrf.mxu0
      %v1075 = vadd.f32 %v962, %v1074
      %v1076 = vpop.f32.mrf.mxu0
      %v1077 = vpop.f32.mrf.mxu0
      %v1078 = vadd.f32 %v965, %v1077
      %v1079 = vpop.f32.mrf.mxu0
      %1080 = vmatprep.mubr.bf16.mxu0 %v520
      %1081 = vmatmul.mubr.bf16.gmra.mxu0 %v519
      %v1082 = vpop.f32.mrf.mxu0
      %v1083 = vadd.f32 %v970, %v1082
      %v1084 = vpop.f32.mrf.mxu0
      %v1085 = vpop.f32.mrf.mxu0
      %v1086 = vadd.f32 %v973, %v1085
      %v1087 = vpop.f32.mrf.mxu0
      %1088 = vmatprep.mubr.bf16.mxu0 %v526
      %1089 = vmatmul.mubr.bf16.gmra.mxu0 %v525
      %v1090 = vpop.f32.mrf.mxu0
      %v1091 = vadd.f32 %v978, %v1090
      %v1092 = vpop.f32.mrf.mxu0
      %v1093 = vpop.f32.mrf.mxu0
      %v1094 = vadd.f32 %v981, %v1093
      %v1095 = vpop.f32.mrf.mxu0
      %1096 = vmatprep.mubr.bf16.mxu0 %v532
      %1097 = vmatmul.mubr.bf16.gmra.mxu0 %v531
      %v1098 = vpop.f32.mrf.mxu0
      %v1099 = vadd.f32 %v986, %v1098
      %v1100 = vpop.f32.mrf.mxu0
      %v1101 = vpop.f32.mrf.mxu0
      %v1102 = vadd.f32 %v989, %v1101
      %v1103 = vpop.f32.mrf.mxu0
      %1104 = vmatprep.mubr.bf16.mxu0 %v538
      %1105 = vmatmul.mubr.bf16.gmra.mxu0 %v537
      %v1106 = vpop.f32.mrf.mxu0
      %v1107 = vadd.f32 %v994, %v1106
      %v1108 = vpop.f32.mrf.mxu0
      %v1109 = vpop.f32.mrf.mxu0
      %v1110 = vadd.f32 %v997, %v1109
      %v1111 = vpop.f32.mrf.mxu0
      %1112 = vmatprep.mubr.bf16.mxu0 %v544
      %1113 = vmatmul.mubr.bf16.gmra.mxu0 %v543
      %v1114 = vpop.f32.mrf.mxu0
      %v1115 = vadd.f32 %v1002, %v1114
      %v1116 = vpop.f32.mrf.mxu0
      %v1117 = vpop.f32.mrf.mxu0
      %v1118 = vadd.f32 %v1005, %v1117
      %v1119 = vpop.f32.mrf.mxu0
      %1120 = vdwg.mxu0
      %1121 = vmatprep.subr.bf16.mxu0 0
      %1122 = vmatpush1.bf16.msra.mxu0 %v838
      %1123 = vmatprep.subr.bf16.mxu0 0
      %1124 = vmatpush1.bf16.msra.mxu0 %v837
      %1125 = vmatprep.subr.bf16.mxu0 0
      %1126 = vmatpush1.bf16.msra.mxu0 %v836
      %1127 = vmatprep.subr.bf16.mxu0 0
      %1128 = vmatpush1.bf16.msra.mxu0 %v835
      %1129 = vmatprep.subr.bf16.mxu0 0
      %1130 = vmatpush1.bf16.msra.mxu0 %v834
      %1131 = vmatprep.subr.bf16.mxu0 0
      %1132 = vmatpush1.bf16.msra.mxu0 %v833
      %1133 = vmatprep.subr.bf16.mxu0 0
      %1134 = vmatpush1.bf16.msra.mxu0 %v832
      %1135 = vmatprep.subr.bf16.mxu0 0
      %1136 = vmatpush1.bf16.msra.mxu0 %v831
      %1137 = vmatprep.subr.bf16.mxu0 0
      %1138 = vmatpush2.bf16.msra.mxu0 %v846
      %1139 = vmatprep.subr.bf16.mxu0 0
      %1140 = vmatpush2.bf16.msra.mxu0 %v845
      %1141 = vmatprep.subr.bf16.mxu0 0
      %1142 = vmatpush2.bf16.msra.mxu0 %v844
      %1143 = vmatprep.subr.bf16.mxu0 0
      %1144 = vmatpush2.bf16.msra.mxu0 %v843
      %1145 = vmatprep.subr.bf16.mxu0 0
      %1146 = vmatpush2.bf16.msra.mxu0 %v842
      %1147 = vmatprep.subr.bf16.mxu0 0
      %1148 = vmatpush2.bf16.msra.mxu0 %v841
      %1149 = vmatprep.subr.bf16.mxu0 0
      %1150 = vmatpush2.bf16.msra.mxu0 %v840
      %1151 = vmatprep.subr.bf16.mxu0 0
      %1152 = vmatpush2.bf16.msra.mxu0 %v839
      %1153 = vmatprep.mubr.bf16.mxu0 %v492
      %1154 = vmatmul.mubr.bf16.gmra.mxu0 %v491
      %v1155 = vpop.f32.mrf.mxu0
      %v1156 = vadd.f32 %v1043, %v1155
      %v1157 = vpop.f32.mrf.mxu0
      %v1158 = vpop.f32.mrf.mxu0
      %v1159 = vadd.f32 %v1046, %v1158
      %v1160 = vpop.f32.mrf.mxu0
      %1161 = vmatprep.mubr.bf16.mxu0 %v498
      %1162 = vmatmul.mubr.bf16.gmra.mxu0 %v497
      %v1163 = vpop.f32.mrf.mxu0
      %v1164 = vadd.f32 %v1051, %v1163
      %v1165 = vpop.f32.mrf.mxu0
      %v1166 = vpop.f32.mrf.mxu0
      %v1167 = vadd.f32 %v1054, %v1166
      %v1168 = vpop.f32.mrf.mxu0
      %1169 = vmatprep.mubr.bf16.mxu0 %v504
      %1170 = vmatmul.mubr.bf16.gmra.mxu0 %v503
      %v1171 = vpop.f32.mrf.mxu0
      %v1172 = vadd.f32 %v1059, %v1171
      %v1173 = vpop.f32.mrf.mxu0
      %v1174 = vpop.f32.mrf.mxu0
      %v1175 = vadd.f32 %v1062, %v1174
      %v1176 = vpop.f32.mrf.mxu0
      %1177 = vmatprep.mubr.bf16.mxu0 %v510
      %1178 = vmatmul.mubr.bf16.gmra.mxu0 %v509
      %v1179 = vpop.f32.mrf.mxu0
      %v1180 = vadd.f32 %v1067, %v1179
      %v1181 = vpop.f32.mrf.mxu0
      %v1182 = vpop.f32.mrf.mxu0
      %v1183 = vadd.f32 %v1070, %v1182
      %v1184 = vpop.f32.mrf.mxu0
      %1185 = vmatprep.mubr.bf16.mxu0 %v516
      %1186 = vmatmul.mubr.bf16.gmra.mxu0 %v515
      %v1187 = vpop.f32.mrf.mxu0
      %v1188 = vadd.f32 %v1075, %v1187
      %v1189 = vpop.f32.mrf.mxu0
      %v1190 = vpop.f32.mrf.mxu0
      %v1191 = vadd.f32 %v1078, %v1190
      %v1192 = vpop.f32.mrf.mxu0
      %1193 = vmatprep.mubr.bf16.mxu0 %v522
      %1194 = vmatmul.mubr.bf16.gmra.mxu0 %v521
      %v1195 = vpop.f32.mrf.mxu0
      %v1196 = vadd.f32 %v1083, %v1195
      %v1197 = vpop.f32.mrf.mxu0
      %v1198 = vpop.f32.mrf.mxu0
      %v1199 = vadd.f32 %v1086, %v1198
      %v1200 = vpop.f32.mrf.mxu0
      %1201 = vmatprep.mubr.bf16.mxu0 %v528
      %1202 = vmatmul.mubr.bf16.gmra.mxu0 %v527
      %v1203 = vpop.f32.mrf.mxu0
      %v1204 = vadd.f32 %v1091, %v1203
      %v1205 = vpop.f32.mrf.mxu0
      %v1206 = vpop.f32.mrf.mxu0
      %v1207 = vadd.f32 %v1094, %v1206
      %v1208 = vpop.f32.mrf.mxu0
      %1209 = vmatprep.mubr.bf16.mxu0 %v534
      %1210 = vmatmul.mubr.bf16.gmra.mxu0 %v533
      %v1211 = vpop.f32.mrf.mxu0
      %v1212 = vadd.f32 %v1099, %v1211
      %v1213 = vpop.f32.mrf.mxu0
      %v1214 = vpop.f32.mrf.mxu0
      %v1215 = vadd.f32 %v1102, %v1214
      %v1216 = vpop.f32.mrf.mxu0
      %1217 = vmatprep.mubr.bf16.mxu0 %v540
      %1218 = vmatmul.mubr.bf16.gmra.mxu0 %v539
      %v1219 = vpop.f32.mrf.mxu0
      %v1220 = vadd.f32 %v1107, %v1219
      %v1221 = vpop.f32.mrf.mxu0
      %v1222 = vpop.f32.mrf.mxu0
      %v1223 = vadd.f32 %v1110, %v1222
      %v1224 = vpop.f32.mrf.mxu0
      %1225 = vmatprep.mubr.bf16.mxu0 %v546
      %1226 = vmatmul.mubr.bf16.gmra.mxu0 %v545
      %v1227 = vpop.f32.mrf.mxu0
      %v1228 = vadd.f32 %v1115, %v1227
      %v1229 = vpop.f32.mrf.mxu0
      %v1230 = vpop.f32.mrf.mxu0
      %v1231 = vadd.f32 %v1118, %v1230
      %v1232 = vpop.f32.mrf.mxu0
      %1233 = vdwg.mxu0
      %v1234 = vpack.c.bf16 %v1159, %v1156
      %v1235 = vpack.c.bf16 %v1167, %v1164
      %v1236 = vpack.c.bf16 %v1175, %v1172
      %v1237 = vpack.c.bf16 %v1183, %v1180
      %v1238 = vpack.c.bf16 %v1191, %v1188
      %v1239 = vpack.c.bf16 %v1199, %v1196
      %v1240 = vpack.c.bf16 %v1207, %v1204
      %v1241 = vpack.c.bf16 %v1215, %v1212
      %v1242 = vpack.c.bf16 %v1223, %v1220
      %v1243 = vpack.c.bf16 %v1231, %v1228
      %v1254 = vunpack.c.l.b16 %v1234
      %v1255 = vunpack.c.h.b16 %v1234
      %v1256 = vunpack.c.l.b16 %v1235
      %v1257 = vunpack.c.h.b16 %v1235
      %v1258 = vunpack.c.l.b16 %v1236
      %v1259 = vunpack.c.h.b16 %v1236
      %v1260 = vunpack.c.l.b16 %v1237
      %v1261 = vunpack.c.h.b16 %v1237
      %v1262 = vunpack.c.l.b16 %v1238
      %v1263 = vunpack.c.h.b16 %v1238
      %v1264 = vunpack.c.l.b16 %v1239
      %v1265 = vunpack.c.h.b16 %v1239
      %v1266 = vunpack.c.l.b16 %v1240
      %v1267 = vunpack.c.h.b16 %v1240
      %v1268 = vunpack.c.l.b16 %v1241
      %v1269 = vunpack.c.h.b16 %v1241
      %v1270 = vunpack.c.l.b16 %v1242
      %v1271 = vunpack.c.h.b16 %v1242
      %v1272 = vunpack.c.l.b16 %v1243
      %v1273 = vunpack.c.h.b16 %v1243
      %v1274 = vpack.c.b16 %v1254, %v1254
      %v1275 = vpack.c.b16 %v1255, %v1255
      %v1276 = vpack.c.b16 %v1256, %v1256
      %v1277 = vpack.c.b16 %v1257, %v1257
      %v1278 = vpack.c.b16 %v1258, %v1258
      %v1279 = vpack.c.b16 %v1259, %v1259
      %v1280 = vpack.c.b16 %v1260, %v1260
      %v1281 = vpack.c.b16 %v1261, %v1261
      %v1282 = vpack.c.b16 %v1262, %v1262
      %v1283 = vpack.c.b16 %v1263, %v1263
      %v1284 = vpack.c.b16 %v1264, %v1264
      %v1285 = vpack.c.b16 %v1265, %v1265
      %v1286 = vpack.c.b16 %v1266, %v1266
      %v1287 = vpack.c.b16 %v1267, %v1267
      %v1288 = vpack.c.b16 %v1268, %v1268
      %v1289 = vpack.c.b16 %v1269, %v1269
      %v1290 = vpack.c.b16 %v1270, %v1270
      %v1291 = vpack.c.b16 %v1271, %v1271
      %v1292 = vpack.c.b16 %v1272, %v1272
      %v1293 = vpack.c.b16 %v1273, %v1273
      %vm1314 = vcmask 257024
      %1315 = vst.msk [vmem:[%s148] sm:$0xf] %vm1314, %v1274
      %1316 = vst.msk [vmem:[%s148 + $0x4] sm:$0xf] %vm1314, %v1275
      %1317 = vst.msk [vmem:[%s148 + $0x8] sm:$0xf] %vm1314, %v1276
      %1318 = vst.msk [vmem:[%s148 + $0xc] sm:$0xf] %vm1314, %v1277
      %1319 = vst.msk [vmem:[%s148 + $0x10] sm:$0xf] %vm1314, %v1278
      %1320 = vst.msk [vmem:[%s148 + $0x14] sm:$0xf] %vm1314, %v1279
      %1321 = vst.msk [vmem:[%s148 + $0x18] sm:$0xf] %vm1314, %v1280
      %1322 = vst.msk [vmem:[%s148 + $0x1c] sm:$0xf] %vm1314, %v1281
      %1323 = vst.msk [vmem:[%s148 + $0x20] sm:$0xf] %vm1314, %v1282
      %1324 = vst.msk [vmem:[%s148 + $0x24] sm:$0xf] %vm1314, %v1283
      %1325 = vst.msk [vmem:[%s148 + $0x28] sm:$0xf] %vm1314, %v1284
      %1326 = vst.msk [vmem:[%s148 + $0x2c] sm:$0xf] %vm1314, %v1285
      %1327 = vst.msk [vmem:[%s148 + $0x30] sm:$0xf] %vm1314, %v1286
      %1328 = vst.msk [vmem:[%s148 + $0x34] sm:$0xf] %vm1314, %v1287
      %1329 = vst.msk [vmem:[%s148 + $0x38] sm:$0xf] %vm1314, %v1288
      %1330 = vst.msk [vmem:[%s148 + $0x3c] sm:$0xf] %vm1314, %v1289
      %1331 = vst.msk [vmem:[%s148 + $0x40] sm:$0xf] %vm1314, %v1290
      %1332 = vst.msk [vmem:[%s148 + $0x44] sm:$0xf] %vm1314, %v1291
      %1333 = vst.msk [vmem:[%s148 + $0x48] sm:$0xf] %vm1314, %v1292
      %1334 = vst.msk [vmem:[%s148 + $0x4c] sm:$0xf] %vm1314, %v1293
      %s1335 = smul.u32 20, %s13
      %p1336 = scmp.lt.s32.totalorder %s1335, 39
      %s1337 = scalar_select %p1336, %s1335, 39
      %s1338 = smul.addr %s1337, 4
      %s1339 = scalar_lea.vmem %s2, %s1338
      // Predicated region
      $region29: #{vit_forward.13} parent=27 // pred_check
        %p1340 = pneg %p78
      $region30: #{vit_forward.13} parent=27 // pred_check_branch
        %1342 = sbr.rel (%p1340) target = $region32
      $region31: #{vit_forward.13} parent=27 // pred_region
        %s1343 = smul.u32 20, %s13
      $region32: #{vit_forward.13} parent=27 // pred_fallthru
        _
    $region28: #{vit_forward.13} parent=5 // pred_fallthru
      _
    %p1344 = scmp.le.s32.totalorder 2, %s8
    // Predicated region
    $region33: #{vit_forward.13} parent=5 // pred_check
      %p1345 = pneg %p1344
    $region34: #{vit_forward.13} parent=5 // pred_check_branch
      %1347 = sbr.rel (%p1345) target = $region36
    $region35: #{vit_forward.13} parent=5 // pred_region
      %s1348 = ssub.s32 %s8, 2
      // Predicated region
      $region37: #{vit_forward.13} parent=35 // pred_check
        %p1349 = pneg %p84
      $region38: #{vit_forward.13} parent=35 // pred_check_branch
        %1351 = sbr.rel (%p1349) target = $region40
      $region39: #{vit_forward.13} parent=35 // pred_region
        %s1352 = smul.u32 20, %s14
        %p1353 = scmp.lt.s32.totalorder %s1352, 39
        %s1354 = scalar_select %p1353, %s1352, 39
        %s1355 = smul.addr %s1354, 4
        %s1356 = scalar_lea.vmem %s2, %s1355
      $region40: #{vit_forward.13} parent=35 // pred_fallthru
        _
    $region36: #{vit_forward.13} parent=5 // pred_fallthru
      _
  $region6: #{vit_forward.13} parent=0 // loop_footer
    %s12 = sadd.s32 1, %s8
  $region7: #{vit_forward.13} parent=0 // loop_footer_branch
    %7 = sbr.rel target = $region3
  $region8: #{vit_forward.13} parent=0 // loop_exit
    _

// kernel: vit_forward.14
$region0: #{vit_forward.14}
  #allocation0 [shape = 'u32[]', space=smem, size = 0x4, offset = 0x4, fixed_abs, tag = 'smem constant byte address 0x4 - core index']
  #allocation1 [shape = 'u32[144,128]{1,0:T(1,128)}', space=vmem, size = 0x12000, scoped, tag = 'internal scratch']
  %s0 = inlined_call_operand.vmem [shape: bf16[2,160,32], index: 0, kind: input, shape index: {}]
  %s1 = inlined_call_operand.vmem [shape: f32[1,32], index: 1, kind: input, shape index: {}]
  %s2 = inlined_call_operand.vmem [shape: f32[1,32], index: 2, kind: input, shape index: {}]
  %s3 = inlined_call_operand.vmem [shape: f32[160,32], index: 3, kind: input, shape index: {}]
  %s4 = inlined_call_operand.vmem [shape: f32[1,32], index: 4, kind: input, shape index: {}]
  %s5 = inlined_call_operand.vmem [shape: f32[1,32], index: 5, kind: input, shape index: {}]
  %s6 = inlined_call_operand.vmem [shape: bf16[2,168,32], index: 6, kind: output, shape index: {}]
  %s7 = sld [smem:[#allocation0]]
  $region57: #{vit_forward.14} parent=0
    _
  %s9 = ssub.s32 1, %s7
  %s10 = scalar_select 0, %s9, %s7
  loop: start=0, step=1, limit=4
  $region2: #{vit_forward.14} parent=0 // loop_pre_header
    _
  $region3: #{vit_forward.14} parent=0 // loop_header
    %s12 = sphi 0, %s16
    %p13 = scmp.ge.s32.totalorder %s12, 4
    %s22 = sphi 0, %s24
    %s25 = sphi 0, %s22
    %s26 = sphi 0, %s25
    %s42 = sphi 0, %s26
    %s46 = sphi 0, %s46
    %s48 = sphi 0, %s46
    %s49 = sphi 0, %s48
    %s63 = sphi 0, %s49
    %s67 = sphi 0, %s67
    %s69 = sphi 0, %s67
    %s70 = sphi 0, %s69
    %s84 = sphi 0, %s70
    %s88 = sphi 0, %s88
    %s90 = sphi 0, %s88
    %s91 = sphi 0, %s90
    %s105 = sphi 0, %s91
    %s109 = sphi 0, %s109
    %s111 = sphi 0, %s109
    %s112 = sphi 0, %s111
    %s126 = sphi 0, %s112
    %s130 = sphi 0, %s130
    %s132 = sphi 0, %s130
    %s133 = sphi 0, %s132
    %s147 = sphi 0, %s133
    %s153 = sphi 0, %s155
    %s156 = sphi 0, %s153
    %s157 = sphi 0, %s156
    %s173 = sphi 0, %s157
  $region4: #{vit_forward.14} parent=0 // loop_header_branch
    %15 = sbr.rel (%p13) target = $region8
  $region5: #{vit_forward.14} parent=0 // loop_body
    %s17 = ssub.s32 %s12, 1
    %s18 = ssub.s32 %s12, 2
    %s19 = sadd.s32 %s12, 1
    %s20 = ssub.s32 %s12, %s19
    %p21 = scmp.eq.s32.totalorder %s20, 0
    %s23 = sadd.s32 %s22, 1
    %s24 = scalar_select %p21, %s22, %s23
    %p27 = pneg %p21
    %p28 = scmp.eq.s32.totalorder %s12, 1
    %p29 = por %p27, %p28
    %p30 = scmp.ne.s32.totalorder %s22, %s25
    %p31 = scmp.eq.s32.totalorder %s12, 0
    %p32 = por %p30, %p31
    %p33 = scmp.ne.s32.totalorder %s22, %s25
    %p34 = scmp.eq.s32.totalorder %s17, 1
    %p35 = por %p33, %p34
    %p36 = scmp.ne.s32.totalorder %s25, %s26
    %p37 = scmp.eq.s32.totalorder %s17, 0
    %p38 = por %p36, %p37
    %p39 = scmp.ne.s32.totalorder %s25, %s26
    %p40 = scmp.eq.s32.totalorder %s18, 1
    %p41 = por %p39, %p40
    %p43 = scmp.ne.s32.totalorder %s26, %s42
    %p44 = scmp.eq.s32.totalorder %s18, 0
    %p45 = por %p43, %p44
    %s47 = sadd.s32 %s46, 1
    %p50 = scmp.eq.s32.totalorder %s12, 1
    %p51 = scmp.ne.s32.totalorder %s46, %s48
    %p52 = scmp.eq.s32.totalorder %s12, 0
    %p53 = por %p51, %p52
    %p54 = scmp.ne.s32.totalorder %s46, %s48
    %p55 = scmp.eq.s32.totalorder %s17, 1
    %p56 = por %p54, %p55
    %p57 = scmp.ne.s32.totalorder %s48, %s49
    %p58 = scmp.eq.s32.totalorder %s17, 0
    %p59 = por %p57, %p58
    %p60 = scmp.ne.s32.totalorder %s48, %s49
    %p61 = scmp.eq.s32.totalorder %s18, 1
    %p62 = por %p60, %p61
    %p64 = scmp.ne.s32.totalorder %s49, %s63
    %p65 = scmp.eq.s32.totalorder %s18, 0
    %p66 = por %p64, %p65
    %s68 = sadd.s32 %s67, 1
    %p71 = scmp.eq.s32.totalorder %s12, 1
    %p72 = scmp.ne.s32.totalorder %s67, %s69
    %p73 = scmp.eq.s32.totalorder %s12, 0
    %p74 = por %p72, %p73
    %p75 = scmp.ne.s32.totalorder %s67, %s69
    %p76 = scmp.eq.s32.totalorder %s17, 1
    %p77 = por %p75, %p76
    %p78 = scmp.ne.s32.totalorder %s69, %s70
    %p79 = scmp.eq.s32.totalorder %s17, 0
    %p80 = por %p78, %p79
    %p81 = scmp.ne.s32.totalorder %s69, %s70
    %p82 = scmp.eq.s32.totalorder %s18, 1
    %p83 = por %p81, %p82
    %p85 = scmp.ne.s32.totalorder %s70, %s84
    %p86 = scmp.eq.s32.totalorder %s18, 0
    %p87 = por %p85, %p86
    %s89 = sadd.s32 %s88, 1
    %p92 = scmp.eq.s32.totalorder %s12, 1
    %p93 = scmp.ne.s32.totalorder %s88, %s90
    %p94 = scmp.eq.s32.totalorder %s12, 0
    %p95 = por %p93, %p94
    %p96 = scmp.ne.s32.totalorder %s88, %s90
    %p97 = scmp.eq.s32.totalorder %s17, 1
    %p98 = por %p96, %p97
    %p99 = scmp.ne.s32.totalorder %s90, %s91
    %p100 = scmp.eq.s32.totalorder %s17, 0
    %p101 = por %p99, %p100
    %p102 = scmp.ne.s32.totalorder %s90, %s91
    %p103 = scmp.eq.s32.totalorder %s18, 1
    %p104 = por %p102, %p103
    %p106 = scmp.ne.s32.totalorder %s91, %s105
    %p107 = scmp.eq.s32.totalorder %s18, 0
    %p108 = por %p106, %p107
    %s110 = sadd.s32 %s109, 1
    %p113 = scmp.eq.s32.totalorder %s12, 1
    %p114 = scmp.ne.s32.totalorder %s109, %s111
    %p115 = scmp.eq.s32.totalorder %s12, 0
    %p116 = por %p114, %p115
    %p117 = scmp.ne.s32.totalorder %s109, %s111
    %p118 = scmp.eq.s32.totalorder %s17, 1
    %p119 = por %p117, %p118
    %p120 = scmp.ne.s32.totalorder %s111, %s112
    %p121 = scmp.eq.s32.totalorder %s17, 0
    %p122 = por %p120, %p121
    %p123 = scmp.ne.s32.totalorder %s111, %s112
    %p124 = scmp.eq.s32.totalorder %s18, 1
    %p125 = por %p123, %p124
    %p127 = scmp.ne.s32.totalorder %s112, %s126
    %p128 = scmp.eq.s32.totalorder %s18, 0
    %p129 = por %p127, %p128
    %s131 = sadd.s32 %s130, 1
    %p134 = scmp.eq.s32.totalorder %s12, 1
    %p135 = scmp.ne.s32.totalorder %s130, %s132
    %p136 = scmp.eq.s32.totalorder %s12, 0
    %p137 = por %p135, %p136
    %p138 = scmp.ne.s32.totalorder %s130, %s132
    %p139 = scmp.eq.s32.totalorder %s17, 1
    %p140 = por %p138, %p139
    %p141 = scmp.ne.s32.totalorder %s132, %s133
    %p142 = scmp.eq.s32.totalorder %s17, 0
    %p143 = por %p141, %p142
    %p144 = scmp.ne.s32.totalorder %s132, %s133
    %p145 = scmp.eq.s32.totalorder %s18, 1
    %p146 = por %p144, %p145
    %p148 = scmp.ne.s32.totalorder %s133, %s147
    %p149 = scmp.eq.s32.totalorder %s18, 0
    %p150 = por %p148, %p149
    %s151 = ssub.s32 %s12, %s19
    %p152 = scmp.eq.s32.totalorder %s151, 0
    %s154 = sadd.s32 %s153, 1
    %s155 = scalar_select %p152, %s153, %s154
    %p158 = pneg %p152
    %p159 = scmp.eq.s32.totalorder %s12, 1
    %p160 = por %p158, %p159
    %p161 = scmp.ne.s32.totalorder %s153, %s156
    %p162 = scmp.eq.s32.totalorder %s12, 0
    %p163 = por %p161, %p162
    %p164 = scmp.ne.s32.totalorder %s153, %s156
    %p165 = scmp.eq.s32.totalorder %s17, 1
    %p166 = por %p164, %p165
    %p167 = scmp.ne.s32.totalorder %s156, %s157
    %p168 = scmp.eq.s32.totalorder %s17, 0
    %p169 = por %p167, %p168
    %p170 = scmp.ne.s32.totalorder %s156, %s157
    %p171 = scmp.eq.s32.totalorder %s18, 1
    %p172 = por %p170, %p171
    %p174 = scmp.ne.s32.totalorder %s157, %s173
    %p175 = scmp.eq.s32.totalorder %s18, 0
    %p176 = por %p174, %p175
    %p177 = scmp.le.s32.totalorder 1, %s12
    %p178 = scmp.lt.s32.totalorder %s12, 3
    %p179 = pnand %p177, %p178
    %p180 = pneg %p179
    // Predicated region
    $region9: #{vit_forward.14} parent=5 // pred_check
      _
    $region10: #{vit_forward.14} parent=5 // pred_check_branch
      %182 = sbr.rel (%p179) target = $region12
    $region11: #{vit_forward.14} parent=5 // pred_region
      %s183 = ssub.s32 %s12, 1
      // Predicated region
      $region13: #{vit_forward.14} parent=11 // pred_check
        %p184 = pneg %p59
      $region14: #{vit_forward.14} parent=11 // pred_check_branch
        %186 = sbr.rel (%p184) target = $region16
      $region15: #{vit_forward.14} parent=11 // pred_region
        _
      $region16: #{vit_forward.14} parent=11 // pred_fallthru
        _
      // Predicated region
      $region17: #{vit_forward.14} parent=11 // pred_check
        %p187 = pneg %p80
      $region18: #{vit_forward.14} parent=11 // pred_check_branch
        %189 = sbr.rel (%p187) target = $region20
      $region19: #{vit_forward.14} parent=11 // pred_region
        _
      $region20: #{vit_forward.14} parent=11 // pred_fallthru
        _
      // Predicated region
      $region21: #{vit_forward.14} parent=11 // pred_check
        %p190 = pneg %p101
      $region22: #{vit_forward.14} parent=11 // pred_check_branch
        %192 = sbr.rel (%p190) target = $region24
      $region23: #{vit_forward.14} parent=11 // pred_region
        _
      $region24: #{vit_forward.14} parent=11 // pred_fallthru
        _
      // Predicated region
      $region25: #{vit_forward.14} parent=11 // pred_check
        %p193 = pneg %p122
      $region26: #{vit_forward.14} parent=11 // pred_check_branch
        %195 = sbr.rel (%p193) target = $region28
      $region27: #{vit_forward.14} parent=11 // pred_region
        _
      $region28: #{vit_forward.14} parent=11 // pred_fallthru
        _
      // Predicated region
      $region29: #{vit_forward.14} parent=11 // pred_check
        %p196 = pneg %p143
      $region30: #{vit_forward.14} parent=11 // pred_check_branch
        %198 = sbr.rel (%p196) target = $region32
      $region31: #{vit_forward.14} parent=11 // pred_region
        _
      $region32: #{vit_forward.14} parent=11 // pred_fallthru
        _
    $region12: #{vit_forward.14} parent=5 // pred_fallthru
      _
    %p199 = scmp.lt.s32.totalorder %s12, 2
    // Predicated region
    $region33: #{vit_forward.14} parent=5 // pred_check
      %p200 = pneg %p199
    $region34: #{vit_forward.14} parent=5 // pred_check_branch
      %202 = sbr.rel (%p200) target = $region36
    $region35: #{vit_forward.14} parent=5 // pred_region
      // Predicated region
      $region37: #{vit_forward.14} parent=35 // pred_check
        %p203 = pneg %p32
      $region38: #{vit_forward.14} parent=35 // pred_check_branch
        %205 = sbr.rel (%p203) target = $region40
      $region39: #{vit_forward.14} parent=35 // pred_region
        %p206 = scmp.lt.s32.totalorder %s12, 1
        %s207 = scalar_select %p206, %s12, 1
        %s208 = smul.addr %s207, 20
        %s209 = smul.addr %s208, 4
        %s210 = scalar_lea.vmem %s0, %s209
      $region40: #{vit_forward.14} parent=35 // pred_fallthru
        _
    $region36: #{vit_forward.14} parent=5 // pred_fallthru
      _
    %p211 = scmp.le.s32.totalorder 1, %s12
    %p212 = scmp.lt.s32.totalorder %s12, 3
    %p213 = pnand %p211, %p212
    %p214 = pneg %p213
    // Predicated region
    $region41: #{vit_forward.14} parent=5 // pred_check
      _
    $region42: #{vit_forward.14} parent=5 // pred_check_branch
      %216 = sbr.rel (%p213) target = $region44
    $region43: #{vit_forward.14} parent=5 // pred_region
      %s217 = ssub.s32 %s12, 1
      %p218 = scmp.lt.s32.totalorder %s17, 1
      %s219 = scalar_select %p218, %s17, 1
      %s220 = smul.addr %s219, 20
      %s221 = smul.addr %s220, 4
      %s222 = scalar_lea.vmem %s0, %s221
      %p223 = pneg %p38
      %p224 = pneg %p35
      %p225 = pneg %p59
      %p226 = pneg %p56
      %p227 = pneg %p80
      %p228 = pneg %p77
      %p229 = pneg %p101
      %p230 = pneg %p98
      %p231 = pneg %p122
      %p232 = pneg %p119
      %p233 = pneg %p143
      %p234 = pneg %p140
      %p235 = pneg %p169
      %p236 = pneg %p166
      %p237 = scmp.lt.s32.totalorder %s17, 1
      %s238 = scalar_select %p237, %s17, 1
      %s239 = smul.addr %s238, 21
      %s240 = smul.addr %s239, 4
      %s241 = scalar_lea.vmem %s6, %s240
      %p242 = scmp.lt.s32.totalorder %s17, 1
      %s243 = scalar_select %p242, %s17, 1
      %s244 = smul.addr %s243, 20
      %s245 = smul.addr %s244, 4
      %s246 = scalar_lea.vmem %s0, %s245
      %p247 = scmp.lt.s32.totalorder %s17, 1
      %s248 = scalar_select %p247, %s17, 1
      %s249 = smul.addr %s248, 21
      %s250 = smul.addr %s249, 4
      %s251 = scalar_lea.vmem %s6, %s250
      %v253 = vld [vmem:[%s4] sm:$0x1]
      %v254 = vld [vmem:[%s5] sm:$0x1]
      %v255 = vld [vmem:[%s1] sm:$0x1]
      %v256 = vld [vmem:[%s2] sm:$0x1]
      %v257 = vadd.f32 %v255, %v256
      %v258 = vld [vmem:[%s246] sm:$0xf]
      %v259 = vld [vmem:[%s246 + $0x4] sm:$0xf]
      %v260 = vld [vmem:[%s246 + $0x8] sm:$0xf]
      %v261 = vld [vmem:[%s246 + $0xc] sm:$0xf]
      %v262 = vld [vmem:[%s246 + $0x10] sm:$0xf]
      %v263 = vld [vmem:[%s246 + $0x14] sm:$0xf]
      %v264 = vld [vmem:[%s246 + $0x18] sm:$0xf]
      %v265 = vld [vmem:[%s246 + $0x1c] sm:$0xf]
      %v266 = vld [vmem:[%s246 + $0x20] sm:$0xf]
      %v267 = vld [vmem:[%s246 + $0x24] sm:$0xf]
      %v268 = vld [vmem:[%s246 + $0x28] sm:$0xf]
      %v269 = vld [vmem:[%s246 + $0x2c] sm:$0xf]
      %v270 = vld [vmem:[%s246 + $0x30] sm:$0xf]
      %v271 = vld [vmem:[%s246 + $0x34] sm:$0xf]
      %v272 = vld [vmem:[%s246 + $0x38] sm:$0xf]
      %v273 = vld [vmem:[%s246 + $0x3c] sm:$0xf]
      %v274 = vld [vmem:[%s246 + $0x40] sm:$0xf]
      %v275 = vld [vmem:[%s246 + $0x44] sm:$0xf]
      %v276 = vld [vmem:[%s246 + $0x48] sm:$0xf]
      %v277 = vld [vmem:[%s246 + $0x4c] sm:$0xf]
      %v278 = vunpack.c.l.bf16 %v258
      %v279 = vunpack.c.l.bf16 %v259
      %v280 = vunpack.c.l.bf16 %v260
      %v281 = vunpack.c.l.bf16 %v261
      %v282 = vunpack.c.l.bf16 %v262
      %v283 = vunpack.c.l.bf16 %v263
      %v284 = vunpack.c.l.bf16 %v264
      %v285 = vunpack.c.l.bf16 %v265
      %v286 = vunpack.c.l.bf16 %v266
      %v287 = vunpack.c.l.bf16 %v267
      %v288 = vunpack.c.l.bf16 %v268
      %v289 = vunpack.c.l.bf16 %v269
      %v290 = vunpack.c.l.bf16 %v270
      %v291 = vunpack.c.l.bf16 %v271
      %v292 = vunpack.c.l.bf16 %v272
      %v293 = vunpack.c.l.bf16 %v273
      %v294 = vunpack.c.l.bf16 %v274
      %v295 = vunpack.c.l.bf16 %v275
      %v296 = vunpack.c.l.bf16 %v276
      %v297 = vunpack.c.l.bf16 %v277
      %v298 = vld [vmem:[%s3] sm:$0xff]
      %v299 = vld [vmem:[%s3 + $0x8] sm:$0xff]
      %v300 = vld [vmem:[%s3 + $0x10] sm:$0xff]
      %v301 = vld [vmem:[%s3 + $0x18] sm:$0xff]
      %v302 = vld [vmem:[%s3 + $0x20] sm:$0xff]
      %v303 = vld [vmem:[%s3 + $0x28] sm:$0xff]
      %v304 = vld [vmem:[%s3 + $0x30] sm:$0xff]
      %v305 = vld [vmem:[%s3 + $0x38] sm:$0xff]
      %v306 = vld [vmem:[%s3 + $0x40] sm:$0xff]
      %v307 = vld [vmem:[%s3 + $0x48] sm:$0xff]
      %v308 = vld [vmem:[%s3 + $0x50] sm:$0xff]
      %v309 = vld [vmem:[%s3 + $0x58] sm:$0xff]
      %v310 = vld [vmem:[%s3 + $0x60] sm:$0xff]
      %v311 = vld [vmem:[%s3 + $0x68] sm:$0xff]
      %v312 = vld [vmem:[%s3 + $0x70] sm:$0xff]
      %v313 = vld [vmem:[%s3 + $0x78] sm:$0xff]
      %v314 = vld [vmem:[%s3 + $0x80] sm:$0xff]
      %v315 = vld [vmem:[%s3 + $0x88] sm:$0xff]
      %v316 = vld [vmem:[%s3 + $0x90] sm:$0xff]
      %v317 = vld [vmem:[%s3 + $0x98] sm:$0xff]
      %v318 = vadd.f32 %v278, %v298
      %v319 = vadd.f32 %v279, %v299
      %v320 = vadd.f32 %v280, %v300
      %v321 = vadd.f32 %v281, %v301
      %v322 = vadd.f32 %v282, %v302
      %v323 = vadd.f32 %v283, %v303
      %v324 = vadd.f32 %v284, %v304
      %v325 = vadd.f32 %v285, %v305
      %v326 = vadd.f32 %v286, %v306
      %v327 = vadd.f32 %v287, %v307
      %v328 = vadd.f32 %v288, %v308
      %v329 = vadd.f32 %v289, %v309
      %v330 = vadd.f32 %v290, %v310
      %v331 = vadd.f32 %v291, %v311
      %v332 = vadd.f32 %v292, %v312
      %v333 = vadd.f32 %v293, %v313
      %v334 = vadd.f32 %v294, %v314
      %v335 = vadd.f32 %v295, %v315
      %v336 = vadd.f32 %v296, %v316
      %v337 = vadd.f32 %v297, %v317
      %vm338 = vcmask 253952
      %v339 = vsel %vm338, %v257, 0.0
      %340 = vadd.xlane.f32.xlu0 %v339
      %v341 = vpop.xlane.xlu0 %340
      %v342 = vrcp.pop 32.0
      %v343 = vmul.f32 %v341, %v342
      %v344 = vsub.f32 %v257, %v343
      %v345 = vmul.f32 %v344, %v344
      %v346 = vsel %vm338, %v345, 0.0
      %347 = vadd.xlane.f32.xlu0 %v346
      %v348 = vpop.xlane.xlu0 %347
      %v349 = vmul.f32 %v348, %v342
      %v350 = vadd.f32 %v349, 1e-05
      %v351 = vrsqrt.pop %v350
      %v352 = vmul.f32 %v344, %v351
      %v353 = vmul.f32 %v352, %v253
      %v354 = vadd.f32 %v353, %v254
      %v355 = vpack.c.bf16 %v354, %v354
      %vm356 = vcmask 253952
      %vm357 = vsmask.f32 256
      %vm358 = vmand %vm356, %vm357
      %v359 = vld [vmem:[%s251] sm:$0x1]
      %v360 = vsel %vm358, %v355, %v359
      %361 = vst [vmem:[%s251] sm:$0x1] %v360
      %vm362 = vcmask 261120
      %v363 = vsel %vm362, %v318, 0.0
      %364 = vadd.xlane.f32.xlu0 %v363
      %v365 = vpop.xlane.xlu0 %364
      %v366 = vsel %vm362, %v319, 0.0
      %367 = vadd.xlane.f32.xlu0 %v366
      %v368 = vpop.xlane.xlu0 %367
      %v369 = vsel %vm362, %v320, 0.0
      %370 = vadd.xlane.f32.xlu0 %v369
      %v371 = vpop.xlane.xlu0 %370
      %v372 = vsel %vm362, %v321, 0.0
      %373 = vadd.xlane.f32.xlu0 %v372
      %v374 = vpop.xlane.xlu0 %373
      %v375 = vsel %vm362, %v322, 0.0
      %376 = vadd.xlane.f32.xlu0 %v375
      %v377 = vpop.xlane.xlu0 %376
      %v378 = vsel %vm362, %v323, 0.0
      %379 = vadd.xlane.f32.xlu0 %v378
      %v380 = vpop.xlane.xlu0 %379
      %v381 = vsel %vm362, %v324, 0.0
      %382 = vadd.xlane.f32.xlu0 %v381
      %v383 = vpop.xlane.xlu0 %382
      %v384 = vsel %vm362, %v325, 0.0
      %385 = vadd.xlane.f32.xlu0 %v384
      %v386 = vpop.xlane.xlu0 %385
      %v387 = vsel %vm362, %v326, 0.0
      %388 = vadd.xlane.f32.xlu0 %v387
      %v389 = vpop.xlane.xlu0 %388
      %v390 = vsel %vm362, %v327, 0.0
      %391 = vadd.xlane.f32.xlu0 %v390
      %v392 = vpop.xlane.xlu0 %391
      %v393 = vsel %vm362, %v328, 0.0
      %394 = vadd.xlane.f32.xlu0 %v393
      %v395 = vpop.xlane.xlu0 %394
      %v396 = vsel %vm362, %v329, 0.0
      %397 = vadd.xlane.f32.xlu0 %v396
      %v398 = vpop.xlane.xlu0 %397
      %v399 = vsel %vm362, %v330, 0.0
      %400 = vadd.xlane.f32.xlu0 %v399
      %v401 = vpop.xlane.xlu0 %400
      %v402 = vsel %vm362, %v331, 0.0
      %403 = vadd.xlane.f32.xlu0 %v402
      %v404 = vpop.xlane.xlu0 %403
      %v405 = vsel %vm362, %v332, 0.0
      %406 = vadd.xlane.f32.xlu0 %v405
      %v407 = vpop.xlane.xlu0 %406
      %v408 = vsel %vm362, %v333, 0.0
      %409 = vadd.xlane.f32.xlu0 %v408
      %v410 = vpop.xlane.xlu0 %409
      %v411 = vsel %vm362, %v334, 0.0
      %412 = vadd.xlane.f32.xlu0 %v411
      %v413 = vpop.xlane.xlu0 %412
      %v414 = vsel %vm362, %v335, 0.0
      %415 = vadd.xlane.f32.xlu0 %v414
      %v416 = vpop.xlane.xlu0 %415
      %v417 = vsel %vm362, %v336, 0.0
      %418 = vadd.xlane.f32.xlu0 %v417
      %v419 = vpop.xlane.xlu0 %418
      %v420 = vsel %vm362, %v337, 0.0
      %421 = vadd.xlane.f32.xlu0 %v420
      %v422 = vpop.xlane.xlu0 %421
      %v423 = vmul.f32 %v365, %v342
      %v424 = vmul.f32 %v368, %v342
      %v425 = vmul.f32 %v371, %v342
      %v426 = vmul.f32 %v374, %v342
      %v427 = vmul.f32 %v377, %v342
      %v428 = vmul.f32 %v380, %v342
      %v429 = vmul.f32 %v383, %v342
      %v430 = vmul.f32 %v386, %v342
      %v431 = vmul.f32 %v389, %v342
      %v432 = vmul.f32 %v392, %v342
      %v433 = vmul.f32 %v395, %v342
      %v434 = vmul.f32 %v398, %v342
      %v435 = vmul.f32 %v401, %v342
      %v436 = vmul.f32 %v404, %v342
      %v437 = vmul.f32 %v407, %v342
      %v438 = vmul.f32 %v410, %v342
      %v439 = vmul.f32 %v413, %v342
      %v440 = vmul.f32 %v416, %v342
      %v441 = vmul.f32 %v419, %v342
      %v442 = vmul.f32 %v422, %v342
      %v443 = vsub.f32 %v318, %v423
      %v444 = vsub.f32 %v319, %v424
      %v445 = vsub.f32 %v320, %v425
      %v446 = vsub.f32 %v321, %v426
      %v447 = vsub.f32 %v322, %v427
      %v448 = vsub.f32 %v323, %v428
      %v449 = vsub.f32 %v324, %v429
      %v450 = vsub.f32 %v325, %v430
      %v451 = vsub.f32 %v326, %v431
      %v452 = vsub.f32 %v327, %v432
      %v453 = vsub.f32 %v328, %v433
      %v454 = vsub.f32 %v329, %v434
      %v455 = vsub.f32 %v330, %v435
      %v456 = vsub.f32 %v331, %v436
      %v457 = vsub.f32 %v332, %v437
      %v458 = vsub.f32 %v333, %v438
      %v459 = vsub.f32 %v334, %v439
      %v460 = vsub.f32 %v335, %v440
      %v461 = vsub.f32 %v336, %v441
      %v462 = vsub.f32 %v337, %v442
      %v463 = vmul.f32 %v443, %v443
      %v464 = vmul.f32 %v444, %v444
      %v465 = vmul.f32 %v445, %v445
      %v466 = vmul.f32 %v446, %v446
      %v467 = vmul.f32 %v447, %v447
      %v468 = vmul.f32 %v448, %v448
      %v469 = vmul.f32 %v449, %v449
      %v470 = vmul.f32 %v450, %v450
      %v471 = vmul.f32 %v451, %v451
      %v472 = vmul.f32 %v452, %v452
      %v473 = vmul.f32 %v453, %v453
      %v474 = vmul.f32 %v454, %v454
      %v475 = vmul.f32 %v455, %v455
      %v476 = vmul.f32 %v456, %v456
      %v477 = vmul.f32 %v457, %v457
      %v478 = vmul.f32 %v458, %v458
      %v479 = vmul.f32 %v459, %v459
      %v480 = vmul.f32 %v460, %v460
      %v481 = vmul.f32 %v461, %v461
      %v482 = vmul.f32 %v462, %v462
      %v483 = vsel %vm362, %v463, 0.0
      %484 = vadd.xlane.f32.xlu0 %v483
      %v485 = vpop.xlane.xlu0 %484
      %v486 = vsel %vm362, %v464, 0.0
      %487 = vadd.xlane.f32.xlu0 %v486
      %v488 = vpop.xlane.xlu0 %487
      %v489 = vsel %vm362, %v465, 0.0
      %490 = vadd.xlane.f32.xlu0 %v489
      %v491 = vpop.xlane.xlu0 %490
      %v492 = vsel %vm362, %v466, 0.0
      %493 = vadd.xlane.f32.xlu0 %v492
      %v494 = vpop.xlane.xlu0 %493
      %v495 = vsel %vm362, %v467, 0.0
      %496 = vadd.xlane.f32.xlu0 %v495
      %v497 = vpop.xlane.xlu0 %496
      %v498 = vsel %vm362, %v468, 0.0
      %499 = vadd.xlane.f32.xlu0 %v498
      %v500 = vpop.xlane.xlu0 %499
      %v501 = vsel %vm362, %v469, 0.0
      %502 = vadd.xlane.f32.xlu0 %v501
      %v503 = vpop.xlane.xlu0 %502
      %v504 = vsel %vm362, %v470, 0.0
      %505 = vadd.xlane.f32.xlu0 %v504
      %v506 = vpop.xlane.xlu0 %505
      %v507 = vsel %vm362, %v471, 0.0
      %508 = vadd.xlane.f32.xlu0 %v507
      %v509 = vpop.xlane.xlu0 %508
      %v510 = vsel %vm362, %v472, 0.0
      %511 = vadd.xlane.f32.xlu0 %v510
      %v512 = vpop.xlane.xlu0 %511
      %v513 = vsel %vm362, %v473, 0.0
      %514 = vadd.xlane.f32.xlu0 %v513
      %v515 = vpop.xlane.xlu0 %514
      %v516 = vsel %vm362, %v474, 0.0
      %517 = vadd.xlane.f32.xlu0 %v516
      %v518 = vpop.xlane.xlu0 %517
      %v519 = vsel %vm362, %v475, 0.0
      %520 = vadd.xlane.f32.xlu0 %v519
      %v521 = vpop.xlane.xlu0 %520
      %v522 = vsel %vm362, %v476, 0.0
      %523 = vadd.xlane.f32.xlu0 %v522
      %v524 = vpop.xlane.xlu0 %523
      %v525 = vsel %vm362, %v477, 0.0
      %526 = vadd.xlane.f32.xlu0 %v525
      %v527 = vpop.xlane.xlu0 %526
      %v528 = vsel %vm362, %v478, 0.0
      %529 = vadd.xlane.f32.xlu0 %v528
      %v530 = vpop.xlane.xlu0 %529
      %v531 = vsel %vm362, %v479, 0.0
      %532 = vadd.xlane.f32.xlu0 %v531
      %v533 = vpop.xlane.xlu0 %532
      %v534 = vsel %vm362, %v480, 0.0
      %535 = vadd.xlane.f32.xlu0 %v534
      %v536 = vpop.xlane.xlu0 %535
      %v537 = vsel %vm362, %v481, 0.0
      %538 = vadd.xlane.f32.xlu0 %v537
      %v539 = vpop.xlane.xlu0 %538
      %v540 = vsel %vm362, %v482, 0.0
      %541 = vadd.xlane.f32.xlu0 %v540
      %v542 = vpop.xlane.xlu0 %541
      %v543 = vmul.f32 %v485, %v342
      %v544 = vmul.f32 %v488, %v342
      %v545 = vmul.f32 %v491, %v342
      %v546 = vmul.f32 %v494, %v342
      %v547 = vmul.f32 %v497, %v342
      %v548 = vmul.f32 %v500, %v342
      %v549 = vmul.f32 %v503, %v342
      %v550 = vmul.f32 %v506, %v342
      %v551 = vmul.f32 %v509, %v342
      %v552 = vmul.f32 %v512, %v342
      %v553 = vmul.f32 %v515, %v342
      %v554 = vmul.f32 %v518, %v342
      %v555 = vmul.f32 %v521, %v342
      %v556 = vmul.f32 %v524, %v342
      %v557 = vmul.f32 %v527, %v342
      %v558 = vmul.f32 %v530, %v342
      %v559 = vmul.f32 %v533, %v342
      %v560 = vmul.f32 %v536, %v342
      %v561 = vmul.f32 %v539, %v342
      %v562 = vmul.f32 %v542, %v342
      %v563 = vadd.f32 %v543, 1e-05
      %v564 = vadd.f32 %v544, 1e-05
      %v565 = vadd.f32 %v545, 1e-05
      %v566 = vadd.f32 %v546, 1e-05
      %v567 = vadd.f32 %v547, 1e-05
      %v568 = vadd.f32 %v548, 1e-05
      %v569 = vadd.f32 %v549, 1e-05
      %v570 = vadd.f32 %v550, 1e-05
      %v571 = vadd.f32 %v551, 1e-05
      %v572 = vadd.f32 %v552, 1e-05
      %v573 = vadd.f32 %v553, 1e-05
      %v574 = vadd.f32 %v554, 1e-05
      %v575 = vadd.f32 %v555, 1e-05
      %v576 = vadd.f32 %v556, 1e-05
      %v577 = vadd.f32 %v557, 1e-05
      %v578 = vadd.f32 %v558, 1e-05
      %v579 = vadd.f32 %v559, 1e-05
      %v580 = vadd.f32 %v560, 1e-05
      %v581 = vadd.f32 %v561, 1e-05
      %v582 = vadd.f32 %v562, 1e-05
      %v583 = vrsqrt.pop %v563
      %v584 = vrsqrt.pop %v564
      %v585 = vrsqrt.pop %v565
      %v586 = vrsqrt.pop %v566
      %v587 = vrsqrt.pop %v567
      %v588 = vrsqrt.pop %v568
      %v589 = vrsqrt.pop %v569
      %v590 = vrsqrt.pop %v570
      %v591 = vrsqrt.pop %v571
      %v592 = vrsqrt.pop %v572
      %v593 = vrsqrt.pop %v573
      %v594 = vrsqrt.pop %v574
      %v595 = vrsqrt.pop %v575
      %v596 = vrsqrt.pop %v576
      %v597 = vrsqrt.pop %v577
      %v598 = vrsqrt.pop %v578
      %v599 = vrsqrt.pop %v579
      %v600 = vrsqrt.pop %v580
      %v601 = vrsqrt.pop %v581
      %v602 = vrsqrt.pop %v582
      %v603 = vmul.f32 %v443, %v583
      %v604 = vmul.f32 %v444, %v584
      %v605 = vmul.f32 %v445, %v585
      %v606 = vmul.f32 %v446, %v586
      %v607 = vmul.f32 %v447, %v587
      %v608 = vmul.f32 %v448, %v588
      %v609 = vmul.f32 %v449, %v589
      %v610 = vmul.f32 %v450, %v590
      %v611 = vmul.f32 %v451, %v591
      %v612 = vmul.f32 %v452, %v592
      %v613 = vmul.f32 %v453, %v593
      %v614 = vmul.f32 %v454, %v594
      %v615 = vmul.f32 %v455, %v595
      %v616 = vmul.f32 %v456, %v596
      %v617 = vmul.f32 %v457, %v597
      %v618 = vmul.f32 %v458, %v598
      %v619 = vmul.f32 %v459, %v599
      %v620 = vmul.f32 %v460, %v600
      %v621 = vmul.f32 %v461, %v601
      %v622 = vmul.f32 %v462, %v602
      %v624 = vlaneseq
      %v625 = vshrl.u32 %v624, 7
      %v626 = vsub.s32 0, %v625
      %v627 = vrot.slane %v253, %v626
      %v629 = vmul.f32 %v603, %v627
      %v630 = vmul.f32 %v604, %v627
      %v631 = vmul.f32 %v605, %v627
      %v632 = vmul.f32 %v606, %v627
      %v633 = vmul.f32 %v607, %v627
      %v634 = vmul.f32 %v608, %v627
      %v635 = vmul.f32 %v609, %v627
      %v636 = vmul.f32 %v610, %v627
      %v637 = vmul.f32 %v611, %v627
      %v638 = vmul.f32 %v612, %v627
      %v639 = vmul.f32 %v613, %v627
      %v640 = vmul.f32 %v614, %v627
      %v641 = vmul.f32 %v615, %v627
      %v642 = vmul.f32 %v616, %v627
      %v643 = vmul.f32 %v617, %v627
      %v644 = vmul.f32 %v618, %v627
      %v645 = vmul.f32 %v619, %v627
      %v646 = vmul.f32 %v620, %v627
      %v647 = vmul.f32 %v621, %v627
      %v648 = vmul.f32 %v622, %v627
      %v650 = vlaneseq
      %v651 = vshrl.u32 %v650, 7
      %v652 = vsub.s32 0, %v651
      %v653 = vrot.slane %v254, %v652
      %v655 = vadd.f32 %v629, %v653
      %v656 = vadd.f32 %v630, %v653
      %v657 = vadd.f32 %v631, %v653
      %v658 = vadd.f32 %v632, %v653
      %v659 = vadd.f32 %v633, %v653
      %v660 = vadd.f32 %v634, %v653
      %v661 = vadd.f32 %v635, %v653
      %v662 = vadd.f32 %v636, %v653
      %v663 = vadd.f32 %v637, %v653
      %v664 = vadd.f32 %v638, %v653
      %v665 = vadd.f32 %v639, %v653
      %v666 = vadd.f32 %v640, %v653
      %v667 = vadd.f32 %v641, %v653
      %v668 = vadd.f32 %v642, %v653
      %v669 = vadd.f32 %v643, %v653
      %v670 = vadd.f32 %v644, %v653
      %v671 = vadd.f32 %v645, %v653
      %v672 = vadd.f32 %v646, %v653
      %v673 = vadd.f32 %v647, %v653
      %v674 = vadd.f32 %v648, %v653
      %v675 = vpack.c.bf16 %v656, %v655
      %v676 = vpack.c.bf16 %v658, %v657
      %v677 = vpack.c.bf16 %v660, %v659
      %v678 = vpack.c.bf16 %v662, %v661
      %v679 = vpack.c.bf16 %v664, %v663
      %v680 = vpack.c.bf16 %v666, %v665
      %v681 = vpack.c.bf16 %v668, %v667
      %v682 = vpack.c.bf16 %v670, %v669
      %v683 = vpack.c.bf16 %v672, %v671
      %v684 = vpack.c.bf16 %v674, %v673
      %v695 = vunpack.c.l.b16 %v675
      %v696 = vunpack.c.h.b16 %v675
      %v697 = vunpack.c.l.b16 %v676
      %v698 = vunpack.c.h.b16 %v676
      %v699 = vunpack.c.l.b16 %v677
      %v700 = vunpack.c.h.b16 %v677
      %v701 = vunpack.c.l.b16 %v678
      %v702 = vunpack.c.h.b16 %v678
      %v703 = vunpack.c.l.b16 %v679
      %v704 = vunpack.c.h.b16 %v679
      %v705 = vunpack.c.l.b16 %v680
      %v706 = vunpack.c.h.b16 %v680
      %v707 = vunpack.c.l.b16 %v681
      %v708 = vunpack.c.h.b16 %v681
      %v709 = vunpack.c.l.b16 %v682
      %v710 = vunpack.c.h.b16 %v682
      %v711 = vunpack.c.l.b16 %v683
      %v712 = vunpack.c.h.b16 %v683
      %v713 = vunpack.c.l.b16 %v684
      %v714 = vunpack.c.h.b16 %v684
      %v715 = vpack.c.b16 %v695, %v695
      %v716 = vpack.c.b16 %v696, %v696
      %v717 = vpack.c.b16 %v697, %v697
      %v718 = vpack.c.b16 %v698, %v698
      %v719 = vpack.c.b16 %v699, %v699
      %v720 = vpack.c.b16 %v700, %v700
      %v721 = vpack.c.b16 %v701, %v701
      %v722 = vpack.c.b16 %v702, %v702
      %v723 = vpack.c.b16 %v703, %v703
      %v724 = vpack.c.b16 %v704, %v704
      %v725 = vpack.c.b16 %v705, %v705
      %v726 = vpack.c.b16 %v706, %v706
      %v727 = vpack.c.b16 %v707, %v707
      %v728 = vpack.c.b16 %v708, %v708
      %v729 = vpack.c.b16 %v709, %v709
      %v730 = vpack.c.b16 %v710, %v710
      %v731 = vpack.c.b16 %v711, %v711
      %v732 = vpack.c.b16 %v712, %v712
      %v733 = vpack.c.b16 %v713, %v713
      %v734 = vpack.c.b16 %v714, %v714
      %vm735 = vsmask.f32 4368
      %vm736 = vmor %vm357, %vm735
      %v738 = vshrl.u32 %v715, 16
      %v740 = vrot.slane %v738, 7
      %v741 = vshll.u32 %v715, 16
      %v743 = vor.u32 %v740, %v741
      %v744 = vrot.slane %v740, 4
      %v746 = vshrl.u32 %v716, 16
      %v748 = vrot.slane %v746, 7
      %v749 = vshll.u32 %v716, 16
      %v751 = vor.u32 %v748, %v749
      %v752 = vsel %vm736, %v744, %v751
      %v753 = vrot.slane %v748, 4
      %v755 = vshrl.u32 %v717, 16
      %v757 = vrot.slane %v755, 7
      %v758 = vshll.u32 %v717, 16
      %v760 = vor.u32 %v757, %v758
      %v761 = vsel %vm736, %v753, %v760
      %v762 = vrot.slane %v757, 4
      %v764 = vshrl.u32 %v718, 16
      %v766 = vrot.slane %v764, 7
      %v767 = vshll.u32 %v718, 16
      %v769 = vor.u32 %v766, %v767
      %v770 = vsel %vm736, %v762, %v769
      %v771 = vrot.slane %v766, 4
      %v773 = vshrl.u32 %v719, 16
      %v775 = vrot.slane %v773, 7
      %v776 = vshll.u32 %v719, 16
      %v778 = vor.u32 %v775, %v776
      %v779 = vsel %vm736, %v771, %v778
      %v780 = vrot.slane %v775, 4
      %v782 = vshrl.u32 %v720, 16
      %v784 = vrot.slane %v782, 7
      %v785 = vshll.u32 %v720, 16
      %v787 = vor.u32 %v784, %v785
      %v788 = vsel %vm736, %v780, %v787
      %v789 = vrot.slane %v784, 4
      %v791 = vshrl.u32 %v721, 16
      %v793 = vrot.slane %v791, 7
      %v794 = vshll.u32 %v721, 16
      %v796 = vor.u32 %v793, %v794
      %v797 = vsel %vm736, %v789, %v796
      %v798 = vrot.slane %v793, 4
      %v800 = vshrl.u32 %v722, 16
      %v802 = vrot.slane %v800, 7
      %v803 = vshll.u32 %v722, 16
      %v805 = vor.u32 %v802, %v803
      %v806 = vsel %vm736, %v798, %v805
      %v807 = vrot.slane %v802, 4
      %v809 = vshrl.u32 %v723, 16
      %v811 = vrot.slane %v809, 7
      %v812 = vshll.u32 %v723, 16
      %v814 = vor.u32 %v811, %v812
      %v815 = vsel %vm736, %v807, %v814
      %v816 = vrot.slane %v811, 4
      %v818 = vshrl.u32 %v724, 16
      %v820 = vrot.slane %v818, 7
      %v821 = vshll.u32 %v724, 16
      %v823 = vor.u32 %v820, %v821
      %v824 = vsel %vm736, %v816, %v823
      %v825 = vrot.slane %v820, 4
      %v827 = vshrl.u32 %v725, 16
      %v829 = vrot.slane %v827, 7
      %v830 = vshll.u32 %v725, 16
      %v832 = vor.u32 %v829, %v830
      %v833 = vsel %vm736, %v825, %v832
      %v834 = vrot.slane %v829, 4
      %v836 = vshrl.u32 %v726, 16
      %v838 = vrot.slane %v836, 7
      %v839 = vshll.u32 %v726, 16
      %v841 = vor.u32 %v838, %v839
      %v842 = vsel %vm736, %v834, %v841
      %v843 = vrot.slane %v838, 4
      %v845 = vshrl.u32 %v727, 16
      %v847 = vrot.slane %v845, 7
      %v848 = vshll.u32 %v727, 16
      %v850 = vor.u32 %v847, %v848
      %v851 = vsel %vm736, %v843, %v850
      %v852 = vrot.slane %v847, 4
      %v854 = vshrl.u32 %v728, 16
      %v856 = vrot.slane %v854, 7
      %v857 = vshll.u32 %v728, 16
      %v859 = vor.u32 %v856, %v857
      %v860 = vsel %vm736, %v852, %v859
      %v861 = vrot.slane %v856, 4
      %v863 = vshrl.u32 %v729, 16
      %v865 = vrot.slane %v863, 7
      %v866 = vshll.u32 %v729, 16
      %v868 = vor.u32 %v865, %v866
      %v869 = vsel %vm736, %v861, %v868
      %v870 = vrot.slane %v865, 4
      %v872 = vshrl.u32 %v730, 16
      %v874 = vrot.slane %v872, 7
      %v875 = vshll.u32 %v730, 16
      %v877 = vor.u32 %v874, %v875
      %v878 = vsel %vm736, %v870, %v877
      %v879 = vrot.slane %v874, 4
      %v881 = vshrl.u32 %v731, 16
      %v883 = vrot.slane %v881, 7
      %v884 = vshll.u32 %v731, 16
      %v886 = vor.u32 %v883, %v884
      %v887 = vsel %vm736, %v879, %v886
      %v888 = vrot.slane %v883, 4
      %v890 = vshrl.u32 %v732, 16
      %v892 = vrot.slane %v890, 7
      %v893 = vshll.u32 %v732, 16
      %v895 = vor.u32 %v892, %v893
      %v896 = vsel %vm736, %v888, %v895
      %v897 = vrot.slane %v892, 4
      %v899 = vshrl.u32 %v733, 16
      %v901 = vrot.slane %v899, 7
      %v902 = vshll.u32 %v733, 16
      %v904 = vor.u32 %v901, %v902
      %v905 = vsel %vm736, %v897, %v904
      %v906 = vrot.slane %v901, 4
      %v908 = vshrl.u32 %v734, 16
      %v910 = vrot.slane %v908, 7
      %v911 = vshll.u32 %v734, 16
      %v913 = vor.u32 %v910, %v911
      %v914 = vsel %vm736, %v906, %v913
      %v915 = vrot.slane %v910, 4
      %vm937 = vcmask 257024
      %vm938 = vsmask.f32 7938
      %vm939 = vmand %vm937, %vm938
      %v940 = vld [vmem:[%s251] sm:$0xf]
      %v941 = vsel %vm939, %v743, %v940
      %942 = vst [vmem:[%s251] sm:$0xf] %v941
      %vm943 = vcmask 257024
      %944 = vst.msk [vmem:[%s251 + $0x4] sm:$0xf] %vm943, %v752
      %945 = vst.msk [vmem:[%s251 + $0x8] sm:$0xf] %vm943, %v761
      %946 = vst.msk [vmem:[%s251 + $0xc] sm:$0xf] %vm943, %v770
      %947 = vst.msk [vmem:[%s251 + $0x10] sm:$0xf] %vm943, %v779
      %948 = vst.msk [vmem:[%s251 + $0x14] sm:$0xf] %vm943, %v788
      %949 = vst.msk [vmem:[%s251 + $0x18] sm:$0xf] %vm943, %v797
      %950 = vst.msk [vmem:[%s251 + $0x1c] sm:$0xf] %vm943, %v806
      %951 = vst.msk [vmem:[%s251 + $0x20] sm:$0xf] %vm943, %v815
      %952 = vst.msk [vmem:[%s251 + $0x24] sm:$0xf] %vm943, %v824
      %953 = vst.msk [vmem:[%s251 + $0x28] sm:$0xf] %vm943, %v833
      %954 = vst.msk [vmem:[%s251 + $0x2c] sm:$0xf] %vm943, %v842
      %955 = vst.msk [vmem:[%s251 + $0x30] sm:$0xf] %vm943, %v851
      %956 = vst.msk [vmem:[%s251 + $0x34] sm:$0xf] %vm943, %v860
      %957 = vst.msk [vmem:[%s251 + $0x38] sm:$0xf] %vm943, %v869
      %958 = vst.msk [vmem:[%s251 + $0x3c] sm:$0xf] %vm943, %v878
      %959 = vst.msk [vmem:[%s251 + $0x40] sm:$0xf] %vm943, %v887
      %960 = vst.msk [vmem:[%s251 + $0x44] sm:$0xf] %vm943, %v896
      %961 = vst.msk [vmem:[%s251 + $0x48] sm:$0xf] %vm943, %v905
      %962 = vst.msk [vmem:[%s251 + $0x4c] sm:$0xf] %vm943, %v914
      %v963 = vld [vmem:[%s251 + $0x50] sm:$0x1]
      %v964 = vsel %vm358, %v915, %v963
      %965 = vst [vmem:[%s251 + $0x50] sm:$0x1] %v964
      %v966 = vld [vmem:[%s251 + $0x50] sm:$0xf]
      %v967 = vsel %vm939, 0, %v966
      %968 = vst [vmem:[%s251 + $0x50] sm:$0xf] %v967
      %p969 = scmp.lt.s32.totalorder %s17, 1
      %s970 = scalar_select %p969, %s17, 1
      %s971 = smul.addr %s970, 21
      %s972 = smul.addr %s971, 4
      %s973 = scalar_lea.vmem %s6, %s972
      // Predicated region
      $region45: #{vit_forward.14} parent=43 // pred_check
        %p974 = pneg %p166
      $region46: #{vit_forward.14} parent=43 // pred_check_branch
        %976 = sbr.rel (%p974) target = $region48
      $region47: #{vit_forward.14} parent=43 // pred_region
        _
      $region48: #{vit_forward.14} parent=43 // pred_fallthru
        _
    $region44: #{vit_forward.14} parent=5 // pred_fallthru
      _
    %p977 = scmp.le.s32.totalorder 2, %s12
    // Predicated region
    $region49: #{vit_forward.14} parent=5 // pred_check
      %p978 = pneg %p977
    $region50: #{vit_forward.14} parent=5 // pred_check_branch
      %980 = sbr.rel (%p978) target = $region52
    $region51: #{vit_forward.14} parent=5 // pred_region
      %s981 = ssub.s32 %s12, 2
      // Predicated region
      $region53: #{vit_forward.14} parent=51 // pred_check
        %p982 = pneg %p172
      $region54: #{vit_forward.14} parent=51 // pred_check_branch
        %984 = sbr.rel (%p982) target = $region56
      $region55: #{vit_forward.14} parent=51 // pred_region
        %p985 = scmp.lt.s32.totalorder %s18, 1
        %s986 = scalar_select %p985, %s18, 1
        %s987 = smul.addr %s986, 21
        %s988 = smul.addr %s987, 4
        %s989 = scalar_lea.vmem %s6, %s988
      $region56: #{vit_forward.14} parent=51 // pred_fallthru
        _
    $region52: #{vit_forward.14} parent=5 // pred_fallthru
      _
  $region6: #{vit_forward.14} parent=0 // loop_footer
    %s16 = sadd.s32 1, %s12
  $region7: #{vit_forward.14} parent=0 // loop_footer_branch
    %11 = sbr.rel target = $region3
  $region8: #{vit_forward.14} parent=0 // loop_exit
    _

// kernel: vit_forward.15
$region0: #{vit_forward.15}
  #allocation0 [shape = 'u32[]', space=smem, size = 0x4, offset = 0x4, fixed_abs, tag = 'smem constant byte address 0x4 - core index']
  #allocation1 [shape = 'u32[144,128]{1,0:T(1,128)}', space=vmem, size = 0x12000, scoped, tag = 'internal scratch']
  %s0 = inlined_call_operand.vmem [shape: bf16[336,32], index: 0, kind: input, shape index: {}]
  %s1 = inlined_call_operand.vmem [shape: bf16[32,96], index: 1, kind: input, shape index: {}]
  %s2 = inlined_call_operand.vmem [shape: f32[1,32], index: 2, kind: input, shape index: {}]
  %s3 = inlined_call_operand.vmem [shape: f32[1,32], index: 3, kind: input, shape index: {}]
  %s4 = inlined_call_operand.vmem [shape: f32[1,96], index: 4, kind: input, shape index: {}]
  %s5 = inlined_call_operand.vmem [shape: bf16[336,96], index: 5, kind: output, shape index: {}]
  %s6 = sld [smem:[#allocation0]]
  $region53: #{vit_forward.15} parent=0
    _
  %s8 = ssub.s32 1, %s6
  %s9 = scalar_select 0, %s8, %s6
  loop: start=0, step=1, limit=4
  $region2: #{vit_forward.15} parent=0 // loop_pre_header
    _
  $region3: #{vit_forward.15} parent=0 // loop_header
    %s11 = sphi 0, %s15
    %p12 = scmp.ge.s32.totalorder %s11, 4
    %s21 = sphi 0, %s23
    %s24 = sphi 0, %s21
    %s25 = sphi 0, %s24
    %s41 = sphi 0, %s25
    %s45 = sphi 0, %s45
    %s47 = sphi 0, %s45
    %s48 = sphi 0, %s47
    %s62 = sphi 0, %s48
    %s66 = sphi 0, %s66
    %s68 = sphi 0, %s66
    %s69 = sphi 0, %s68
    %s83 = sphi 0, %s69
    %s87 = sphi 0, %s87
    %s89 = sphi 0, %s87
    %s90 = sphi 0, %s89
    %s104 = sphi 0, %s90
    %s108 = sphi 0, %s108
    %s110 = sphi 0, %s108
    %s111 = sphi 0, %s110
    %s125 = sphi 0, %s111
    %s131 = sphi 0, %s133
    %s134 = sphi 0, %s131
    %s135 = sphi 0, %s134
    %s151 = sphi 0, %s135
  $region4: #{vit_forward.15} parent=0 // loop_header_branch
    %14 = sbr.rel (%p12) target = $region8
  $region5: #{vit_forward.15} parent=0 // loop_body
    %s16 = ssub.s32 %s11, 1
    %s17 = ssub.s32 %s11, 2
    %s18 = sadd.s32 %s11, 1
    %s19 = ssub.s32 %s11, %s18
    %p20 = scmp.eq.s32.totalorder %s19, 0
    %s22 = sadd.s32 %s21, 1
    %s23 = scalar_select %p20, %s21, %s22
    %p26 = pneg %p20
    %p27 = scmp.eq.s32.totalorder %s11, 1
    %p28 = por %p26, %p27
    %p29 = scmp.ne.s32.totalorder %s21, %s24
    %p30 = scmp.eq.s32.totalorder %s11, 0
    %p31 = por %p29, %p30
    %p32 = scmp.ne.s32.totalorder %s21, %s24
    %p33 = scmp.eq.s32.totalorder %s16, 1
    %p34 = por %p32, %p33
    %p35 = scmp.ne.s32.totalorder %s24, %s25
    %p36 = scmp.eq.s32.totalorder %s16, 0
    %p37 = por %p35, %p36
    %p38 = scmp.ne.s32.totalorder %s24, %s25
    %p39 = scmp.eq.s32.totalorder %s17, 1
    %p40 = por %p38, %p39
    %p42 = scmp.ne.s32.totalorder %s25, %s41
    %p43 = scmp.eq.s32.totalorder %s17, 0
    %p44 = por %p42, %p43
    %s46 = sadd.s32 %s45, 1
    %p49 = scmp.eq.s32.totalorder %s11, 1
    %p50 = scmp.ne.s32.totalorder %s45, %s47
    %p51 = scmp.eq.s32.totalorder %s11, 0
    %p52 = por %p50, %p51
    %p53 = scmp.ne.s32.totalorder %s45, %s47
    %p54 = scmp.eq.s32.totalorder %s16, 1
    %p55 = por %p53, %p54
    %p56 = scmp.ne.s32.totalorder %s47, %s48
    %p57 = scmp.eq.s32.totalorder %s16, 0
    %p58 = por %p56, %p57
    %p59 = scmp.ne.s32.totalorder %s47, %s48
    %p60 = scmp.eq.s32.totalorder %s17, 1
    %p61 = por %p59, %p60
    %p63 = scmp.ne.s32.totalorder %s48, %s62
    %p64 = scmp.eq.s32.totalorder %s17, 0
    %p65 = por %p63, %p64
    %s67 = sadd.s32 %s66, 1
    %p70 = scmp.eq.s32.totalorder %s11, 1
    %p71 = scmp.ne.s32.totalorder %s66, %s68
    %p72 = scmp.eq.s32.totalorder %s11, 0
    %p73 = por %p71, %p72
    %p74 = scmp.ne.s32.totalorder %s66, %s68
    %p75 = scmp.eq.s32.totalorder %s16, 1
    %p76 = por %p74, %p75
    %p77 = scmp.ne.s32.totalorder %s68, %s69
    %p78 = scmp.eq.s32.totalorder %s16, 0
    %p79 = por %p77, %p78
    %p80 = scmp.ne.s32.totalorder %s68, %s69
    %p81 = scmp.eq.s32.totalorder %s17, 1
    %p82 = por %p80, %p81
    %p84 = scmp.ne.s32.totalorder %s69, %s83
    %p85 = scmp.eq.s32.totalorder %s17, 0
    %p86 = por %p84, %p85
    %s88 = sadd.s32 %s87, 1
    %p91 = scmp.eq.s32.totalorder %s11, 1
    %p92 = scmp.ne.s32.totalorder %s87, %s89
    %p93 = scmp.eq.s32.totalorder %s11, 0
    %p94 = por %p92, %p93
    %p95 = scmp.ne.s32.totalorder %s87, %s89
    %p96 = scmp.eq.s32.totalorder %s16, 1
    %p97 = por %p95, %p96
    %p98 = scmp.ne.s32.totalorder %s89, %s90
    %p99 = scmp.eq.s32.totalorder %s16, 0
    %p100 = por %p98, %p99
    %p101 = scmp.ne.s32.totalorder %s89, %s90
    %p102 = scmp.eq.s32.totalorder %s17, 1
    %p103 = por %p101, %p102
    %p105 = scmp.ne.s32.totalorder %s90, %s104
    %p106 = scmp.eq.s32.totalorder %s17, 0
    %p107 = por %p105, %p106
    %s109 = sadd.s32 %s108, 1
    %p112 = scmp.eq.s32.totalorder %s11, 1
    %p113 = scmp.ne.s32.totalorder %s108, %s110
    %p114 = scmp.eq.s32.totalorder %s11, 0
    %p115 = por %p113, %p114
    %p116 = scmp.ne.s32.totalorder %s108, %s110
    %p117 = scmp.eq.s32.totalorder %s16, 1
    %p118 = por %p116, %p117
    %p119 = scmp.ne.s32.totalorder %s110, %s111
    %p120 = scmp.eq.s32.totalorder %s16, 0
    %p121 = por %p119, %p120
    %p122 = scmp.ne.s32.totalorder %s110, %s111
    %p123 = scmp.eq.s32.totalorder %s17, 1
    %p124 = por %p122, %p123
    %p126 = scmp.ne.s32.totalorder %s111, %s125
    %p127 = scmp.eq.s32.totalorder %s17, 0
    %p128 = por %p126, %p127
    %s129 = ssub.s32 %s11, %s18
    %p130 = scmp.eq.s32.totalorder %s129, 0
    %s132 = sadd.s32 %s131, 1
    %s133 = scalar_select %p130, %s131, %s132
    %p136 = pneg %p130
    %p137 = scmp.eq.s32.totalorder %s11, 1
    %p138 = por %p136, %p137
    %p139 = scmp.ne.s32.totalorder %s131, %s134
    %p140 = scmp.eq.s32.totalorder %s11, 0
    %p141 = por %p139, %p140
    %p142 = scmp.ne.s32.totalorder %s131, %s134
    %p143 = scmp.eq.s32.totalorder %s16, 1
    %p144 = por %p142, %p143
    %p145 = scmp.ne.s32.totalorder %s134, %s135
    %p146 = scmp.eq.s32.totalorder %s16, 0
    %p147 = por %p145, %p146
    %p148 = scmp.ne.s32.totalorder %s134, %s135
    %p149 = scmp.eq.s32.totalorder %s17, 1
    %p150 = por %p148, %p149
    %p152 = scmp.ne.s32.totalorder %s135, %s151
    %p153 = scmp.eq.s32.totalorder %s17, 0
    %p154 = por %p152, %p153
    %p155 = scmp.le.s32.totalorder 1, %s11
    %p156 = scmp.lt.s32.totalorder %s11, 3
    %p157 = pnand %p155, %p156
    %p158 = pneg %p157
    // Predicated region
    $region9: #{vit_forward.15} parent=5 // pred_check
      _
    $region10: #{vit_forward.15} parent=5 // pred_check_branch
      %160 = sbr.rel (%p157) target = $region12
    $region11: #{vit_forward.15} parent=5 // pred_region
      %s161 = ssub.s32 %s11, 1
      // Predicated region
      $region13: #{vit_forward.15} parent=11 // pred_check
        %p162 = pneg %p58
      $region14: #{vit_forward.15} parent=11 // pred_check_branch
        %164 = sbr.rel (%p162) target = $region16
      $region15: #{vit_forward.15} parent=11 // pred_region
        _
      $region16: #{vit_forward.15} parent=11 // pred_fallthru
        _
      // Predicated region
      $region17: #{vit_forward.15} parent=11 // pred_check
        %p165 = pneg %p79
      $region18: #{vit_forward.15} parent=11 // pred_check_branch
        %167 = sbr.rel (%p165) target = $region20
      $region19: #{vit_forward.15} parent=11 // pred_region
        _
      $region20: #{vit_forward.15} parent=11 // pred_fallthru
        _
      // Predicated region
      $region21: #{vit_forward.15} parent=11 // pred_check
        %p168 = pneg %p100
      $region22: #{vit_forward.15} parent=11 // pred_check_branch
        %170 = sbr.rel (%p168) target = $region24
      $region23: #{vit_forward.15} parent=11 // pred_region
        _
      $region24: #{vit_forward.15} parent=11 // pred_fallthru
        _
      // Predicated region
      $region25: #{vit_forward.15} parent=11 // pred_check
        %p171 = pneg %p121
      $region26: #{vit_forward.15} parent=11 // pred_check_branch
        %173 = sbr.rel (%p171) target = $region28
      $region27: #{vit_forward.15} parent=11 // pred_region
        _
      $region28: #{vit_forward.15} parent=11 // pred_fallthru
        _
    $region12: #{vit_forward.15} parent=5 // pred_fallthru
      _
    %p174 = scmp.lt.s32.totalorder %s11, 2
    // Predicated region
    $region29: #{vit_forward.15} parent=5 // pred_check
      %p175 = pneg %p174
    $region30: #{vit_forward.15} parent=5 // pred_check_branch
      %177 = sbr.rel (%p175) target = $region32
    $region31: #{vit_forward.15} parent=5 // pred_region
      // Predicated region
      $region33: #{vit_forward.15} parent=31 // pred_check
        %p178 = pneg %p31
      $region34: #{vit_forward.15} parent=31 // pred_check_branch
        %180 = sbr.rel (%p178) target = $region36
      $region35: #{vit_forward.15} parent=31 // pred_region
        %s181 = smul.u32 21, %s11
        %p182 = scmp.lt.s32.totalorder %s181, 41
        %s183 = scalar_select %p182, %s181, 41
        %s184 = smul.addr %s183, 4
        %s185 = scalar_lea.vmem %s0, %s184
        %s186 = smul.u32 21, %s11
      $region36: #{vit_forward.15} parent=31 // pred_fallthru
        _
    $region32: #{vit_forward.15} parent=5 // pred_fallthru
      _
    %p187 = scmp.le.s32.totalorder 1, %s11
    %p188 = scmp.lt.s32.totalorder %s11, 3
    %p189 = pnand %p187, %p188
    %p190 = pneg %p189
    // Predicated region
    $region37: #{vit_forward.15} parent=5 // pred_check
      _
    $region38: #{vit_forward.15} parent=5 // pred_check_branch
      %192 = sbr.rel (%p189) target = $region40
    $region39: #{vit_forward.15} parent=5 // pred_region
      %s193 = ssub.s32 %s11, 1
      %s194 = smul.u32 21, %s16
      %p195 = scmp.lt.s32.totalorder %s194, 41
      %s196 = scalar_select %p195, %s194, 41
      %s197 = smul.addr %s196, 4
      %s198 = scalar_lea.vmem %s0, %s197
      %p199 = pneg %p37
      %p200 = pneg %p34
      %p201 = pneg %p58
      %p202 = pneg %p55
      %p203 = pneg %p79
      %p204 = pneg %p76
      %p205 = pneg %p100
      %p206 = pneg %p97
      %p207 = pneg %p121
      %p208 = pneg %p118
      %p209 = pneg %p147
      %p210 = pneg %p144
      %s211 = smul.u32 21, %s16
      %p212 = scmp.lt.s32.totalorder %s211, 41
      %s213 = scalar_select %p212, %s211, 41
      %s214 = smul.addr %s213, 4
      %s215 = scalar_lea.vmem %s5, %s214
      %s216 = smul.u32 21, %s16
      %p217 = scmp.lt.s32.totalorder %s216, 41
      %s218 = scalar_select %p217, %s216, 41
      %s219 = smul.addr %s218, 4
      %s220 = scalar_lea.vmem %s0, %s219
      %s221 = smul.u32 21, %s16
      %s222 = smul.u32 21, %s16
      %p223 = scmp.lt.s32.totalorder %s222, 41
      %s224 = scalar_select %p223, %s222, 41
      %s225 = smul.addr %s224, 4
      %s226 = scalar_lea.vmem %s5, %s225
      %s227 = smul.u32 21, %s16
      %v229 = vld [vmem:[%s220] sm:$0xf]
      %v230 = vld [vmem:[%s220 + $0x4] sm:$0xf]
      %v231 = vld [vmem:[%s220 + $0x8] sm:$0xf]
      %v232 = vld [vmem:[%s220 + $0xc] sm:$0xf]
      %v233 = vld [vmem:[%s220 + $0x10] sm:$0xf]
      %v234 = vld [vmem:[%s220 + $0x14] sm:$0xf]
      %v235 = vld [vmem:[%s220 + $0x18] sm:$0xf]
      %v236 = vld [vmem:[%s220 + $0x1c] sm:$0xf]
      %v237 = vld [vmem:[%s220 + $0x20] sm:$0xf]
      %v238 = vld [vmem:[%s220 + $0x24] sm:$0xf]
      %v239 = vld [vmem:[%s220 + $0x28] sm:$0xf]
      %v240 = vld [vmem:[%s220 + $0x2c] sm:$0xf]
      %v241 = vld [vmem:[%s220 + $0x30] sm:$0xf]
      %v242 = vld [vmem:[%s220 + $0x34] sm:$0xf]
      %v243 = vld [vmem:[%s220 + $0x38] sm:$0xf]
      %v244 = vld [vmem:[%s220 + $0x3c] sm:$0xf]
      %v245 = vld [vmem:[%s220 + $0x40] sm:$0xf]
      %v246 = vld [vmem:[%s220 + $0x44] sm:$0xf]
      %v247 = vld [vmem:[%s220 + $0x48] sm:$0xf]
      %v248 = vld [vmem:[%s220 + $0x4c] sm:$0xf]
      %v249 = vld [vmem:[%s220 + $0x50] sm:$0xf]
      %v250 = vunpack.c.l.bf16 %v229
      %v251 = vunpack.c.l.bf16 %v230
      %v252 = vunpack.c.l.bf16 %v231
      %v253 = vunpack.c.l.bf16 %v232
      %v254 = vunpack.c.l.bf16 %v233
      %v255 = vunpack.c.l.bf16 %v234
      %v256 = vunpack.c.l.bf16 %v235
      %v257 = vunpack.c.l.bf16 %v236
      %v258 = vunpack.c.l.bf16 %v237
      %v259 = vunpack.c.l.bf16 %v238
      %v260 = vunpack.c.l.bf16 %v239
      %v261 = vunpack.c.l.bf16 %v240
      %v262 = vunpack.c.l.bf16 %v241
      %v263 = vunpack.c.l.bf16 %v242
      %v264 = vunpack.c.l.bf16 %v243
      %v265 = vunpack.c.l.bf16 %v244
      %v266 = vunpack.c.l.bf16 %v245
      %v267 = vunpack.c.l.bf16 %v246
      %v268 = vunpack.c.l.bf16 %v247
      %v269 = vunpack.c.l.bf16 %v248
      %v270 = vunpack.c.l.bf16 %v249
      %vm271 = vcmask 261120
      %v272 = vsel %vm271, %v250, 0.0
      %273 = vadd.xlane.f32.xlu0 %v272
      %v274 = vpop.xlane.xlu0 %273
      %v275 = vsel %vm271, %v251, 0.0
      %276 = vadd.xlane.f32.xlu0 %v275
      %v277 = vpop.xlane.xlu0 %276
      %v278 = vsel %vm271, %v252, 0.0
      %279 = vadd.xlane.f32.xlu0 %v278
      %v280 = vpop.xlane.xlu0 %279
      %v281 = vsel %vm271, %v253, 0.0
      %282 = vadd.xlane.f32.xlu0 %v281
      %v283 = vpop.xlane.xlu0 %282
      %v284 = vsel %vm271, %v254, 0.0
      %285 = vadd.xlane.f32.xlu0 %v284
      %v286 = vpop.xlane.xlu0 %285
      %v287 = vsel %vm271, %v255, 0.0
      %288 = vadd.xlane.f32.xlu0 %v287
      %v289 = vpop.xlane.xlu0 %288
      %v290 = vsel %vm271, %v256, 0.0
      %291 = vadd.xlane.f32.xlu0 %v290
      %v292 = vpop.xlane.xlu0 %291
      %v293 = vsel %vm271, %v257, 0.0
      %294 = vadd.xlane.f32.xlu0 %v293
      %v295 = vpop.xlane.xlu0 %294
      %v296 = vsel %vm271, %v258, 0.0
      %297 = vadd.xlane.f32.xlu0 %v296
      %v298 = vpop.xlane.xlu0 %297
      %v299 = vsel %vm271, %v259, 0.0
      %300 = vadd.xlane.f32.xlu0 %v299
      %v301 = vpop.xlane.xlu0 %300
      %v302 = vsel %vm271, %v260, 0.0
      %303 = vadd.xlane.f32.xlu0 %v302
      %v304 = vpop.xlane.xlu0 %303
      %v305 = vsel %vm271, %v261, 0.0
      %306 = vadd.xlane.f32.xlu0 %v305
      %v307 = vpop.xlane.xlu0 %306
      %v308 = vsel %vm271, %v262, 0.0
      %309 = vadd.xlane.f32.xlu0 %v308
      %v310 = vpop.xlane.xlu0 %309
      %v311 = vsel %vm271, %v263, 0.0
      %312 = vadd.xlane.f32.xlu0 %v311
      %v313 = vpop.xlane.xlu0 %312
      %v314 = vsel %vm271, %v264, 0.0
      %315 = vadd.xlane.f32.xlu0 %v314
      %v316 = vpop.xlane.xlu0 %315
      %v317 = vsel %vm271, %v265, 0.0
      %318 = vadd.xlane.f32.xlu0 %v317
      %v319 = vpop.xlane.xlu0 %318
      %v320 = vsel %vm271, %v266, 0.0
      %321 = vadd.xlane.f32.xlu0 %v320
      %v322 = vpop.xlane.xlu0 %321
      %v323 = vsel %vm271, %v267, 0.0
      %324 = vadd.xlane.f32.xlu0 %v323
      %v325 = vpop.xlane.xlu0 %324
      %v326 = vsel %vm271, %v268, 0.0
      %327 = vadd.xlane.f32.xlu0 %v326
      %v328 = vpop.xlane.xlu0 %327
      %v329 = vsel %vm271, %v269, 0.0
      %330 = vadd.xlane.f32.xlu0 %v329
      %v331 = vpop.xlane.xlu0 %330
      %v332 = vsel %vm271, %v270, 0.0
      %333 = vadd.xlane.f32.xlu0 %v332
      %v334 = vpop.xlane.xlu0 %333
      %v335 = vrcp.pop 32.0
      %v336 = vmul.f32 %v274, %v335
      %v337 = vmul.f32 %v277, %v335
      %v338 = vmul.f32 %v280, %v335
      %v339 = vmul.f32 %v283, %v335
      %v340 = vmul.f32 %v286, %v335
      %v341 = vmul.f32 %v289, %v335
      %v342 = vmul.f32 %v292, %v335
      %v343 = vmul.f32 %v295, %v335
      %v344 = vmul.f32 %v298, %v335
      %v345 = vmul.f32 %v301, %v335
      %v346 = vmul.f32 %v304, %v335
      %v347 = vmul.f32 %v307, %v335
      %v348 = vmul.f32 %v310, %v335
      %v349 = vmul.f32 %v313, %v335
      %v350 = vmul.f32 %v316, %v335
      %v351 = vmul.f32 %v319, %v335
      %v352 = vmul.f32 %v322, %v335
      %v353 = vmul.f32 %v325, %v335
      %v354 = vmul.f32 %v328, %v335
      %v355 = vmul.f32 %v331, %v335
      %v356 = vmul.f32 %v334, %v335
      %v357 = vsub.f32 %v250, %v336
      %v358 = vsub.f32 %v251, %v337
      %v359 = vsub.f32 %v252, %v338
      %v360 = vsub.f32 %v253, %v339
      %v361 = vsub.f32 %v254, %v340
      %v362 = vsub.f32 %v255, %v341
      %v363 = vsub.f32 %v256, %v342
      %v364 = vsub.f32 %v257, %v343
      %v365 = vsub.f32 %v258, %v344
      %v366 = vsub.f32 %v259, %v345
      %v367 = vsub.f32 %v260, %v346
      %v368 = vsub.f32 %v261, %v347
      %v369 = vsub.f32 %v262, %v348
      %v370 = vsub.f32 %v263, %v349
      %v371 = vsub.f32 %v264, %v350
      %v372 = vsub.f32 %v265, %v351
      %v373 = vsub.f32 %v266, %v352
      %v374 = vsub.f32 %v267, %v353
      %v375 = vsub.f32 %v268, %v354
      %v376 = vsub.f32 %v269, %v355
      %v377 = vsub.f32 %v270, %v356
      %v378 = vmul.f32 %v357, %v357
      %v379 = vmul.f32 %v358, %v358
      %v380 = vmul.f32 %v359, %v359
      %v381 = vmul.f32 %v360, %v360
      %v382 = vmul.f32 %v361, %v361
      %v383 = vmul.f32 %v362, %v362
      %v384 = vmul.f32 %v363, %v363
      %v385 = vmul.f32 %v364, %v364
      %v386 = vmul.f32 %v365, %v365
      %v387 = vmul.f32 %v366, %v366
      %v388 = vmul.f32 %v367, %v367
      %v389 = vmul.f32 %v368, %v368
      %v390 = vmul.f32 %v369, %v369
      %v391 = vmul.f32 %v370, %v370
      %v392 = vmul.f32 %v371, %v371
      %v393 = vmul.f32 %v372, %v372
      %v394 = vmul.f32 %v373, %v373
      %v395 = vmul.f32 %v374, %v374
      %v396 = vmul.f32 %v375, %v375
      %v397 = vmul.f32 %v376, %v376
      %v398 = vmul.f32 %v377, %v377
      %v399 = vsel %vm271, %v378, 0.0
      %400 = vadd.xlane.f32.xlu0 %v399
      %v401 = vpop.xlane.xlu0 %400
      %v402 = vsel %vm271, %v379, 0.0
      %403 = vadd.xlane.f32.xlu0 %v402
      %v404 = vpop.xlane.xlu0 %403
      %v405 = vsel %vm271, %v380, 0.0
      %406 = vadd.xlane.f32.xlu0 %v405
      %v407 = vpop.xlane.xlu0 %406
      %v408 = vsel %vm271, %v381, 0.0
      %409 = vadd.xlane.f32.xlu0 %v408
      %v410 = vpop.xlane.xlu0 %409
      %v411 = vsel %vm271, %v382, 0.0
      %412 = vadd.xlane.f32.xlu0 %v411
      %v413 = vpop.xlane.xlu0 %412
      %v414 = vsel %vm271, %v383, 0.0
      %415 = vadd.xlane.f32.xlu0 %v414
      %v416 = vpop.xlane.xlu0 %415
      %v417 = vsel %vm271, %v384, 0.0
      %418 = vadd.xlane.f32.xlu0 %v417
      %v419 = vpop.xlane.xlu0 %418
      %v420 = vsel %vm271, %v385, 0.0
      %421 = vadd.xlane.f32.xlu0 %v420
      %v422 = vpop.xlane.xlu0 %421
      %v423 = vsel %vm271, %v386, 0.0
      %424 = vadd.xlane.f32.xlu0 %v423
      %v425 = vpop.xlane.xlu0 %424
      %v426 = vsel %vm271, %v387, 0.0
      %427 = vadd.xlane.f32.xlu0 %v426
      %v428 = vpop.xlane.xlu0 %427
      %v429 = vsel %vm271, %v388, 0.0
      %430 = vadd.xlane.f32.xlu0 %v429
      %v431 = vpop.xlane.xlu0 %430
      %v432 = vsel %vm271, %v389, 0.0
      %433 = vadd.xlane.f32.xlu0 %v432
      %v434 = vpop.xlane.xlu0 %433
      %v435 = vsel %vm271, %v390, 0.0
      %436 = vadd.xlane.f32.xlu0 %v435
      %v437 = vpop.xlane.xlu0 %436
      %v438 = vsel %vm271, %v391, 0.0
      %439 = vadd.xlane.f32.xlu0 %v438
      %v440 = vpop.xlane.xlu0 %439
      %v441 = vsel %vm271, %v392, 0.0
      %442 = vadd.xlane.f32.xlu0 %v441
      %v443 = vpop.xlane.xlu0 %442
      %v444 = vsel %vm271, %v393, 0.0
      %445 = vadd.xlane.f32.xlu0 %v444
      %v446 = vpop.xlane.xlu0 %445
      %v447 = vsel %vm271, %v394, 0.0
      %448 = vadd.xlane.f32.xlu0 %v447
      %v449 = vpop.xlane.xlu0 %448
      %v450 = vsel %vm271, %v395, 0.0
      %451 = vadd.xlane.f32.xlu0 %v450
      %v452 = vpop.xlane.xlu0 %451
      %v453 = vsel %vm271, %v396, 0.0
      %454 = vadd.xlane.f32.xlu0 %v453
      %v455 = vpop.xlane.xlu0 %454
      %v456 = vsel %vm271, %v397, 0.0
      %457 = vadd.xlane.f32.xlu0 %v456
      %v458 = vpop.xlane.xlu0 %457
      %v459 = vsel %vm271, %v398, 0.0
      %460 = vadd.xlane.f32.xlu0 %v459
      %v461 = vpop.xlane.xlu0 %460
      %v462 = vmul.f32 %v401, %v335
      %v463 = vmul.f32 %v404, %v335
      %v464 = vmul.f32 %v407, %v335
      %v465 = vmul.f32 %v410, %v335
      %v466 = vmul.f32 %v413, %v335
      %v467 = vmul.f32 %v416, %v335
      %v468 = vmul.f32 %v419, %v335
      %v469 = vmul.f32 %v422, %v335
      %v470 = vmul.f32 %v425, %v335
      %v471 = vmul.f32 %v428, %v335
      %v472 = vmul.f32 %v431, %v335
      %v473 = vmul.f32 %v434, %v335
      %v474 = vmul.f32 %v437, %v335
      %v475 = vmul.f32 %v440, %v335
      %v476 = vmul.f32 %v443, %v335
      %v477 = vmul.f32 %v446, %v335
      %v478 = vmul.f32 %v449, %v335
      %v479 = vmul.f32 %v452, %v335
      %v480 = vmul.f32 %v455, %v335
      %v481 = vmul.f32 %v458, %v335
      %v482 = vmul.f32 %v461, %v335
      %v483 = vadd.f32 %v462, 1e-05
      %v484 = vadd.f32 %v463, 1e-05
      %v485 = vadd.f32 %v464, 1e-05
      %v486 = vadd.f32 %v465, 1e-05
      %v487 = vadd.f32 %v466, 1e-05
      %v488 = vadd.f32 %v467, 1e-05
      %v489 = vadd.f32 %v468, 1e-05
      %v490 = vadd.f32 %v469, 1e-05
      %v491 = vadd.f32 %v470, 1e-05
      %v492 = vadd.f32 %v471, 1e-05
      %v493 = vadd.f32 %v472, 1e-05
      %v494 = vadd.f32 %v473, 1e-05
      %v495 = vadd.f32 %v474, 1e-05
      %v496 = vadd.f32 %v475, 1e-05
      %v497 = vadd.f32 %v476, 1e-05
      %v498 = vadd.f32 %v477, 1e-05
      %v499 = vadd.f32 %v478, 1e-05
      %v500 = vadd.f32 %v479, 1e-05
      %v501 = vadd.f32 %v480, 1e-05
      %v502 = vadd.f32 %v481, 1e-05
      %v503 = vadd.f32 %v482, 1e-05
      %v504 = vrsqrt.pop %v483
      %v505 = vrsqrt.pop %v484
      %v506 = vrsqrt.pop %v485
      %v507 = vrsqrt.pop %v486
      %v508 = vrsqrt.pop %v487
      %v509 = vrsqrt.pop %v488
      %v510 = vrsqrt.pop %v489
      %v511 = vrsqrt.pop %v490
      %v512 = vrsqrt.pop %v491
      %v513 = vrsqrt.pop %v492
      %v514 = vrsqrt.pop %v493
      %v515 = vrsqrt.pop %v494
      %v516 = vrsqrt.pop %v495
      %v517 = vrsqrt.pop %v496
      %v518 = vrsqrt.pop %v497
      %v519 = vrsqrt.pop %v498
      %v520 = vrsqrt.pop %v499
      %v521 = vrsqrt.pop %v500
      %v522 = vrsqrt.pop %v501
      %v523 = vrsqrt.pop %v502
      %v524 = vrsqrt.pop %v503
      %v525 = vmul.f32 %v357, %v504
      %v526 = vmul.f32 %v358, %v505
      %v527 = vmul.f32 %v359, %v506
      %v528 = vmul.f32 %v360, %v507
      %v529 = vmul.f32 %v361, %v508
      %v530 = vmul.f32 %v362, %v509
      %v531 = vmul.f32 %v363, %v510
      %v532 = vmul.f32 %v364, %v511
      %v533 = vmul.f32 %v365, %v512
      %v534 = vmul.f32 %v366, %v513
      %v535 = vmul.f32 %v367, %v514
      %v536 = vmul.f32 %v368, %v515
      %v537 = vmul.f32 %v369, %v516
      %v538 = vmul.f32 %v370, %v517
      %v539 = vmul.f32 %v371, %v518
      %v540 = vmul.f32 %v372, %v519
      %v541 = vmul.f32 %v373, %v520
      %v542 = vmul.f32 %v374, %v521
      %v543 = vmul.f32 %v375, %v522
      %v544 = vmul.f32 %v376, %v523
      %v545 = vmul.f32 %v377, %v524
      %v546 = vld [vmem:[%s2] sm:$0x1]
      %v548 = vlaneseq
      %v549 = vshrl.u32 %v548, 7
      %v550 = vsub.s32 0, %v549
      %v551 = vrot.slane %v546, %v550
      %v553 = vmul.f32 %v525, %v551
      %v554 = vmul.f32 %v526, %v551
      %v555 = vmul.f32 %v527, %v551
      %v556 = vmul.f32 %v528, %v551
      %v557 = vmul.f32 %v529, %v551
      %v558 = vmul.f32 %v530, %v551
      %v559 = vmul.f32 %v531, %v551
      %v560 = vmul.f32 %v532, %v551
      %v561 = vmul.f32 %v533, %v551
      %v562 = vmul.f32 %v534, %v551
      %v563 = vmul.f32 %v535, %v551
      %v564 = vmul.f32 %v536, %v551
      %v565 = vmul.f32 %v537, %v551
      %v566 = vmul.f32 %v538, %v551
      %v567 = vmul.f32 %v539, %v551
      %v568 = vmul.f32 %v540, %v551
      %v569 = vmul.f32 %v541, %v551
      %v570 = vmul.f32 %v542, %v551
      %v571 = vmul.f32 %v543, %v551
      %v572 = vmul.f32 %v544, %v551
      %v573 = vmul.f32 %v545, %v551
      %v574 = vld [vmem:[%s3] sm:$0x1]
      %v576 = vlaneseq
      %v577 = vshrl.u32 %v576, 7
      %v578 = vsub.s32 0, %v577
      %v579 = vrot.slane %v574, %v578
      %v581 = vadd.f32 %v553, %v579
      %v582 = vadd.f32 %v554, %v579
      %v583 = vadd.f32 %v555, %v579
      %v584 = vadd.f32 %v556, %v579
      %v585 = vadd.f32 %v557, %v579
      %v586 = vadd.f32 %v558, %v579
      %v587 = vadd.f32 %v559, %v579
      %v588 = vadd.f32 %v560, %v579
      %v589 = vadd.f32 %v561, %v579
      %v590 = vadd.f32 %v562, %v579
      %v591 = vadd.f32 %v563, %v579
      %v592 = vadd.f32 %v564, %v579
      %v593 = vadd.f32 %v565, %v579
      %v594 = vadd.f32 %v566, %v579
      %v595 = vadd.f32 %v567, %v579
      %v596 = vadd.f32 %v568, %v579
      %v597 = vadd.f32 %v569, %v579
      %v598 = vadd.f32 %v570, %v579
      %v599 = vadd.f32 %v571, %v579
      %v600 = vadd.f32 %v572, %v579
      %v601 = vadd.f32 %v573, %v579
      %v602 = vpack.c.bf16 %v582, %v581
      %v603 = vpack.c.bf16 %v584, %v583
      %v604 = vpack.c.bf16 %v586, %v585
      %v605 = vpack.c.bf16 %v588, %v587
      %v606 = vpack.c.bf16 %v590, %v589
      %v607 = vpack.c.bf16 %v592, %v591
      %v608 = vpack.c.bf16 %v594, %v593
      %v609 = vpack.c.bf16 %v596, %v595
      %v610 = vpack.c.bf16 %v598, %v597
      %v611 = vpack.c.bf16 %v600, %v599
      %v612 = vpack.c.bf16 %v601, %v601
      %v613 = vld [vmem:[%s1] sm:$0xf]
      %v614 = vld [vmem:[%s1 + $0x4] sm:$0xf]
      %v615 = vld [vmem:[%s1 + $0x8] sm:$0xf]
      %v616 = vld [vmem:[%s1 + $0xc] sm:$0xf]
      %v617 = vld [vmem:[%s4] sm:$0x1]
      %v619 = vlaneseq
      %v620 = vshrl.u32 %v619, 7
      %v621 = vsub.s32 0, %v620
      %v622 = vrot.slane %v617, %v621
      %v628 = vunpack.c.l.b16 %v613
      %v629 = vunpack.c.l.b16 %v614
      %v630 = vunpack.c.l.b16 %v615
      %v631 = vunpack.c.l.b16 %v616
      %v632 = vpack.c.b16 %v629, %v628
      %v633 = vpack.c.b16 %v631, %v630
      %v637 = vsel %vm271, %v602, 0
      %v640 = vsel %vm271, %v603, 0
      %v643 = vsel %vm271, %v604, 0
      %v646 = vsel %vm271, %v605, 0
      %v649 = vsel %vm271, %v606, 0
      %v652 = vsel %vm271, %v607, 0
      %v655 = vsel %vm271, %v608, 0
      %v658 = vsel %vm271, %v609, 0
      %v661 = vsel %vm271, %v610, 0
      %v664 = vsel %vm271, %v611, 0
      %v667 = vsel %vm271, %v612, 0
      %669 = vmatprep.subr.bf16.mxu0 0
      %670 = vmatpush1.bf16.msra.mxu0 0
      %671 = vmatprep.subr.bf16.mxu0 0
      %672 = vmatpush1.bf16.msra.mxu0 0
      %673 = vmatprep.subr.bf16.mxu0 0
      %674 = vmatpush1.bf16.msra.mxu0 0
      %675 = vmatprep.subr.bf16.mxu0 0
      %676 = vmatpush1.bf16.msra.mxu0 0
      %677 = vmatprep.subr.bf16.mxu0 0
      %678 = vmatpush1.bf16.msra.mxu0 0
      %679 = vmatprep.subr.bf16.mxu0 0
      %680 = vmatpush1.bf16.msra.mxu0 0
      %681 = vmatprep.subr.bf16.mxu0 0
      %682 = vmatpush1.bf16.msra.mxu0 %v633
      %683 = vmatprep.subr.bf16.mxu0 0
      %684 = vmatpush1.bf16.msra.mxu0 %v632
      %685 = vmatprep.subr.bf16.mxu0 0
      %686 = vmatpush2.bf16.msra.mxu0 0
      %687 = vmatprep.subr.bf16.mxu0 0
      %688 = vmatpush2.bf16.msra.mxu0 0
      %689 = vmatprep.subr.bf16.mxu0 0
      %690 = vmatpush2.bf16.msra.mxu0 0
      %691 = vmatprep.subr.bf16.mxu0 0
      %692 = vmatpush2.bf16.msra.mxu0 0
      %693 = vmatprep.subr.bf16.mxu0 0
      %694 = vmatpush2.bf16.msra.mxu0 0
      %695 = vmatprep.subr.bf16.mxu0 0
      %696 = vmatpush2.bf16.msra.mxu0 0
      %697 = vmatprep.subr.bf16.mxu0 0
      %698 = vmatpush2.bf16.msra.mxu0 0
      %699 = vmatprep.subr.bf16.mxu0 0
      %700 = vmatpush2.bf16.msra.mxu0 0
      %701 = vmatprep.mubr.bf16.mxu0 0
      %702 = vmatmul.mubr.bf16.gmra.mxu0 %v637
      %v703 = vpop.f32.mrf.mxu0
      %v704 = vadd.f32 %v622, %v703
      %v705 = vpop.f32.mrf.mxu0
      %v706 = vpop.f32.mrf.mxu0
      %v707 = vadd.f32 %v622, %v706
      %v708 = vpop.f32.mrf.mxu0
      %709 = vmatprep.mubr.bf16.mxu0 0
      %710 = vmatmul.mubr.bf16.gmra.mxu0 %v640
      %v711 = vpop.f32.mrf.mxu0
      %v712 = vadd.f32 %v622, %v711
      %v713 = vpop.f32.mrf.mxu0
      %v714 = vpop.f32.mrf.mxu0
      %v715 = vadd.f32 %v622, %v714
      %v716 = vpop.f32.mrf.mxu0
      %717 = vmatprep.mubr.bf16.mxu0 0
      %718 = vmatmul.mubr.bf16.gmra.mxu0 %v643
      %v719 = vpop.f32.mrf.mxu0
      %v720 = vadd.f32 %v622, %v719
      %v721 = vpop.f32.mrf.mxu0
      %v722 = vpop.f32.mrf.mxu0
      %v723 = vadd.f32 %v622, %v722
      %v724 = vpop.f32.mrf.mxu0
      %725 = vmatprep.mubr.bf16.mxu0 0
      %726 = vmatmul.mubr.bf16.gmra.mxu0 %v646
      %v727 = vpop.f32.mrf.mxu0
      %v728 = vadd.f32 %v622, %v727
      %v729 = vpop.f32.mrf.mxu0
      %v730 = vpop.f32.mrf.mxu0
      %v731 = vadd.f32 %v622, %v730
      %v732 = vpop.f32.mrf.mxu0
      %733 = vmatprep.mubr.bf16.mxu0 0
      %734 = vmatmul.mubr.bf16.gmra.mxu0 %v649
      %v735 = vpop.f32.mrf.mxu0
      %v736 = vadd.f32 %v622, %v735
      %v737 = vpop.f32.mrf.mxu0
      %v738 = vpop.f32.mrf.mxu0
      %v739 = vadd.f32 %v622, %v738
      %v740 = vpop.f32.mrf.mxu0
      %741 = vmatprep.mubr.bf16.mxu0 0
      %742 = vmatmul.mubr.bf16.gmra.mxu0 %v652
      %v743 = vpop.f32.mrf.mxu0
      %v744 = vadd.f32 %v622, %v743
      %v745 = vpop.f32.mrf.mxu0
      %v746 = vpop.f32.mrf.mxu0
      %v747 = vadd.f32 %v622, %v746
      %v748 = vpop.f32.mrf.mxu0
      %749 = vmatprep.mubr.bf16.mxu0 0
      %750 = vmatmul.mubr.bf16.gmra.mxu0 %v655
      %v751 = vpop.f32.mrf.mxu0
      %v752 = vadd.f32 %v622, %v751
      %v753 = vpop.f32.mrf.mxu0
      %v754 = vpop.f32.mrf.mxu0
      %v755 = vadd.f32 %v622, %v754
      %v756 = vpop.f32.mrf.mxu0
      %757 = vmatprep.mubr.bf16.mxu0 0
      %758 = vmatmul.mubr.bf16.gmra.mxu0 %v658
      %v759 = vpop.f32.mrf.mxu0
      %v760 = vadd.f32 %v622, %v759
      %v761 = vpop.f32.mrf.mxu0
      %v762 = vpop.f32.mrf.mxu0
      %v763 = vadd.f32 %v622, %v762
      %v764 = vpop.f32.mrf.mxu0
      %765 = vmatprep.mubr.bf16.mxu0 0
      %766 = vmatmul.mubr.bf16.gmra.mxu0 %v661
      %v767 = vpop.f32.mrf.mxu0
      %v768 = vadd.f32 %v622, %v767
      %v769 = vpop.f32.mrf.mxu0
      %v770 = vpop.f32.mrf.mxu0
      %v771 = vadd.f32 %v622, %v770
      %v772 = vpop.f32.mrf.mxu0
      %773 = vmatprep.mubr.bf16.mxu0 0
      %774 = vmatmul.mubr.bf16.gmra.mxu0 %v664
      %v775 = vpop.f32.mrf.mxu0
      %v776 = vadd.f32 %v622, %v775
      %v777 = vpop.f32.mrf.mxu0
      %v778 = vpop.f32.mrf.mxu0
      %v779 = vadd.f32 %v622, %v778
      %v780 = vpop.f32.mrf.mxu0
      %781 = vmatprep.mubr.bf16.mxu0 0
      %782 = vmatmul.mubr.bf16.gmra.mxu0 %v667
      %v783 = vpop.f32.mrf.mxu0
      %v784 = vadd.f32 %v622, %v783
      %v785 = vpop.f32.mrf.mxu0
      %v786 = vpop.f32.mrf.mxu0
      %v787 = vpop.f32.mrf.mxu0
      %788 = vdwg.mxu0
      %v789 = vpack.c.bf16 %v707, %v704
      %v790 = vpack.c.bf16 %v715, %v712
      %v791 = vpack.c.bf16 %v723, %v720
      %v792 = vpack.c.bf16 %v731, %v728
      %v793 = vpack.c.bf16 %v739, %v736
      %v794 = vpack.c.bf16 %v747, %v744
      %v795 = vpack.c.bf16 %v755, %v752
      %v796 = vpack.c.bf16 %v763, %v760
      %v797 = vpack.c.bf16 %v771, %v768
      %v798 = vpack.c.bf16 %v779, %v776
      %v799 = vpack.c.bf16 %v784, %v784
      %v811 = vunpack.c.l.b16 %v789
      %v812 = vunpack.c.h.b16 %v789
      %v813 = vunpack.c.l.b16 %v790
      %v814 = vunpack.c.h.b16 %v790
      %v815 = vunpack.c.l.b16 %v791
      %v816 = vunpack.c.h.b16 %v791
      %v817 = vunpack.c.l.b16 %v792
      %v818 = vunpack.c.h.b16 %v792
      %v819 = vunpack.c.l.b16 %v793
      %v820 = vunpack.c.h.b16 %v793
      %v821 = vunpack.c.l.b16 %v794
      %v822 = vunpack.c.h.b16 %v794
      %v823 = vunpack.c.l.b16 %v795
      %v824 = vunpack.c.h.b16 %v795
      %v825 = vunpack.c.l.b16 %v796
      %v826 = vunpack.c.h.b16 %v796
      %v827 = vunpack.c.l.b16 %v797
      %v828 = vunpack.c.h.b16 %v797
      %v829 = vunpack.c.l.b16 %v798
      %v830 = vunpack.c.h.b16 %v798
      %v831 = vunpack.c.l.b16 %v799
      %v832 = vpack.c.b16 %v811, %v811
      %v833 = vpack.c.b16 %v812, %v812
      %v834 = vpack.c.b16 %v813, %v813
      %v835 = vpack.c.b16 %v814, %v814
      %v836 = vpack.c.b16 %v815, %v815
      %v837 = vpack.c.b16 %v816, %v816
      %v838 = vpack.c.b16 %v817, %v817
      %v839 = vpack.c.b16 %v818, %v818
      %v840 = vpack.c.b16 %v819, %v819
      %v841 = vpack.c.b16 %v820, %v820
      %v842 = vpack.c.b16 %v821, %v821
      %v843 = vpack.c.b16 %v822, %v822
      %v844 = vpack.c.b16 %v823, %v823
      %v845 = vpack.c.b16 %v824, %v824
      %v846 = vpack.c.b16 %v825, %v825
      %v847 = vpack.c.b16 %v826, %v826
      %v848 = vpack.c.b16 %v827, %v827
      %v849 = vpack.c.b16 %v828, %v828
      %v850 = vpack.c.b16 %v829, %v829
      %v851 = vpack.c.b16 %v830, %v830
      %v852 = vpack.c.b16 %v831, %v831
      %vm874 = vcmask 781312
      %875 = vst.msk [vmem:[%s226] sm:$0xf] %vm874, %v832
      %876 = vst.msk [vmem:[%s226 + $0x4] sm:$0xf] %vm874, %v833
      %877 = vst.msk [vmem:[%s226 + $0x8] sm:$0xf] %vm874, %v834
      %878 = vst.msk [vmem:[%s226 + $0xc] sm:$0xf] %vm874, %v835
      %879 = vst.msk [vmem:[%s226 + $0x10] sm:$0xf] %vm874, %v836
      %880 = vst.msk [vmem:[%s226 + $0x14] sm:$0xf] %vm874, %v837
      %881 = vst.msk [vmem:[%s226 + $0x18] sm:$0xf] %vm874, %v838
      %882 = vst.msk [vmem:[%s226 + $0x1c] sm:$0xf] %vm874, %v839
      %883 = vst.msk [vmem:[%s226 + $0x20] sm:$0xf] %vm874, %v840
      %884 = vst.msk [vmem:[%s226 + $0x24] sm:$0xf] %vm874, %v841
      %885 = vst.msk [vmem:[%s226 + $0x28] sm:$0xf] %vm874, %v842
      %886 = vst.msk [vmem:[%s226 + $0x2c] sm:$0xf] %vm874, %v843
      %887 = vst.msk [vmem:[%s226 + $0x30] sm:$0xf] %vm874, %v844
      %888 = vst.msk [vmem:[%s226 + $0x34] sm:$0xf] %vm874, %v845
      %889 = vst.msk [vmem:[%s226 + $0x38] sm:$0xf] %vm874, %v846
      %890 = vst.msk [vmem:[%s226 + $0x3c] sm:$0xf] %vm874, %v847
      %891 = vst.msk [vmem:[%s226 + $0x40] sm:$0xf] %vm874, %v848
      %892 = vst.msk [vmem:[%s226 + $0x44] sm:$0xf] %vm874, %v849
      %893 = vst.msk [vmem:[%s226 + $0x48] sm:$0xf] %vm874, %v850
      %894 = vst.msk [vmem:[%s226 + $0x4c] sm:$0xf] %vm874, %v851
      %895 = vst.msk [vmem:[%s226 + $0x50] sm:$0xf] %vm874, %v852
      %s896 = smul.u32 21, %s16
      %p897 = scmp.lt.s32.totalorder %s896, 41
      %s898 = scalar_select %p897, %s896, 41
      %s899 = smul.addr %s898, 4
      %s900 = scalar_lea.vmem %s5, %s899
      // Predicated region
      $region41: #{vit_forward.15} parent=39 // pred_check
        %p901 = pneg %p144
      $region42: #{vit_forward.15} parent=39 // pred_check_branch
        %903 = sbr.rel (%p901) target = $region44
      $region43: #{vit_forward.15} parent=39 // pred_region
        %s904 = smul.u32 21, %s16
      $region44: #{vit_forward.15} parent=39 // pred_fallthru
        _
    $region40: #{vit_forward.15} parent=5 // pred_fallthru
      _
    %p905 = scmp.le.s32.totalorder 2, %s11
    // Predicated region
    $region45: #{vit_forward.15} parent=5 // pred_check
      %p906 = pneg %p905
    $region46: #{vit_forward.15} parent=5 // pred_check_branch
      %908 = sbr.rel (%p906) target = $region48
    $region47: #{vit_forward.15} parent=5 // pred_region
      %s909 = ssub.s32 %s11, 2
      // Predicated region
      $region49: #{vit_forward.15} parent=47 // pred_check
        %p910 = pneg %p150
      $region50: #{vit_forward.15} parent=47 // pred_check_branch
        %912 = sbr.rel (%p910) target = $region52
      $region51: #{vit_forward.15} parent=47 // pred_region
        %s913 = smul.u32 21, %s17
        %p914 = scmp.lt.s32.totalorder %s913, 41
        %s915 = scalar_select %p914, %s913, 41
        %s916 = smul.addr %s915, 4
        %s917 = scalar_lea.vmem %s5, %s916
      $region52: #{vit_forward.15} parent=47 // pred_fallthru
        _
    $region48: #{vit_forward.15} parent=5 // pred_fallthru
      _
  $region6: #{vit_forward.15} parent=0 // loop_footer
    %s15 = sadd.s32 1, %s11
  $region7: #{vit_forward.15} parent=0 // loop_footer_branch
    %10 = sbr.rel target = $region3
  $region8: #{vit_forward.15} parent=0 // loop_exit
    _

// kernel: vit_forward.17
$region0: #{vit_forward.17}
  #allocation0 [shape = 'u32[]', space=smem, size = 0x4, offset = 0x4, fixed_abs, tag = 'smem constant byte address 0x4 - core index']
  #allocation1 [shape = 'u32[144,128]{1,0:T(1,128)}', space=vmem, size = 0x12000, scoped, tag = 'internal scratch']
  %s0 = inlined_call_operand.vmem [shape: bf16[336,32], index: 0, kind: input, shape index: {}]
  %s1 = inlined_call_operand.vmem [shape: bf16[32,32], index: 1, kind: input, shape index: {}]
  %s2 = inlined_call_operand.vmem [shape: f32[1,32], index: 2, kind: input, shape index: {}]
  %s3 = inlined_call_operand.vmem [shape: bf16[336,32], index: 3, kind: input, shape index: {}]
  %s4 = inlined_call_operand.vmem [shape: bf16[336,32], index: 4, kind: output, shape index: {}]
  %s5 = sld [smem:[#allocation0]]
  $region49: #{vit_forward.17} parent=0
    _
  %s7 = ssub.s32 1, %s5
  %s8 = scalar_select 0, %s7, %s5
  loop: start=0, step=1, limit=4
  $region2: #{vit_forward.17} parent=0 // loop_pre_header
    _
  $region3: #{vit_forward.17} parent=0 // loop_header
    %s10 = sphi 0, %s14
    %p11 = scmp.ge.s32.totalorder %s10, 4
    %s20 = sphi 0, %s22
    %s23 = sphi 0, %s20
    %s24 = sphi 0, %s23
    %s40 = sphi 0, %s24
    %s44 = sphi 0, %s44
    %s46 = sphi 0, %s44
    %s47 = sphi 0, %s46
    %s61 = sphi 0, %s47
    %s65 = sphi 0, %s65
    %s67 = sphi 0, %s65
    %s68 = sphi 0, %s67
    %s82 = sphi 0, %s68
    %s88 = sphi 0, %s90
    %s91 = sphi 0, %s88
    %s92 = sphi 0, %s91
    %s108 = sphi 0, %s92
    %s114 = sphi 0, %s116
    %s117 = sphi 0, %s114
    %s118 = sphi 0, %s117
    %s134 = sphi 0, %s118
  $region4: #{vit_forward.17} parent=0 // loop_header_branch
    %13 = sbr.rel (%p11) target = $region8
  $region5: #{vit_forward.17} parent=0 // loop_body
    %s15 = ssub.s32 %s10, 1
    %s16 = ssub.s32 %s10, 2
    %s17 = sadd.s32 %s10, 1
    %s18 = ssub.s32 %s10, %s17
    %p19 = scmp.eq.s32.totalorder %s18, 0
    %s21 = sadd.s32 %s20, 1
    %s22 = scalar_select %p19, %s20, %s21
    %p25 = pneg %p19
    %p26 = scmp.eq.s32.totalorder %s10, 1
    %p27 = por %p25, %p26
    %p28 = scmp.ne.s32.totalorder %s20, %s23
    %p29 = scmp.eq.s32.totalorder %s10, 0
    %p30 = por %p28, %p29
    %p31 = scmp.ne.s32.totalorder %s20, %s23
    %p32 = scmp.eq.s32.totalorder %s15, 1
    %p33 = por %p31, %p32
    %p34 = scmp.ne.s32.totalorder %s23, %s24
    %p35 = scmp.eq.s32.totalorder %s15, 0
    %p36 = por %p34, %p35
    %p37 = scmp.ne.s32.totalorder %s23, %s24
    %p38 = scmp.eq.s32.totalorder %s16, 1
    %p39 = por %p37, %p38
    %p41 = scmp.ne.s32.totalorder %s24, %s40
    %p42 = scmp.eq.s32.totalorder %s16, 0
    %p43 = por %p41, %p42
    %s45 = sadd.s32 %s44, 1
    %p48 = scmp.eq.s32.totalorder %s10, 1
    %p49 = scmp.ne.s32.totalorder %s44, %s46
    %p50 = scmp.eq.s32.totalorder %s10, 0
    %p51 = por %p49, %p50
    %p52 = scmp.ne.s32.totalorder %s44, %s46
    %p53 = scmp.eq.s32.totalorder %s15, 1
    %p54 = por %p52, %p53
    %p55 = scmp.ne.s32.totalorder %s46, %s47
    %p56 = scmp.eq.s32.totalorder %s15, 0
    %p57 = por %p55, %p56
    %p58 = scmp.ne.s32.totalorder %s46, %s47
    %p59 = scmp.eq.s32.totalorder %s16, 1
    %p60 = por %p58, %p59
    %p62 = scmp.ne.s32.totalorder %s47, %s61
    %p63 = scmp.eq.s32.totalorder %s16, 0
    %p64 = por %p62, %p63
    %s66 = sadd.s32 %s65, 1
    %p69 = scmp.eq.s32.totalorder %s10, 1
    %p70 = scmp.ne.s32.totalorder %s65, %s67
    %p71 = scmp.eq.s32.totalorder %s10, 0
    %p72 = por %p70, %p71
    %p73 = scmp.ne.s32.totalorder %s65, %s67
    %p74 = scmp.eq.s32.totalorder %s15, 1
    %p75 = por %p73, %p74
    %p76 = scmp.ne.s32.totalorder %s67, %s68
    %p77 = scmp.eq.s32.totalorder %s15, 0
    %p78 = por %p76, %p77
    %p79 = scmp.ne.s32.totalorder %s67, %s68
    %p80 = scmp.eq.s32.totalorder %s16, 1
    %p81 = por %p79, %p80
    %p83 = scmp.ne.s32.totalorder %s68, %s82
    %p84 = scmp.eq.s32.totalorder %s16, 0
    %p85 = por %p83, %p84
    %s86 = ssub.s32 %s10, %s17
    %p87 = scmp.eq.s32.totalorder %s86, 0
    %s89 = sadd.s32 %s88, 1
    %s90 = scalar_select %p87, %s88, %s89
    %p93 = pneg %p87
    %p94 = scmp.eq.s32.totalorder %s10, 1
    %p95 = por %p93, %p94
    %p96 = scmp.ne.s32.totalorder %s88, %s91
    %p97 = scmp.eq.s32.totalorder %s10, 0
    %p98 = por %p96, %p97
    %p99 = scmp.ne.s32.totalorder %s88, %s91
    %p100 = scmp.eq.s32.totalorder %s15, 1
    %p101 = por %p99, %p100
    %p102 = scmp.ne.s32.totalorder %s91, %s92
    %p103 = scmp.eq.s32.totalorder %s15, 0
    %p104 = por %p102, %p103
    %p105 = scmp.ne.s32.totalorder %s91, %s92
    %p106 = scmp.eq.s32.totalorder %s16, 1
    %p107 = por %p105, %p106
    %p109 = scmp.ne.s32.totalorder %s92, %s108
    %p110 = scmp.eq.s32.totalorder %s16, 0
    %p111 = por %p109, %p110
    %s112 = ssub.s32 %s10, %s17
    %p113 = scmp.eq.s32.totalorder %s112, 0
    %s115 = sadd.s32 %s114, 1
    %s116 = scalar_select %p113, %s114, %s115
    %p119 = pneg %p113
    %p120 = scmp.eq.s32.totalorder %s10, 1
    %p121 = por %p119, %p120
    %p122 = scmp.ne.s32.totalorder %s114, %s117
    %p123 = scmp.eq.s32.totalorder %s10, 0
    %p124 = por %p122, %p123
    %p125 = scmp.ne.s32.totalorder %s114, %s117
    %p126 = scmp.eq.s32.totalorder %s15, 1
    %p127 = por %p125, %p126
    %p128 = scmp.ne.s32.totalorder %s117, %s118
    %p129 = scmp.eq.s32.totalorder %s15, 0
    %p130 = por %p128, %p129
    %p131 = scmp.ne.s32.totalorder %s117, %s118
    %p132 = scmp.eq.s32.totalorder %s16, 1
    %p133 = por %p131, %p132
    %p135 = scmp.ne.s32.totalorder %s118, %s134
    %p136 = scmp.eq.s32.totalorder %s16, 0
    %p137 = por %p135, %p136
    %p138 = scmp.le.s32.totalorder 1, %s10
    %p139 = scmp.lt.s32.totalorder %s10, 3
    %p140 = pnand %p138, %p139
    %p141 = pneg %p140
    // Predicated region
    $region9: #{vit_forward.17} parent=5 // pred_check
      _
    $region10: #{vit_forward.17} parent=5 // pred_check_branch
      %143 = sbr.rel (%p140) target = $region12
    $region11: #{vit_forward.17} parent=5 // pred_region
      %s144 = ssub.s32 %s10, 1
      // Predicated region
      $region13: #{vit_forward.17} parent=11 // pred_check
        %p145 = pneg %p57
      $region14: #{vit_forward.17} parent=11 // pred_check_branch
        %147 = sbr.rel (%p145) target = $region16
      $region15: #{vit_forward.17} parent=11 // pred_region
        _
      $region16: #{vit_forward.17} parent=11 // pred_fallthru
        _
      // Predicated region
      $region17: #{vit_forward.17} parent=11 // pred_check
        %p148 = pneg %p78
      $region18: #{vit_forward.17} parent=11 // pred_check_branch
        %150 = sbr.rel (%p148) target = $region20
      $region19: #{vit_forward.17} parent=11 // pred_region
        _
      $region20: #{vit_forward.17} parent=11 // pred_fallthru
        _
    $region12: #{vit_forward.17} parent=5 // pred_fallthru
      _
    %p151 = scmp.lt.s32.totalorder %s10, 2
    // Predicated region
    $region21: #{vit_forward.17} parent=5 // pred_check
      %p152 = pneg %p151
    $region22: #{vit_forward.17} parent=5 // pred_check_branch
      %154 = sbr.rel (%p152) target = $region24
    $region23: #{vit_forward.17} parent=5 // pred_region
      // Predicated region
      $region25: #{vit_forward.17} parent=23 // pred_check
        %p155 = pneg %p30
      $region26: #{vit_forward.17} parent=23 // pred_check_branch
        %157 = sbr.rel (%p155) target = $region28
      $region27: #{vit_forward.17} parent=23 // pred_region
        %s158 = smul.u32 21, %s10
        %p159 = scmp.lt.s32.totalorder %s158, 41
        %s160 = scalar_select %p159, %s158, 41
        %s161 = smul.addr %s160, 4
        %s162 = scalar_lea.vmem %s0, %s161
        %s163 = smul.u32 21, %s10
      $region28: #{vit_forward.17} parent=23 // pred_fallthru
        _
      // Predicated region
      $region29: #{vit_forward.17} parent=23 // pred_check
        %p164 = pneg %p98
      $region30: #{vit_forward.17} parent=23 // pred_check_branch
        %166 = sbr.rel (%p164) target = $region32
      $region31: #{vit_forward.17} parent=23 // pred_region
        %s167 = smul.u32 21, %s10
        %p168 = scmp.lt.s32.totalorder %s167, 41
        %s169 = scalar_select %p168, %s167, 41
        %s170 = smul.addr %s169, 4
        %s171 = scalar_lea.vmem %s3, %s170
        %s172 = smul.u32 21, %s10
      $region32: #{vit_forward.17} parent=23 // pred_fallthru
        _
    $region24: #{vit_forward.17} parent=5 // pred_fallthru
      _
    %p173 = scmp.le.s32.totalorder 1, %s10
    %p174 = scmp.lt.s32.totalorder %s10, 3
    %p175 = pnand %p173, %p174
    %p176 = pneg %p175
    // Predicated region
    $region33: #{vit_forward.17} parent=5 // pred_check
      _
    $region34: #{vit_forward.17} parent=5 // pred_check_branch
      %178 = sbr.rel (%p175) target = $region36
    $region35: #{vit_forward.17} parent=5 // pred_region
      %s179 = ssub.s32 %s10, 1
      %s180 = smul.u32 21, %s15
      %p181 = scmp.lt.s32.totalorder %s180, 41
      %s182 = scalar_select %p181, %s180, 41
      %s183 = smul.addr %s182, 4
      %s184 = scalar_lea.vmem %s0, %s183
      %p185 = pneg %p36
      %p186 = pneg %p33
      %p187 = pneg %p57
      %p188 = pneg %p54
      %p189 = pneg %p78
      %p190 = pneg %p75
      %s191 = smul.u32 21, %s15
      %p192 = scmp.lt.s32.totalorder %s191, 41
      %s193 = scalar_select %p192, %s191, 41
      %s194 = smul.addr %s193, 4
      %s195 = scalar_lea.vmem %s3, %s194
      %p196 = pneg %p104
      %p197 = pneg %p101
      %p198 = pneg %p130
      %p199 = pneg %p127
      %s200 = smul.u32 21, %s15
      %p201 = scmp.lt.s32.totalorder %s200, 41
      %s202 = scalar_select %p201, %s200, 41
      %s203 = smul.addr %s202, 4
      %s204 = scalar_lea.vmem %s4, %s203
      %s205 = smul.u32 21, %s15
      %p206 = scmp.lt.s32.totalorder %s205, 41
      %s207 = scalar_select %p206, %s205, 41
      %s208 = smul.addr %s207, 4
      %s209 = scalar_lea.vmem %s0, %s208
      %s210 = smul.u32 21, %s15
      %s211 = smul.u32 21, %s15
      %p212 = scmp.lt.s32.totalorder %s211, 41
      %s213 = scalar_select %p212, %s211, 41
      %s214 = smul.addr %s213, 4
      %s215 = scalar_lea.vmem %s3, %s214
      %s216 = smul.u32 21, %s15
      %s217 = smul.u32 21, %s15
      %p218 = scmp.lt.s32.totalorder %s217, 41
      %s219 = scalar_select %p218, %s217, 41
      %s220 = smul.addr %s219, 4
      %s221 = scalar_lea.vmem %s4, %s220
      %s222 = smul.u32 21, %s15
      %v224 = vld [vmem:[%s209] sm:$0xf]
      %v225 = vld [vmem:[%s209 + $0x4] sm:$0xf]
      %v226 = vld [vmem:[%s209 + $0x8] sm:$0xf]
      %v227 = vld [vmem:[%s209 + $0xc] sm:$0xf]
      %v228 = vld [vmem:[%s209 + $0x10] sm:$0xf]
      %v229 = vld [vmem:[%s209 + $0x14] sm:$0xf]
      %v230 = vld [vmem:[%s209 + $0x18] sm:$0xf]
      %v231 = vld [vmem:[%s209 + $0x1c] sm:$0xf]
      %v232 = vld [vmem:[%s209 + $0x20] sm:$0xf]
      %v233 = vld [vmem:[%s209 + $0x24] sm:$0xf]
      %v234 = vld [vmem:[%s209 + $0x28] sm:$0xf]
      %v235 = vld [vmem:[%s209 + $0x2c] sm:$0xf]
      %v236 = vld [vmem:[%s209 + $0x30] sm:$0xf]
      %v237 = vld [vmem:[%s209 + $0x34] sm:$0xf]
      %v238 = vld [vmem:[%s209 + $0x38] sm:$0xf]
      %v239 = vld [vmem:[%s209 + $0x3c] sm:$0xf]
      %v240 = vld [vmem:[%s209 + $0x40] sm:$0xf]
      %v241 = vld [vmem:[%s209 + $0x44] sm:$0xf]
      %v242 = vld [vmem:[%s209 + $0x48] sm:$0xf]
      %v243 = vld [vmem:[%s209 + $0x4c] sm:$0xf]
      %v244 = vld [vmem:[%s209 + $0x50] sm:$0xf]
      %v245 = vld [vmem:[%s1] sm:$0xf]
      %v246 = vld [vmem:[%s1 + $0x4] sm:$0xf]
      %v247 = vld [vmem:[%s1 + $0x8] sm:$0xf]
      %v248 = vld [vmem:[%s1 + $0xc] sm:$0xf]
      %v249 = vld [vmem:[%s2] sm:$0x1]
      %v251 = vlaneseq
      %v252 = vshrl.u32 %v251, 7
      %v253 = vsub.s32 0, %v252
      %v254 = vrot.slane %v249, %v253
      %v277 = vunpack.c.l.b16 %v224
      %v278 = vunpack.c.l.b16 %v225
      %v279 = vunpack.c.l.b16 %v226
      %v280 = vunpack.c.l.b16 %v227
      %v281 = vunpack.c.l.b16 %v228
      %v282 = vunpack.c.l.b16 %v229
      %v283 = vunpack.c.l.b16 %v230
      %v284 = vunpack.c.l.b16 %v231
      %v285 = vunpack.c.l.b16 %v232
      %v286 = vunpack.c.l.b16 %v233
      %v287 = vunpack.c.l.b16 %v234
      %v288 = vunpack.c.l.b16 %v235
      %v289 = vunpack.c.l.b16 %v236
      %v290 = vunpack.c.l.b16 %v237
      %v291 = vunpack.c.l.b16 %v238
      %v292 = vunpack.c.l.b16 %v239
      %v293 = vunpack.c.l.b16 %v240
      %v294 = vunpack.c.l.b16 %v241
      %v295 = vunpack.c.l.b16 %v242
      %v296 = vunpack.c.l.b16 %v243
      %v297 = vunpack.c.l.b16 %v244
      %v298 = vpack.c.b16 %v278, %v277
      %v299 = vpack.c.b16 %v280, %v279
      %v300 = vpack.c.b16 %v282, %v281
      %v301 = vpack.c.b16 %v284, %v283
      %v302 = vpack.c.b16 %v286, %v285
      %v303 = vpack.c.b16 %v288, %v287
      %v304 = vpack.c.b16 %v290, %v289
      %v305 = vpack.c.b16 %v292, %v291
      %v306 = vpack.c.b16 %v294, %v293
      %v307 = vpack.c.b16 %v296, %v295
      %v308 = vpack.c.b16 %v297, %v297
      %v313 = vunpack.c.l.b16 %v245
      %v314 = vunpack.c.l.b16 %v246
      %v315 = vunpack.c.l.b16 %v247
      %v316 = vunpack.c.l.b16 %v248
      %v317 = vpack.c.b16 %v314, %v313
      %v318 = vpack.c.b16 %v316, %v315
      %vm321 = vcmask 261120
      %v323 = vsel %vm321, %v298, 0
      %v326 = vsel %vm321, %v299, 0
      %v329 = vsel %vm321, %v300, 0
      %v332 = vsel %vm321, %v301, 0
      %v335 = vsel %vm321, %v302, 0
      %v338 = vsel %vm321, %v303, 0
      %v341 = vsel %vm321, %v304, 0
      %v344 = vsel %vm321, %v305, 0
      %v347 = vsel %vm321, %v306, 0
      %v350 = vsel %vm321, %v307, 0
      %v353 = vsel %vm321, %v308, 0
      %355 = vmatprep.subr.bf16.mxu0 0
      %356 = vmatpush1.bf16.msra.mxu0 0
      %357 = vmatprep.subr.bf16.mxu0 0
      %358 = vmatpush1.bf16.msra.mxu0 0
      %359 = vmatprep.subr.bf16.mxu0 0
      %360 = vmatpush1.bf16.msra.mxu0 0
      %361 = vmatprep.subr.bf16.mxu0 0
      %362 = vmatpush1.bf16.msra.mxu0 0
      %363 = vmatprep.subr.bf16.mxu0 0
      %364 = vmatpush1.bf16.msra.mxu0 0
      %365 = vmatprep.subr.bf16.mxu0 0
      %366 = vmatpush1.bf16.msra.mxu0 0
      %367 = vmatprep.subr.bf16.mxu0 0
      %368 = vmatpush1.bf16.msra.mxu0 %v318
      %369 = vmatprep.subr.bf16.mxu0 0
      %370 = vmatpush1.bf16.msra.mxu0 %v317
      %371 = vmatprep.subr.bf16.mxu0 0
      %372 = vmatpush2.bf16.msra.mxu0 0
      %373 = vmatprep.subr.bf16.mxu0 0
      %374 = vmatpush2.bf16.msra.mxu0 0
      %375 = vmatprep.subr.bf16.mxu0 0
      %376 = vmatpush2.bf16.msra.mxu0 0
      %377 = vmatprep.subr.bf16.mxu0 0
      %378 = vmatpush2.bf16.msra.mxu0 0
      %379 = vmatprep.subr.bf16.mxu0 0
      %380 = vmatpush2.bf16.msra.mxu0 0
      %381 = vmatprep.subr.bf16.mxu0 0
      %382 = vmatpush2.bf16.msra.mxu0 0
      %383 = vmatprep.subr.bf16.mxu0 0
      %384 = vmatpush2.bf16.msra.mxu0 0
      %385 = vmatprep.subr.bf16.mxu0 0
      %386 = vmatpush2.bf16.msra.mxu0 0
      %387 = vmatprep.mubr.bf16.mxu0 0
      %388 = vmatmul.mubr.bf16.gmra.mxu0 %v323
      %v389 = vpop.f32.mrf.mxu0
      %v390 = vadd.f32 %v254, %v389
      %v391 = vpop.f32.mrf.mxu0
      %v392 = vpop.f32.mrf.mxu0
      %v393 = vadd.f32 %v254, %v392
      %v394 = vpop.f32.mrf.mxu0
      %395 = vmatprep.mubr.bf16.mxu0 0
      %396 = vmatmul.mubr.bf16.gmra.mxu0 %v326
      %v397 = vpop.f32.mrf.mxu0
      %v398 = vadd.f32 %v254, %v397
      %v399 = vpop.f32.mrf.mxu0
      %v400 = vpop.f32.mrf.mxu0
      %v401 = vadd.f32 %v254, %v400
      %v402 = vpop.f32.mrf.mxu0
      %403 = vmatprep.mubr.bf16.mxu0 0
      %404 = vmatmul.mubr.bf16.gmra.mxu0 %v329
      %v405 = vpop.f32.mrf.mxu0
      %v406 = vadd.f32 %v254, %v405
      %v407 = vpop.f32.mrf.mxu0
      %v408 = vpop.f32.mrf.mxu0
      %v409 = vadd.f32 %v254, %v408
      %v410 = vpop.f32.mrf.mxu0
      %411 = vmatprep.mubr.bf16.mxu0 0
      %412 = vmatmul.mubr.bf16.gmra.mxu0 %v332
      %v413 = vpop.f32.mrf.mxu0
      %v414 = vadd.f32 %v254, %v413
      %v415 = vpop.f32.mrf.mxu0
      %v416 = vpop.f32.mrf.mxu0
      %v417 = vadd.f32 %v254, %v416
      %v418 = vpop.f32.mrf.mxu0
      %419 = vmatprep.mubr.bf16.mxu0 0
      %420 = vmatmul.mubr.bf16.gmra.mxu0 %v335
      %v421 = vpop.f32.mrf.mxu0
      %v422 = vadd.f32 %v254, %v421
      %v423 = vpop.f32.mrf.mxu0
      %v424 = vpop.f32.mrf.mxu0
      %v425 = vadd.f32 %v254, %v424
      %v426 = vpop.f32.mrf.mxu0
      %427 = vmatprep.mubr.bf16.mxu0 0
      %428 = vmatmul.mubr.bf16.gmra.mxu0 %v338
      %v429 = vpop.f32.mrf.mxu0
      %v430 = vadd.f32 %v254, %v429
      %v431 = vpop.f32.mrf.mxu0
      %v432 = vpop.f32.mrf.mxu0
      %v433 = vadd.f32 %v254, %v432
      %v434 = vpop.f32.mrf.mxu0
      %435 = vmatprep.mubr.bf16.mxu0 0
      %436 = vmatmul.mubr.bf16.gmra.mxu0 %v341
      %v437 = vpop.f32.mrf.mxu0
      %v438 = vadd.f32 %v254, %v437
      %v439 = vpop.f32.mrf.mxu0
      %v440 = vpop.f32.mrf.mxu0
      %v441 = vadd.f32 %v254, %v440
      %v442 = vpop.f32.mrf.mxu0
      %443 = vmatprep.mubr.bf16.mxu0 0
      %444 = vmatmul.mubr.bf16.gmra.mxu0 %v344
      %v445 = vpop.f32.mrf.mxu0
      %v446 = vadd.f32 %v254, %v445
      %v447 = vpop.f32.mrf.mxu0
      %v448 = vpop.f32.mrf.mxu0
      %v449 = vadd.f32 %v254, %v448
      %v450 = vpop.f32.mrf.mxu0
      %451 = vmatprep.mubr.bf16.mxu0 0
      %452 = vmatmul.mubr.bf16.gmra.mxu0 %v347
      %v453 = vpop.f32.mrf.mxu0
      %v454 = vadd.f32 %v254, %v453
      %v455 = vpop.f32.mrf.mxu0
      %v456 = vpop.f32.mrf.mxu0
      %v457 = vadd.f32 %v254, %v456
      %v458 = vpop.f32.mrf.mxu0
      %459 = vmatprep.mubr.bf16.mxu0 0
      %460 = vmatmul.mubr.bf16.gmra.mxu0 %v350
      %v461 = vpop.f32.mrf.mxu0
      %v462 = vadd.f32 %v254, %v461
      %v463 = vpop.f32.mrf.mxu0
      %v464 = vpop.f32.mrf.mxu0
      %v465 = vadd.f32 %v254, %v464
      %v466 = vpop.f32.mrf.mxu0
      %467 = vmatprep.mubr.bf16.mxu0 0
      %468 = vmatmul.mubr.bf16.gmra.mxu0 %v353
      %v469 = vpop.f32.mrf.mxu0
      %v470 = vadd.f32 %v254, %v469
      %v471 = vpop.f32.mrf.mxu0
      %v472 = vpop.f32.mrf.mxu0
      %v473 = vpop.f32.mrf.mxu0
      %474 = vdwg.mxu0
      %v475 = vld [vmem:[%s215] sm:$0xf]
      %v476 = vld [vmem:[%s215 + $0x4] sm:$0xf]
      %v477 = vld [vmem:[%s215 + $0x8] sm:$0xf]
      %v478 = vld [vmem:[%s215 + $0xc] sm:$0xf]
      %v479 = vld [vmem:[%s215 + $0x10] sm:$0xf]
      %v480 = vld [vmem:[%s215 + $0x14] sm:$0xf]
      %v481 = vld [vmem:[%s215 + $0x18] sm:$0xf]
      %v482 = vld [vmem:[%s215 + $0x1c] sm:$0xf]
      %v483 = vld [vmem:[%s215 + $0x20] sm:$0xf]
      %v484 = vld [vmem:[%s215 + $0x24] sm:$0xf]
      %v485 = vld [vmem:[%s215 + $0x28] sm:$0xf]
      %v486 = vld [vmem:[%s215 + $0x2c] sm:$0xf]
      %v487 = vld [vmem:[%s215 + $0x30] sm:$0xf]
      %v488 = vld [vmem:[%s215 + $0x34] sm:$0xf]
      %v489 = vld [vmem:[%s215 + $0x38] sm:$0xf]
      %v490 = vld [vmem:[%s215 + $0x3c] sm:$0xf]
      %v491 = vld [vmem:[%s215 + $0x40] sm:$0xf]
      %v492 = vld [vmem:[%s215 + $0x44] sm:$0xf]
      %v493 = vld [vmem:[%s215 + $0x48] sm:$0xf]
      %v494 = vld [vmem:[%s215 + $0x4c] sm:$0xf]
      %v495 = vld [vmem:[%s215 + $0x50] sm:$0xf]
      %v496 = vunpack.c.l.bf16 %v475
      %v497 = vunpack.c.l.bf16 %v476
      %v498 = vunpack.c.l.bf16 %v477
      %v499 = vunpack.c.l.bf16 %v478
      %v500 = vunpack.c.l.bf16 %v479
      %v501 = vunpack.c.l.bf16 %v480
      %v502 = vunpack.c.l.bf16 %v481
      %v503 = vunpack.c.l.bf16 %v482
      %v504 = vunpack.c.l.bf16 %v483
      %v505 = vunpack.c.l.bf16 %v484
      %v506 = vunpack.c.l.bf16 %v485
      %v507 = vunpack.c.l.bf16 %v486
      %v508 = vunpack.c.l.bf16 %v487
      %v509 = vunpack.c.l.bf16 %v488
      %v510 = vunpack.c.l.bf16 %v489
      %v511 = vunpack.c.l.bf16 %v490
      %v512 = vunpack.c.l.bf16 %v491
      %v513 = vunpack.c.l.bf16 %v492
      %v514 = vunpack.c.l.bf16 %v493
      %v515 = vunpack.c.l.bf16 %v494
      %v516 = vunpack.c.l.bf16 %v495
      %v517 = vadd.f32 %v390, %v496
      %v518 = vadd.f32 %v393, %v497
      %v519 = vadd.f32 %v398, %v498
      %v520 = vadd.f32 %v401, %v499
      %v521 = vadd.f32 %v406, %v500
      %v522 = vadd.f32 %v409, %v501
      %v523 = vadd.f32 %v414, %v502
      %v524 = vadd.f32 %v417, %v503
      %v525 = vadd.f32 %v422, %v504
      %v526 = vadd.f32 %v425, %v505
      %v527 = vadd.f32 %v430, %v506
      %v528 = vadd.f32 %v433, %v507
      %v529 = vadd.f32 %v438, %v508
      %v530 = vadd.f32 %v441, %v509
      %v531 = vadd.f32 %v446, %v510
      %v532 = vadd.f32 %v449, %v511
      %v533 = vadd.f32 %v454, %v512
      %v534 = vadd.f32 %v457, %v513
      %v535 = vadd.f32 %v462, %v514
      %v536 = vadd.f32 %v465, %v515
      %v537 = vadd.f32 %v470, %v516
      %v538 = vpack.c.bf16 %v518, %v517
      %v539 = vpack.c.bf16 %v520, %v519
      %v540 = vpack.c.bf16 %v522, %v521
      %v541 = vpack.c.bf16 %v524, %v523
      %v542 = vpack.c.bf16 %v526, %v525
      %v543 = vpack.c.bf16 %v528, %v527
      %v544 = vpack.c.bf16 %v530, %v529
      %v545 = vpack.c.bf16 %v532, %v531
      %v546 = vpack.c.bf16 %v534, %v533
      %v547 = vpack.c.bf16 %v536, %v535
      %v548 = vpack.c.bf16 %v537, %v537
      %v560 = vunpack.c.l.b16 %v538
      %v561 = vunpack.c.h.b16 %v538
      %v562 = vunpack.c.l.b16 %v539
      %v563 = vunpack.c.h.b16 %v539
      %v564 = vunpack.c.l.b16 %v540
      %v565 = vunpack.c.h.b16 %v540
      %v566 = vunpack.c.l.b16 %v541
      %v567 = vunpack.c.h.b16 %v541
      %v568 = vunpack.c.l.b16 %v542
      %v569 = vunpack.c.h.b16 %v542
      %v570 = vunpack.c.l.b16 %v543
      %v571 = vunpack.c.h.b16 %v543
      %v572 = vunpack.c.l.b16 %v544
      %v573 = vunpack.c.h.b16 %v544
      %v574 = vunpack.c.l.b16 %v545
      %v575 = vunpack.c.h.b16 %v545
      %v576 = vunpack.c.l.b16 %v546
      %v577 = vunpack.c.h.b16 %v546
      %v578 = vunpack.c.l.b16 %v547
      %v579 = vunpack.c.h.b16 %v547
      %v580 = vunpack.c.l.b16 %v548
      %v581 = vpack.c.b16 %v560, %v560
      %v582 = vpack.c.b16 %v561, %v561
      %v583 = vpack.c.b16 %v562, %v562
      %v584 = vpack.c.b16 %v563, %v563
      %v585 = vpack.c.b16 %v564, %v564
      %v586 = vpack.c.b16 %v565, %v565
      %v587 = vpack.c.b16 %v566, %v566
      %v588 = vpack.c.b16 %v567, %v567
      %v589 = vpack.c.b16 %v568, %v568
      %v590 = vpack.c.b16 %v569, %v569
      %v591 = vpack.c.b16 %v570, %v570
      %v592 = vpack.c.b16 %v571, %v571
      %v593 = vpack.c.b16 %v572, %v572
      %v594 = vpack.c.b16 %v573, %v573
      %v595 = vpack.c.b16 %v574, %v574
      %v596 = vpack.c.b16 %v575, %v575
      %v597 = vpack.c.b16 %v576, %v576
      %v598 = vpack.c.b16 %v577, %v577
      %v599 = vpack.c.b16 %v578, %v578
      %v600 = vpack.c.b16 %v579, %v579
      %v601 = vpack.c.b16 %v580, %v580
      %vm623 = vcmask 257024
      %624 = vst.msk [vmem:[%s221] sm:$0xf] %vm623, %v581
      %625 = vst.msk [vmem:[%s221 + $0x4] sm:$0xf] %vm623, %v582
      %626 = vst.msk [vmem:[%s221 + $0x8] sm:$0xf] %vm623, %v583
      %627 = vst.msk [vmem:[%s221 + $0xc] sm:$0xf] %vm623, %v584
      %628 = vst.msk [vmem:[%s221 + $0x10] sm:$0xf] %vm623, %v585
      %629 = vst.msk [vmem:[%s221 + $0x14] sm:$0xf] %vm623, %v586
      %630 = vst.msk [vmem:[%s221 + $0x18] sm:$0xf] %vm623, %v587
      %631 = vst.msk [vmem:[%s221 + $0x1c] sm:$0xf] %vm623, %v588
      %632 = vst.msk [vmem:[%s221 + $0x20] sm:$0xf] %vm623, %v589
      %633 = vst.msk [vmem:[%s221 + $0x24] sm:$0xf] %vm623, %v590
      %634 = vst.msk [vmem:[%s221 + $0x28] sm:$0xf] %vm623, %v591
      %635 = vst.msk [vmem:[%s221 + $0x2c] sm:$0xf] %vm623, %v592
      %636 = vst.msk [vmem:[%s221 + $0x30] sm:$0xf] %vm623, %v593
      %637 = vst.msk [vmem:[%s221 + $0x34] sm:$0xf] %vm623, %v594
      %638 = vst.msk [vmem:[%s221 + $0x38] sm:$0xf] %vm623, %v595
      %639 = vst.msk [vmem:[%s221 + $0x3c] sm:$0xf] %vm623, %v596
      %640 = vst.msk [vmem:[%s221 + $0x40] sm:$0xf] %vm623, %v597
      %641 = vst.msk [vmem:[%s221 + $0x44] sm:$0xf] %vm623, %v598
      %642 = vst.msk [vmem:[%s221 + $0x48] sm:$0xf] %vm623, %v599
      %643 = vst.msk [vmem:[%s221 + $0x4c] sm:$0xf] %vm623, %v600
      %644 = vst.msk [vmem:[%s221 + $0x50] sm:$0xf] %vm623, %v601
      %s645 = smul.u32 21, %s15
      %p646 = scmp.lt.s32.totalorder %s645, 41
      %s647 = scalar_select %p646, %s645, 41
      %s648 = smul.addr %s647, 4
      %s649 = scalar_lea.vmem %s4, %s648
      // Predicated region
      $region37: #{vit_forward.17} parent=35 // pred_check
        %p650 = pneg %p127
      $region38: #{vit_forward.17} parent=35 // pred_check_branch
        %652 = sbr.rel (%p650) target = $region40
      $region39: #{vit_forward.17} parent=35 // pred_region
        %s653 = smul.u32 21, %s15
      $region40: #{vit_forward.17} parent=35 // pred_fallthru
        _
    $region36: #{vit_forward.17} parent=5 // pred_fallthru
      _
    %p654 = scmp.le.s32.totalorder 2, %s10
    // Predicated region
    $region41: #{vit_forward.17} parent=5 // pred_check
      %p655 = pneg %p654
    $region42: #{vit_forward.17} parent=5 // pred_check_branch
      %657 = sbr.rel (%p655) target = $region44
    $region43: #{vit_forward.17} parent=5 // pred_region
      %s658 = ssub.s32 %s10, 2
      // Predicated region
      $region45: #{vit_forward.17} parent=43 // pred_check
        %p659 = pneg %p133
      $region46: #{vit_forward.17} parent=43 // pred_check_branch
        %661 = sbr.rel (%p659) target = $region48
      $region47: #{vit_forward.17} parent=43 // pred_region
        %s662 = smul.u32 21, %s16
        %p663 = scmp.lt.s32.totalorder %s662, 41
        %s664 = scalar_select %p663, %s662, 41
        %s665 = smul.addr %s664, 4
        %s666 = scalar_lea.vmem %s4, %s665
      $region48: #{vit_forward.17} parent=43 // pred_fallthru
        _
    $region44: #{vit_forward.17} parent=5 // pred_fallthru
      _
  $region6: #{vit_forward.17} parent=0 // loop_footer
    %s14 = sadd.s32 1, %s10
  $region7: #{vit_forward.17} parent=0 // loop_footer_branch
    %9 = sbr.rel target = $region3
  $region8: #{vit_forward.17} parent=0 // loop_exit
    _

// kernel: vit_forward.16
$region0: #{vit_forward.16}
  #allocation0 [shape = 'u32[]', space=smem, size = 0x4, offset = 0x4, fixed_abs, tag = 'smem constant byte address 0x4 - core index']
  #allocation1 [shape = 'u32[144,128]{1,0:T(1,128)}', space=vmem, size = 0x12000, scoped, tag = 'internal scratch']
  %s0 = inlined_call_operand.vmem [shape: bf16[2,168,96], index: 0, kind: input, shape index: {}]
  %s1 = inlined_call_operand.vmem [shape: bf16[2,168,32], index: 1, kind: output, shape index: {}]
  %s2 = sld [smem:[#allocation0]]
  $region37: #{vit_forward.16} parent=0
    _
  %s4 = ssub.s32 1, %s2
  %s5 = scalar_select 0, %s4, %s2
  loop: start=0, step=1, limit=4
  $region2: #{vit_forward.16} parent=0 // loop_pre_header
    _
  $region3: #{vit_forward.16} parent=0 // loop_header
    %s7 = sphi 0, %s11
    %p8 = scmp.ge.s32.totalorder %s7, 4
    %s17 = sphi 0, %s19
    %s20 = sphi 0, %s17
    %s21 = sphi 0, %s20
    %s37 = sphi 0, %s21
    %s43 = sphi 0, %s45
    %s46 = sphi 0, %s43
    %s47 = sphi 0, %s46
    %s63 = sphi 0, %s47
  $region4: #{vit_forward.16} parent=0 // loop_header_branch
    %10 = sbr.rel (%p8) target = $region8
  $region5: #{vit_forward.16} parent=0 // loop_body
    %s12 = ssub.s32 %s7, 1
    %s13 = ssub.s32 %s7, 2
    %s14 = sadd.s32 %s7, 1
    %s15 = ssub.s32 %s7, %s14
    %p16 = scmp.eq.s32.totalorder %s15, 0
    %s18 = sadd.s32 %s17, 1
    %s19 = scalar_select %p16, %s17, %s18
    %p22 = pneg %p16
    %p23 = scmp.eq.s32.totalorder %s7, 1
    %p24 = por %p22, %p23
    %p25 = scmp.ne.s32.totalorder %s17, %s20
    %p26 = scmp.eq.s32.totalorder %s7, 0
    %p27 = por %p25, %p26
    %p28 = scmp.ne.s32.totalorder %s17, %s20
    %p29 = scmp.eq.s32.totalorder %s12, 1
    %p30 = por %p28, %p29
    %p31 = scmp.ne.s32.totalorder %s20, %s21
    %p32 = scmp.eq.s32.totalorder %s12, 0
    %p33 = por %p31, %p32
    %p34 = scmp.ne.s32.totalorder %s20, %s21
    %p35 = scmp.eq.s32.totalorder %s13, 1
    %p36 = por %p34, %p35
    %p38 = scmp.ne.s32.totalorder %s21, %s37
    %p39 = scmp.eq.s32.totalorder %s13, 0
    %p40 = por %p38, %p39
    %s41 = ssub.s32 %s7, %s14
    %p42 = scmp.eq.s32.totalorder %s41, 0
    %s44 = sadd.s32 %s43, 1
    %s45 = scalar_select %p42, %s43, %s44
    %p48 = pneg %p42
    %p49 = scmp.eq.s32.totalorder %s7, 1
    %p50 = por %p48, %p49
    %p51 = scmp.ne.s32.totalorder %s43, %s46
    %p52 = scmp.eq.s32.totalorder %s7, 0
    %p53 = por %p51, %p52
    %p54 = scmp.ne.s32.totalorder %s43, %s46
    %p55 = scmp.eq.s32.totalorder %s12, 1
    %p56 = por %p54, %p55
    %p57 = scmp.ne.s32.totalorder %s46, %s47
    %p58 = scmp.eq.s32.totalorder %s12, 0
    %p59 = por %p57, %p58
    %p60 = scmp.ne.s32.totalorder %s46, %s47
    %p61 = scmp.eq.s32.totalorder %s13, 1
    %p62 = por %p60, %p61
    %p64 = scmp.ne.s32.totalorder %s47, %s63
    %p65 = scmp.eq.s32.totalorder %s13, 0
    %p66 = por %p64, %p65
    %p67 = scmp.le.s32.totalorder 1, %s7
    %p68 = scmp.lt.s32.totalorder %s7, 3
    %p69 = pnand %p67, %p68
    %p70 = pneg %p69
    // Predicated region
    $region9: #{vit_forward.16} parent=5 // pred_check
      _
    $region10: #{vit_forward.16} parent=5 // pred_check_branch
      %72 = sbr.rel (%p69) target = $region12
    $region11: #{vit_forward.16} parent=5 // pred_region
      %s73 = ssub.s32 %s7, 1
    $region12: #{vit_forward.16} parent=5 // pred_fallthru
      _
    %p74 = scmp.lt.s32.totalorder %s7, 2
    // Predicated region
    $region13: #{vit_forward.16} parent=5 // pred_check
      %p75 = pneg %p74
    $region14: #{vit_forward.16} parent=5 // pred_check_branch
      %77 = sbr.rel (%p75) target = $region16
    $region15: #{vit_forward.16} parent=5 // pred_region
      // Predicated region
      $region17: #{vit_forward.16} parent=15 // pred_check
        %p78 = pneg %p27
      $region18: #{vit_forward.16} parent=15 // pred_check_branch
        %80 = sbr.rel (%p78) target = $region20
      $region19: #{vit_forward.16} parent=15 // pred_region
        %p81 = scmp.lt.s32.totalorder %s7, 1
        %s82 = scalar_select %p81, %s7, 1
        %s83 = smul.addr %s82, 21
        %s84 = smul.addr %s83, 4
        %s85 = scalar_lea.vmem %s0, %s84
      $region20: #{vit_forward.16} parent=15 // pred_fallthru
        _
    $region16: #{vit_forward.16} parent=5 // pred_fallthru
      _
    %p86 = scmp.le.s32.totalorder 1, %s7
    %p87 = scmp.lt.s32.totalorder %s7, 3
    %p88 = pnand %p86, %p87
    %p89 = pneg %p88
    // Predicated region
    $region21: #{vit_forward.16} parent=5 // pred_check
      _
    $region22: #{vit_forward.16} parent=5 // pred_check_branch
      %91 = sbr.rel (%p88) target = $region24
    $region23: #{vit_forward.16} parent=5 // pred_region
      %s92 = ssub.s32 %s7, 1
      %p93 = scmp.lt.s32.totalorder %s12, 1
      %s94 = scalar_select %p93, %s12, 1
      %s95 = smul.addr %s94, 21
      %s96 = smul.addr %s95, 4
      %s97 = scalar_lea.vmem %s0, %s96
      %p98 = pneg %p33
      %p99 = pneg %p30
      %p100 = pneg %p59
      %p101 = pneg %p56
      %p102 = scmp.lt.s32.totalorder %s12, 1
      %s103 = scalar_select %p102, %s12, 1
      %s104 = smul.addr %s103, 21
      %s105 = smul.addr %s104, 4
      %s106 = scalar_lea.vmem %s1, %s105
      %p107 = scmp.lt.s32.totalorder %s12, 1
      %s108 = scalar_select %p107, %s12, 1
      %s109 = smul.addr %s108, 21
      %s110 = smul.addr %s109, 4
      %s111 = scalar_lea.vmem %s0, %s110
      %p112 = scmp.lt.s32.totalorder %s12, 1
      %s113 = scalar_select %p112, %s12, 1
      %s114 = smul.addr %s113, 21
      %s115 = smul.addr %s114, 4
      %s116 = scalar_lea.vmem %s1, %s115
      %v118 = vlaneseq
      %v119 = vand.u32 %v118, 127
      %v120 = vadd.s32 %v119, 128
      %vm121 = vcmp.lt.s32.totalorder %v119, 161
      %vm122 = vcmp.lt.s32.totalorder %v120, 161
      %v123 = vsel %vm121, 0.0, -1e+30
      %v124 = vsel %vm122, 0.0, -1e+30
      %v125 = vld [vmem:[%s111] sm:$0xf]
      %v126 = vld [vmem:[%s111 + $0x4] sm:$0xf]
      %v127 = vld [vmem:[%s111 + $0x8] sm:$0xf]
      %v128 = vld [vmem:[%s111 + $0xc] sm:$0xf]
      %v129 = vld [vmem:[%s111 + $0x10] sm:$0xf]
      %v130 = vld [vmem:[%s111 + $0x14] sm:$0xf]
      %v131 = vld [vmem:[%s111 + $0x18] sm:$0xf]
      %v132 = vld [vmem:[%s111 + $0x1c] sm:$0xf]
      %v133 = vld [vmem:[%s111 + $0x20] sm:$0xf]
      %v134 = vld [vmem:[%s111 + $0x24] sm:$0xf]
      %v135 = vld [vmem:[%s111 + $0x28] sm:$0xf]
      %v136 = vld [vmem:[%s111 + $0x2c] sm:$0xf]
      %v137 = vld [vmem:[%s111 + $0x30] sm:$0xf]
      %v138 = vld [vmem:[%s111 + $0x34] sm:$0xf]
      %v139 = vld [vmem:[%s111 + $0x38] sm:$0xf]
      %v140 = vld [vmem:[%s111 + $0x3c] sm:$0xf]
      %v141 = vld [vmem:[%s111 + $0x40] sm:$0xf]
      %v142 = vld [vmem:[%s111 + $0x44] sm:$0xf]
      %v143 = vld [vmem:[%s111 + $0x48] sm:$0xf]
      %v144 = vld [vmem:[%s111 + $0x4c] sm:$0xf]
      %v145 = vld [vmem:[%s111 + $0x50] sm:$0xf]
      %v167 = vunpack.c.l.b16 %v125
      %v168 = vunpack.c.l.b16 %v126
      %v169 = vunpack.c.l.b16 %v127
      %v170 = vunpack.c.l.b16 %v128
      %v171 = vunpack.c.l.b16 %v129
      %v172 = vunpack.c.l.b16 %v130
      %v173 = vunpack.c.l.b16 %v131
      %v174 = vunpack.c.l.b16 %v132
      %v175 = vunpack.c.l.b16 %v133
      %v176 = vunpack.c.l.b16 %v134
      %v177 = vunpack.c.l.b16 %v135
      %v178 = vunpack.c.l.b16 %v136
      %v179 = vunpack.c.l.b16 %v137
      %v180 = vunpack.c.l.b16 %v138
      %v181 = vunpack.c.l.b16 %v139
      %v182 = vunpack.c.l.b16 %v140
      %v183 = vunpack.c.l.b16 %v141
      %v184 = vunpack.c.l.b16 %v142
      %v185 = vunpack.c.l.b16 %v143
      %v186 = vunpack.c.l.b16 %v144
      %v187 = vunpack.c.l.b16 %v145
      %v188 = vpack.c.b16 %v168, %v167
      %v189 = vpack.c.b16 %v170, %v169
      %v190 = vpack.c.b16 %v172, %v171
      %v191 = vpack.c.b16 %v174, %v173
      %v192 = vpack.c.b16 %v176, %v175
      %v193 = vpack.c.b16 %v178, %v177
      %v194 = vpack.c.b16 %v180, %v179
      %v195 = vpack.c.b16 %v182, %v181
      %v196 = vpack.c.b16 %v184, %v183
      %v197 = vpack.c.b16 %v186, %v185
      %v198 = vpack.c.b16 %v187, %v187
      %199 = vrot.lane.b32.xlu0 %v188, 96
      %v200 = vpop.permute.xlu0 %199
      %201 = vrot.lane.b32.xlu0 %v189, 96
      %v202 = vpop.permute.xlu0 %201
      %203 = vrot.lane.b32.xlu0 %v190, 96
      %v204 = vpop.permute.xlu0 %203
      %205 = vrot.lane.b32.xlu0 %v191, 96
      %v206 = vpop.permute.xlu0 %205
      %207 = vrot.lane.b32.xlu0 %v192, 96
      %v208 = vpop.permute.xlu0 %207
      %209 = vrot.lane.b32.xlu0 %v193, 96
      %v210 = vpop.permute.xlu0 %209
      %211 = vrot.lane.b32.xlu0 %v194, 96
      %v212 = vpop.permute.xlu0 %211
      %213 = vrot.lane.b32.xlu0 %v195, 96
      %v214 = vpop.permute.xlu0 %213
      %215 = vrot.lane.b32.xlu0 %v196, 96
      %v216 = vpop.permute.xlu0 %215
      %217 = vrot.lane.b32.xlu0 %v197, 96
      %v218 = vpop.permute.xlu0 %217
      %219 = vrot.lane.b32.xlu0 %v198, 96
      %v220 = vpop.permute.xlu0 %219
      %vm221 = vcmask 130048
      %v223 = vsel %vm221, %v188, 0
      %v226 = vsel %vm221, %v189, 0
      %v229 = vsel %vm221, %v190, 0
      %v232 = vsel %vm221, %v191, 0
      %v235 = vsel %vm221, %v192, 0
      %v238 = vsel %vm221, %v193, 0
      %v241 = vsel %vm221, %v194, 0
      %v244 = vsel %vm221, %v195, 0
      %v247 = vsel %vm221, %v196, 0
      %v250 = vsel %vm221, %v197, 0
      %v253 = vsel %vm221, %v198, 0
      %v256 = vsel %vm221, %v200, 0
      %v259 = vsel %vm221, %v202, 0
      %v262 = vsel %vm221, %v204, 0
      %v265 = vsel %vm221, %v206, 0
      %v268 = vsel %vm221, %v208, 0
      %v271 = vsel %vm221, %v210, 0
      %v274 = vsel %vm221, %v212, 0
      %v277 = vsel %vm221, %v214, 0
      %v280 = vsel %vm221, %v216, 0
      %v283 = vsel %vm221, %v218, 0
      %v286 = vsel %vm221, %v220, 0
      %288 = vmatprep.subr.bf16.mxu0 0
      %289 = vmatpush1.bf16.xpose.msra.mxu0 %v277
      %290 = vmatprep.subr.bf16.mxu0 0
      %291 = vmatpush1.bf16.xpose.msra.mxu0 %v274
      %292 = vmatprep.subr.bf16.mxu0 0
      %293 = vmatpush1.bf16.xpose.msra.mxu0 %v271
      %294 = vmatprep.subr.bf16.mxu0 0
      %295 = vmatpush1.bf16.xpose.msra.mxu0 %v268
      %296 = vmatprep.subr.bf16.mxu0 0
      %297 = vmatpush1.bf16.xpose.msra.mxu0 %v265
      %298 = vmatprep.subr.bf16.mxu0 0
      %299 = vmatpush1.bf16.xpose.msra.mxu0 %v262
      %300 = vmatprep.subr.bf16.mxu0 0
      %301 = vmatpush1.bf16.xpose.msra.mxu0 %v259
      %302 = vmatprep.subr.bf16.mxu0 0
      %303 = vmatpush1.bf16.xpose.msra.mxu0 %v256
      %304 = vmatprep.subr.bf16.mxu0 0
      %305 = vmatpush2.bf16.xpose.msra.mxu0 0
      %306 = vmatprep.subr.bf16.mxu0 0
      %307 = vmatpush2.bf16.xpose.msra.mxu0 0
      %308 = vmatprep.subr.bf16.mxu0 0
      %309 = vmatpush2.bf16.xpose.msra.mxu0 0
      %310 = vmatprep.subr.bf16.mxu0 0
      %311 = vmatpush2.bf16.xpose.msra.mxu0 0
      %312 = vmatprep.subr.bf16.mxu0 0
      %313 = vmatpush2.bf16.xpose.msra.mxu0 0
      %314 = vmatprep.subr.bf16.mxu0 0
      %315 = vmatpush2.bf16.xpose.msra.mxu0 %v286
      %316 = vmatprep.subr.bf16.mxu0 0
      %317 = vmatpush2.bf16.xpose.msra.mxu0 %v283
      %318 = vmatprep.subr.bf16.mxu0 0
      %319 = vmatpush2.bf16.xpose.msra.mxu0 %v280
      %320 = vmatprep.mubr.bf16.mxu0 0
      %321 = vmatmul.mubr.bf16.gmra.mxu0 %v223
      %v322 = vpop.f32.mrf.mxu0
      %v323 = vadd.f32 %v123, %v322
      %v324 = vpop.f32.mrf.mxu0
      %v325 = vadd.f32 %v124, %v324
      %v326 = vpop.f32.mrf.mxu0
      %v327 = vadd.f32 %v123, %v326
      %v328 = vpop.f32.mrf.mxu0
      %v329 = vadd.f32 %v124, %v328
      %330 = vmatprep.mubr.bf16.mxu0 0
      %331 = vmatmul.mubr.bf16.gmra.mxu0 %v226
      %v332 = vpop.f32.mrf.mxu0
      %v333 = vadd.f32 %v123, %v332
      %v334 = vpop.f32.mrf.mxu0
      %v335 = vadd.f32 %v124, %v334
      %v336 = vpop.f32.mrf.mxu0
      %v337 = vadd.f32 %v123, %v336
      %v338 = vpop.f32.mrf.mxu0
      %v339 = vadd.f32 %v124, %v338
      %340 = vmatprep.mubr.bf16.mxu0 0
      %341 = vmatmul.mubr.bf16.gmra.mxu0 %v229
      %v342 = vpop.f32.mrf.mxu0
      %v343 = vadd.f32 %v123, %v342
      %v344 = vpop.f32.mrf.mxu0
      %v345 = vadd.f32 %v124, %v344
      %v346 = vpop.f32.mrf.mxu0
      %v347 = vadd.f32 %v123, %v346
      %v348 = vpop.f32.mrf.mxu0
      %v349 = vadd.f32 %v124, %v348
      %350 = vmatprep.mubr.bf16.mxu0 0
      %351 = vmatmul.mubr.bf16.gmra.mxu0 %v232
      %v352 = vpop.f32.mrf.mxu0
      %v353 = vadd.f32 %v123, %v352
      %v354 = vpop.f32.mrf.mxu0
      %v355 = vadd.f32 %v124, %v354
      %v356 = vpop.f32.mrf.mxu0
      %v357 = vadd.f32 %v123, %v356
      %v358 = vpop.f32.mrf.mxu0
      %v359 = vadd.f32 %v124, %v358
      %360 = vmatprep.mubr.bf16.mxu0 0
      %361 = vmatmul.mubr.bf16.gmra.mxu0 %v235
      %v362 = vpop.f32.mrf.mxu0
      %v363 = vadd.f32 %v123, %v362
      %v364 = vpop.f32.mrf.mxu0
      %v365 = vadd.f32 %v124, %v364
      %v366 = vpop.f32.mrf.mxu0
      %v367 = vadd.f32 %v123, %v366
      %v368 = vpop.f32.mrf.mxu0
      %v369 = vadd.f32 %v124, %v368
      %370 = vmatprep.mubr.bf16.mxu0 0
      %371 = vmatmul.mubr.bf16.gmra.mxu0 %v238
      %v372 = vpop.f32.mrf.mxu0
      %v373 = vadd.f32 %v123, %v372
      %v374 = vpop.f32.mrf.mxu0
      %v375 = vadd.f32 %v124, %v374
      %v376 = vpop.f32.mrf.mxu0
      %v377 = vadd.f32 %v123, %v376
      %v378 = vpop.f32.mrf.mxu0
      %v379 = vadd.f32 %v124, %v378
      %380 = vmatprep.mubr.bf16.mxu0 0
      %381 = vmatmul.mubr.bf16.gmra.mxu0 %v241
      %v382 = vpop.f32.mrf.mxu0
      %v383 = vadd.f32 %v123, %v382
      %v384 = vpop.f32.mrf.mxu0
      %v385 = vadd.f32 %v124, %v384
      %v386 = vpop.f32.mrf.mxu0
      %v387 = vadd.f32 %v123, %v386
      %v388 = vpop.f32.mrf.mxu0
      %v389 = vadd.f32 %v124, %v388
      %390 = vmatprep.mubr.bf16.mxu0 0
      %391 = vmatmul.mubr.bf16.gmra.mxu0 %v244
      %v392 = vpop.f32.mrf.mxu0
      %v393 = vadd.f32 %v123, %v392
      %v394 = vpop.f32.mrf.mxu0
      %v395 = vadd.f32 %v124, %v394
      %v396 = vpop.f32.mrf.mxu0
      %v397 = vadd.f32 %v123, %v396
      %v398 = vpop.f32.mrf.mxu0
      %v399 = vadd.f32 %v124, %v398
      %400 = vmatprep.mubr.bf16.mxu0 0
      %401 = vmatmul.mubr.bf16.gmra.mxu0 %v247
      %v402 = vpop.f32.mrf.mxu0
      %v403 = vadd.f32 %v123, %v402
      %v404 = vpop.f32.mrf.mxu0
      %v405 = vadd.f32 %v124, %v404
      %v406 = vpop.f32.mrf.mxu0
      %v407 = vadd.f32 %v123, %v406
      %v408 = vpop.f32.mrf.mxu0
      %v409 = vadd.f32 %v124, %v408
      %410 = vmatprep.mubr.bf16.mxu0 0
      %411 = vmatmul.mubr.bf16.gmra.mxu0 %v250
      %v412 = vpop.f32.mrf.mxu0
      %v413 = vadd.f32 %v123, %v412
      %v414 = vpop.f32.mrf.mxu0
      %v415 = vadd.f32 %v124, %v414
      %v416 = vpop.f32.mrf.mxu0
      %v417 = vadd.f32 %v123, %v416
      %v418 = vpop.f32.mrf.mxu0
      %v419 = vadd.f32 %v124, %v418
      %420 = vmatprep.mubr.bf16.mxu0 0
      %421 = vmatmul.mubr.bf16.gmra.mxu0 %v253
      %v422 = vpop.f32.mrf.mxu0
      %v423 = vadd.f32 %v123, %v422
      %v424 = vpop.f32.mrf.mxu0
      %v425 = vadd.f32 %v124, %v424
      %v426 = vpop.f32.mrf.mxu0
      %v427 = vpop.f32.mrf.mxu0
      %428 = vdwg.mxu0
      %vm429 = vcmask 326656
      %v430 = vsel %vm429, %v325, -inf
      %v431 = vmax.f32 %v323, %v430
      %432 = vmax.xlane.f32.xlu0 %v431
      %v433 = vpop.xlane.xlu0 %432
      %v434 = vsel %vm429, %v329, -inf
      %v435 = vmax.f32 %v327, %v434
      %436 = vmax.xlane.f32.xlu0 %v435
      %v437 = vpop.xlane.xlu0 %436
      %v438 = vsel %vm429, %v335, -inf
      %v439 = vmax.f32 %v333, %v438
      %440 = vmax.xlane.f32.xlu0 %v439
      %v441 = vpop.xlane.xlu0 %440
      %v442 = vsel %vm429, %v339, -inf
      %v443 = vmax.f32 %v337, %v442
      %444 = vmax.xlane.f32.xlu0 %v443
      %v445 = vpop.xlane.xlu0 %444
      %v446 = vsel %vm429, %v345, -inf
      %v447 = vmax.f32 %v343, %v446
      %448 = vmax.xlane.f32.xlu0 %v447
      %v449 = vpop.xlane.xlu0 %448
      %v450 = vsel %vm429, %v349, -inf
      %v451 = vmax.f32 %v347, %v450
      %452 = vmax.xlane.f32.xlu0 %v451
      %v453 = vpop.xlane.xlu0 %452
      %v454 = vsel %vm429, %v355, -inf
      %v455 = vmax.f32 %v353, %v454
      %456 = vmax.xlane.f32.xlu0 %v455
      %v457 = vpop.xlane.xlu0 %456
      %v458 = vsel %vm429, %v359, -inf
      %v459 = vmax.f32 %v357, %v458
      %460 = vmax.xlane.f32.xlu0 %v459
      %v461 = vpop.xlane.xlu0 %460
      %v462 = vsel %vm429, %v365, -inf
      %v463 = vmax.f32 %v363, %v462
      %464 = vmax.xlane.f32.xlu0 %v463
      %v465 = vpop.xlane.xlu0 %464
      %v466 = vsel %vm429, %v369, -inf
      %v467 = vmax.f32 %v367, %v466
      %468 = vmax.xlane.f32.xlu0 %v467
      %v469 = vpop.xlane.xlu0 %468
      %v470 = vsel %vm429, %v375, -inf
      %v471 = vmax.f32 %v373, %v470
      %472 = vmax.xlane.f32.xlu0 %v471
      %v473 = vpop.xlane.xlu0 %472
      %v474 = vsel %vm429, %v379, -inf
      %v475 = vmax.f32 %v377, %v474
      %476 = vmax.xlane.f32.xlu0 %v475
      %v477 = vpop.xlane.xlu0 %476
      %v478 = vsel %vm429, %v385, -inf
      %v479 = vmax.f32 %v383, %v478
      %480 = vmax.xlane.f32.xlu0 %v479
      %v481 = vpop.xlane.xlu0 %480
      %v482 = vsel %vm429, %v389, -inf
      %v483 = vmax.f32 %v387, %v482
      %484 = vmax.xlane.f32.xlu0 %v483
      %v485 = vpop.xlane.xlu0 %484
      %v486 = vsel %vm429, %v395, -inf
      %v487 = vmax.f32 %v393, %v486
      %488 = vmax.xlane.f32.xlu0 %v487
      %v489 = vpop.xlane.xlu0 %488
      %v490 = vsel %vm429, %v399, -inf
      %v491 = vmax.f32 %v397, %v490
      %492 = vmax.xlane.f32.xlu0 %v491
      %v493 = vpop.xlane.xlu0 %492
      %v494 = vsel %vm429, %v405, -inf
      %v495 = vmax.f32 %v403, %v494
      %496 = vmax.xlane.f32.xlu0 %v495
      %v497 = vpop.xlane.xlu0 %496
      %v498 = vsel %vm429, %v409, -inf
      %v499 = vmax.f32 %v407, %v498
      %500 = vmax.xlane.f32.xlu0 %v499
      %v501 = vpop.xlane.xlu0 %500
      %v502 = vsel %vm429, %v415, -inf
      %v503 = vmax.f32 %v413, %v502
      %504 = vmax.xlane.f32.xlu0 %v503
      %v505 = vpop.xlane.xlu0 %504
      %v506 = vsel %vm429, %v419, -inf
      %v507 = vmax.f32 %v417, %v506
      %508 = vmax.xlane.f32.xlu0 %v507
      %v509 = vpop.xlane.xlu0 %508
      %v510 = vsel %vm429, %v425, -inf
      %v511 = vmax.f32 %v423, %v510
      %512 = vmax.xlane.f32.xlu0 %v511
      %v513 = vpop.xlane.xlu0 %512
      %v514 = vsub.f32 %v323, %v433
      %v515 = vsub.f32 %v325, %v433
      %v516 = vsub.f32 %v327, %v437
      %v517 = vsub.f32 %v329, %v437
      %v518 = vsub.f32 %v333, %v441
      %v519 = vsub.f32 %v335, %v441
      %v520 = vsub.f32 %v337, %v445
      %v521 = vsub.f32 %v339, %v445
      %v522 = vsub.f32 %v343, %v449
      %v523 = vsub.f32 %v345, %v449
      %v524 = vsub.f32 %v347, %v453
      %v525 = vsub.f32 %v349, %v453
      %v526 = vsub.f32 %v353, %v457
      %v527 = vsub.f32 %v355, %v457
      %v528 = vsub.f32 %v357, %v461
      %v529 = vsub.f32 %v359, %v461
      %v530 = vsub.f32 %v363, %v465
      %v531 = vsub.f32 %v365, %v465
      %v532 = vsub.f32 %v367, %v469
      %v533 = vsub.f32 %v369, %v469
      %v534 = vsub.f32 %v373, %v473
      %v535 = vsub.f32 %v375, %v473
      %v536 = vsub.f32 %v377, %v477
      %v537 = vsub.f32 %v379, %v477
      %v538 = vsub.f32 %v383, %v481
      %v539 = vsub.f32 %v385, %v481
      %v540 = vsub.f32 %v387, %v485
      %v541 = vsub.f32 %v389, %v485
      %v542 = vsub.f32 %v393, %v489
      %v543 = vsub.f32 %v395, %v489
      %v544 = vsub.f32 %v397, %v493
      %v545 = vsub.f32 %v399, %v493
      %v546 = vsub.f32 %v403, %v497
      %v547 = vsub.f32 %v405, %v497
      %v548 = vsub.f32 %v407, %v501
      %v549 = vsub.f32 %v409, %v501
      %v550 = vsub.f32 %v413, %v505
      %v551 = vsub.f32 %v415, %v505
      %v552 = vsub.f32 %v417, %v509
      %v553 = vsub.f32 %v419, %v509
      %v554 = vsub.f32 %v423, %v513
      %v555 = vsub.f32 %v425, %v513
      %v556 = vmul.f32 %v514, 1.442695
      %v557 = vpow.pop %v556
      %v558 = vmul.f32 %v515, 1.442695
      %v559 = vpow.pop %v558
      %v560 = vmul.f32 %v516, 1.442695
      %v561 = vpow.pop %v560
      %v562 = vmul.f32 %v517, 1.442695
      %v563 = vpow.pop %v562
      %v564 = vmul.f32 %v518, 1.442695
      %v565 = vpow.pop %v564
      %v566 = vmul.f32 %v519, 1.442695
      %v567 = vpow.pop %v566
      %v568 = vmul.f32 %v520, 1.442695
      %v569 = vpow.pop %v568
      %v570 = vmul.f32 %v521, 1.442695
      %v571 = vpow.pop %v570
      %v572 = vmul.f32 %v522, 1.442695
      %v573 = vpow.pop %v572
      %v574 = vmul.f32 %v523, 1.442695
      %v575 = vpow.pop %v574
      %v576 = vmul.f32 %v524, 1.442695
      %v577 = vpow.pop %v576
      %v578 = vmul.f32 %v525, 1.442695
      %v579 = vpow.pop %v578
      %v580 = vmul.f32 %v526, 1.442695
      %v581 = vpow.pop %v580
      %v582 = vmul.f32 %v527, 1.442695
      %v583 = vpow.pop %v582
      %v584 = vmul.f32 %v528, 1.442695
      %v585 = vpow.pop %v584
      %v586 = vmul.f32 %v529, 1.442695
      %v587 = vpow.pop %v586
      %v588 = vmul.f32 %v530, 1.442695
      %v589 = vpow.pop %v588
      %v590 = vmul.f32 %v531, 1.442695
      %v591 = vpow.pop %v590
      %v592 = vmul.f32 %v532, 1.442695
      %v593 = vpow.pop %v592
      %v594 = vmul.f32 %v533, 1.442695
      %v595 = vpow.pop %v594
      %v596 = vmul.f32 %v534, 1.442695
      %v597 = vpow.pop %v596
      %v598 = vmul.f32 %v535, 1.442695
      %v599 = vpow.pop %v598
      %v600 = vmul.f32 %v536, 1.442695
      %v601 = vpow.pop %v600
      %v602 = vmul.f32 %v537, 1.442695
      %v603 = vpow.pop %v602
      %v604 = vmul.f32 %v538, 1.442695
      %v605 = vpow.pop %v604
      %v606 = vmul.f32 %v539, 1.442695
      %v607 = vpow.pop %v606
      %v608 = vmul.f32 %v540, 1.442695
      %v609 = vpow.pop %v608
      %v610 = vmul.f32 %v541, 1.442695
      %v611 = vpow.pop %v610
      %v612 = vmul.f32 %v542, 1.442695
      %v613 = vpow.pop %v612
      %v614 = vmul.f32 %v543, 1.442695
      %v615 = vpow.pop %v614
      %v616 = vmul.f32 %v544, 1.442695
      %v617 = vpow.pop %v616
      %v618 = vmul.f32 %v545, 1.442695
      %v619 = vpow.pop %v618
      %v620 = vmul.f32 %v546, 1.442695
      %v621 = vpow.pop %v620
      %v622 = vmul.f32 %v547, 1.442695
      %v623 = vpow.pop %v622
      %v624 = vmul.f32 %v548, 1.442695
      %v625 = vpow.pop %v624
      %v626 = vmul.f32 %v549, 1.442695
      %v627 = vpow.pop %v626
      %v628 = vmul.f32 %v550, 1.442695
      %v629 = vpow.pop %v628
      %v630 = vmul.f32 %v551, 1.442695
      %v631 = vpow.pop %v630
      %v632 = vmul.f32 %v552, 1.442695
      %v633 = vpow.pop %v632
      %v634 = vmul.f32 %v553, 1.442695
      %v635 = vpow.pop %v634
      %v636 = vmul.f32 %v554, 1.442695
      %v637 = vpow.pop %v636
      %v638 = vmul.f32 %v555, 1.442695
      %v639 = vpow.pop %v638
      %v640 = vsel %vm429, %v559, 0.0
      %v641 = vadd.f32 %v557, %v640
      %642 = vadd.xlane.f32.xlu0 %v641
      %v643 = vpop.xlane.xlu0 %642
      %v644 = vsel %vm429, %v563, 0.0
      %v645 = vadd.f32 %v561, %v644
      %646 = vadd.xlane.f32.xlu0 %v645
      %v647 = vpop.xlane.xlu0 %646
      %v648 = vsel %vm429, %v567, 0.0
      %v649 = vadd.f32 %v565, %v648
      %650 = vadd.xlane.f32.xlu0 %v649
      %v651 = vpop.xlane.xlu0 %650
      %v652 = vsel %vm429, %v571, 0.0
      %v653 = vadd.f32 %v569, %v652
      %654 = vadd.xlane.f32.xlu0 %v653
      %v655 = vpop.xlane.xlu0 %654
      %v656 = vsel %vm429, %v575, 0.0
      %v657 = vadd.f32 %v573, %v656
      %658 = vadd.xlane.f32.xlu0 %v657
      %v659 = vpop.xlane.xlu0 %658
      %v660 = vsel %vm429, %v579, 0.0
      %v661 = vadd.f32 %v577, %v660
      %662 = vadd.xlane.f32.xlu0 %v661
      %v663 = vpop.xlane.xlu0 %662
      %v664 = vsel %vm429, %v583, 0.0
      %v665 = vadd.f32 %v581, %v664
      %666 = vadd.xlane.f32.xlu0 %v665
      %v667 = vpop.xlane.xlu0 %666
      %v668 = vsel %vm429, %v587, 0.0
      %v669 = vadd.f32 %v585, %v668
      %670 = vadd.xlane.f32.xlu0 %v669
      %v671 = vpop.xlane.xlu0 %670
      %v672 = vsel %vm429, %v591, 0.0
      %v673 = vadd.f32 %v589, %v672
      %674 = vadd.xlane.f32.xlu0 %v673
      %v675 = vpop.xlane.xlu0 %674
      %v676 = vsel %vm429, %v595, 0.0
      %v677 = vadd.f32 %v593, %v676
      %678 = vadd.xlane.f32.xlu0 %v677
      %v679 = vpop.xlane.xlu0 %678
      %v680 = vsel %vm429, %v599, 0.0
      %v681 = vadd.f32 %v597, %v680
      %682 = vadd.xlane.f32.xlu0 %v681
      %v683 = vpop.xlane.xlu0 %682
      %v684 = vsel %vm429, %v603, 0.0
      %v685 = vadd.f32 %v601, %v684
      %686 = vadd.xlane.f32.xlu0 %v685
      %v687 = vpop.xlane.xlu0 %686
      %v688 = vsel %vm429, %v607, 0.0
      %v689 = vadd.f32 %v605, %v688
      %690 = vadd.xlane.f32.xlu0 %v689
      %v691 = vpop.xlane.xlu0 %690
      %v692 = vsel %vm429, %v611, 0.0
      %v693 = vadd.f32 %v609, %v692
      %694 = vadd.xlane.f32.xlu0 %v693
      %v695 = vpop.xlane.xlu0 %694
      %v696 = vsel %vm429, %v615, 0.0
      %v697 = vadd.f32 %v613, %v696
      %698 = vadd.xlane.f32.xlu0 %v697
      %v699 = vpop.xlane.xlu0 %698
      %v700 = vsel %vm429, %v619, 0.0
      %v701 = vadd.f32 %v617, %v700
      %702 = vadd.xlane.f32.xlu0 %v701
      %v703 = vpop.xlane.xlu0 %702
      %v704 = vsel %vm429, %v623, 0.0
      %v705 = vadd.f32 %v621, %v704
      %706 = vadd.xlane.f32.xlu0 %v705
      %v707 = vpop.xlane.xlu0 %706
      %v708 = vsel %vm429, %v627, 0.0
      %v709 = vadd.f32 %v625, %v708
      %710 = vadd.xlane.f32.xlu0 %v709
      %v711 = vpop.xlane.xlu0 %710
      %v712 = vsel %vm429, %v631, 0.0
      %v713 = vadd.f32 %v629, %v712
      %714 = vadd.xlane.f32.xlu0 %v713
      %v715 = vpop.xlane.xlu0 %714
      %v716 = vsel %vm429, %v635, 0.0
      %v717 = vadd.f32 %v633, %v716
      %718 = vadd.xlane.f32.xlu0 %v717
      %v719 = vpop.xlane.xlu0 %718
      %v720 = vsel %vm429, %v639, 0.0
      %v721 = vadd.f32 %v637, %v720
      %722 = vadd.xlane.f32.xlu0 %v721
      %v723 = vpop.xlane.xlu0 %722
      %v724 = vrcp.pop %v643
      %v725 = vrcp.pop %v647
      %v726 = vrcp.pop %v651
      %v727 = vrcp.pop %v655
      %v728 = vrcp.pop %v659
      %v729 = vrcp.pop %v663
      %v730 = vrcp.pop %v667
      %v731 = vrcp.pop %v671
      %v732 = vrcp.pop %v675
      %v733 = vrcp.pop %v679
      %v734 = vrcp.pop %v683
      %v735 = vrcp.pop %v687
      %v736 = vrcp.pop %v691
      %v737 = vrcp.pop %v695
      %v738 = vrcp.pop %v699
      %v739 = vrcp.pop %v703
      %v740 = vrcp.pop %v707
      %v741 = vrcp.pop %v711
      %v742 = vrcp.pop %v715
      %v743 = vrcp.pop %v719
      %v744 = vrcp.pop %v723
      %v745 = vmul.f32 %v557, %v724
      %v746 = vmul.f32 %v559, %v724
      %v747 = vmul.f32 %v561, %v725
      %v748 = vmul.f32 %v563, %v725
      %v749 = vmul.f32 %v565, %v726
      %v750 = vmul.f32 %v567, %v726
      %v751 = vmul.f32 %v569, %v727
      %v752 = vmul.f32 %v571, %v727
      %v753 = vmul.f32 %v573, %v728
      %v754 = vmul.f32 %v575, %v728
      %v755 = vmul.f32 %v577, %v729
      %v756 = vmul.f32 %v579, %v729
      %v757 = vmul.f32 %v581, %v730
      %v758 = vmul.f32 %v583, %v730
      %v759 = vmul.f32 %v585, %v731
      %v760 = vmul.f32 %v587, %v731
      %v761 = vmul.f32 %v589, %v732
      %v762 = vmul.f32 %v591, %v732
      %v763 = vmul.f32 %v593, %v733
      %v764 = vmul.f32 %v595, %v733
      %v765 = vmul.f32 %v597, %v734
      %v766 = vmul.f32 %v599, %v734
      %v767 = vmul.f32 %v601, %v735
      %v768 = vmul.f32 %v603, %v735
      %v769 = vmul.f32 %v605, %v736
      %v770 = vmul.f32 %v607, %v736
      %v771 = vmul.f32 %v609, %v737
      %v772 = vmul.f32 %v611, %v737
      %v773 = vmul.f32 %v613, %v738
      %v774 = vmul.f32 %v615, %v738
      %v775 = vmul.f32 %v617, %v739
      %v776 = vmul.f32 %v619, %v739
      %v777 = vmul.f32 %v621, %v740
      %v778 = vmul.f32 %v623, %v740
      %v779 = vmul.f32 %v625, %v741
      %v780 = vmul.f32 %v627, %v741
      %v781 = vmul.f32 %v629, %v742
      %v782 = vmul.f32 %v631, %v742
      %v783 = vmul.f32 %v633, %v743
      %v784 = vmul.f32 %v635, %v743
      %v785 = vmul.f32 %v637, %v744
      %v786 = vmul.f32 %v639, %v744
      %v787 = vpack.c.bf16 %v747, %v745
      %v788 = vpack.c.bf16 %v748, %v746
      %v789 = vpack.c.bf16 %v751, %v749
      %v790 = vpack.c.bf16 %v752, %v750
      %v791 = vpack.c.bf16 %v755, %v753
      %v792 = vpack.c.bf16 %v756, %v754
      %v793 = vpack.c.bf16 %v759, %v757
      %v794 = vpack.c.bf16 %v760, %v758
      %v795 = vpack.c.bf16 %v763, %v761
      %v796 = vpack.c.bf16 %v764, %v762
      %v797 = vpack.c.bf16 %v767, %v765
      %v798 = vpack.c.bf16 %v768, %v766
      %v799 = vpack.c.bf16 %v771, %v769
      %v800 = vpack.c.bf16 %v772, %v770
      %v801 = vpack.c.bf16 %v775, %v773
      %v802 = vpack.c.bf16 %v776, %v774
      %v803 = vpack.c.bf16 %v779, %v777
      %v804 = vpack.c.bf16 %v780, %v778
      %v805 = vpack.c.bf16 %v783, %v781
      %v806 = vpack.c.bf16 %v784, %v782
      %v807 = vpack.c.bf16 %v785, %v785
      %v808 = vpack.c.bf16 %v786, %v786
      %809 = vrot.lane.b32.xlu0 %v188, 64
      %v810 = vpop.permute.xlu0 %809
      %811 = vrot.lane.b32.xlu0 %v189, 64
      %v812 = vpop.permute.xlu0 %811
      %813 = vrot.lane.b32.xlu0 %v190, 64
      %v814 = vpop.permute.xlu0 %813
      %815 = vrot.lane.b32.xlu0 %v191, 64
      %v816 = vpop.permute.xlu0 %815
      %817 = vrot.lane.b32.xlu0 %v192, 64
      %v818 = vpop.permute.xlu0 %817
      %819 = vrot.lane.b32.xlu0 %v193, 64
      %v820 = vpop.permute.xlu0 %819
      %821 = vrot.lane.b32.xlu0 %v194, 64
      %v822 = vpop.permute.xlu0 %821
      %823 = vrot.lane.b32.xlu0 %v195, 64
      %v824 = vpop.permute.xlu0 %823
      %825 = vrot.lane.b32.xlu0 %v196, 64
      %v826 = vpop.permute.xlu0 %825
      %827 = vrot.lane.b32.xlu0 %v197, 64
      %v828 = vpop.permute.xlu0 %827
      %829 = vrot.lane.b32.xlu0 %v198, 64
      %v830 = vpop.permute.xlu0 %829
      %v842 = vsel %vm429, %v788, 0
      %v845 = vsel %vm429, %v790, 0
      %v848 = vsel %vm429, %v792, 0
      %v851 = vsel %vm429, %v794, 0
      %v854 = vsel %vm429, %v796, 0
      %v857 = vsel %vm429, %v798, 0
      %v860 = vsel %vm429, %v800, 0
      %v863 = vsel %vm429, %v802, 0
      %v866 = vsel %vm429, %v804, 0
      %v869 = vsel %vm429, %v806, 0
      %v872 = vsel %vm429, %v808, 0
      %vm874 = vcmask 1043456
      %v876 = vsel %vm874, %v830, 0
      %878 = vmatprep.subr.bf16.mxu0 0
      %879 = vmatpush1.bf16.msra.mxu0 %v824
      %880 = vmatprep.subr.bf16.mxu0 0
      %881 = vmatpush1.bf16.msra.mxu0 %v822
      %882 = vmatprep.subr.bf16.mxu0 0
      %883 = vmatpush1.bf16.msra.mxu0 %v820
      %884 = vmatprep.subr.bf16.mxu0 0
      %885 = vmatpush1.bf16.msra.mxu0 %v818
      %886 = vmatprep.subr.bf16.mxu0 0
      %887 = vmatpush1.bf16.msra.mxu0 %v816
      %888 = vmatprep.subr.bf16.mxu0 0
      %889 = vmatpush1.bf16.msra.mxu0 %v814
      %890 = vmatprep.subr.bf16.mxu0 0
      %891 = vmatpush1.bf16.msra.mxu0 %v812
      %892 = vmatprep.subr.bf16.mxu0 0
      %893 = vmatpush1.bf16.msra.mxu0 %v810
      %894 = vmatprep.subr.bf16.mxu0 0
      %895 = vmatpush2.bf16.msra.mxu0 0
      %896 = vmatprep.subr.bf16.mxu0 0
      %897 = vmatpush2.bf16.msra.mxu0 0
      %898 = vmatprep.subr.bf16.mxu0 0
      %899 = vmatpush2.bf16.msra.mxu0 0
      %900 = vmatprep.subr.bf16.mxu0 0
      %901 = vmatpush2.bf16.msra.mxu0 0
      %902 = vmatprep.subr.bf16.mxu0 0
      %903 = vmatpush2.bf16.msra.mxu0 0
      %904 = vmatprep.subr.bf16.mxu0 0
      %905 = vmatpush2.bf16.msra.mxu0 %v876
      %906 = vmatprep.subr.bf16.mxu0 0
      %907 = vmatpush2.bf16.msra.mxu0 %v828
      %908 = vmatprep.subr.bf16.mxu0 0
      %909 = vmatpush2.bf16.msra.mxu0 %v826
      %910 = vmatprep.mubr.bf16.mxu0 %v842
      %911 = vmatmul.mubr.bf16.gmra.mxu0 %v787
      %v912 = vpop.f32.mrf.mxu0
      %v913 = vadd.f32 0.0, %v912
      %v914 = vpop.f32.mrf.mxu0
      %v915 = vpop.f32.mrf.mxu0
      %v916 = vadd.f32 0.0, %v915
      %v917 = vpop.f32.mrf.mxu0
      %918 = vmatprep.mubr.bf16.mxu0 %v845
      %919 = vmatmul.mubr.bf16.gmra.mxu0 %v789
      %v920 = vpop.f32.mrf.mxu0
      %v921 = vadd.f32 0.0, %v920
      %v922 = vpop.f32.mrf.mxu0
      %v923 = vpop.f32.mrf.mxu0
      %v924 = vadd.f32 0.0, %v923
      %v925 = vpop.f32.mrf.mxu0
      %926 = vmatprep.mubr.bf16.mxu0 %v848
      %927 = vmatmul.mubr.bf16.gmra.mxu0 %v791
      %v928 = vpop.f32.mrf.mxu0
      %v929 = vadd.f32 0.0, %v928
      %v930 = vpop.f32.mrf.mxu0
      %v931 = vpop.f32.mrf.mxu0
      %v932 = vadd.f32 0.0, %v931
      %v933 = vpop.f32.mrf.mxu0
      %934 = vmatprep.mubr.bf16.mxu0 %v851
      %935 = vmatmul.mubr.bf16.gmra.mxu0 %v793
      %v936 = vpop.f32.mrf.mxu0
      %v937 = vadd.f32 0.0, %v936
      %v938 = vpop.f32.mrf.mxu0
      %v939 = vpop.f32.mrf.mxu0
      %v940 = vadd.f32 0.0, %v939
      %v941 = vpop.f32.mrf.mxu0
      %942 = vmatprep.mubr.bf16.mxu0 %v854
      %943 = vmatmul.mubr.bf16.gmra.mxu0 %v795
      %v944 = vpop.f32.mrf.mxu0
      %v945 = vadd.f32 0.0, %v944
      %v946 = vpop.f32.mrf.mxu0
      %v947 = vpop.f32.mrf.mxu0
      %v948 = vadd.f32 0.0, %v947
      %v949 = vpop.f32.mrf.mxu0
      %950 = vmatprep.mubr.bf16.mxu0 %v857
      %951 = vmatmul.mubr.bf16.gmra.mxu0 %v797
      %v952 = vpop.f32.mrf.mxu0
      %v953 = vadd.f32 0.0, %v952
      %v954 = vpop.f32.mrf.mxu0
      %v955 = vpop.f32.mrf.mxu0
      %v956 = vadd.f32 0.0, %v955
      %v957 = vpop.f32.mrf.mxu0
      %958 = vmatprep.mubr.bf16.mxu0 %v860
      %959 = vmatmul.mubr.bf16.gmra.mxu0 %v799
      %v960 = vpop.f32.mrf.mxu0
      %v961 = vadd.f32 0.0, %v960
      %v962 = vpop.f32.mrf.mxu0
      %v963 = vpop.f32.mrf.mxu0
      %v964 = vadd.f32 0.0, %v963
      %v965 = vpop.f32.mrf.mxu0
      %966 = vmatprep.mubr.bf16.mxu0 %v863
      %967 = vmatmul.mubr.bf16.gmra.mxu0 %v801
      %v968 = vpop.f32.mrf.mxu0
      %v969 = vadd.f32 0.0, %v968
      %v970 = vpop.f32.mrf.mxu0
      %v971 = vpop.f32.mrf.mxu0
      %v972 = vadd.f32 0.0, %v971
      %v973 = vpop.f32.mrf.mxu0
      %974 = vmatprep.mubr.bf16.mxu0 %v866
      %975 = vmatmul.mubr.bf16.gmra.mxu0 %v803
      %v976 = vpop.f32.mrf.mxu0
      %v977 = vadd.f32 0.0, %v976
      %v978 = vpop.f32.mrf.mxu0
      %v979 = vpop.f32.mrf.mxu0
      %v980 = vadd.f32 0.0, %v979
      %v981 = vpop.f32.mrf.mxu0
      %982 = vmatprep.mubr.bf16.mxu0 %v869
      %983 = vmatmul.mubr.bf16.gmra.mxu0 %v805
      %v984 = vpop.f32.mrf.mxu0
      %v985 = vadd.f32 0.0, %v984
      %v986 = vpop.f32.mrf.mxu0
      %v987 = vpop.f32.mrf.mxu0
      %v988 = vadd.f32 0.0, %v987
      %v989 = vpop.f32.mrf.mxu0
      %990 = vmatprep.mubr.bf16.mxu0 %v872
      %991 = vmatmul.mubr.bf16.gmra.mxu0 %v807
      %v992 = vpop.f32.mrf.mxu0
      %v993 = vadd.f32 0.0, %v992
      %v994 = vpop.f32.mrf.mxu0
      %v995 = vpop.f32.mrf.mxu0
      %v996 = vpop.f32.mrf.mxu0
      %997 = vdwg.mxu0
      %998 = vrot.lane.b32.xlu0 %v188, 112
      %v999 = vpop.permute.xlu0 %998
      %1000 = vrot.lane.b32.xlu0 %v189, 112
      %v1001 = vpop.permute.xlu0 %1000
      %1002 = vrot.lane.b32.xlu0 %v190, 112
      %v1003 = vpop.permute.xlu0 %1002
      %1004 = vrot.lane.b32.xlu0 %v191, 112
      %v1005 = vpop.permute.xlu0 %1004
      %1006 = vrot.lane.b32.xlu0 %v192, 112
      %v1007 = vpop.permute.xlu0 %1006
      %1008 = vrot.lane.b32.xlu0 %v193, 112
      %v1009 = vpop.permute.xlu0 %1008
      %1010 = vrot.lane.b32.xlu0 %v194, 112
      %v1011 = vpop.permute.xlu0 %1010
      %1012 = vrot.lane.b32.xlu0 %v195, 112
      %v1013 = vpop.permute.xlu0 %1012
      %1014 = vrot.lane.b32.xlu0 %v196, 112
      %v1015 = vpop.permute.xlu0 %1014
      %1016 = vrot.lane.b32.xlu0 %v197, 112
      %v1017 = vpop.permute.xlu0 %1016
      %1018 = vrot.lane.b32.xlu0 %v198, 112
      %v1019 = vpop.permute.xlu0 %1018
      %1020 = vrot.lane.b32.xlu0 %v188, 80
      %v1021 = vpop.permute.xlu0 %1020
      %1022 = vrot.lane.b32.xlu0 %v189, 80
      %v1023 = vpop.permute.xlu0 %1022
      %1024 = vrot.lane.b32.xlu0 %v190, 80
      %v1025 = vpop.permute.xlu0 %1024
      %1026 = vrot.lane.b32.xlu0 %v191, 80
      %v1027 = vpop.permute.xlu0 %1026
      %1028 = vrot.lane.b32.xlu0 %v192, 80
      %v1029 = vpop.permute.xlu0 %1028
      %1030 = vrot.lane.b32.xlu0 %v193, 80
      %v1031 = vpop.permute.xlu0 %1030
      %1032 = vrot.lane.b32.xlu0 %v194, 80
      %v1033 = vpop.permute.xlu0 %1032
      %1034 = vrot.lane.b32.xlu0 %v195, 80
      %v1035 = vpop.permute.xlu0 %1034
      %1036 = vrot.lane.b32.xlu0 %v196, 80
      %v1037 = vpop.permute.xlu0 %1036
      %1038 = vrot.lane.b32.xlu0 %v197, 80
      %v1039 = vpop.permute.xlu0 %1038
      %1040 = vrot.lane.b32.xlu0 %v198, 80
      %v1041 = vpop.permute.xlu0 %1040
      %v1043 = vsel %vm221, %v999, 0
      %v1046 = vsel %vm221, %v1001, 0
      %v1049 = vsel %vm221, %v1003, 0
      %v1052 = vsel %vm221, %v1005, 0
      %v1055 = vsel %vm221, %v1007, 0
      %v1058 = vsel %vm221, %v1009, 0
      %v1061 = vsel %vm221, %v1011, 0
      %v1064 = vsel %vm221, %v1013, 0
      %v1067 = vsel %vm221, %v1015, 0
      %v1070 = vsel %vm221, %v1017, 0
      %v1073 = vsel %vm221, %v1019, 0
      %v1076 = vsel %vm221, %v1021, 0
      %v1079 = vsel %vm221, %v1023, 0
      %v1082 = vsel %vm221, %v1025, 0
      %v1085 = vsel %vm221, %v1027, 0
      %v1088 = vsel %vm221, %v1029, 0
      %v1091 = vsel %vm221, %v1031, 0
      %v1094 = vsel %vm221, %v1033, 0
      %v1097 = vsel %vm221, %v1035, 0
      %v1100 = vsel %vm221, %v1037, 0
      %v1103 = vsel %vm221, %v1039, 0
      %v1106 = vsel %vm221, %v1041, 0
      %1108 = vmatprep.subr.bf16.mxu0 0
      %1109 = vmatpush1.bf16.xpose.msra.mxu0 %v1097
      %1110 = vmatprep.subr.bf16.mxu0 0
      %1111 = vmatpush1.bf16.xpose.msra.mxu0 %v1094
      %1112 = vmatprep.subr.bf16.mxu0 0
      %1113 = vmatpush1.bf16.xpose.msra.mxu0 %v1091
      %1114 = vmatprep.subr.bf16.mxu0 0
      %1115 = vmatpush1.bf16.xpose.msra.mxu0 %v1088
      %1116 = vmatprep.subr.bf16.mxu0 0
      %1117 = vmatpush1.bf16.xpose.msra.mxu0 %v1085
      %1118 = vmatprep.subr.bf16.mxu0 0
      %1119 = vmatpush1.bf16.xpose.msra.mxu0 %v1082
      %1120 = vmatprep.subr.bf16.mxu0 0
      %1121 = vmatpush1.bf16.xpose.msra.mxu0 %v1079
      %1122 = vmatprep.subr.bf16.mxu0 0
      %1123 = vmatpush1.bf16.xpose.msra.mxu0 %v1076
      %1124 = vmatprep.subr.bf16.mxu0 0
      %1125 = vmatpush2.bf16.xpose.msra.mxu0 0
      %1126 = vmatprep.subr.bf16.mxu0 0
      %1127 = vmatpush2.bf16.xpose.msra.mxu0 0
      %1128 = vmatprep.subr.bf16.mxu0 0
      %1129 = vmatpush2.bf16.xpose.msra.mxu0 0
      %1130 = vmatprep.subr.bf16.mxu0 0
      %1131 = vmatpush2.bf16.xpose.msra.mxu0 0
      %1132 = vmatprep.subr.bf16.mxu0 0
      %1133 = vmatpush2.bf16.xpose.msra.mxu0 0
      %1134 = vmatprep.subr.bf16.mxu0 0
      %1135 = vmatpush2.bf16.xpose.msra.mxu0 %v1106
      %1136 = vmatprep.subr.bf16.mxu0 0
      %1137 = vmatpush2.bf16.xpose.msra.mxu0 %v1103
      %1138 = vmatprep.subr.bf16.mxu0 0
      %1139 = vmatpush2.bf16.xpose.msra.mxu0 %v1100
      %1140 = vmatprep.mubr.bf16.mxu0 0
      %1141 = vmatmul.mubr.bf16.gmra.mxu0 %v1043
      %v1142 = vpop.f32.mrf.mxu0
      %v1143 = vadd.f32 %v123, %v1142
      %v1144 = vpop.f32.mrf.mxu0
      %v1145 = vadd.f32 %v124, %v1144
      %v1146 = vpop.f32.mrf.mxu0
      %v1147 = vadd.f32 %v123, %v1146
      %v1148 = vpop.f32.mrf.mxu0
      %v1149 = vadd.f32 %v124, %v1148
      %1150 = vmatprep.mubr.bf16.mxu0 0
      %1151 = vmatmul.mubr.bf16.gmra.mxu0 %v1046
      %v1152 = vpop.f32.mrf.mxu0
      %v1153 = vadd.f32 %v123, %v1152
      %v1154 = vpop.f32.mrf.mxu0
      %v1155 = vadd.f32 %v124, %v1154
      %v1156 = vpop.f32.mrf.mxu0
      %v1157 = vadd.f32 %v123, %v1156
      %v1158 = vpop.f32.mrf.mxu0
      %v1159 = vadd.f32 %v124, %v1158
      %1160 = vmatprep.mubr.bf16.mxu0 0
      %1161 = vmatmul.mubr.bf16.gmra.mxu0 %v1049
      %v1162 = vpop.f32.mrf.mxu0
      %v1163 = vadd.f32 %v123, %v1162
      %v1164 = vpop.f32.mrf.mxu0
      %v1165 = vadd.f32 %v124, %v1164
      %v1166 = vpop.f32.mrf.mxu0
      %v1167 = vadd.f32 %v123, %v1166
      %v1168 = vpop.f32.mrf.mxu0
      %v1169 = vadd.f32 %v124, %v1168
      %1170 = vmatprep.mubr.bf16.mxu0 0
      %1171 = vmatmul.mubr.bf16.gmra.mxu0 %v1052
      %v1172 = vpop.f32.mrf.mxu0
      %v1173 = vadd.f32 %v123, %v1172
      %v1174 = vpop.f32.mrf.mxu0
      %v1175 = vadd.f32 %v124, %v1174
      %v1176 = vpop.f32.mrf.mxu0
      %v1177 = vadd.f32 %v123, %v1176
      %v1178 = vpop.f32.mrf.mxu0
      %v1179 = vadd.f32 %v124, %v1178
      %1180 = vmatprep.mubr.bf16.mxu0 0
      %1181 = vmatmul.mubr.bf16.gmra.mxu0 %v1055
      %v1182 = vpop.f32.mrf.mxu0
      %v1183 = vadd.f32 %v123, %v1182
      %v1184 = vpop.f32.mrf.mxu0
      %v1185 = vadd.f32 %v124, %v1184
      %v1186 = vpop.f32.mrf.mxu0
      %v1187 = vadd.f32 %v123, %v1186
      %v1188 = vpop.f32.mrf.mxu0
      %v1189 = vadd.f32 %v124, %v1188
      %1190 = vmatprep.mubr.bf16.mxu0 0
      %1191 = vmatmul.mubr.bf16.gmra.mxu0 %v1058
      %v1192 = vpop.f32.mrf.mxu0
      %v1193 = vadd.f32 %v123, %v1192
      %v1194 = vpop.f32.mrf.mxu0
      %v1195 = vadd.f32 %v124, %v1194
      %v1196 = vpop.f32.mrf.mxu0
      %v1197 = vadd.f32 %v123, %v1196
      %v1198 = vpop.f32.mrf.mxu0
      %v1199 = vadd.f32 %v124, %v1198
      %1200 = vmatprep.mubr.bf16.mxu0 0
      %1201 = vmatmul.mubr.bf16.gmra.mxu0 %v1061
      %v1202 = vpop.f32.mrf.mxu0
      %v1203 = vadd.f32 %v123, %v1202
      %v1204 = vpop.f32.mrf.mxu0
      %v1205 = vadd.f32 %v124, %v1204
      %v1206 = vpop.f32.mrf.mxu0
      %v1207 = vadd.f32 %v123, %v1206
      %v1208 = vpop.f32.mrf.mxu0
      %v1209 = vadd.f32 %v124, %v1208
      %1210 = vmatprep.mubr.bf16.mxu0 0
      %1211 = vmatmul.mubr.bf16.gmra.mxu0 %v1064
      %v1212 = vpop.f32.mrf.mxu0
      %v1213 = vadd.f32 %v123, %v1212
      %v1214 = vpop.f32.mrf.mxu0
      %v1215 = vadd.f32 %v124, %v1214
      %v1216 = vpop.f32.mrf.mxu0
      %v1217 = vadd.f32 %v123, %v1216
      %v1218 = vpop.f32.mrf.mxu0
      %v1219 = vadd.f32 %v124, %v1218
      %1220 = vmatprep.mubr.bf16.mxu0 0
      %1221 = vmatmul.mubr.bf16.gmra.mxu0 %v1067
      %v1222 = vpop.f32.mrf.mxu0
      %v1223 = vadd.f32 %v123, %v1222
      %v1224 = vpop.f32.mrf.mxu0
      %v1225 = vadd.f32 %v124, %v1224
      %v1226 = vpop.f32.mrf.mxu0
      %v1227 = vadd.f32 %v123, %v1226
      %v1228 = vpop.f32.mrf.mxu0
      %v1229 = vadd.f32 %v124, %v1228
      %1230 = vmatprep.mubr.bf16.mxu0 0
      %1231 = vmatmul.mubr.bf16.gmra.mxu0 %v1070
      %v1232 = vpop.f32.mrf.mxu0
      %v1233 = vadd.f32 %v123, %v1232
      %v1234 = vpop.f32.mrf.mxu0
      %v1235 = vadd.f32 %v124, %v1234
      %v1236 = vpop.f32.mrf.mxu0
      %v1237 = vadd.f32 %v123, %v1236
      %v1238 = vpop.f32.mrf.mxu0
      %v1239 = vadd.f32 %v124, %v1238
      %1240 = vmatprep.mubr.bf16.mxu0 0
      %1241 = vmatmul.mubr.bf16.gmra.mxu0 %v1073
      %v1242 = vpop.f32.mrf.mxu0
      %v1243 = vadd.f32 %v123, %v1242
      %v1244 = vpop.f32.mrf.mxu0
      %v1245 = vadd.f32 %v124, %v1244
      %v1246 = vpop.f32.mrf.mxu0
      %v1247 = vpop.f32.mrf.mxu0
      %1248 = vdwg.mxu0
      %v1249 = vsel %vm429, %v1145, -inf
      %v1250 = vmax.f32 %v1143, %v1249
      %1251 = vmax.xlane.f32.xlu0 %v1250
      %v1252 = vpop.xlane.xlu0 %1251
      %v1253 = vsel %vm429, %v1149, -inf
      %v1254 = vmax.f32 %v1147, %v1253
      %1255 = vmax.xlane.f32.xlu0 %v1254
      %v1256 = vpop.xlane.xlu0 %1255
      %v1257 = vsel %vm429, %v1155, -inf
      %v1258 = vmax.f32 %v1153, %v1257
      %1259 = vmax.xlane.f32.xlu0 %v1258
      %v1260 = vpop.xlane.xlu0 %1259
      %v1261 = vsel %vm429, %v1159, -inf
      %v1262 = vmax.f32 %v1157, %v1261
      %1263 = vmax.xlane.f32.xlu0 %v1262
      %v1264 = vpop.xlane.xlu0 %1263
      %v1265 = vsel %vm429, %v1165, -inf
      %v1266 = vmax.f32 %v1163, %v1265
      %1267 = vmax.xlane.f32.xlu0 %v1266
      %v1268 = vpop.xlane.xlu0 %1267
      %v1269 = vsel %vm429, %v1169, -inf
      %v1270 = vmax.f32 %v1167, %v1269
      %1271 = vmax.xlane.f32.xlu0 %v1270
      %v1272 = vpop.xlane.xlu0 %1271
      %v1273 = vsel %vm429, %v1175, -inf
      %v1274 = vmax.f32 %v1173, %v1273
      %1275 = vmax.xlane.f32.xlu0 %v1274
      %v1276 = vpop.xlane.xlu0 %1275
      %v1277 = vsel %vm429, %v1179, -inf
      %v1278 = vmax.f32 %v1177, %v1277
      %1279 = vmax.xlane.f32.xlu0 %v1278
      %v1280 = vpop.xlane.xlu0 %1279
      %v1281 = vsel %vm429, %v1185, -inf
      %v1282 = vmax.f32 %v1183, %v1281
      %1283 = vmax.xlane.f32.xlu0 %v1282
      %v1284 = vpop.xlane.xlu0 %1283
      %v1285 = vsel %vm429, %v1189, -inf
      %v1286 = vmax.f32 %v1187, %v1285
      %1287 = vmax.xlane.f32.xlu0 %v1286
      %v1288 = vpop.xlane.xlu0 %1287
      %v1289 = vsel %vm429, %v1195, -inf
      %v1290 = vmax.f32 %v1193, %v1289
      %1291 = vmax.xlane.f32.xlu0 %v1290
      %v1292 = vpop.xlane.xlu0 %1291
      %v1293 = vsel %vm429, %v1199, -inf
      %v1294 = vmax.f32 %v1197, %v1293
      %1295 = vmax.xlane.f32.xlu0 %v1294
      %v1296 = vpop.xlane.xlu0 %1295
      %v1297 = vsel %vm429, %v1205, -inf
      %v1298 = vmax.f32 %v1203, %v1297
      %1299 = vmax.xlane.f32.xlu0 %v1298
      %v1300 = vpop.xlane.xlu0 %1299
      %v1301 = vsel %vm429, %v1209, -inf
      %v1302 = vmax.f32 %v1207, %v1301
      %1303 = vmax.xlane.f32.xlu0 %v1302
      %v1304 = vpop.xlane.xlu0 %1303
      %v1305 = vsel %vm429, %v1215, -inf
      %v1306 = vmax.f32 %v1213, %v1305
      %1307 = vmax.xlane.f32.xlu0 %v1306
      %v1308 = vpop.xlane.xlu0 %1307
      %v1309 = vsel %vm429, %v1219, -inf
      %v1310 = vmax.f32 %v1217, %v1309
      %1311 = vmax.xlane.f32.xlu0 %v1310
      %v1312 = vpop.xlane.xlu0 %1311
      %v1313 = vsel %vm429, %v1225, -inf
      %v1314 = vmax.f32 %v1223, %v1313
      %1315 = vmax.xlane.f32.xlu0 %v1314
      %v1316 = vpop.xlane.xlu0 %1315
      %v1317 = vsel %vm429, %v1229, -inf
      %v1318 = vmax.f32 %v1227, %v1317
      %1319 = vmax.xlane.f32.xlu0 %v1318
      %v1320 = vpop.xlane.xlu0 %1319
      %v1321 = vsel %vm429, %v1235, -inf
      %v1322 = vmax.f32 %v1233, %v1321
      %1323 = vmax.xlane.f32.xlu0 %v1322
      %v1324 = vpop.xlane.xlu0 %1323
      %v1325 = vsel %vm429, %v1239, -inf
      %v1326 = vmax.f32 %v1237, %v1325
      %1327 = vmax.xlane.f32.xlu0 %v1326
      %v1328 = vpop.xlane.xlu0 %1327
      %v1329 = vsel %vm429, %v1245, -inf
      %v1330 = vmax.f32 %v1243, %v1329
      %1331 = vmax.xlane.f32.xlu0 %v1330
      %v1332 = vpop.xlane.xlu0 %1331
      %v1333 = vsub.f32 %v1143, %v1252
      %v1334 = vsub.f32 %v1145, %v1252
      %v1335 = vsub.f32 %v1147, %v1256
      %v1336 = vsub.f32 %v1149, %v1256
      %v1337 = vsub.f32 %v1153, %v1260
      %v1338 = vsub.f32 %v1155, %v1260
      %v1339 = vsub.f32 %v1157, %v1264
      %v1340 = vsub.f32 %v1159, %v1264
      %v1341 = vsub.f32 %v1163, %v1268
      %v1342 = vsub.f32 %v1165, %v1268
      %v1343 = vsub.f32 %v1167, %v1272
      %v1344 = vsub.f32 %v1169, %v1272
      %v1345 = vsub.f32 %v1173, %v1276
      %v1346 = vsub.f32 %v1175, %v1276
      %v1347 = vsub.f32 %v1177, %v1280
      %v1348 = vsub.f32 %v1179, %v1280
      %v1349 = vsub.f32 %v1183, %v1284
      %v1350 = vsub.f32 %v1185, %v1284
      %v1351 = vsub.f32 %v1187, %v1288
      %v1352 = vsub.f32 %v1189, %v1288
      %v1353 = vsub.f32 %v1193, %v1292
      %v1354 = vsub.f32 %v1195, %v1292
      %v1355 = vsub.f32 %v1197, %v1296
      %v1356 = vsub.f32 %v1199, %v1296
      %v1357 = vsub.f32 %v1203, %v1300
      %v1358 = vsub.f32 %v1205, %v1300
      %v1359 = vsub.f32 %v1207, %v1304
      %v1360 = vsub.f32 %v1209, %v1304
      %v1361 = vsub.f32 %v1213, %v1308
      %v1362 = vsub.f32 %v1215, %v1308
      %v1363 = vsub.f32 %v1217, %v1312
      %v1364 = vsub.f32 %v1219, %v1312
      %v1365 = vsub.f32 %v1223, %v1316
      %v1366 = vsub.f32 %v1225, %v1316
      %v1367 = vsub.f32 %v1227, %v1320
      %v1368 = vsub.f32 %v1229, %v1320
      %v1369 = vsub.f32 %v1233, %v1324
      %v1370 = vsub.f32 %v1235, %v1324
      %v1371 = vsub.f32 %v1237, %v1328
      %v1372 = vsub.f32 %v1239, %v1328
      %v1373 = vsub.f32 %v1243, %v1332
      %v1374 = vsub.f32 %v1245, %v1332
      %v1375 = vmul.f32 %v1333, 1.442695
      %v1376 = vpow.pop %v1375
      %v1377 = vmul.f32 %v1334, 1.442695
      %v1378 = vpow.pop %v1377
      %v1379 = vmul.f32 %v1335, 1.442695
      %v1380 = vpow.pop %v1379
      %v1381 = vmul.f32 %v1336, 1.442695
      %v1382 = vpow.pop %v1381
      %v1383 = vmul.f32 %v1337, 1.442695
      %v1384 = vpow.pop %v1383
      %v1385 = vmul.f32 %v1338, 1.442695
      %v1386 = vpow.pop %v1385
      %v1387 = vmul.f32 %v1339, 1.442695
      %v1388 = vpow.pop %v1387
      %v1389 = vmul.f32 %v1340, 1.442695
      %v1390 = vpow.pop %v1389
      %v1391 = vmul.f32 %v1341, 1.442695
      %v1392 = vpow.pop %v1391
      %v1393 = vmul.f32 %v1342, 1.442695
      %v1394 = vpow.pop %v1393
      %v1395 = vmul.f32 %v1343, 1.442695
      %v1396 = vpow.pop %v1395
      %v1397 = vmul.f32 %v1344, 1.442695
      %v1398 = vpow.pop %v1397
      %v1399 = vmul.f32 %v1345, 1.442695
      %v1400 = vpow.pop %v1399
      %v1401 = vmul.f32 %v1346, 1.442695
      %v1402 = vpow.pop %v1401
      %v1403 = vmul.f32 %v1347, 1.442695
      %v1404 = vpow.pop %v1403
      %v1405 = vmul.f32 %v1348, 1.442695
      %v1406 = vpow.pop %v1405
      %v1407 = vmul.f32 %v1349, 1.442695
      %v1408 = vpow.pop %v1407
      %v1409 = vmul.f32 %v1350, 1.442695
      %v1410 = vpow.pop %v1409
      %v1411 = vmul.f32 %v1351, 1.442695
      %v1412 = vpow.pop %v1411
      %v1413 = vmul.f32 %v1352, 1.442695
      %v1414 = vpow.pop %v1413
      %v1415 = vmul.f32 %v1353, 1.442695
      %v1416 = vpow.pop %v1415
      %v1417 = vmul.f32 %v1354, 1.442695
      %v1418 = vpow.pop %v1417
      %v1419 = vmul.f32 %v1355, 1.442695
      %v1420 = vpow.pop %v1419
      %v1421 = vmul.f32 %v1356, 1.442695
      %v1422 = vpow.pop %v1421
      %v1423 = vmul.f32 %v1357, 1.442695
      %v1424 = vpow.pop %v1423
      %v1425 = vmul.f32 %v1358, 1.442695
      %v1426 = vpow.pop %v1425
      %v1427 = vmul.f32 %v1359, 1.442695
      %v1428 = vpow.pop %v1427
      %v1429 = vmul.f32 %v1360, 1.442695
      %v1430 = vpow.pop %v1429
      %v1431 = vmul.f32 %v1361, 1.442695
      %v1432 = vpow.pop %v1431
      %v1433 = vmul.f32 %v1362, 1.442695
      %v1434 = vpow.pop %v1433
      %v1435 = vmul.f32 %v1363, 1.442695
      %v1436 = vpow.pop %v1435
      %v1437 = vmul.f32 %v1364, 1.442695
      %v1438 = vpow.pop %v1437
      %v1439 = vmul.f32 %v1365, 1.442695
      %v1440 = vpow.pop %v1439
      %v1441 = vmul.f32 %v1366, 1.442695
      %v1442 = vpow.pop %v1441
      %v1443 = vmul.f32 %v1367, 1.442695
      %v1444 = vpow.pop %v1443
      %v1445 = vmul.f32 %v1368, 1.442695
      %v1446 = vpow.pop %v1445
      %v1447 = vmul.f32 %v1369, 1.442695
      %v1448 = vpow.pop %v1447
      %v1449 = vmul.f32 %v1370, 1.442695
      %v1450 = vpow.pop %v1449
      %v1451 = vmul.f32 %v1371, 1.442695
      %v1452 = vpow.pop %v1451
      %v1453 = vmul.f32 %v1372, 1.442695
      %v1454 = vpow.pop %v1453
      %v1455 = vmul.f32 %v1373, 1.442695
      %v1456 = vpow.pop %v1455
      %v1457 = vmul.f32 %v1374, 1.442695
      %v1458 = vpow.pop %v1457
      %v1459 = vsel %vm429, %v1378, 0.0
      %v1460 = vadd.f32 %v1376, %v1459
      %1461 = vadd.xlane.f32.xlu0 %v1460
      %v1462 = vpop.xlane.xlu0 %1461
      %v1463 = vsel %vm429, %v1382, 0.0
      %v1464 = vadd.f32 %v1380, %v1463
      %1465 = vadd.xlane.f32.xlu0 %v1464
      %v1466 = vpop.xlane.xlu0 %1465
      %v1467 = vsel %vm429, %v1386, 0.0
      %v1468 = vadd.f32 %v1384, %v1467
      %1469 = vadd.xlane.f32.xlu0 %v1468
      %v1470 = vpop.xlane.xlu0 %1469
      %v1471 = vsel %vm429, %v1390, 0.0
      %v1472 = vadd.f32 %v1388, %v1471
      %1473 = vadd.xlane.f32.xlu0 %v1472
      %v1474 = vpop.xlane.xlu0 %1473
      %v1475 = vsel %vm429, %v1394, 0.0
      %v1476 = vadd.f32 %v1392, %v1475
      %1477 = vadd.xlane.f32.xlu0 %v1476
      %v1478 = vpop.xlane.xlu0 %1477
      %v1479 = vsel %vm429, %v1398, 0.0
      %v1480 = vadd.f32 %v1396, %v1479
      %1481 = vadd.xlane.f32.xlu0 %v1480
      %v1482 = vpop.xlane.xlu0 %1481
      %v1483 = vsel %vm429, %v1402, 0.0
      %v1484 = vadd.f32 %v1400, %v1483
      %1485 = vadd.xlane.f32.xlu0 %v1484
      %v1486 = vpop.xlane.xlu0 %1485
      %v1487 = vsel %vm429, %v1406, 0.0
      %v1488 = vadd.f32 %v1404, %v1487
      %1489 = vadd.xlane.f32.xlu0 %v1488
      %v1490 = vpop.xlane.xlu0 %1489
      %v1491 = vsel %vm429, %v1410, 0.0
      %v1492 = vadd.f32 %v1408, %v1491
      %1493 = vadd.xlane.f32.xlu0 %v1492
      %v1494 = vpop.xlane.xlu0 %1493
      %v1495 = vsel %vm429, %v1414, 0.0
      %v1496 = vadd.f32 %v1412, %v1495
      %1497 = vadd.xlane.f32.xlu0 %v1496
      %v1498 = vpop.xlane.xlu0 %1497
      %v1499 = vsel %vm429, %v1418, 0.0
      %v1500 = vadd.f32 %v1416, %v1499
      %1501 = vadd.xlane.f32.xlu0 %v1500
      %v1502 = vpop.xlane.xlu0 %1501
      %v1503 = vsel %vm429, %v1422, 0.0
      %v1504 = vadd.f32 %v1420, %v1503
      %1505 = vadd.xlane.f32.xlu0 %v1504
      %v1506 = vpop.xlane.xlu0 %1505
      %v1507 = vsel %vm429, %v1426, 0.0
      %v1508 = vadd.f32 %v1424, %v1507
      %1509 = vadd.xlane.f32.xlu0 %v1508
      %v1510 = vpop.xlane.xlu0 %1509
      %v1511 = vsel %vm429, %v1430, 0.0
      %v1512 = vadd.f32 %v1428, %v1511
      %1513 = vadd.xlane.f32.xlu0 %v1512
      %v1514 = vpop.xlane.xlu0 %1513
      %v1515 = vsel %vm429, %v1434, 0.0
      %v1516 = vadd.f32 %v1432, %v1515
      %1517 = vadd.xlane.f32.xlu0 %v1516
      %v1518 = vpop.xlane.xlu0 %1517
      %v1519 = vsel %vm429, %v1438, 0.0
      %v1520 = vadd.f32 %v1436, %v1519
      %1521 = vadd.xlane.f32.xlu0 %v1520
      %v1522 = vpop.xlane.xlu0 %1521
      %v1523 = vsel %vm429, %v1442, 0.0
      %v1524 = vadd.f32 %v1440, %v1523
      %1525 = vadd.xlane.f32.xlu0 %v1524
      %v1526 = vpop.xlane.xlu0 %1525
      %v1527 = vsel %vm429, %v1446, 0.0
      %v1528 = vadd.f32 %v1444, %v1527
      %1529 = vadd.xlane.f32.xlu0 %v1528
      %v1530 = vpop.xlane.xlu0 %1529
      %v1531 = vsel %vm429, %v1450, 0.0
      %v1532 = vadd.f32 %v1448, %v1531
      %1533 = vadd.xlane.f32.xlu0 %v1532
      %v1534 = vpop.xlane.xlu0 %1533
      %v1535 = vsel %vm429, %v1454, 0.0
      %v1536 = vadd.f32 %v1452, %v1535
      %1537 = vadd.xlane.f32.xlu0 %v1536
      %v1538 = vpop.xlane.xlu0 %1537
      %v1539 = vsel %vm429, %v1458, 0.0
      %v1540 = vadd.f32 %v1456, %v1539
      %1541 = vadd.xlane.f32.xlu0 %v1540
      %v1542 = vpop.xlane.xlu0 %1541
      %v1543 = vrcp.pop %v1462
      %v1544 = vrcp.pop %v1466
      %v1545 = vrcp.pop %v1470
      %v1546 = vrcp.pop %v1474
      %v1547 = vrcp.pop %v1478
      %v1548 = vrcp.pop %v1482
      %v1549 = vrcp.pop %v1486
      %v1550 = vrcp.pop %v1490
      %v1551 = vrcp.pop %v1494
      %v1552 = vrcp.pop %v1498
      %v1553 = vrcp.pop %v1502
      %v1554 = vrcp.pop %v1506
      %v1555 = vrcp.pop %v1510
      %v1556 = vrcp.pop %v1514
      %v1557 = vrcp.pop %v1518
      %v1558 = vrcp.pop %v1522
      %v1559 = vrcp.pop %v1526
      %v1560 = vrcp.pop %v1530
      %v1561 = vrcp.pop %v1534
      %v1562 = vrcp.pop %v1538
      %v1563 = vrcp.pop %v1542
      %v1564 = vmul.f32 %v1376, %v1543
      %v1565 = vmul.f32 %v1378, %v1543
      %v1566 = vmul.f32 %v1380, %v1544
      %v1567 = vmul.f32 %v1382, %v1544
      %v1568 = vmul.f32 %v1384, %v1545
      %v1569 = vmul.f32 %v1386, %v1545
      %v1570 = vmul.f32 %v1388, %v1546
      %v1571 = vmul.f32 %v1390, %v1546
      %v1572 = vmul.f32 %v1392, %v1547
      %v1573 = vmul.f32 %v1394, %v1547
      %v1574 = vmul.f32 %v1396, %v1548
      %v1575 = vmul.f32 %v1398, %v1548
      %v1576 = vmul.f32 %v1400, %v1549
      %v1577 = vmul.f32 %v1402, %v1549
      %v1578 = vmul.f32 %v1404, %v1550
      %v1579 = vmul.f32 %v1406, %v1550
      %v1580 = vmul.f32 %v1408, %v1551
      %v1581 = vmul.f32 %v1410, %v1551
      %v1582 = vmul.f32 %v1412, %v1552
      %v1583 = vmul.f32 %v1414, %v1552
      %v1584 = vmul.f32 %v1416, %v1553
      %v1585 = vmul.f32 %v1418, %v1553
      %v1586 = vmul.f32 %v1420, %v1554
      %v1587 = vmul.f32 %v1422, %v1554
      %v1588 = vmul.f32 %v1424, %v1555
      %v1589 = vmul.f32 %v1426, %v1555
      %v1590 = vmul.f32 %v1428, %v1556
      %v1591 = vmul.f32 %v1430, %v1556
      %v1592 = vmul.f32 %v1432, %v1557
      %v1593 = vmul.f32 %v1434, %v1557
      %v1594 = vmul.f32 %v1436, %v1558
      %v1595 = vmul.f32 %v1438, %v1558
      %v1596 = vmul.f32 %v1440, %v1559
      %v1597 = vmul.f32 %v1442, %v1559
      %v1598 = vmul.f32 %v1444, %v1560
      %v1599 = vmul.f32 %v1446, %v1560
      %v1600 = vmul.f32 %v1448, %v1561
      %v1601 = vmul.f32 %v1450, %v1561
      %v1602 = vmul.f32 %v1452, %v1562
      %v1603 = vmul.f32 %v1454, %v1562
      %v1604 = vmul.f32 %v1456, %v1563
      %v1605 = vmul.f32 %v1458, %v1563
      %v1606 = vpack.c.bf16 %v1566, %v1564
      %v1607 = vpack.c.bf16 %v1567, %v1565
      %v1608 = vpack.c.bf16 %v1570, %v1568
      %v1609 = vpack.c.bf16 %v1571, %v1569
      %v1610 = vpack.c.bf16 %v1574, %v1572
      %v1611 = vpack.c.bf16 %v1575, %v1573
      %v1612 = vpack.c.bf16 %v1578, %v1576
      %v1613 = vpack.c.bf16 %v1579, %v1577
      %v1614 = vpack.c.bf16 %v1582, %v1580
      %v1615 = vpack.c.bf16 %v1583, %v1581
      %v1616 = vpack.c.bf16 %v1586, %v1584
      %v1617 = vpack.c.bf16 %v1587, %v1585
      %v1618 = vpack.c.bf16 %v1590, %v1588
      %v1619 = vpack.c.bf16 %v1591, %v1589
      %v1620 = vpack.c.bf16 %v1594, %v1592
      %v1621 = vpack.c.bf16 %v1595, %v1593
      %v1622 = vpack.c.bf16 %v1598, %v1596
      %v1623 = vpack.c.bf16 %v1599, %v1597
      %v1624 = vpack.c.bf16 %v1602, %v1600
      %v1625 = vpack.c.bf16 %v1603, %v1601
      %v1626 = vpack.c.bf16 %v1604, %v1604
      %v1627 = vpack.c.bf16 %v1605, %v1605
      %1628 = vrot.lane.b32.xlu0 %v188, 48
      %v1629 = vpop.permute.xlu0 %1628
      %1630 = vrot.lane.b32.xlu0 %v189, 48
      %v1631 = vpop.permute.xlu0 %1630
      %1632 = vrot.lane.b32.xlu0 %v190, 48
      %v1633 = vpop.permute.xlu0 %1632
      %1634 = vrot.lane.b32.xlu0 %v191, 48
      %v1635 = vpop.permute.xlu0 %1634
      %1636 = vrot.lane.b32.xlu0 %v192, 48
      %v1637 = vpop.permute.xlu0 %1636
      %1638 = vrot.lane.b32.xlu0 %v193, 48
      %v1639 = vpop.permute.xlu0 %1638
      %1640 = vrot.lane.b32.xlu0 %v194, 48
      %v1641 = vpop.permute.xlu0 %1640
      %1642 = vrot.lane.b32.xlu0 %v195, 48
      %v1643 = vpop.permute.xlu0 %1642
      %1644 = vrot.lane.b32.xlu0 %v196, 48
      %v1645 = vpop.permute.xlu0 %1644
      %1646 = vrot.lane.b32.xlu0 %v197, 48
      %v1647 = vpop.permute.xlu0 %1646
      %1648 = vrot.lane.b32.xlu0 %v198, 48
      %v1649 = vpop.permute.xlu0 %1648
      %v1661 = vsel %vm429, %v1607, 0
      %v1664 = vsel %vm429, %v1609, 0
      %v1667 = vsel %vm429, %v1611, 0
      %v1670 = vsel %vm429, %v1613, 0
      %v1673 = vsel %vm429, %v1615, 0
      %v1676 = vsel %vm429, %v1617, 0
      %v1679 = vsel %vm429, %v1619, 0
      %v1682 = vsel %vm429, %v1621, 0
      %v1685 = vsel %vm429, %v1623, 0
      %v1688 = vsel %vm429, %v1625, 0
      %v1691 = vsel %vm429, %v1627, 0
      %v1694 = vsel %vm874, %v1649, 0
      %1696 = vmatprep.subr.bf16.mxu0 0
      %1697 = vmatpush1.bf16.msra.mxu0 %v1643
      %1698 = vmatprep.subr.bf16.mxu0 0
      %1699 = vmatpush1.bf16.msra.mxu0 %v1641
      %1700 = vmatprep.subr.bf16.mxu0 0
      %1701 = vmatpush1.bf16.msra.mxu0 %v1639
      %1702 = vmatprep.subr.bf16.mxu0 0
      %1703 = vmatpush1.bf16.msra.mxu0 %v1637
      %1704 = vmatprep.subr.bf16.mxu0 0
      %1705 = vmatpush1.bf16.msra.mxu0 %v1635
      %1706 = vmatprep.subr.bf16.mxu0 0
      %1707 = vmatpush1.bf16.msra.mxu0 %v1633
      %1708 = vmatprep.subr.bf16.mxu0 0
      %1709 = vmatpush1.bf16.msra.mxu0 %v1631
      %1710 = vmatprep.subr.bf16.mxu0 0
      %1711 = vmatpush1.bf16.msra.mxu0 %v1629
      %1712 = vmatprep.subr.bf16.mxu0 0
      %1713 = vmatpush2.bf16.msra.mxu0 0
      %1714 = vmatprep.subr.bf16.mxu0 0
      %1715 = vmatpush2.bf16.msra.mxu0 0
      %1716 = vmatprep.subr.bf16.mxu0 0
      %1717 = vmatpush2.bf16.msra.mxu0 0
      %1718 = vmatprep.subr.bf16.mxu0 0
      %1719 = vmatpush2.bf16.msra.mxu0 0
      %1720 = vmatprep.subr.bf16.mxu0 0
      %1721 = vmatpush2.bf16.msra.mxu0 0
      %1722 = vmatprep.subr.bf16.mxu0 0
      %1723 = vmatpush2.bf16.msra.mxu0 %v1694
      %1724 = vmatprep.subr.bf16.mxu0 0
      %1725 = vmatpush2.bf16.msra.mxu0 %v1647
      %1726 = vmatprep.subr.bf16.mxu0 0
      %1727 = vmatpush2.bf16.msra.mxu0 %v1645
      %1728 = vmatprep.mubr.bf16.mxu0 %v1661
      %1729 = vmatmul.mubr.bf16.gmra.mxu0 %v1606
      %v1730 = vpop.f32.mrf.mxu0
      %v1731 = vadd.f32 0.0, %v1730
      %v1732 = vpop.f32.mrf.mxu0
      %v1733 = vpop.f32.mrf.mxu0
      %v1734 = vadd.f32 0.0, %v1733
      %v1735 = vpop.f32.mrf.mxu0
      %1736 = vmatprep.mubr.bf16.mxu0 %v1664
      %1737 = vmatmul.mubr.bf16.gmra.mxu0 %v1608
      %v1738 = vpop.f32.mrf.mxu0
      %v1739 = vadd.f32 0.0, %v1738
      %v1740 = vpop.f32.mrf.mxu0
      %v1741 = vpop.f32.mrf.mxu0
      %v1742 = vadd.f32 0.0, %v1741
      %v1743 = vpop.f32.mrf.mxu0
      %1744 = vmatprep.mubr.bf16.mxu0 %v1667
      %1745 = vmatmul.mubr.bf16.gmra.mxu0 %v1610
      %v1746 = vpop.f32.mrf.mxu0
      %v1747 = vadd.f32 0.0, %v1746
      %v1748 = vpop.f32.mrf.mxu0
      %v1749 = vpop.f32.mrf.mxu0
      %v1750 = vadd.f32 0.0, %v1749
      %v1751 = vpop.f32.mrf.mxu0
      %1752 = vmatprep.mubr.bf16.mxu0 %v1670
      %1753 = vmatmul.mubr.bf16.gmra.mxu0 %v1612
      %v1754 = vpop.f32.mrf.mxu0
      %v1755 = vadd.f32 0.0, %v1754
      %v1756 = vpop.f32.mrf.mxu0
      %v1757 = vpop.f32.mrf.mxu0
      %v1758 = vadd.f32 0.0, %v1757
      %v1759 = vpop.f32.mrf.mxu0
      %1760 = vmatprep.mubr.bf16.mxu0 %v1673
      %1761 = vmatmul.mubr.bf16.gmra.mxu0 %v1614
      %v1762 = vpop.f32.mrf.mxu0
      %v1763 = vadd.f32 0.0, %v1762
      %v1764 = vpop.f32.mrf.mxu0
      %v1765 = vpop.f32.mrf.mxu0
      %v1766 = vadd.f32 0.0, %v1765
      %v1767 = vpop.f32.mrf.mxu0
      %1768 = vmatprep.mubr.bf16.mxu0 %v1676
      %1769 = vmatmul.mubr.bf16.gmra.mxu0 %v1616
      %v1770 = vpop.f32.mrf.mxu0
      %v1771 = vadd.f32 0.0, %v1770
      %v1772 = vpop.f32.mrf.mxu0
      %v1773 = vpop.f32.mrf.mxu0
      %v1774 = vadd.f32 0.0, %v1773
      %v1775 = vpop.f32.mrf.mxu0
      %1776 = vmatprep.mubr.bf16.mxu0 %v1679
      %1777 = vmatmul.mubr.bf16.gmra.mxu0 %v1618
      %v1778 = vpop.f32.mrf.mxu0
      %v1779 = vadd.f32 0.0, %v1778
      %v1780 = vpop.f32.mrf.mxu0
      %v1781 = vpop.f32.mrf.mxu0
      %v1782 = vadd.f32 0.0, %v1781
      %v1783 = vpop.f32.mrf.mxu0
      %1784 = vmatprep.mubr.bf16.mxu0 %v1682
      %1785 = vmatmul.mubr.bf16.gmra.mxu0 %v1620
      %v1786 = vpop.f32.mrf.mxu0
      %v1787 = vadd.f32 0.0, %v1786
      %v1788 = vpop.f32.mrf.mxu0
      %v1789 = vpop.f32.mrf.mxu0
      %v1790 = vadd.f32 0.0, %v1789
      %v1791 = vpop.f32.mrf.mxu0
      %1792 = vmatprep.mubr.bf16.mxu0 %v1685
      %1793 = vmatmul.mubr.bf16.gmra.mxu0 %v1622
      %v1794 = vpop.f32.mrf.mxu0
      %v1795 = vadd.f32 0.0, %v1794
      %v1796 = vpop.f32.mrf.mxu0
      %v1797 = vpop.f32.mrf.mxu0
      %v1798 = vadd.f32 0.0, %v1797
      %v1799 = vpop.f32.mrf.mxu0
      %1800 = vmatprep.mubr.bf16.mxu0 %v1688
      %1801 = vmatmul.mubr.bf16.gmra.mxu0 %v1624
      %v1802 = vpop.f32.mrf.mxu0
      %v1803 = vadd.f32 0.0, %v1802
      %v1804 = vpop.f32.mrf.mxu0
      %v1805 = vpop.f32.mrf.mxu0
      %v1806 = vadd.f32 0.0, %v1805
      %v1807 = vpop.f32.mrf.mxu0
      %1808 = vmatprep.mubr.bf16.mxu0 %v1691
      %1809 = vmatmul.mubr.bf16.gmra.mxu0 %v1626
      %v1810 = vpop.f32.mrf.mxu0
      %v1811 = vadd.f32 0.0, %v1810
      %v1812 = vpop.f32.mrf.mxu0
      %v1813 = vpop.f32.mrf.mxu0
      %v1814 = vpop.f32.mrf.mxu0
      %1815 = vdwg.mxu0
      %1837 = vrot.lane.b32.xlu0 %v1731, 16
      %v1838 = vpop.permute.xlu0 %1837
      %1839 = vrot.lane.b32.xlu0 %v1734, 16
      %v1840 = vpop.permute.xlu0 %1839
      %1841 = vrot.lane.b32.xlu0 %v1739, 16
      %v1842 = vpop.permute.xlu0 %1841
      %1843 = vrot.lane.b32.xlu0 %v1742, 16
      %v1844 = vpop.permute.xlu0 %1843
      %1845 = vrot.lane.b32.xlu0 %v1747, 16
      %v1846 = vpop.permute.xlu0 %1845
      %1847 = vrot.lane.b32.xlu0 %v1750, 16
      %v1848 = vpop.permute.xlu0 %1847
      %1849 = vrot.lane.b32.xlu0 %v1755, 16
      %v1850 = vpop.permute.xlu0 %1849
      %1851 = vrot.lane.b32.xlu0 %v1758, 16
      %v1852 = vpop.permute.xlu0 %1851
      %1853 = vrot.lane.b32.xlu0 %v1763, 16
      %v1854 = vpop.permute.xlu0 %1853
      %1855 = vrot.lane.b32.xlu0 %v1766, 16
      %v1856 = vpop.permute.xlu0 %1855
      %1857 = vrot.lane.b32.xlu0 %v1771, 16
      %v1858 = vpop.permute.xlu0 %1857
      %1859 = vrot.lane.b32.xlu0 %v1774, 16
      %v1860 = vpop.permute.xlu0 %1859
      %1861 = vrot.lane.b32.xlu0 %v1779, 16
      %v1862 = vpop.permute.xlu0 %1861
      %1863 = vrot.lane.b32.xlu0 %v1782, 16
      %v1864 = vpop.permute.xlu0 %1863
      %1865 = vrot.lane.b32.xlu0 %v1787, 16
      %v1866 = vpop.permute.xlu0 %1865
      %1867 = vrot.lane.b32.xlu0 %v1790, 16
      %v1868 = vpop.permute.xlu0 %1867
      %1869 = vrot.lane.b32.xlu0 %v1795, 16
      %v1870 = vpop.permute.xlu0 %1869
      %1871 = vrot.lane.b32.xlu0 %v1798, 16
      %v1872 = vpop.permute.xlu0 %1871
      %1873 = vrot.lane.b32.xlu0 %v1803, 16
      %v1874 = vpop.permute.xlu0 %1873
      %1875 = vrot.lane.b32.xlu0 %v1806, 16
      %v1876 = vpop.permute.xlu0 %1875
      %1877 = vrot.lane.b32.xlu0 %v1811, 16
      %v1878 = vpop.permute.xlu0 %1877
      %v1900 = vsel %vm221, %v913, %v1838
      %v1901 = vsel %vm221, %v916, %v1840
      %v1902 = vsel %vm221, %v921, %v1842
      %v1903 = vsel %vm221, %v924, %v1844
      %v1904 = vsel %vm221, %v929, %v1846
      %v1905 = vsel %vm221, %v932, %v1848
      %v1906 = vsel %vm221, %v937, %v1850
      %v1907 = vsel %vm221, %v940, %v1852
      %v1908 = vsel %vm221, %v945, %v1854
      %v1909 = vsel %vm221, %v948, %v1856
      %v1910 = vsel %vm221, %v953, %v1858
      %v1911 = vsel %vm221, %v956, %v1860
      %v1912 = vsel %vm221, %v961, %v1862
      %v1913 = vsel %vm221, %v964, %v1864
      %v1914 = vsel %vm221, %v969, %v1866
      %v1915 = vsel %vm221, %v972, %v1868
      %v1916 = vsel %vm221, %v977, %v1870
      %v1917 = vsel %vm221, %v980, %v1872
      %v1918 = vsel %vm221, %v985, %v1874
      %v1919 = vsel %vm221, %v988, %v1876
      %v1920 = vsel %vm221, %v993, %v1878
      %v1921 = vpack.c.bf16 %v1901, %v1900
      %v1922 = vpack.c.bf16 %v1903, %v1902
      %v1923 = vpack.c.bf16 %v1905, %v1904
      %v1924 = vpack.c.bf16 %v1907, %v1906
      %v1925 = vpack.c.bf16 %v1909, %v1908
      %v1926 = vpack.c.bf16 %v1911, %v1910
      %v1927 = vpack.c.bf16 %v1913, %v1912
      %v1928 = vpack.c.bf16 %v1915, %v1914
      %v1929 = vpack.c.bf16 %v1917, %v1916
      %v1930 = vpack.c.bf16 %v1919, %v1918
      %v1931 = vpack.c.bf16 %v1920, %v1920
      %v1943 = vunpack.c.l.b16 %v1921
      %v1944 = vunpack.c.h.b16 %v1921
      %v1945 = vunpack.c.l.b16 %v1922
      %v1946 = vunpack.c.h.b16 %v1922
      %v1947 = vunpack.c.l.b16 %v1923
      %v1948 = vunpack.c.h.b16 %v1923
      %v1949 = vunpack.c.l.b16 %v1924
      %v1950 = vunpack.c.h.b16 %v1924
      %v1951 = vunpack.c.l.b16 %v1925
      %v1952 = vunpack.c.h.b16 %v1925
      %v1953 = vunpack.c.l.b16 %v1926
      %v1954 = vunpack.c.h.b16 %v1926
      %v1955 = vunpack.c.l.b16 %v1927
      %v1956 = vunpack.c.h.b16 %v1927
      %v1957 = vunpack.c.l.b16 %v1928
      %v1958 = vunpack.c.h.b16 %v1928
      %v1959 = vunpack.c.l.b16 %v1929
      %v1960 = vunpack.c.h.b16 %v1929
      %v1961 = vunpack.c.l.b16 %v1930
      %v1962 = vunpack.c.h.b16 %v1930
      %v1963 = vunpack.c.l.b16 %v1931
      %v1964 = vpack.c.b16 %v1943, %v1943
      %v1965 = vpack.c.b16 %v1944, %v1944
      %v1966 = vpack.c.b16 %v1945, %v1945
      %v1967 = vpack.c.b16 %v1946, %v1946
      %v1968 = vpack.c.b16 %v1947, %v1947
      %v1969 = vpack.c.b16 %v1948, %v1948
      %v1970 = vpack.c.b16 %v1949, %v1949
      %v1971 = vpack.c.b16 %v1950, %v1950
      %v1972 = vpack.c.b16 %v1951, %v1951
      %v1973 = vpack.c.b16 %v1952, %v1952
      %v1974 = vpack.c.b16 %v1953, %v1953
      %v1975 = vpack.c.b16 %v1954, %v1954
      %v1976 = vpack.c.b16 %v1955, %v1955
      %v1977 = vpack.c.b16 %v1956, %v1956
      %v1978 = vpack.c.b16 %v1957, %v1957
      %v1979 = vpack.c.b16 %v1958, %v1958
      %v1980 = vpack.c.b16 %v1959, %v1959
      %v1981 = vpack.c.b16 %v1960, %v1960
      %v1982 = vpack.c.b16 %v1961, %v1961
      %v1983 = vpack.c.b16 %v1962, %v1962
      %v1984 = vpack.c.b16 %v1963, %v1963
      %vm2006 = vcmask 257024
      %2007 = vst.msk [vmem:[%s116] sm:$0xf] %vm2006, %v1964
      %2008 = vst.msk [vmem:[%s116 + $0x4] sm:$0xf] %vm2006, %v1965
      %2009 = vst.msk [vmem:[%s116 + $0x8] sm:$0xf] %vm2006, %v1966
      %2010 = vst.msk [vmem:[%s116 + $0xc] sm:$0xf] %vm2006, %v1967
      %2011 = vst.msk [vmem:[%s116 + $0x10] sm:$0xf] %vm2006, %v1968
      %2012 = vst.msk [vmem:[%s116 + $0x14] sm:$0xf] %vm2006, %v1969
      %2013 = vst.msk [vmem:[%s116 + $0x18] sm:$0xf] %vm2006, %v1970
      %2014 = vst.msk [vmem:[%s116 + $0x1c] sm:$0xf] %vm2006, %v1971
      %2015 = vst.msk [vmem:[%s116 + $0x20] sm:$0xf] %vm2006, %v1972
      %2016 = vst.msk [vmem:[%s116 + $0x24] sm:$0xf] %vm2006, %v1973
      %2017 = vst.msk [vmem:[%s116 + $0x28] sm:$0xf] %vm2006, %v1974
      %2018 = vst.msk [vmem:[%s116 + $0x2c] sm:$0xf] %vm2006, %v1975
      %2019 = vst.msk [vmem:[%s116 + $0x30] sm:$0xf] %vm2006, %v1976
      %2020 = vst.msk [vmem:[%s116 + $0x34] sm:$0xf] %vm2006, %v1977
      %2021 = vst.msk [vmem:[%s116 + $0x38] sm:$0xf] %vm2006, %v1978
      %2022 = vst.msk [vmem:[%s116 + $0x3c] sm:$0xf] %vm2006, %v1979
      %2023 = vst.msk [vmem:[%s116 + $0x40] sm:$0xf] %vm2006, %v1980
      %2024 = vst.msk [vmem:[%s116 + $0x44] sm:$0xf] %vm2006, %v1981
      %2025 = vst.msk [vmem:[%s116 + $0x48] sm:$0xf] %vm2006, %v1982
      %2026 = vst.msk [vmem:[%s116 + $0x4c] sm:$0xf] %vm2006, %v1983
      %2027 = vst.msk [vmem:[%s116 + $0x50] sm:$0xf] %vm2006, %v1984
      %p2028 = scmp.lt.s32.totalorder %s12, 1
      %s2029 = scalar_select %p2028, %s12, 1
      %s2030 = smul.addr %s2029, 21
      %s2031 = smul.addr %s2030, 4
      %s2032 = scalar_lea.vmem %s1, %s2031
      // Predicated region
      $region25: #{vit_forward.16} parent=23 // pred_check
        %p2033 = pneg %p56
      $region26: #{vit_forward.16} parent=23 // pred_check_branch
        %2035 = sbr.rel (%p2033) target = $region28
      $region27: #{vit_forward.16} parent=23 // pred_region
        _
      $region28: #{vit_forward.16} parent=23 // pred_fallthru
        _
    $region24: #{vit_forward.16} parent=5 // pred_fallthru
      _
    %p2036 = scmp.le.s32.totalorder 2, %s7
    // Predicated region
    $region29: #{vit_forward.16} parent=5 // pred_check
      %p2037 = pneg %p2036
    $region30: #{vit_forward.16} parent=5 // pred_check_branch
      %2039 = sbr.rel (%p2037) target = $region32
    $region31: #{vit_forward.16} parent=5 // pred_region
      %s2040 = ssub.s32 %s7, 2
      // Predicated region
      $region33: #{vit_forward.16} parent=31 // pred_check
        %p2041 = pneg %p62
      $region34: #{vit_forward.16} parent=31 // pred_check_branch
        %2043 = sbr.rel (%p2041) target = $region36
      $region35: #{vit_forward.16} parent=31 // pred_region
        %p2044 = scmp.lt.s32.totalorder %s13, 1
        %s2045 = scalar_select %p2044, %s13, 1
        %s2046 = smul.addr %s2045, 21
        %s2047 = smul.addr %s2046, 4
        %s2048 = scalar_lea.vmem %s1, %s2047
      $region36: #{vit_forward.16} parent=31 // pred_fallthru
        _
    $region32: #{vit_forward.16} parent=5 // pred_fallthru
      _
  $region6: #{vit_forward.16} parent=0 // loop_footer
    %s11 = sadd.s32 1, %s7
  $region7: #{vit_forward.16} parent=0 // loop_footer_branch
    %6 = sbr.rel target = $region3
  $region8: #{vit_forward.16} parent=0 // loop_exit
    _

// kernel: vit_forward.18
$region0: #{vit_forward.18}
  #allocation0 [shape = 'u32[]', space=smem, size = 0x4, offset = 0x4, fixed_abs, tag = 'smem constant byte address 0x4 - core index']
  #allocation1 [shape = 'u32[144,128]{1,0:T(1,128)}', space=vmem, size = 0x12000, scoped, tag = 'internal scratch']
  %s0 = inlined_call_operand.vmem [shape: bf16[336,32], index: 0, kind: input, shape index: {}]
  %s1 = inlined_call_operand.vmem [shape: bf16[32,128], index: 1, kind: input, shape index: {}]
  %s2 = inlined_call_operand.vmem [shape: f32[1,32], index: 2, kind: input, shape index: {}]
  %s3 = inlined_call_operand.vmem [shape: f32[1,32], index: 3, kind: input, shape index: {}]
  %s4 = inlined_call_operand.vmem [shape: f32[1,128], index: 4, kind: input, shape index: {}]
  %s5 = inlined_call_operand.vmem [shape: bf16[336,128], index: 5, kind: output, shape index: {}]
  %s6 = sld [smem:[#allocation0]]
  $region53: #{vit_forward.18} parent=0
    _
  %s8 = ssub.s32 1, %s6
  %s9 = scalar_select 0, %s8, %s6
  loop: start=0, step=1, limit=4
  $region2: #{vit_forward.18} parent=0 // loop_pre_header
    _
  $region3: #{vit_forward.18} parent=0 // loop_header
    %s11 = sphi 0, %s15
    %p12 = scmp.ge.s32.totalorder %s11, 4
    %s21 = sphi 0, %s23
    %s24 = sphi 0, %s21
    %s25 = sphi 0, %s24
    %s41 = sphi 0, %s25
    %s45 = sphi 0, %s45
    %s47 = sphi 0, %s45
    %s48 = sphi 0, %s47
    %s62 = sphi 0, %s48
    %s66 = sphi 0, %s66
    %s68 = sphi 0, %s66
    %s69 = sphi 0, %s68
    %s83 = sphi 0, %s69
    %s87 = sphi 0, %s87
    %s89 = sphi 0, %s87
    %s90 = sphi 0, %s89
    %s104 = sphi 0, %s90
    %s108 = sphi 0, %s108
    %s110 = sphi 0, %s108
    %s111 = sphi 0, %s110
    %s125 = sphi 0, %s111
    %s131 = sphi 0, %s133
    %s134 = sphi 0, %s131
    %s135 = sphi 0, %s134
    %s151 = sphi 0, %s135
  $region4: #{vit_forward.18} parent=0 // loop_header_branch
    %14 = sbr.rel (%p12) target = $region8
  $region5: #{vit_forward.18} parent=0 // loop_body
    %s16 = ssub.s32 %s11, 1
    %s17 = ssub.s32 %s11, 2
    %s18 = sadd.s32 %s11, 1
    %s19 = ssub.s32 %s11, %s18
    %p20 = scmp.eq.s32.totalorder %s19, 0
    %s22 = sadd.s32 %s21, 1
    %s23 = scalar_select %p20, %s21, %s22
    %p26 = pneg %p20
    %p27 = scmp.eq.s32.totalorder %s11, 1
    %p28 = por %p26, %p27
    %p29 = scmp.ne.s32.totalorder %s21, %s24
    %p30 = scmp.eq.s32.totalorder %s11, 0
    %p31 = por %p29, %p30
    %p32 = scmp.ne.s32.totalorder %s21, %s24
    %p33 = scmp.eq.s32.totalorder %s16, 1
    %p34 = por %p32, %p33
    %p35 = scmp.ne.s32.totalorder %s24, %s25
    %p36 = scmp.eq.s32.totalorder %s16, 0
    %p37 = por %p35, %p36
    %p38 = scmp.ne.s32.totalorder %s24, %s25
    %p39 = scmp.eq.s32.totalorder %s17, 1
    %p40 = por %p38, %p39
    %p42 = scmp.ne.s32.totalorder %s25, %s41
    %p43 = scmp.eq.s32.totalorder %s17, 0
    %p44 = por %p42, %p43
    %s46 = sadd.s32 %s45, 1
    %p49 = scmp.eq.s32.totalorder %s11, 1
    %p50 = scmp.ne.s32.totalorder %s45, %s47
    %p51 = scmp.eq.s32.totalorder %s11, 0
    %p52 = por %p50, %p51
    %p53 = scmp.ne.s32.totalorder %s45, %s47
    %p54 = scmp.eq.s32.totalorder %s16, 1
    %p55 = por %p53, %p54
    %p56 = scmp.ne.s32.totalorder %s47, %s48
    %p57 = scmp.eq.s32.totalorder %s16, 0
    %p58 = por %p56, %p57
    %p59 = scmp.ne.s32.totalorder %s47, %s48
    %p60 = scmp.eq.s32.totalorder %s17, 1
    %p61 = por %p59, %p60
    %p63 = scmp.ne.s32.totalorder %s48, %s62
    %p64 = scmp.eq.s32.totalorder %s17, 0
    %p65 = por %p63, %p64
    %s67 = sadd.s32 %s66, 1
    %p70 = scmp.eq.s32.totalorder %s11, 1
    %p71 = scmp.ne.s32.totalorder %s66, %s68
    %p72 = scmp.eq.s32.totalorder %s11, 0
    %p73 = por %p71, %p72
    %p74 = scmp.ne.s32.totalorder %s66, %s68
    %p75 = scmp.eq.s32.totalorder %s16, 1
    %p76 = por %p74, %p75
    %p77 = scmp.ne.s32.totalorder %s68, %s69
    %p78 = scmp.eq.s32.totalorder %s16, 0
    %p79 = por %p77, %p78
    %p80 = scmp.ne.s32.totalorder %s68, %s69
    %p81 = scmp.eq.s32.totalorder %s17, 1
    %p82 = por %p80, %p81
    %p84 = scmp.ne.s32.totalorder %s69, %s83
    %p85 = scmp.eq.s32.totalorder %s17, 0
    %p86 = por %p84, %p85
    %s88 = sadd.s32 %s87, 1
    %p91 = scmp.eq.s32.totalorder %s11, 1
    %p92 = scmp.ne.s32.totalorder %s87, %s89
    %p93 = scmp.eq.s32.totalorder %s11, 0
    %p94 = por %p92, %p93
    %p95 = scmp.ne.s32.totalorder %s87, %s89
    %p96 = scmp.eq.s32.totalorder %s16, 1
    %p97 = por %p95, %p96
    %p98 = scmp.ne.s32.totalorder %s89, %s90
    %p99 = scmp.eq.s32.totalorder %s16, 0
    %p100 = por %p98, %p99
    %p101 = scmp.ne.s32.totalorder %s89, %s90
    %p102 = scmp.eq.s32.totalorder %s17, 1
    %p103 = por %p101, %p102
    %p105 = scmp.ne.s32.totalorder %s90, %s104
    %p106 = scmp.eq.s32.totalorder %s17, 0
    %p107 = por %p105, %p106
    %s109 = sadd.s32 %s108, 1
    %p112 = scmp.eq.s32.totalorder %s11, 1
    %p113 = scmp.ne.s32.totalorder %s108, %s110
    %p114 = scmp.eq.s32.totalorder %s11, 0
    %p115 = por %p113, %p114
    %p116 = scmp.ne.s32.totalorder %s108, %s110
    %p117 = scmp.eq.s32.totalorder %s16, 1
    %p118 = por %p116, %p117
    %p119 = scmp.ne.s32.totalorder %s110, %s111
    %p120 = scmp.eq.s32.totalorder %s16, 0
    %p121 = por %p119, %p120
    %p122 = scmp.ne.s32.totalorder %s110, %s111
    %p123 = scmp.eq.s32.totalorder %s17, 1
    %p124 = por %p122, %p123
    %p126 = scmp.ne.s32.totalorder %s111, %s125
    %p127 = scmp.eq.s32.totalorder %s17, 0
    %p128 = por %p126, %p127
    %s129 = ssub.s32 %s11, %s18
    %p130 = scmp.eq.s32.totalorder %s129, 0
    %s132 = sadd.s32 %s131, 1
    %s133 = scalar_select %p130, %s131, %s132
    %p136 = pneg %p130
    %p137 = scmp.eq.s32.totalorder %s11, 1
    %p138 = por %p136, %p137
    %p139 = scmp.ne.s32.totalorder %s131, %s134
    %p140 = scmp.eq.s32.totalorder %s11, 0
    %p141 = por %p139, %p140
    %p142 = scmp.ne.s32.totalorder %s131, %s134
    %p143 = scmp.eq.s32.totalorder %s16, 1
    %p144 = por %p142, %p143
    %p145 = scmp.ne.s32.totalorder %s134, %s135
    %p146 = scmp.eq.s32.totalorder %s16, 0
    %p147 = por %p145, %p146
    %p148 = scmp.ne.s32.totalorder %s134, %s135
    %p149 = scmp.eq.s32.totalorder %s17, 1
    %p150 = por %p148, %p149
    %p152 = scmp.ne.s32.totalorder %s135, %s151
    %p153 = scmp.eq.s32.totalorder %s17, 0
    %p154 = por %p152, %p153
    %p155 = scmp.le.s32.totalorder 1, %s11
    %p156 = scmp.lt.s32.totalorder %s11, 3
    %p157 = pnand %p155, %p156
    %p158 = pneg %p157
    // Predicated region
    $region9: #{vit_forward.18} parent=5 // pred_check
      _
    $region10: #{vit_forward.18} parent=5 // pred_check_branch
      %160 = sbr.rel (%p157) target = $region12
    $region11: #{vit_forward.18} parent=5 // pred_region
      %s161 = ssub.s32 %s11, 1
      // Predicated region
      $region13: #{vit_forward.18} parent=11 // pred_check
        %p162 = pneg %p58
      $region14: #{vit_forward.18} parent=11 // pred_check_branch
        %164 = sbr.rel (%p162) target = $region16
      $region15: #{vit_forward.18} parent=11 // pred_region
        _
      $region16: #{vit_forward.18} parent=11 // pred_fallthru
        _
      // Predicated region
      $region17: #{vit_forward.18} parent=11 // pred_check
        %p165 = pneg %p79
      $region18: #{vit_forward.18} parent=11 // pred_check_branch
        %167 = sbr.rel (%p165) target = $region20
      $region19: #{vit_forward.18} parent=11 // pred_region
        _
      $region20: #{vit_forward.18} parent=11 // pred_fallthru
        _
      // Predicated region
      $region21: #{vit_forward.18} parent=11 // pred_check
        %p168 = pneg %p100
      $region22: #{vit_forward.18} parent=11 // pred_check_branch
        %170 = sbr.rel (%p168) target = $region24
      $region23: #{vit_forward.18} parent=11 // pred_region
        _
      $region24: #{vit_forward.18} parent=11 // pred_fallthru
        _
      // Predicated region
      $region25: #{vit_forward.18} parent=11 // pred_check
        %p171 = pneg %p121
      $region26: #{vit_forward.18} parent=11 // pred_check_branch
        %173 = sbr.rel (%p171) target = $region28
      $region27: #{vit_forward.18} parent=11 // pred_region
        _
      $region28: #{vit_forward.18} parent=11 // pred_fallthru
        _
    $region12: #{vit_forward.18} parent=5 // pred_fallthru
      _
    %p174 = scmp.lt.s32.totalorder %s11, 2
    // Predicated region
    $region29: #{vit_forward.18} parent=5 // pred_check
      %p175 = pneg %p174
    $region30: #{vit_forward.18} parent=5 // pred_check_branch
      %177 = sbr.rel (%p175) target = $region32
    $region31: #{vit_forward.18} parent=5 // pred_region
      // Predicated region
      $region33: #{vit_forward.18} parent=31 // pred_check
        %p178 = pneg %p31
      $region34: #{vit_forward.18} parent=31 // pred_check_branch
        %180 = sbr.rel (%p178) target = $region36
      $region35: #{vit_forward.18} parent=31 // pred_region
        %s181 = smul.u32 21, %s11
        %p182 = scmp.lt.s32.totalorder %s181, 41
        %s183 = scalar_select %p182, %s181, 41
        %s184 = smul.addr %s183, 4
        %s185 = scalar_lea.vmem %s0, %s184
        %s186 = smul.u32 21, %s11
      $region36: #{vit_forward.18} parent=31 // pred_fallthru
        _
    $region32: #{vit_forward.18} parent=5 // pred_fallthru
      _
    %p187 = scmp.le.s32.totalorder 1, %s11
    %p188 = scmp.lt.s32.totalorder %s11, 3
    %p189 = pnand %p187, %p188
    %p190 = pneg %p189
    // Predicated region
    $region37: #{vit_forward.18} parent=5 // pred_check
      _
    $region38: #{vit_forward.18} parent=5 // pred_check_branch
      %192 = sbr.rel (%p189) target = $region40
    $region39: #{vit_forward.18} parent=5 // pred_region
      %s193 = ssub.s32 %s11, 1
      %s194 = smul.u32 21, %s16
      %p195 = scmp.lt.s32.totalorder %s194, 41
      %s196 = scalar_select %p195, %s194, 41
      %s197 = smul.addr %s196, 4
      %s198 = scalar_lea.vmem %s0, %s197
      %p199 = pneg %p37
      %p200 = pneg %p34
      %p201 = pneg %p58
      %p202 = pneg %p55
      %p203 = pneg %p79
      %p204 = pneg %p76
      %p205 = pneg %p100
      %p206 = pneg %p97
      %p207 = pneg %p121
      %p208 = pneg %p118
      %p209 = pneg %p147
      %p210 = pneg %p144
      %s211 = smul.u32 21, %s16
      %p212 = scmp.lt.s32.totalorder %s211, 41
      %s213 = scalar_select %p212, %s211, 41
      %s214 = smul.addr %s213, 4
      %s215 = scalar_lea.vmem %s5, %s214
      %s216 = smul.u32 21, %s16
      %p217 = scmp.lt.s32.totalorder %s216, 41
      %s218 = scalar_select %p217, %s216, 41
      %s219 = smul.addr %s218, 4
      %s220 = scalar_lea.vmem %s0, %s219
      %s221 = smul.u32 21, %s16
      %s222 = smul.u32 21, %s16
      %p223 = scmp.lt.s32.totalorder %s222, 41
      %s224 = scalar_select %p223, %s222, 41
      %s225 = smul.addr %s224, 4
      %s226 = scalar_lea.vmem %s5, %s225
      %s227 = smul.u32 21, %s16
      %v229 = vld [vmem:[%s220] sm:$0xf]
      %v230 = vld [vmem:[%s220 + $0x4] sm:$0xf]
      %v231 = vld [vmem:[%s220 + $0x8] sm:$0xf]
      %v232 = vld [vmem:[%s220 + $0xc] sm:$0xf]
      %v233 = vld [vmem:[%s220 + $0x10] sm:$0xf]
      %v234 = vld [vmem:[%s220 + $0x14] sm:$0xf]
      %v235 = vld [vmem:[%s220 + $0x18] sm:$0xf]
      %v236 = vld [vmem:[%s220 + $0x1c] sm:$0xf]
      %v237 = vld [vmem:[%s220 + $0x20] sm:$0xf]
      %v238 = vld [vmem:[%s220 + $0x24] sm:$0xf]
      %v239 = vld [vmem:[%s220 + $0x28] sm:$0xf]
      %v240 = vld [vmem:[%s220 + $0x2c] sm:$0xf]
      %v241 = vld [vmem:[%s220 + $0x30] sm:$0xf]
      %v242 = vld [vmem:[%s220 + $0x34] sm:$0xf]
      %v243 = vld [vmem:[%s220 + $0x38] sm:$0xf]
      %v244 = vld [vmem:[%s220 + $0x3c] sm:$0xf]
      %v245 = vld [vmem:[%s220 + $0x40] sm:$0xf]
      %v246 = vld [vmem:[%s220 + $0x44] sm:$0xf]
      %v247 = vld [vmem:[%s220 + $0x48] sm:$0xf]
      %v248 = vld [vmem:[%s220 + $0x4c] sm:$0xf]
      %v249 = vld [vmem:[%s220 + $0x50] sm:$0xf]
      %v250 = vunpack.c.l.bf16 %v229
      %v251 = vunpack.c.l.bf16 %v230
      %v252 = vunpack.c.l.bf16 %v231
      %v253 = vunpack.c.l.bf16 %v232
      %v254 = vunpack.c.l.bf16 %v233
      %v255 = vunpack.c.l.bf16 %v234
      %v256 = vunpack.c.l.bf16 %v235
      %v257 = vunpack.c.l.bf16 %v236
      %v258 = vunpack.c.l.bf16 %v237
      %v259 = vunpack.c.l.bf16 %v238
      %v260 = vunpack.c.l.bf16 %v239
      %v261 = vunpack.c.l.bf16 %v240
      %v262 = vunpack.c.l.bf16 %v241
      %v263 = vunpack.c.l.bf16 %v242
      %v264 = vunpack.c.l.bf16 %v243
      %v265 = vunpack.c.l.bf16 %v244
      %v266 = vunpack.c.l.bf16 %v245
      %v267 = vunpack.c.l.bf16 %v246
      %v268 = vunpack.c.l.bf16 %v247
      %v269 = vunpack.c.l.bf16 %v248
      %v270 = vunpack.c.l.bf16 %v249
      %vm271 = vcmask 261120
      %v272 = vsel %vm271, %v250, 0.0
      %273 = vadd.xlane.f32.xlu0 %v272
      %v274 = vpop.xlane.xlu0 %273
      %v275 = vsel %vm271, %v251, 0.0
      %276 = vadd.xlane.f32.xlu0 %v275
      %v277 = vpop.xlane.xlu0 %276
      %v278 = vsel %vm271, %v252, 0.0
      %279 = vadd.xlane.f32.xlu0 %v278
      %v280 = vpop.xlane.xlu0 %279
      %v281 = vsel %vm271, %v253, 0.0
      %282 = vadd.xlane.f32.xlu0 %v281
      %v283 = vpop.xlane.xlu0 %282
      %v284 = vsel %vm271, %v254, 0.0
      %285 = vadd.xlane.f32.xlu0 %v284
      %v286 = vpop.xlane.xlu0 %285
      %v287 = vsel %vm271, %v255, 0.0
      %288 = vadd.xlane.f32.xlu0 %v287
      %v289 = vpop.xlane.xlu0 %288
      %v290 = vsel %vm271, %v256, 0.0
      %291 = vadd.xlane.f32.xlu0 %v290
      %v292 = vpop.xlane.xlu0 %291
      %v293 = vsel %vm271, %v257, 0.0
      %294 = vadd.xlane.f32.xlu0 %v293
      %v295 = vpop.xlane.xlu0 %294
      %v296 = vsel %vm271, %v258, 0.0
      %297 = vadd.xlane.f32.xlu0 %v296
      %v298 = vpop.xlane.xlu0 %297
      %v299 = vsel %vm271, %v259, 0.0
      %300 = vadd.xlane.f32.xlu0 %v299
      %v301 = vpop.xlane.xlu0 %300
      %v302 = vsel %vm271, %v260, 0.0
      %303 = vadd.xlane.f32.xlu0 %v302
      %v304 = vpop.xlane.xlu0 %303
      %v305 = vsel %vm271, %v261, 0.0
      %306 = vadd.xlane.f32.xlu0 %v305
      %v307 = vpop.xlane.xlu0 %306
      %v308 = vsel %vm271, %v262, 0.0
      %309 = vadd.xlane.f32.xlu0 %v308
      %v310 = vpop.xlane.xlu0 %309
      %v311 = vsel %vm271, %v263, 0.0
      %312 = vadd.xlane.f32.xlu0 %v311
      %v313 = vpop.xlane.xlu0 %312
      %v314 = vsel %vm271, %v264, 0.0
      %315 = vadd.xlane.f32.xlu0 %v314
      %v316 = vpop.xlane.xlu0 %315
      %v317 = vsel %vm271, %v265, 0.0
      %318 = vadd.xlane.f32.xlu0 %v317
      %v319 = vpop.xlane.xlu0 %318
      %v320 = vsel %vm271, %v266, 0.0
      %321 = vadd.xlane.f32.xlu0 %v320
      %v322 = vpop.xlane.xlu0 %321
      %v323 = vsel %vm271, %v267, 0.0
      %324 = vadd.xlane.f32.xlu0 %v323
      %v325 = vpop.xlane.xlu0 %324
      %v326 = vsel %vm271, %v268, 0.0
      %327 = vadd.xlane.f32.xlu0 %v326
      %v328 = vpop.xlane.xlu0 %327
      %v329 = vsel %vm271, %v269, 0.0
      %330 = vadd.xlane.f32.xlu0 %v329
      %v331 = vpop.xlane.xlu0 %330
      %v332 = vsel %vm271, %v270, 0.0
      %333 = vadd.xlane.f32.xlu0 %v332
      %v334 = vpop.xlane.xlu0 %333
      %v335 = vrcp.pop 32.0
      %v336 = vmul.f32 %v274, %v335
      %v337 = vmul.f32 %v277, %v335
      %v338 = vmul.f32 %v280, %v335
      %v339 = vmul.f32 %v283, %v335
      %v340 = vmul.f32 %v286, %v335
      %v341 = vmul.f32 %v289, %v335
      %v342 = vmul.f32 %v292, %v335
      %v343 = vmul.f32 %v295, %v335
      %v344 = vmul.f32 %v298, %v335
      %v345 = vmul.f32 %v301, %v335
      %v346 = vmul.f32 %v304, %v335
      %v347 = vmul.f32 %v307, %v335
      %v348 = vmul.f32 %v310, %v335
      %v349 = vmul.f32 %v313, %v335
      %v350 = vmul.f32 %v316, %v335
      %v351 = vmul.f32 %v319, %v335
      %v352 = vmul.f32 %v322, %v335
      %v353 = vmul.f32 %v325, %v335
      %v354 = vmul.f32 %v328, %v335
      %v355 = vmul.f32 %v331, %v335
      %v356 = vmul.f32 %v334, %v335
      %v357 = vsub.f32 %v250, %v336
      %v358 = vsub.f32 %v251, %v337
      %v359 = vsub.f32 %v252, %v338
      %v360 = vsub.f32 %v253, %v339
      %v361 = vsub.f32 %v254, %v340
      %v362 = vsub.f32 %v255, %v341
      %v363 = vsub.f32 %v256, %v342
      %v364 = vsub.f32 %v257, %v343
      %v365 = vsub.f32 %v258, %v344
      %v366 = vsub.f32 %v259, %v345
      %v367 = vsub.f32 %v260, %v346
      %v368 = vsub.f32 %v261, %v347
      %v369 = vsub.f32 %v262, %v348
      %v370 = vsub.f32 %v263, %v349
      %v371 = vsub.f32 %v264, %v350
      %v372 = vsub.f32 %v265, %v351
      %v373 = vsub.f32 %v266, %v352
      %v374 = vsub.f32 %v267, %v353
      %v375 = vsub.f32 %v268, %v354
      %v376 = vsub.f32 %v269, %v355
      %v377 = vsub.f32 %v270, %v356
      %v378 = vmul.f32 %v357, %v357
      %v379 = vmul.f32 %v358, %v358
      %v380 = vmul.f32 %v359, %v359
      %v381 = vmul.f32 %v360, %v360
      %v382 = vmul.f32 %v361, %v361
      %v383 = vmul.f32 %v362, %v362
      %v384 = vmul.f32 %v363, %v363
      %v385 = vmul.f32 %v364, %v364
      %v386 = vmul.f32 %v365, %v365
      %v387 = vmul.f32 %v366, %v366
      %v388 = vmul.f32 %v367, %v367
      %v389 = vmul.f32 %v368, %v368
      %v390 = vmul.f32 %v369, %v369
      %v391 = vmul.f32 %v370, %v370
      %v392 = vmul.f32 %v371, %v371
      %v393 = vmul.f32 %v372, %v372
      %v394 = vmul.f32 %v373, %v373
      %v395 = vmul.f32 %v374, %v374
      %v396 = vmul.f32 %v375, %v375
      %v397 = vmul.f32 %v376, %v376
      %v398 = vmul.f32 %v377, %v377
      %v399 = vsel %vm271, %v378, 0.0
      %400 = vadd.xlane.f32.xlu0 %v399
      %v401 = vpop.xlane.xlu0 %400
      %v402 = vsel %vm271, %v379, 0.0
      %403 = vadd.xlane.f32.xlu0 %v402
      %v404 = vpop.xlane.xlu0 %403
      %v405 = vsel %vm271, %v380, 0.0
      %406 = vadd.xlane.f32.xlu0 %v405
      %v407 = vpop.xlane.xlu0 %406
      %v408 = vsel %vm271, %v381, 0.0
      %409 = vadd.xlane.f32.xlu0 %v408
      %v410 = vpop.xlane.xlu0 %409
      %v411 = vsel %vm271, %v382, 0.0
      %412 = vadd.xlane.f32.xlu0 %v411
      %v413 = vpop.xlane.xlu0 %412
      %v414 = vsel %vm271, %v383, 0.0
      %415 = vadd.xlane.f32.xlu0 %v414
      %v416 = vpop.xlane.xlu0 %415
      %v417 = vsel %vm271, %v384, 0.0
      %418 = vadd.xlane.f32.xlu0 %v417
      %v419 = vpop.xlane.xlu0 %418
      %v420 = vsel %vm271, %v385, 0.0
      %421 = vadd.xlane.f32.xlu0 %v420
      %v422 = vpop.xlane.xlu0 %421
      %v423 = vsel %vm271, %v386, 0.0
      %424 = vadd.xlane.f32.xlu0 %v423
      %v425 = vpop.xlane.xlu0 %424
      %v426 = vsel %vm271, %v387, 0.0
      %427 = vadd.xlane.f32.xlu0 %v426
      %v428 = vpop.xlane.xlu0 %427
      %v429 = vsel %vm271, %v388, 0.0
      %430 = vadd.xlane.f32.xlu0 %v429
      %v431 = vpop.xlane.xlu0 %430
      %v432 = vsel %vm271, %v389, 0.0
      %433 = vadd.xlane.f32.xlu0 %v432
      %v434 = vpop.xlane.xlu0 %433
      %v435 = vsel %vm271, %v390, 0.0
      %436 = vadd.xlane.f32.xlu0 %v435
      %v437 = vpop.xlane.xlu0 %436
      %v438 = vsel %vm271, %v391, 0.0
      %439 = vadd.xlane.f32.xlu0 %v438
      %v440 = vpop.xlane.xlu0 %439
      %v441 = vsel %vm271, %v392, 0.0
      %442 = vadd.xlane.f32.xlu0 %v441
      %v443 = vpop.xlane.xlu0 %442
      %v444 = vsel %vm271, %v393, 0.0
      %445 = vadd.xlane.f32.xlu0 %v444
      %v446 = vpop.xlane.xlu0 %445
      %v447 = vsel %vm271, %v394, 0.0
      %448 = vadd.xlane.f32.xlu0 %v447
      %v449 = vpop.xlane.xlu0 %448
      %v450 = vsel %vm271, %v395, 0.0
      %451 = vadd.xlane.f32.xlu0 %v450
      %v452 = vpop.xlane.xlu0 %451
      %v453 = vsel %vm271, %v396, 0.0
      %454 = vadd.xlane.f32.xlu0 %v453
      %v455 = vpop.xlane.xlu0 %454
      %v456 = vsel %vm271, %v397, 0.0
      %457 = vadd.xlane.f32.xlu0 %v456
      %v458 = vpop.xlane.xlu0 %457
      %v459 = vsel %vm271, %v398, 0.0
      %460 = vadd.xlane.f32.xlu0 %v459
      %v461 = vpop.xlane.xlu0 %460
      %v462 = vmul.f32 %v401, %v335
      %v463 = vmul.f32 %v404, %v335
      %v464 = vmul.f32 %v407, %v335
      %v465 = vmul.f32 %v410, %v335
      %v466 = vmul.f32 %v413, %v335
      %v467 = vmul.f32 %v416, %v335
      %v468 = vmul.f32 %v419, %v335
      %v469 = vmul.f32 %v422, %v335
      %v470 = vmul.f32 %v425, %v335
      %v471 = vmul.f32 %v428, %v335
      %v472 = vmul.f32 %v431, %v335
      %v473 = vmul.f32 %v434, %v335
      %v474 = vmul.f32 %v437, %v335
      %v475 = vmul.f32 %v440, %v335
      %v476 = vmul.f32 %v443, %v335
      %v477 = vmul.f32 %v446, %v335
      %v478 = vmul.f32 %v449, %v335
      %v479 = vmul.f32 %v452, %v335
      %v480 = vmul.f32 %v455, %v335
      %v481 = vmul.f32 %v458, %v335
      %v482 = vmul.f32 %v461, %v335
      %v483 = vadd.f32 %v462, 1e-05
      %v484 = vadd.f32 %v463, 1e-05
      %v485 = vadd.f32 %v464, 1e-05
      %v486 = vadd.f32 %v465, 1e-05
      %v487 = vadd.f32 %v466, 1e-05
      %v488 = vadd.f32 %v467, 1e-05
      %v489 = vadd.f32 %v468, 1e-05
      %v490 = vadd.f32 %v469, 1e-05
      %v491 = vadd.f32 %v470, 1e-05
      %v492 = vadd.f32 %v471, 1e-05
      %v493 = vadd.f32 %v472, 1e-05
      %v494 = vadd.f32 %v473, 1e-05
      %v495 = vadd.f32 %v474, 1e-05
      %v496 = vadd.f32 %v475, 1e-05
      %v497 = vadd.f32 %v476, 1e-05
      %v498 = vadd.f32 %v477, 1e-05
      %v499 = vadd.f32 %v478, 1e-05
      %v500 = vadd.f32 %v479, 1e-05
      %v501 = vadd.f32 %v480, 1e-05
      %v502 = vadd.f32 %v481, 1e-05
      %v503 = vadd.f32 %v482, 1e-05
      %v504 = vrsqrt.pop %v483
      %v505 = vrsqrt.pop %v484
      %v506 = vrsqrt.pop %v485
      %v507 = vrsqrt.pop %v486
      %v508 = vrsqrt.pop %v487
      %v509 = vrsqrt.pop %v488
      %v510 = vrsqrt.pop %v489
      %v511 = vrsqrt.pop %v490
      %v512 = vrsqrt.pop %v491
      %v513 = vrsqrt.pop %v492
      %v514 = vrsqrt.pop %v493
      %v515 = vrsqrt.pop %v494
      %v516 = vrsqrt.pop %v495
      %v517 = vrsqrt.pop %v496
      %v518 = vrsqrt.pop %v497
      %v519 = vrsqrt.pop %v498
      %v520 = vrsqrt.pop %v499
      %v521 = vrsqrt.pop %v500
      %v522 = vrsqrt.pop %v501
      %v523 = vrsqrt.pop %v502
      %v524 = vrsqrt.pop %v503
      %v525 = vmul.f32 %v357, %v504
      %v526 = vmul.f32 %v358, %v505
      %v527 = vmul.f32 %v359, %v506
      %v528 = vmul.f32 %v360, %v507
      %v529 = vmul.f32 %v361, %v508
      %v530 = vmul.f32 %v362, %v509
      %v531 = vmul.f32 %v363, %v510
      %v532 = vmul.f32 %v364, %v511
      %v533 = vmul.f32 %v365, %v512
      %v534 = vmul.f32 %v366, %v513
      %v535 = vmul.f32 %v367, %v514
      %v536 = vmul.f32 %v368, %v515
      %v537 = vmul.f32 %v369, %v516
      %v538 = vmul.f32 %v370, %v517
      %v539 = vmul.f32 %v371, %v518
      %v540 = vmul.f32 %v372, %v519
      %v541 = vmul.f32 %v373, %v520
      %v542 = vmul.f32 %v374, %v521
      %v543 = vmul.f32 %v375, %v522
      %v544 = vmul.f32 %v376, %v523
      %v545 = vmul.f32 %v377, %v524
      %v546 = vld [vmem:[%s2] sm:$0x1]
      %v548 = vlaneseq
      %v549 = vshrl.u32 %v548, 7
      %v550 = vsub.s32 0, %v549
      %v551 = vrot.slane %v546, %v550
      %v553 = vmul.f32 %v525, %v551
      %v554 = vmul.f32 %v526, %v551
      %v555 = vmul.f32 %v527, %v551
      %v556 = vmul.f32 %v528, %v551
      %v557 = vmul.f32 %v529, %v551
      %v558 = vmul.f32 %v530, %v551
      %v559 = vmul.f32 %v531, %v551
      %v560 = vmul.f32 %v532, %v551
      %v561 = vmul.f32 %v533, %v551
      %v562 = vmul.f32 %v534, %v551
      %v563 = vmul.f32 %v535, %v551
      %v564 = vmul.f32 %v536, %v551
      %v565 = vmul.f32 %v537, %v551
      %v566 = vmul.f32 %v538, %v551
      %v567 = vmul.f32 %v539, %v551
      %v568 = vmul.f32 %v540, %v551
      %v569 = vmul.f32 %v541, %v551
      %v570 = vmul.f32 %v542, %v551
      %v571 = vmul.f32 %v543, %v551
      %v572 = vmul.f32 %v544, %v551
      %v573 = vmul.f32 %v545, %v551
      %v574 = vld [vmem:[%s3] sm:$0x1]
      %v576 = vlaneseq
      %v577 = vshrl.u32 %v576, 7
      %v578 = vsub.s32 0, %v577
      %v579 = vrot.slane %v574, %v578
      %v581 = vadd.f32 %v553, %v579
      %v582 = vadd.f32 %v554, %v579
      %v583 = vadd.f32 %v555, %v579
      %v584 = vadd.f32 %v556, %v579
      %v585 = vadd.f32 %v557, %v579
      %v586 = vadd.f32 %v558, %v579
      %v587 = vadd.f32 %v559, %v579
      %v588 = vadd.f32 %v560, %v579
      %v589 = vadd.f32 %v561, %v579
      %v590 = vadd.f32 %v562, %v579
      %v591 = vadd.f32 %v563, %v579
      %v592 = vadd.f32 %v564, %v579
      %v593 = vadd.f32 %v565, %v579
      %v594 = vadd.f32 %v566, %v579
      %v595 = vadd.f32 %v567, %v579
      %v596 = vadd.f32 %v568, %v579
      %v597 = vadd.f32 %v569, %v579
      %v598 = vadd.f32 %v570, %v579
      %v599 = vadd.f32 %v571, %v579
      %v600 = vadd.f32 %v572, %v579
      %v601 = vadd.f32 %v573, %v579
      %v602 = vpack.c.bf16 %v582, %v581
      %v603 = vpack.c.bf16 %v584, %v583
      %v604 = vpack.c.bf16 %v586, %v585
      %v605 = vpack.c.bf16 %v588, %v587
      %v606 = vpack.c.bf16 %v590, %v589
      %v607 = vpack.c.bf16 %v592, %v591
      %v608 = vpack.c.bf16 %v594, %v593
      %v609 = vpack.c.bf16 %v596, %v595
      %v610 = vpack.c.bf16 %v598, %v597
      %v611 = vpack.c.bf16 %v600, %v599
      %v612 = vpack.c.bf16 %v601, %v601
      %v613 = vld [vmem:[%s1] sm:$0xf]
      %v614 = vld [vmem:[%s1 + $0x4] sm:$0xf]
      %v615 = vld [vmem:[%s1 + $0x8] sm:$0xf]
      %v616 = vld [vmem:[%s1 + $0xc] sm:$0xf]
      %v617 = vld [vmem:[%s4] sm:$0x1]
      %v619 = vlaneseq
      %v620 = vshrl.u32 %v619, 7
      %v621 = vsub.s32 0, %v620
      %v622 = vrot.slane %v617, %v621
      %v628 = vunpack.c.l.b16 %v613
      %v629 = vunpack.c.l.b16 %v614
      %v630 = vunpack.c.l.b16 %v615
      %v631 = vunpack.c.l.b16 %v616
      %v632 = vpack.c.b16 %v629, %v628
      %v633 = vpack.c.b16 %v631, %v630
      %v637 = vsel %vm271, %v602, 0
      %v640 = vsel %vm271, %v603, 0
      %v643 = vsel %vm271, %v604, 0
      %v646 = vsel %vm271, %v605, 0
      %v649 = vsel %vm271, %v606, 0
      %v652 = vsel %vm271, %v607, 0
      %v655 = vsel %vm271, %v608, 0
      %v658 = vsel %vm271, %v609, 0
      %v661 = vsel %vm271, %v610, 0
      %v664 = vsel %vm271, %v611, 0
      %v667 = vsel %vm271, %v612, 0
      %669 = vmatprep.subr.bf16.mxu0 0
      %670 = vmatpush1.bf16.msra.mxu0 0
      %671 = vmatprep.subr.bf16.mxu0 0
      %672 = vmatpush1.bf16.msra.mxu0 0
      %673 = vmatprep.subr.bf16.mxu0 0
      %674 = vmatpush1.bf16.msra.mxu0 0
      %675 = vmatprep.subr.bf16.mxu0 0
      %676 = vmatpush1.bf16.msra.mxu0 0
      %677 = vmatprep.subr.bf16.mxu0 0
      %678 = vmatpush1.bf16.msra.mxu0 0
      %679 = vmatprep.subr.bf16.mxu0 0
      %680 = vmatpush1.bf16.msra.mxu0 0
      %681 = vmatprep.subr.bf16.mxu0 0
      %682 = vmatpush1.bf16.msra.mxu0 %v633
      %683 = vmatprep.subr.bf16.mxu0 0
      %684 = vmatpush1.bf16.msra.mxu0 %v632
      %685 = vmatprep.subr.bf16.mxu0 0
      %686 = vmatpush2.bf16.msra.mxu0 0
      %687 = vmatprep.subr.bf16.mxu0 0
      %688 = vmatpush2.bf16.msra.mxu0 0
      %689 = vmatprep.subr.bf16.mxu0 0
      %690 = vmatpush2.bf16.msra.mxu0 0
      %691 = vmatprep.subr.bf16.mxu0 0
      %692 = vmatpush2.bf16.msra.mxu0 0
      %693 = vmatprep.subr.bf16.mxu0 0
      %694 = vmatpush2.bf16.msra.mxu0 0
      %695 = vmatprep.subr.bf16.mxu0 0
      %696 = vmatpush2.bf16.msra.mxu0 0
      %697 = vmatprep.subr.bf16.mxu0 0
      %698 = vmatpush2.bf16.msra.mxu0 0
      %699 = vmatprep.subr.bf16.mxu0 0
      %700 = vmatpush2.bf16.msra.mxu0 0
      %701 = vmatprep.mubr.bf16.mxu0 0
      %702 = vmatmul.mubr.bf16.gmra.mxu0 %v637
      %v703 = vpop.f32.mrf.mxu0
      %v704 = vadd.f32 %v622, %v703
      %v705 = vpop.f32.mrf.mxu0
      %v706 = vpop.f32.mrf.mxu0
      %v707 = vadd.f32 %v622, %v706
      %v708 = vpop.f32.mrf.mxu0
      %709 = vmatprep.mubr.bf16.mxu0 0
      %710 = vmatmul.mubr.bf16.gmra.mxu0 %v640
      %v711 = vpop.f32.mrf.mxu0
      %v712 = vadd.f32 %v622, %v711
      %v713 = vpop.f32.mrf.mxu0
      %v714 = vpop.f32.mrf.mxu0
      %v715 = vadd.f32 %v622, %v714
      %v716 = vpop.f32.mrf.mxu0
      %717 = vmatprep.mubr.bf16.mxu0 0
      %718 = vmatmul.mubr.bf16.gmra.mxu0 %v643
      %v719 = vpop.f32.mrf.mxu0
      %v720 = vadd.f32 %v622, %v719
      %v721 = vpop.f32.mrf.mxu0
      %v722 = vpop.f32.mrf.mxu0
      %v723 = vadd.f32 %v622, %v722
      %v724 = vpop.f32.mrf.mxu0
      %725 = vmatprep.mubr.bf16.mxu0 0
      %726 = vmatmul.mubr.bf16.gmra.mxu0 %v646
      %v727 = vpop.f32.mrf.mxu0
      %v728 = vadd.f32 %v622, %v727
      %v729 = vpop.f32.mrf.mxu0
      %v730 = vpop.f32.mrf.mxu0
      %v731 = vadd.f32 %v622, %v730
      %v732 = vpop.f32.mrf.mxu0
      %733 = vmatprep.mubr.bf16.mxu0 0
      %734 = vmatmul.mubr.bf16.gmra.mxu0 %v649
      %v735 = vpop.f32.mrf.mxu0
      %v736 = vadd.f32 %v622, %v735
      %v737 = vpop.f32.mrf.mxu0
      %v738 = vpop.f32.mrf.mxu0
      %v739 = vadd.f32 %v622, %v738
      %v740 = vpop.f32.mrf.mxu0
      %741 = vmatprep.mubr.bf16.mxu0 0
      %742 = vmatmul.mubr.bf16.gmra.mxu0 %v652
      %v743 = vpop.f32.mrf.mxu0
      %v744 = vadd.f32 %v622, %v743
      %v745 = vpop.f32.mrf.mxu0
      %v746 = vpop.f32.mrf.mxu0
      %v747 = vadd.f32 %v622, %v746
      %v748 = vpop.f32.mrf.mxu0
      %749 = vmatprep.mubr.bf16.mxu0 0
      %750 = vmatmul.mubr.bf16.gmra.mxu0 %v655
      %v751 = vpop.f32.mrf.mxu0
      %v752 = vadd.f32 %v622, %v751
      %v753 = vpop.f32.mrf.mxu0
      %v754 = vpop.f32.mrf.mxu0
      %v755 = vadd.f32 %v622, %v754
      %v756 = vpop.f32.mrf.mxu0
      %757 = vmatprep.mubr.bf16.mxu0 0
      %758 = vmatmul.mubr.bf16.gmra.mxu0 %v658
      %v759 = vpop.f32.mrf.mxu0
      %v760 = vadd.f32 %v622, %v759
      %v761 = vpop.f32.mrf.mxu0
      %v762 = vpop.f32.mrf.mxu0
      %v763 = vadd.f32 %v622, %v762
      %v764 = vpop.f32.mrf.mxu0
      %765 = vmatprep.mubr.bf16.mxu0 0
      %766 = vmatmul.mubr.bf16.gmra.mxu0 %v661
      %v767 = vpop.f32.mrf.mxu0
      %v768 = vadd.f32 %v622, %v767
      %v769 = vpop.f32.mrf.mxu0
      %v770 = vpop.f32.mrf.mxu0
      %v771 = vadd.f32 %v622, %v770
      %v772 = vpop.f32.mrf.mxu0
      %773 = vmatprep.mubr.bf16.mxu0 0
      %774 = vmatmul.mubr.bf16.gmra.mxu0 %v664
      %v775 = vpop.f32.mrf.mxu0
      %v776 = vadd.f32 %v622, %v775
      %v777 = vpop.f32.mrf.mxu0
      %v778 = vpop.f32.mrf.mxu0
      %v779 = vadd.f32 %v622, %v778
      %v780 = vpop.f32.mrf.mxu0
      %781 = vmatprep.mubr.bf16.mxu0 0
      %782 = vmatmul.mubr.bf16.gmra.mxu0 %v667
      %v783 = vpop.f32.mrf.mxu0
      %v784 = vadd.f32 %v622, %v783
      %v785 = vpop.f32.mrf.mxu0
      %v786 = vpop.f32.mrf.mxu0
      %v787 = vpop.f32.mrf.mxu0
      %788 = vdwg.mxu0
      %v789 = vmul.f32 %v704, 1.702
      %v790 = vmul.f32 %v707, 1.702
      %v791 = vmul.f32 %v712, 1.702
      %v792 = vmul.f32 %v715, 1.702
      %v793 = vmul.f32 %v720, 1.702
      %v794 = vmul.f32 %v723, 1.702
      %v795 = vmul.f32 %v728, 1.702
      %v796 = vmul.f32 %v731, 1.702
      %v797 = vmul.f32 %v736, 1.702
      %v798 = vmul.f32 %v739, 1.702
      %v799 = vmul.f32 %v744, 1.702
      %v800 = vmul.f32 %v747, 1.702
      %v801 = vmul.f32 %v752, 1.702
      %v802 = vmul.f32 %v755, 1.702
      %v803 = vmul.f32 %v760, 1.702
      %v804 = vmul.f32 %v763, 1.702
      %v805 = vmul.f32 %v768, 1.702
      %v806 = vmul.f32 %v771, 1.702
      %v807 = vmul.f32 %v776, 1.702
      %v808 = vmul.f32 %v779, 1.702
      %v809 = vmul.f32 %v784, 1.702
      %v810 = vxor.u32 %v789, 2147483648
      %v811 = vxor.u32 %v790, 2147483648
      %v812 = vxor.u32 %v791, 2147483648
      %v813 = vxor.u32 %v792, 2147483648
      %v814 = vxor.u32 %v793, 2147483648
      %v815 = vxor.u32 %v794, 2147483648
      %v816 = vxor.u32 %v795, 2147483648
      %v817 = vxor.u32 %v796, 2147483648
      %v818 = vxor.u32 %v797, 2147483648
      %v819 = vxor.u32 %v798, 2147483648
      %v820 = vxor.u32 %v799, 2147483648
      %v821 = vxor.u32 %v800, 2147483648
      %v822 = vxor.u32 %v801, 2147483648
      %v823 = vxor.u32 %v802, 2147483648
      %v824 = vxor.u32 %v803, 2147483648
      %v825 = vxor.u32 %v804, 2147483648
      %v826 = vxor.u32 %v805, 2147483648
      %v827 = vxor.u32 %v806, 2147483648
      %v828 = vxor.u32 %v807, 2147483648
      %v829 = vxor.u32 %v808, 2147483648
      %v830 = vxor.u32 %v809, 2147483648
      %v831 = vmul.f32 %v810, 1.442695
      %v832 = vpow.pop %v831
      %v833 = vmul.f32 %v811, 1.442695
      %v834 = vpow.pop %v833
      %v835 = vmul.f32 %v812, 1.442695
      %v836 = vpow.pop %v835
      %v837 = vmul.f32 %v813, 1.442695
      %v838 = vpow.pop %v837
      %v839 = vmul.f32 %v814, 1.442695
      %v840 = vpow.pop %v839
      %v841 = vmul.f32 %v815, 1.442695
      %v842 = vpow.pop %v841
      %v843 = vmul.f32 %v816, 1.442695
      %v844 = vpow.pop %v843
      %v845 = vmul.f32 %v817, 1.442695
      %v846 = vpow.pop %v845
      %v847 = vmul.f32 %v818, 1.442695
      %v848 = vpow.pop %v847
      %v849 = vmul.f32 %v819, 1.442695
      %v850 = vpow.pop %v849
      %v851 = vmul.f32 %v820, 1.442695
      %v852 = vpow.pop %v851
      %v853 = vmul.f32 %v821, 1.442695
      %v854 = vpow.pop %v853
      %v855 = vmul.f32 %v822, 1.442695
      %v856 = vpow.pop %v855
      %v857 = vmul.f32 %v823, 1.442695
      %v858 = vpow.pop %v857
      %v859 = vmul.f32 %v824, 1.442695
      %v860 = vpow.pop %v859
      %v861 = vmul.f32 %v825, 1.442695
      %v862 = vpow.pop %v861
      %v863 = vmul.f32 %v826, 1.442695
      %v864 = vpow.pop %v863
      %v865 = vmul.f32 %v827, 1.442695
      %v866 = vpow.pop %v865
      %v867 = vmul.f32 %v828, 1.442695
      %v868 = vpow.pop %v867
      %v869 = vmul.f32 %v829, 1.442695
      %v870 = vpow.pop %v869
      %v871 = vmul.f32 %v830, 1.442695
      %v872 = vpow.pop %v871
      %v873 = vadd.f32 %v832, 1.0
      %v874 = vadd.f32 %v834, 1.0
      %v875 = vadd.f32 %v836, 1.0
      %v876 = vadd.f32 %v838, 1.0
      %v877 = vadd.f32 %v840, 1.0
      %v878 = vadd.f32 %v842, 1.0
      %v879 = vadd.f32 %v844, 1.0
      %v880 = vadd.f32 %v846, 1.0
      %v881 = vadd.f32 %v848, 1.0
      %v882 = vadd.f32 %v850, 1.0
      %v883 = vadd.f32 %v852, 1.0
      %v884 = vadd.f32 %v854, 1.0
      %v885 = vadd.f32 %v856, 1.0
      %v886 = vadd.f32 %v858, 1.0
      %v887 = vadd.f32 %v860, 1.0
      %v888 = vadd.f32 %v862, 1.0
      %v889 = vadd.f32 %v864, 1.0
      %v890 = vadd.f32 %v866, 1.0
      %v891 = vadd.f32 %v868, 1.0
      %v892 = vadd.f32 %v870, 1.0
      %v893 = vadd.f32 %v872, 1.0
      %v894 = vrcp.pop %v873
      %v895 = vmul.f32 1.0, %v894
      %v896 = vrcp.pop %v874
      %v897 = vmul.f32 1.0, %v896
      %v898 = vrcp.pop %v875
      %v899 = vmul.f32 1.0, %v898
      %v900 = vrcp.pop %v876
      %v901 = vmul.f32 1.0, %v900
      %v902 = vrcp.pop %v877
      %v903 = vmul.f32 1.0, %v902
      %v904 = vrcp.pop %v878
      %v905 = vmul.f32 1.0, %v904
      %v906 = vrcp.pop %v879
      %v907 = vmul.f32 1.0, %v906
      %v908 = vrcp.pop %v880
      %v909 = vmul.f32 1.0, %v908
      %v910 = vrcp.pop %v881
      %v911 = vmul.f32 1.0, %v910
      %v912 = vrcp.pop %v882
      %v913 = vmul.f32 1.0, %v912
      %v914 = vrcp.pop %v883
      %v915 = vmul.f32 1.0, %v914
      %v916 = vrcp.pop %v884
      %v917 = vmul.f32 1.0, %v916
      %v918 = vrcp.pop %v885
      %v919 = vmul.f32 1.0, %v918
      %v920 = vrcp.pop %v886
      %v921 = vmul.f32 1.0, %v920
      %v922 = vrcp.pop %v887
      %v923 = vmul.f32 1.0, %v922
      %v924 = vrcp.pop %v888
      %v925 = vmul.f32 1.0, %v924
      %v926 = vrcp.pop %v889
      %v927 = vmul.f32 1.0, %v926
      %v928 = vrcp.pop %v890
      %v929 = vmul.f32 1.0, %v928
      %v930 = vrcp.pop %v891
      %v931 = vmul.f32 1.0, %v930
      %v932 = vrcp.pop %v892
      %v933 = vmul.f32 1.0, %v932
      %v934 = vrcp.pop %v893
      %v935 = vmul.f32 1.0, %v934
      %v936 = vmul.f32 %v704, %v895
      %v937 = vmul.f32 %v707, %v897
      %v938 = vmul.f32 %v712, %v899
      %v939 = vmul.f32 %v715, %v901
      %v940 = vmul.f32 %v720, %v903
      %v941 = vmul.f32 %v723, %v905
      %v942 = vmul.f32 %v728, %v907
      %v943 = vmul.f32 %v731, %v909
      %v944 = vmul.f32 %v736, %v911
      %v945 = vmul.f32 %v739, %v913
      %v946 = vmul.f32 %v744, %v915
      %v947 = vmul.f32 %v747, %v917
      %v948 = vmul.f32 %v752, %v919
      %v949 = vmul.f32 %v755, %v921
      %v950 = vmul.f32 %v760, %v923
      %v951 = vmul.f32 %v763, %v925
      %v952 = vmul.f32 %v768, %v927
      %v953 = vmul.f32 %v771, %v929
      %v954 = vmul.f32 %v776, %v931
      %v955 = vmul.f32 %v779, %v933
      %v956 = vmul.f32 %v784, %v935
      %v957 = vpack.c.bf16 %v937, %v936
      %v958 = vpack.c.bf16 %v939, %v938
      %v959 = vpack.c.bf16 %v941, %v940
      %v960 = vpack.c.bf16 %v943, %v942
      %v961 = vpack.c.bf16 %v945, %v944
      %v962 = vpack.c.bf16 %v947, %v946
      %v963 = vpack.c.bf16 %v949, %v948
      %v964 = vpack.c.bf16 %v951, %v950
      %v965 = vpack.c.bf16 %v953, %v952
      %v966 = vpack.c.bf16 %v955, %v954
      %v967 = vpack.c.bf16 %v956, %v956
      %v979 = vunpack.c.l.b16 %v957
      %v980 = vunpack.c.h.b16 %v957
      %v981 = vunpack.c.l.b16 %v958
      %v982 = vunpack.c.h.b16 %v958
      %v983 = vunpack.c.l.b16 %v959
      %v984 = vunpack.c.h.b16 %v959
      %v985 = vunpack.c.l.b16 %v960
      %v986 = vunpack.c.h.b16 %v960
      %v987 = vunpack.c.l.b16 %v961
      %v988 = vunpack.c.h.b16 %v961
      %v989 = vunpack.c.l.b16 %v962
      %v990 = vunpack.c.h.b16 %v962
      %v991 = vunpack.c.l.b16 %v963
      %v992 = vunpack.c.h.b16 %v963
      %v993 = vunpack.c.l.b16 %v964
      %v994 = vunpack.c.h.b16 %v964
      %v995 = vunpack.c.l.b16 %v965
      %v996 = vunpack.c.h.b16 %v965
      %v997 = vunpack.c.l.b16 %v966
      %v998 = vunpack.c.h.b16 %v966
      %v999 = vunpack.c.l.b16 %v967
      %v1000 = vpack.c.b16 %v979, %v979
      %v1001 = vpack.c.b16 %v980, %v980
      %v1002 = vpack.c.b16 %v981, %v981
      %v1003 = vpack.c.b16 %v982, %v982
      %v1004 = vpack.c.b16 %v983, %v983
      %v1005 = vpack.c.b16 %v984, %v984
      %v1006 = vpack.c.b16 %v985, %v985
      %v1007 = vpack.c.b16 %v986, %v986
      %v1008 = vpack.c.b16 %v987, %v987
      %v1009 = vpack.c.b16 %v988, %v988
      %v1010 = vpack.c.b16 %v989, %v989
      %v1011 = vpack.c.b16 %v990, %v990
      %v1012 = vpack.c.b16 %v991, %v991
      %v1013 = vpack.c.b16 %v992, %v992
      %v1014 = vpack.c.b16 %v993, %v993
      %v1015 = vpack.c.b16 %v994, %v994
      %v1016 = vpack.c.b16 %v995, %v995
      %v1017 = vpack.c.b16 %v996, %v996
      %v1018 = vpack.c.b16 %v997, %v997
      %v1019 = vpack.c.b16 %v998, %v998
      %v1020 = vpack.c.b16 %v999, %v999
      %1042 = vst [vmem:[%s226] sm:$0xf] %v1000
      %1043 = vst [vmem:[%s226 + $0x4] sm:$0xf] %v1001
      %1044 = vst [vmem:[%s226 + $0x8] sm:$0xf] %v1002
      %1045 = vst [vmem:[%s226 + $0xc] sm:$0xf] %v1003
      %1046 = vst [vmem:[%s226 + $0x10] sm:$0xf] %v1004
      %1047 = vst [vmem:[%s226 + $0x14] sm:$0xf] %v1005
      %1048 = vst [vmem:[%s226 + $0x18] sm:$0xf] %v1006
      %1049 = vst [vmem:[%s226 + $0x1c] sm:$0xf] %v1007
      %1050 = vst [vmem:[%s226 + $0x20] sm:$0xf] %v1008
      %1051 = vst [vmem:[%s226 + $0x24] sm:$0xf] %v1009
      %1052 = vst [vmem:[%s226 + $0x28] sm:$0xf] %v1010
      %1053 = vst [vmem:[%s226 + $0x2c] sm:$0xf] %v1011
      %1054 = vst [vmem:[%s226 + $0x30] sm:$0xf] %v1012
      %1055 = vst [vmem:[%s226 + $0x34] sm:$0xf] %v1013
      %1056 = vst [vmem:[%s226 + $0x38] sm:$0xf] %v1014
      %1057 = vst [vmem:[%s226 + $0x3c] sm:$0xf] %v1015
      %1058 = vst [vmem:[%s226 + $0x40] sm:$0xf] %v1016
      %1059 = vst [vmem:[%s226 + $0x44] sm:$0xf] %v1017
      %1060 = vst [vmem:[%s226 + $0x48] sm:$0xf] %v1018
      %1061 = vst [vmem:[%s226 + $0x4c] sm:$0xf] %v1019
      %1062 = vst [vmem:[%s226 + $0x50] sm:$0xf] %v1020
      %s1063 = smul.u32 21, %s16
      %p1064 = scmp.lt.s32.totalorder %s1063, 41
      %s1065 = scalar_select %p1064, %s1063, 41
      %s1066 = smul.addr %s1065, 4
      %s1067 = scalar_lea.vmem %s5, %s1066
      // Predicated region
      $region41: #{vit_forward.18} parent=39 // pred_check
        %p1068 = pneg %p144
      $region42: #{vit_forward.18} parent=39 // pred_check_branch
        %1070 = sbr.rel (%p1068) target = $region44
      $region43: #{vit_forward.18} parent=39 // pred_region
        %s1071 = smul.u32 21, %s16
      $region44: #{vit_forward.18} parent=39 // pred_fallthru
        _
    $region40: #{vit_forward.18} parent=5 // pred_fallthru
      _
    %p1072 = scmp.le.s32.totalorder 2, %s11
    // Predicated region
    $region45: #{vit_forward.18} parent=5 // pred_check
      %p1073 = pneg %p1072
    $region46: #{vit_forward.18} parent=5 // pred_check_branch
      %1075 = sbr.rel (%p1073) target = $region48
    $region47: #{vit_forward.18} parent=5 // pred_region
      %s1076 = ssub.s32 %s11, 2
      // Predicated region
      $region49: #{vit_forward.18} parent=47 // pred_check
        %p1077 = pneg %p150
      $region50: #{vit_forward.18} parent=47 // pred_check_branch
        %1079 = sbr.rel (%p1077) target = $region52
      $region51: #{vit_forward.18} parent=47 // pred_region
        %s1080 = smul.u32 21, %s17
        %p1081 = scmp.lt.s32.totalorder %s1080, 41
        %s1082 = scalar_select %p1081, %s1080, 41
        %s1083 = smul.addr %s1082, 4
        %s1084 = scalar_lea.vmem %s5, %s1083
      $region52: #{vit_forward.18} parent=47 // pred_fallthru
        _
    $region48: #{vit_forward.18} parent=5 // pred_fallthru
      _
  $region6: #{vit_forward.18} parent=0 // loop_footer
    %s15 = sadd.s32 1, %s11
  $region7: #{vit_forward.18} parent=0 // loop_footer_branch
    %10 = sbr.rel target = $region3
  $region8: #{vit_forward.18} parent=0 // loop_exit
    _

// kernel: vit_forward.19
$region0: #{vit_forward.19}
  #allocation0 [shape = 'u32[]', space=smem, size = 0x4, offset = 0x4, fixed_abs, tag = 'smem constant byte address 0x4 - core index']
  #allocation1 [shape = 'u32[144,128]{1,0:T(1,128)}', space=vmem, size = 0x12000, scoped, tag = 'internal scratch']
  %s0 = inlined_call_operand.vmem [shape: bf16[336,128], index: 0, kind: input, shape index: {}]
  %s1 = inlined_call_operand.vmem [shape: bf16[128,32], index: 1, kind: input, shape index: {}]
  %s2 = inlined_call_operand.vmem [shape: f32[1,32], index: 2, kind: input, shape index: {}]
  %s3 = inlined_call_operand.vmem [shape: bf16[336,32], index: 3, kind: input, shape index: {}]
  %s4 = inlined_call_operand.vmem [shape: bf16[336,32], index: 4, kind: output, shape index: {}]
  %s5 = sld [smem:[#allocation0]]
  $region49: #{vit_forward.19} parent=0
    _
  %s7 = ssub.s32 1, %s5
  %s8 = scalar_select 0, %s7, %s5
  loop: start=0, step=1, limit=4
  $region2: #{vit_forward.19} parent=0 // loop_pre_header
    _
  $region3: #{vit_forward.19} parent=0 // loop_header
    %s10 = sphi 0, %s14
    %p11 = scmp.ge.s32.totalorder %s10, 4
    %s20 = sphi 0, %s22
    %s23 = sphi 0, %s20
    %s24 = sphi 0, %s23
    %s40 = sphi 0, %s24
    %s44 = sphi 0, %s44
    %s46 = sphi 0, %s44
    %s47 = sphi 0, %s46
    %s61 = sphi 0, %s47
    %s65 = sphi 0, %s65
    %s67 = sphi 0, %s65
    %s68 = sphi 0, %s67
    %s82 = sphi 0, %s68
    %s88 = sphi 0, %s90
    %s91 = sphi 0, %s88
    %s92 = sphi 0, %s91
    %s108 = sphi 0, %s92
    %s114 = sphi 0, %s116
    %s117 = sphi 0, %s114
    %s118 = sphi 0, %s117
    %s134 = sphi 0, %s118
  $region4: #{vit_forward.19} parent=0 // loop_header_branch
    %13 = sbr.rel (%p11) target = $region8
  $region5: #{vit_forward.19} parent=0 // loop_body
    %s15 = ssub.s32 %s10, 1
    %s16 = ssub.s32 %s10, 2
    %s17 = sadd.s32 %s10, 1
    %s18 = ssub.s32 %s10, %s17
    %p19 = scmp.eq.s32.totalorder %s18, 0
    %s21 = sadd.s32 %s20, 1
    %s22 = scalar_select %p19, %s20, %s21
    %p25 = pneg %p19
    %p26 = scmp.eq.s32.totalorder %s10, 1
    %p27 = por %p25, %p26
    %p28 = scmp.ne.s32.totalorder %s20, %s23
    %p29 = scmp.eq.s32.totalorder %s10, 0
    %p30 = por %p28, %p29
    %p31 = scmp.ne.s32.totalorder %s20, %s23
    %p32 = scmp.eq.s32.totalorder %s15, 1
    %p33 = por %p31, %p32
    %p34 = scmp.ne.s32.totalorder %s23, %s24
    %p35 = scmp.eq.s32.totalorder %s15, 0
    %p36 = por %p34, %p35
    %p37 = scmp.ne.s32.totalorder %s23, %s24
    %p38 = scmp.eq.s32.totalorder %s16, 1
    %p39 = por %p37, %p38
    %p41 = scmp.ne.s32.totalorder %s24, %s40
    %p42 = scmp.eq.s32.totalorder %s16, 0
    %p43 = por %p41, %p42
    %s45 = sadd.s32 %s44, 1
    %p48 = scmp.eq.s32.totalorder %s10, 1
    %p49 = scmp.ne.s32.totalorder %s44, %s46
    %p50 = scmp.eq.s32.totalorder %s10, 0
    %p51 = por %p49, %p50
    %p52 = scmp.ne.s32.totalorder %s44, %s46
    %p53 = scmp.eq.s32.totalorder %s15, 1
    %p54 = por %p52, %p53
    %p55 = scmp.ne.s32.totalorder %s46, %s47
    %p56 = scmp.eq.s32.totalorder %s15, 0
    %p57 = por %p55, %p56
    %p58 = scmp.ne.s32.totalorder %s46, %s47
    %p59 = scmp.eq.s32.totalorder %s16, 1
    %p60 = por %p58, %p59
    %p62 = scmp.ne.s32.totalorder %s47, %s61
    %p63 = scmp.eq.s32.totalorder %s16, 0
    %p64 = por %p62, %p63
    %s66 = sadd.s32 %s65, 1
    %p69 = scmp.eq.s32.totalorder %s10, 1
    %p70 = scmp.ne.s32.totalorder %s65, %s67
    %p71 = scmp.eq.s32.totalorder %s10, 0
    %p72 = por %p70, %p71
    %p73 = scmp.ne.s32.totalorder %s65, %s67
    %p74 = scmp.eq.s32.totalorder %s15, 1
    %p75 = por %p73, %p74
    %p76 = scmp.ne.s32.totalorder %s67, %s68
    %p77 = scmp.eq.s32.totalorder %s15, 0
    %p78 = por %p76, %p77
    %p79 = scmp.ne.s32.totalorder %s67, %s68
    %p80 = scmp.eq.s32.totalorder %s16, 1
    %p81 = por %p79, %p80
    %p83 = scmp.ne.s32.totalorder %s68, %s82
    %p84 = scmp.eq.s32.totalorder %s16, 0
    %p85 = por %p83, %p84
    %s86 = ssub.s32 %s10, %s17
    %p87 = scmp.eq.s32.totalorder %s86, 0
    %s89 = sadd.s32 %s88, 1
    %s90 = scalar_select %p87, %s88, %s89
    %p93 = pneg %p87
    %p94 = scmp.eq.s32.totalorder %s10, 1
    %p95 = por %p93, %p94
    %p96 = scmp.ne.s32.totalorder %s88, %s91
    %p97 = scmp.eq.s32.totalorder %s10, 0
    %p98 = por %p96, %p97
    %p99 = scmp.ne.s32.totalorder %s88, %s91
    %p100 = scmp.eq.s32.totalorder %s15, 1
    %p101 = por %p99, %p100
    %p102 = scmp.ne.s32.totalorder %s91, %s92
    %p103 = scmp.eq.s32.totalorder %s15, 0
    %p104 = por %p102, %p103
    %p105 = scmp.ne.s32.totalorder %s91, %s92
    %p106 = scmp.eq.s32.totalorder %s16, 1
    %p107 = por %p105, %p106
    %p109 = scmp.ne.s32.totalorder %s92, %s108
    %p110 = scmp.eq.s32.totalorder %s16, 0
    %p111 = por %p109, %p110
    %s112 = ssub.s32 %s10, %s17
    %p113 = scmp.eq.s32.totalorder %s112, 0
    %s115 = sadd.s32 %s114, 1
    %s116 = scalar_select %p113, %s114, %s115
    %p119 = pneg %p113
    %p120 = scmp.eq.s32.totalorder %s10, 1
    %p121 = por %p119, %p120
    %p122 = scmp.ne.s32.totalorder %s114, %s117
    %p123 = scmp.eq.s32.totalorder %s10, 0
    %p124 = por %p122, %p123
    %p125 = scmp.ne.s32.totalorder %s114, %s117
    %p126 = scmp.eq.s32.totalorder %s15, 1
    %p127 = por %p125, %p126
    %p128 = scmp.ne.s32.totalorder %s117, %s118
    %p129 = scmp.eq.s32.totalorder %s15, 0
    %p130 = por %p128, %p129
    %p131 = scmp.ne.s32.totalorder %s117, %s118
    %p132 = scmp.eq.s32.totalorder %s16, 1
    %p133 = por %p131, %p132
    %p135 = scmp.ne.s32.totalorder %s118, %s134
    %p136 = scmp.eq.s32.totalorder %s16, 0
    %p137 = por %p135, %p136
    %p138 = scmp.le.s32.totalorder 1, %s10
    %p139 = scmp.lt.s32.totalorder %s10, 3
    %p140 = pnand %p138, %p139
    %p141 = pneg %p140
    // Predicated region
    $region9: #{vit_forward.19} parent=5 // pred_check
      _
    $region10: #{vit_forward.19} parent=5 // pred_check_branch
      %143 = sbr.rel (%p140) target = $region12
    $region11: #{vit_forward.19} parent=5 // pred_region
      %s144 = ssub.s32 %s10, 1
      // Predicated region
      $region13: #{vit_forward.19} parent=11 // pred_check
        %p145 = pneg %p57
      $region14: #{vit_forward.19} parent=11 // pred_check_branch
        %147 = sbr.rel (%p145) target = $region16
      $region15: #{vit_forward.19} parent=11 // pred_region
        _
      $region16: #{vit_forward.19} parent=11 // pred_fallthru
        _
      // Predicated region
      $region17: #{vit_forward.19} parent=11 // pred_check
        %p148 = pneg %p78
      $region18: #{vit_forward.19} parent=11 // pred_check_branch
        %150 = sbr.rel (%p148) target = $region20
      $region19: #{vit_forward.19} parent=11 // pred_region
        _
      $region20: #{vit_forward.19} parent=11 // pred_fallthru
        _
    $region12: #{vit_forward.19} parent=5 // pred_fallthru
      _
    %p151 = scmp.lt.s32.totalorder %s10, 2
    // Predicated region
    $region21: #{vit_forward.19} parent=5 // pred_check
      %p152 = pneg %p151
    $region22: #{vit_forward.19} parent=5 // pred_check_branch
      %154 = sbr.rel (%p152) target = $region24
    $region23: #{vit_forward.19} parent=5 // pred_region
      // Predicated region
      $region25: #{vit_forward.19} parent=23 // pred_check
        %p155 = pneg %p30
      $region26: #{vit_forward.19} parent=23 // pred_check_branch
        %157 = sbr.rel (%p155) target = $region28
      $region27: #{vit_forward.19} parent=23 // pred_region
        %s158 = smul.u32 21, %s10
        %p159 = scmp.lt.s32.totalorder %s158, 41
        %s160 = scalar_select %p159, %s158, 41
        %s161 = smul.addr %s160, 4
        %s162 = scalar_lea.vmem %s0, %s161
        %s163 = smul.u32 21, %s10
      $region28: #{vit_forward.19} parent=23 // pred_fallthru
        _
      // Predicated region
      $region29: #{vit_forward.19} parent=23 // pred_check
        %p164 = pneg %p98
      $region30: #{vit_forward.19} parent=23 // pred_check_branch
        %166 = sbr.rel (%p164) target = $region32
      $region31: #{vit_forward.19} parent=23 // pred_region
        %s167 = smul.u32 21, %s10
        %p168 = scmp.lt.s32.totalorder %s167, 41
        %s169 = scalar_select %p168, %s167, 41
        %s170 = smul.addr %s169, 4
        %s171 = scalar_lea.vmem %s3, %s170
        %s172 = smul.u32 21, %s10
      $region32: #{vit_forward.19} parent=23 // pred_fallthru
        _
    $region24: #{vit_forward.19} parent=5 // pred_fallthru
      _
    %p173 = scmp.le.s32.totalorder 1, %s10
    %p174 = scmp.lt.s32.totalorder %s10, 3
    %p175 = pnand %p173, %p174
    %p176 = pneg %p175
    // Predicated region
    $region33: #{vit_forward.19} parent=5 // pred_check
      _
    $region34: #{vit_forward.19} parent=5 // pred_check_branch
      %178 = sbr.rel (%p175) target = $region36
    $region35: #{vit_forward.19} parent=5 // pred_region
      %s179 = ssub.s32 %s10, 1
      %s180 = smul.u32 21, %s15
      %p181 = scmp.lt.s32.totalorder %s180, 41
      %s182 = scalar_select %p181, %s180, 41
      %s183 = smul.addr %s182, 4
      %s184 = scalar_lea.vmem %s0, %s183
      %p185 = pneg %p36
      %p186 = pneg %p33
      %p187 = pneg %p57
      %p188 = pneg %p54
      %p189 = pneg %p78
      %p190 = pneg %p75
      %s191 = smul.u32 21, %s15
      %p192 = scmp.lt.s32.totalorder %s191, 41
      %s193 = scalar_select %p192, %s191, 41
      %s194 = smul.addr %s193, 4
      %s195 = scalar_lea.vmem %s3, %s194
      %p196 = pneg %p104
      %p197 = pneg %p101
      %p198 = pneg %p130
      %p199 = pneg %p127
      %s200 = smul.u32 21, %s15
      %p201 = scmp.lt.s32.totalorder %s200, 41
      %s202 = scalar_select %p201, %s200, 41
      %s203 = smul.addr %s202, 4
      %s204 = scalar_lea.vmem %s4, %s203
      %s205 = smul.u32 21, %s15
      %p206 = scmp.lt.s32.totalorder %s205, 41
      %s207 = scalar_select %p206, %s205, 41
      %s208 = smul.addr %s207, 4
      %s209 = scalar_lea.vmem %s0, %s208
      %s210 = smul.u32 21, %s15
      %s211 = smul.u32 21, %s15
      %p212 = scmp.lt.s32.totalorder %s211, 41
      %s213 = scalar_select %p212, %s211, 41
      %s214 = smul.addr %s213, 4
      %s215 = scalar_lea.vmem %s3, %s214
      %s216 = smul.u32 21, %s15
      %s217 = smul.u32 21, %s15
      %p218 = scmp.lt.s32.totalorder %s217, 41
      %s219 = scalar_select %p218, %s217, 41
      %s220 = smul.addr %s219, 4
      %s221 = scalar_lea.vmem %s4, %s220
      %s222 = smul.u32 21, %s15
      %v224 = vld [vmem:[%s209] sm:$0xf]
      %v225 = vld [vmem:[%s209 + $0x4] sm:$0xf]
      %v226 = vld [vmem:[%s209 + $0x8] sm:$0xf]
      %v227 = vld [vmem:[%s209 + $0xc] sm:$0xf]
      %v228 = vld [vmem:[%s209 + $0x10] sm:$0xf]
      %v229 = vld [vmem:[%s209 + $0x14] sm:$0xf]
      %v230 = vld [vmem:[%s209 + $0x18] sm:$0xf]
      %v231 = vld [vmem:[%s209 + $0x1c] sm:$0xf]
      %v232 = vld [vmem:[%s209 + $0x20] sm:$0xf]
      %v233 = vld [vmem:[%s209 + $0x24] sm:$0xf]
      %v234 = vld [vmem:[%s209 + $0x28] sm:$0xf]
      %v235 = vld [vmem:[%s209 + $0x2c] sm:$0xf]
      %v236 = vld [vmem:[%s209 + $0x30] sm:$0xf]
      %v237 = vld [vmem:[%s209 + $0x34] sm:$0xf]
      %v238 = vld [vmem:[%s209 + $0x38] sm:$0xf]
      %v239 = vld [vmem:[%s209 + $0x3c] sm:$0xf]
      %v240 = vld [vmem:[%s209 + $0x40] sm:$0xf]
      %v241 = vld [vmem:[%s209 + $0x44] sm:$0xf]
      %v242 = vld [vmem:[%s209 + $0x48] sm:$0xf]
      %v243 = vld [vmem:[%s209 + $0x4c] sm:$0xf]
      %v244 = vld [vmem:[%s209 + $0x50] sm:$0xf]
      %v245 = vld [vmem:[%s1] sm:$0xf]
      %v246 = vld [vmem:[%s1 + $0x4] sm:$0xf]
      %v247 = vld [vmem:[%s1 + $0x8] sm:$0xf]
      %v248 = vld [vmem:[%s1 + $0xc] sm:$0xf]
      %v249 = vld [vmem:[%s1 + $0x10] sm:$0xf]
      %v250 = vld [vmem:[%s1 + $0x14] sm:$0xf]
      %v251 = vld [vmem:[%s1 + $0x18] sm:$0xf]
      %v252 = vld [vmem:[%s1 + $0x1c] sm:$0xf]
      %v253 = vld [vmem:[%s1 + $0x20] sm:$0xf]
      %v254 = vld [vmem:[%s1 + $0x24] sm:$0xf]
      %v255 = vld [vmem:[%s1 + $0x28] sm:$0xf]
      %v256 = vld [vmem:[%s1 + $0x2c] sm:$0xf]
      %v257 = vld [vmem:[%s1 + $0x30] sm:$0xf]
      %v258 = vld [vmem:[%s1 + $0x34] sm:$0xf]
      %v259 = vld [vmem:[%s1 + $0x38] sm:$0xf]
      %v260 = vld [vmem:[%s1 + $0x3c] sm:$0xf]
      %v261 = vld [vmem:[%s2] sm:$0x1]
      %v263 = vlaneseq
      %v264 = vshrl.u32 %v263, 7
      %v265 = vsub.s32 0, %v264
      %v266 = vrot.slane %v261, %v265
      %v289 = vunpack.c.l.b16 %v224
      %v290 = vunpack.c.l.b16 %v225
      %v291 = vunpack.c.l.b16 %v226
      %v292 = vunpack.c.l.b16 %v227
      %v293 = vunpack.c.l.b16 %v228
      %v294 = vunpack.c.l.b16 %v229
      %v295 = vunpack.c.l.b16 %v230
      %v296 = vunpack.c.l.b16 %v231
      %v297 = vunpack.c.l.b16 %v232
      %v298 = vunpack.c.l.b16 %v233
      %v299 = vunpack.c.l.b16 %v234
      %v300 = vunpack.c.l.b16 %v235
      %v301 = vunpack.c.l.b16 %v236
      %v302 = vunpack.c.l.b16 %v237
      %v303 = vunpack.c.l.b16 %v238
      %v304 = vunpack.c.l.b16 %v239
      %v305 = vunpack.c.l.b16 %v240
      %v306 = vunpack.c.l.b16 %v241
      %v307 = vunpack.c.l.b16 %v242
      %v308 = vunpack.c.l.b16 %v243
      %v309 = vunpack.c.l.b16 %v244
      %v310 = vpack.c.b16 %v290, %v289
      %v311 = vpack.c.b16 %v292, %v291
      %v312 = vpack.c.b16 %v294, %v293
      %v313 = vpack.c.b16 %v296, %v295
      %v314 = vpack.c.b16 %v298, %v297
      %v315 = vpack.c.b16 %v300, %v299
      %v316 = vpack.c.b16 %v302, %v301
      %v317 = vpack.c.b16 %v304, %v303
      %v318 = vpack.c.b16 %v306, %v305
      %v319 = vpack.c.b16 %v308, %v307
      %v320 = vpack.c.b16 %v309, %v309
      %v348 = vunpack.c.l.b16 %v245
      %v349 = vunpack.c.l.b16 %v246
      %v350 = vunpack.c.l.b16 %v247
      %v351 = vunpack.c.l.b16 %v248
      %v352 = vunpack.c.l.b16 %v249
      %v353 = vunpack.c.l.b16 %v250
      %v354 = vunpack.c.l.b16 %v251
      %v355 = vunpack.c.l.b16 %v252
      %v356 = vunpack.c.l.b16 %v253
      %v357 = vunpack.c.l.b16 %v254
      %v358 = vunpack.c.l.b16 %v255
      %v359 = vunpack.c.l.b16 %v256
      %v360 = vunpack.c.l.b16 %v257
      %v361 = vunpack.c.l.b16 %v258
      %v362 = vunpack.c.l.b16 %v259
      %v363 = vunpack.c.l.b16 %v260
      %v364 = vpack.c.b16 %v349, %v348
      %v365 = vpack.c.b16 %v351, %v350
      %v366 = vpack.c.b16 %v353, %v352
      %v367 = vpack.c.b16 %v355, %v354
      %v368 = vpack.c.b16 %v357, %v356
      %v369 = vpack.c.b16 %v359, %v358
      %v370 = vpack.c.b16 %v361, %v360
      %v371 = vpack.c.b16 %v363, %v362
      %380 = vmatprep.subr.bf16.mxu0 0
      %381 = vmatpush1.bf16.msra.mxu0 %v371
      %382 = vmatprep.subr.bf16.mxu0 0
      %383 = vmatpush1.bf16.msra.mxu0 %v370
      %384 = vmatprep.subr.bf16.mxu0 0
      %385 = vmatpush1.bf16.msra.mxu0 %v369
      %386 = vmatprep.subr.bf16.mxu0 0
      %387 = vmatpush1.bf16.msra.mxu0 %v368
      %388 = vmatprep.subr.bf16.mxu0 0
      %389 = vmatpush1.bf16.msra.mxu0 %v367
      %390 = vmatprep.subr.bf16.mxu0 0
      %391 = vmatpush1.bf16.msra.mxu0 %v366
      %392 = vmatprep.subr.bf16.mxu0 0
      %393 = vmatpush1.bf16.msra.mxu0 %v365
      %394 = vmatprep.subr.bf16.mxu0 0
      %395 = vmatpush1.bf16.msra.mxu0 %v364
      %396 = vmatprep.subr.bf16.mxu0 0
      %397 = vmatpush2.bf16.msra.mxu0 0
      %398 = vmatprep.subr.bf16.mxu0 0
      %399 = vmatpush2.bf16.msra.mxu0 0
      %400 = vmatprep.subr.bf16.mxu0 0
      %401 = vmatpush2.bf16.msra.mxu0 0
      %402 = vmatprep.subr.bf16.mxu0 0
      %403 = vmatpush2.bf16.msra.mxu0 0
      %404 = vmatprep.subr.bf16.mxu0 0
      %405 = vmatpush2.bf16.msra.mxu0 0
      %406 = vmatprep.subr.bf16.mxu0 0
      %407 = vmatpush2.bf16.msra.mxu0 0
      %408 = vmatprep.subr.bf16.mxu0 0
      %409 = vmatpush2.bf16.msra.mxu0 0
      %410 = vmatprep.subr.bf16.mxu0 0
      %411 = vmatpush2.bf16.msra.mxu0 0
      %412 = vmatprep.mubr.bf16.mxu0 0
      %413 = vmatmul.mubr.bf16.gmra.mxu0 %v310
      %v414 = vpop.f32.mrf.mxu0
      %v415 = vadd.f32 %v266, %v414
      %v416 = vpop.f32.mrf.mxu0
      %v417 = vpop.f32.mrf.mxu0
      %v418 = vadd.f32 %v266, %v417
      %v419 = vpop.f32.mrf.mxu0
      %420 = vmatprep.mubr.bf16.mxu0 0
      %421 = vmatmul.mubr.bf16.gmra.mxu0 %v311
      %v422 = vpop.f32.mrf.mxu0
      %v423 = vadd.f32 %v266, %v422
      %v424 = vpop.f32.mrf.mxu0
      %v425 = vpop.f32.mrf.mxu0
      %v426 = vadd.f32 %v266, %v425
      %v427 = vpop.f32.mrf.mxu0
      %428 = vmatprep.mubr.bf16.mxu0 0
      %429 = vmatmul.mubr.bf16.gmra.mxu0 %v312
      %v430 = vpop.f32.mrf.mxu0
      %v431 = vadd.f32 %v266, %v430
      %v432 = vpop.f32.mrf.mxu0
      %v433 = vpop.f32.mrf.mxu0
      %v434 = vadd.f32 %v266, %v433
      %v435 = vpop.f32.mrf.mxu0
      %436 = vmatprep.mubr.bf16.mxu0 0
      %437 = vmatmul.mubr.bf16.gmra.mxu0 %v313
      %v438 = vpop.f32.mrf.mxu0
      %v439 = vadd.f32 %v266, %v438
      %v440 = vpop.f32.mrf.mxu0
      %v441 = vpop.f32.mrf.mxu0
      %v442 = vadd.f32 %v266, %v441
      %v443 = vpop.f32.mrf.mxu0
      %444 = vmatprep.mubr.bf16.mxu0 0
      %445 = vmatmul.mubr.bf16.gmra.mxu0 %v314
      %v446 = vpop.f32.mrf.mxu0
      %v447 = vadd.f32 %v266, %v446
      %v448 = vpop.f32.mrf.mxu0
      %v449 = vpop.f32.mrf.mxu0
      %v450 = vadd.f32 %v266, %v449
      %v451 = vpop.f32.mrf.mxu0
      %452 = vmatprep.mubr.bf16.mxu0 0
      %453 = vmatmul.mubr.bf16.gmra.mxu0 %v315
      %v454 = vpop.f32.mrf.mxu0
      %v455 = vadd.f32 %v266, %v454
      %v456 = vpop.f32.mrf.mxu0
      %v457 = vpop.f32.mrf.mxu0
      %v458 = vadd.f32 %v266, %v457
      %v459 = vpop.f32.mrf.mxu0
      %460 = vmatprep.mubr.bf16.mxu0 0
      %461 = vmatmul.mubr.bf16.gmra.mxu0 %v316
      %v462 = vpop.f32.mrf.mxu0
      %v463 = vadd.f32 %v266, %v462
      %v464 = vpop.f32.mrf.mxu0
      %v465 = vpop.f32.mrf.mxu0
      %v466 = vadd.f32 %v266, %v465
      %v467 = vpop.f32.mrf.mxu0
      %468 = vmatprep.mubr.bf16.mxu0 0
      %469 = vmatmul.mubr.bf16.gmra.mxu0 %v317
      %v470 = vpop.f32.mrf.mxu0
      %v471 = vadd.f32 %v266, %v470
      %v472 = vpop.f32.mrf.mxu0
      %v473 = vpop.f32.mrf.mxu0
      %v474 = vadd.f32 %v266, %v473
      %v475 = vpop.f32.mrf.mxu0
      %476 = vmatprep.mubr.bf16.mxu0 0
      %477 = vmatmul.mubr.bf16.gmra.mxu0 %v318
      %v478 = vpop.f32.mrf.mxu0
      %v479 = vadd.f32 %v266, %v478
      %v480 = vpop.f32.mrf.mxu0
      %v481 = vpop.f32.mrf.mxu0
      %v482 = vadd.f32 %v266, %v481
      %v483 = vpop.f32.mrf.mxu0
      %484 = vmatprep.mubr.bf16.mxu0 0
      %485 = vmatmul.mubr.bf16.gmra.mxu0 %v319
      %v486 = vpop.f32.mrf.mxu0
      %v487 = vadd.f32 %v266, %v486
      %v488 = vpop.f32.mrf.mxu0
      %v489 = vpop.f32.mrf.mxu0
      %v490 = vadd.f32 %v266, %v489
      %v491 = vpop.f32.mrf.mxu0
      %492 = vmatprep.mubr.bf16.mxu0 0
      %493 = vmatmul.mubr.bf16.gmra.mxu0 %v320
      %v494 = vpop.f32.mrf.mxu0
      %v495 = vadd.f32 %v266, %v494
      %v496 = vpop.f32.mrf.mxu0
      %v497 = vpop.f32.mrf.mxu0
      %v498 = vpop.f32.mrf.mxu0
      %499 = vdwg.mxu0
      %v500 = vld [vmem:[%s215] sm:$0xf]
      %v501 = vld [vmem:[%s215 + $0x4] sm:$0xf]
      %v502 = vld [vmem:[%s215 + $0x8] sm:$0xf]
      %v503 = vld [vmem:[%s215 + $0xc] sm:$0xf]
      %v504 = vld [vmem:[%s215 + $0x10] sm:$0xf]
      %v505 = vld [vmem:[%s215 + $0x14] sm:$0xf]
      %v506 = vld [vmem:[%s215 + $0x18] sm:$0xf]
      %v507 = vld [vmem:[%s215 + $0x1c] sm:$0xf]
      %v508 = vld [vmem:[%s215 + $0x20] sm:$0xf]
      %v509 = vld [vmem:[%s215 + $0x24] sm:$0xf]
      %v510 = vld [vmem:[%s215 + $0x28] sm:$0xf]
      %v511 = vld [vmem:[%s215 + $0x2c] sm:$0xf]
      %v512 = vld [vmem:[%s215 + $0x30] sm:$0xf]
      %v513 = vld [vmem:[%s215 + $0x34] sm:$0xf]
      %v514 = vld [vmem:[%s215 + $0x38] sm:$0xf]
      %v515 = vld [vmem:[%s215 + $0x3c] sm:$0xf]
      %v516 = vld [vmem:[%s215 + $0x40] sm:$0xf]
      %v517 = vld [vmem:[%s215 + $0x44] sm:$0xf]
      %v518 = vld [vmem:[%s215 + $0x48] sm:$0xf]
      %v519 = vld [vmem:[%s215 + $0x4c] sm:$0xf]
      %v520 = vld [vmem:[%s215 + $0x50] sm:$0xf]
      %v521 = vunpack.c.l.bf16 %v500
      %v522 = vunpack.c.l.bf16 %v501
      %v523 = vunpack.c.l.bf16 %v502
      %v524 = vunpack.c.l.bf16 %v503
      %v525 = vunpack.c.l.bf16 %v504
      %v526 = vunpack.c.l.bf16 %v505
      %v527 = vunpack.c.l.bf16 %v506
      %v528 = vunpack.c.l.bf16 %v507
      %v529 = vunpack.c.l.bf16 %v508
      %v530 = vunpack.c.l.bf16 %v509
      %v531 = vunpack.c.l.bf16 %v510
      %v532 = vunpack.c.l.bf16 %v511
      %v533 = vunpack.c.l.bf16 %v512
      %v534 = vunpack.c.l.bf16 %v513
      %v535 = vunpack.c.l.bf16 %v514
      %v536 = vunpack.c.l.bf16 %v515
      %v537 = vunpack.c.l.bf16 %v516
      %v538 = vunpack.c.l.bf16 %v517
      %v539 = vunpack.c.l.bf16 %v518
      %v540 = vunpack.c.l.bf16 %v519
      %v541 = vunpack.c.l.bf16 %v520
      %v542 = vadd.f32 %v415, %v521
      %v543 = vadd.f32 %v418, %v522
      %v544 = vadd.f32 %v423, %v523
      %v545 = vadd.f32 %v426, %v524
      %v546 = vadd.f32 %v431, %v525
      %v547 = vadd.f32 %v434, %v526
      %v548 = vadd.f32 %v439, %v527
      %v549 = vadd.f32 %v442, %v528
      %v550 = vadd.f32 %v447, %v529
      %v551 = vadd.f32 %v450, %v530
      %v552 = vadd.f32 %v455, %v531
      %v553 = vadd.f32 %v458, %v532
      %v554 = vadd.f32 %v463, %v533
      %v555 = vadd.f32 %v466, %v534
      %v556 = vadd.f32 %v471, %v535
      %v557 = vadd.f32 %v474, %v536
      %v558 = vadd.f32 %v479, %v537
      %v559 = vadd.f32 %v482, %v538
      %v560 = vadd.f32 %v487, %v539
      %v561 = vadd.f32 %v490, %v540
      %v562 = vadd.f32 %v495, %v541
      %v563 = vpack.c.bf16 %v543, %v542
      %v564 = vpack.c.bf16 %v545, %v544
      %v565 = vpack.c.bf16 %v547, %v546
      %v566 = vpack.c.bf16 %v549, %v548
      %v567 = vpack.c.bf16 %v551, %v550
      %v568 = vpack.c.bf16 %v553, %v552
      %v569 = vpack.c.bf16 %v555, %v554
      %v570 = vpack.c.bf16 %v557, %v556
      %v571 = vpack.c.bf16 %v559, %v558
      %v572 = vpack.c.bf16 %v561, %v560
      %v573 = vpack.c.bf16 %v562, %v562
      %v585 = vunpack.c.l.b16 %v563
      %v586 = vunpack.c.h.b16 %v563
      %v587 = vunpack.c.l.b16 %v564
      %v588 = vunpack.c.h.b16 %v564
      %v589 = vunpack.c.l.b16 %v565
      %v590 = vunpack.c.h.b16 %v565
      %v591 = vunpack.c.l.b16 %v566
      %v592 = vunpack.c.h.b16 %v566
      %v593 = vunpack.c.l.b16 %v567
      %v594 = vunpack.c.h.b16 %v567
      %v595 = vunpack.c.l.b16 %v568
      %v596 = vunpack.c.h.b16 %v568
      %v597 = vunpack.c.l.b16 %v569
      %v598 = vunpack.c.h.b16 %v569
      %v599 = vunpack.c.l.b16 %v570
      %v600 = vunpack.c.h.b16 %v570
      %v601 = vunpack.c.l.b16 %v571
      %v602 = vunpack.c.h.b16 %v571
      %v603 = vunpack.c.l.b16 %v572
      %v604 = vunpack.c.h.b16 %v572
      %v605 = vunpack.c.l.b16 %v573
      %v606 = vpack.c.b16 %v585, %v585
      %v607 = vpack.c.b16 %v586, %v586
      %v608 = vpack.c.b16 %v587, %v587
      %v609 = vpack.c.b16 %v588, %v588
      %v610 = vpack.c.b16 %v589, %v589
      %v611 = vpack.c.b16 %v590, %v590
      %v612 = vpack.c.b16 %v591, %v591
      %v613 = vpack.c.b16 %v592, %v592
      %v614 = vpack.c.b16 %v593, %v593
      %v615 = vpack.c.b16 %v594, %v594
      %v616 = vpack.c.b16 %v595, %v595
      %v617 = vpack.c.b16 %v596, %v596
      %v618 = vpack.c.b16 %v597, %v597
      %v619 = vpack.c.b16 %v598, %v598
      %v620 = vpack.c.b16 %v599, %v599
      %v621 = vpack.c.b16 %v600, %v600
      %v622 = vpack.c.b16 %v601, %v601
      %v623 = vpack.c.b16 %v602, %v602
      %v624 = vpack.c.b16 %v603, %v603
      %v625 = vpack.c.b16 %v604, %v604
      %v626 = vpack.c.b16 %v605, %v605
      %vm648 = vcmask 257024
      %649 = vst.msk [vmem:[%s221] sm:$0xf] %vm648, %v606
      %650 = vst.msk [vmem:[%s221 + $0x4] sm:$0xf] %vm648, %v607
      %651 = vst.msk [vmem:[%s221 + $0x8] sm:$0xf] %vm648, %v608
      %652 = vst.msk [vmem:[%s221 + $0xc] sm:$0xf] %vm648, %v609
      %653 = vst.msk [vmem:[%s221 + $0x10] sm:$0xf] %vm648, %v610
      %654 = vst.msk [vmem:[%s221 + $0x14] sm:$0xf] %vm648, %v611
      %655 = vst.msk [vmem:[%s221 + $0x18] sm:$0xf] %vm648, %v612
      %656 = vst.msk [vmem:[%s221 + $0x1c] sm:$0xf] %vm648, %v613
      %657 = vst.msk [vmem:[%s221 + $0x20] sm:$0xf] %vm648, %v614
      %658 = vst.msk [vmem:[%s221 + $0x24] sm:$0xf] %vm648, %v615
      %659 = vst.msk [vmem:[%s221 + $0x28] sm:$0xf] %vm648, %v616
      %660 = vst.msk [vmem:[%s221 + $0x2c] sm:$0xf] %vm648, %v617
      %661 = vst.msk [vmem:[%s221 + $0x30] sm:$0xf] %vm648, %v618
      %662 = vst.msk [vmem:[%s221 + $0x34] sm:$0xf] %vm648, %v619
      %663 = vst.msk [vmem:[%s221 + $0x38] sm:$0xf] %vm648, %v620
      %664 = vst.msk [vmem:[%s221 + $0x3c] sm:$0xf] %vm648, %v621
      %665 = vst.msk [vmem:[%s221 + $0x40] sm:$0xf] %vm648, %v622
      %666 = vst.msk [vmem:[%s221 + $0x44] sm:$0xf] %vm648, %v623
      %667 = vst.msk [vmem:[%s221 + $0x48] sm:$0xf] %vm648, %v624
      %668 = vst.msk [vmem:[%s221 + $0x4c] sm:$0xf] %vm648, %v625
      %669 = vst.msk [vmem:[%s221 + $0x50] sm:$0xf] %vm648, %v626
      %s670 = smul.u32 21, %s15
      %p671 = scmp.lt.s32.totalorder %s670, 41
      %s672 = scalar_select %p671, %s670, 41
      %s673 = smul.addr %s672, 4
      %s674 = scalar_lea.vmem %s4, %s673
      // Predicated region
      $region37: #{vit_forward.19} parent=35 // pred_check
        %p675 = pneg %p127
      $region38: #{vit_forward.19} parent=35 // pred_check_branch
        %677 = sbr.rel (%p675) target = $region40
      $region39: #{vit_forward.19} parent=35 // pred_region
        %s678 = smul.u32 21, %s15
      $region40: #{vit_forward.19} parent=35 // pred_fallthru
        _
    $region36: #{vit_forward.19} parent=5 // pred_fallthru
      _
    %p679 = scmp.le.s32.totalorder 2, %s10
    // Predicated region
    $region41: #{vit_forward.19} parent=5 // pred_check
      %p680 = pneg %p679
    $region42: #{vit_forward.19} parent=5 // pred_check_branch
      %682 = sbr.rel (%p680) target = $region44
    $region43: #{vit_forward.19} parent=5 // pred_region
      %s683 = ssub.s32 %s10, 2
      // Predicated region
      $region45: #{vit_forward.19} parent=43 // pred_check
        %p684 = pneg %p133
      $region46: #{vit_forward.19} parent=43 // pred_check_branch
        %686 = sbr.rel (%p684) target = $region48
      $region47: #{vit_forward.19} parent=43 // pred_region
        %s687 = smul.u32 21, %s16
        %p688 = scmp.lt.s32.totalorder %s687, 41
        %s689 = scalar_select %p688, %s687, 41
        %s690 = smul.addr %s689, 4
        %s691 = scalar_lea.vmem %s4, %s690
      $region48: #{vit_forward.19} parent=43 // pred_fallthru
        _
    $region44: #{vit_forward.19} parent=5 // pred_fallthru
      _
  $region6: #{vit_forward.19} parent=0 // loop_footer
    %s14 = sadd.s32 1, %s10
  $region7: #{vit_forward.19} parent=0 // loop_footer_branch
    %9 = sbr.rel target = $region3
  $region8: #{vit_forward.19} parent=0 // loop_exit
    _

// kernel: vit_forward.25
$region0: #{vit_forward.25}
  #allocation0 [shape = 'u32[]', space=smem, size = 0x4, offset = 0x4, fixed_abs, tag = 'smem constant byte address 0x4 - core index']
  #allocation1 [shape = 'u32[144,128]{1,0:T(1,128)}', space=vmem, size = 0x12000, scoped, tag = 'internal scratch']
  %s0 = inlined_call_operand.vmem [shape: bf16[2,32], index: 0, kind: input, shape index: {}]
  %s1 = inlined_call_operand.vmem [shape: bf16[32,16], index: 1, kind: input, shape index: {}]
  %s2 = inlined_call_operand.vmem [shape: f32[1,32], index: 2, kind: input, shape index: {}]
  %s3 = inlined_call_operand.vmem [shape: f32[1,32], index: 3, kind: input, shape index: {}]
  %s4 = inlined_call_operand.hbm [shape: f32[2,16], index: 4, kind: output, shape index: {}]
  %s5 = sld [smem:[#allocation0]]
  $region26: #{vit_forward.25} parent=0
    _
  %s7 = ssub.s32 1, %s5
  %s8 = scalar_select 0, %s7, %s5
  $region1: #{vit_forward.25} parent=0
    #allocation2 [shape = 'u8[1024]{0}', space=vmem, size = 0x400, scoped, tag = 'output window, operand 0, single buffered']
    #allocation3 [shape = 's32[1]{0}', space=sflag, size = 0x4, scoped, tag = 'scoped memory for vit_forward.25']
    %9 = vsyncpa [#allocation3], 0
    // Predicated region
    $region2: #{vit_forward.25} parent=1 // pred_check
      _
    $region3: #{vit_forward.25} parent=1 // pred_check_branch
      %11 = sbr.rel (0) target = $region5
    $region4: #{vit_forward.25} parent=1 // pred_region
      _
    $region5: #{vit_forward.25} parent=1 // pred_fallthru
      _
    // Predicated region
    $region6: #{vit_forward.25} parent=1 // pred_check
      _
    $region7: #{vit_forward.25} parent=1 // pred_check_branch
      %13 = sbr.rel (0) target = $region9
    $region8: #{vit_forward.25} parent=1 // pred_region
      _
    $region9: #{vit_forward.25} parent=1 // pred_fallthru
      _
    // Predicated region
    $region10: #{vit_forward.25} parent=1 // pred_check
      _
    $region11: #{vit_forward.25} parent=1 // pred_check_branch
      %15 = sbr.rel (0) target = $region13
    $region12: #{vit_forward.25} parent=1 // pred_region
      _
    $region13: #{vit_forward.25} parent=1 // pred_fallthru
      _
    // Predicated region
    $region14: #{vit_forward.25} parent=1 // pred_check
      _
    $region15: #{vit_forward.25} parent=1 // pred_check_branch
      %17 = sbr.rel (0) target = $region17
    $region16: #{vit_forward.25} parent=1 // pred_region
      _
    $region17: #{vit_forward.25} parent=1 // pred_fallthru
      _
    %v19 = vld [vmem:[%s0] sm:$0x1]
    %v20 = vunpack.c.l.bf16 %v19
    %vm21 = vcmask 254976
    %v22 = vsel %vm21, %v20, 0.0
    %23 = vadd.xlane.f32.xlu0 %v22
    %v24 = vpop.xlane.xlu0 %23
    %v25 = vrcp.pop 32.0
    %v26 = vmul.f32 %v24, %v25
    %v27 = vsub.f32 %v20, %v26
    %v28 = vmul.f32 %v27, %v27
    %v29 = vsel %vm21, %v28, 0.0
    %30 = vadd.xlane.f32.xlu0 %v29
    %v31 = vpop.xlane.xlu0 %30
    %v32 = vmul.f32 %v31, %v25
    %v33 = vadd.f32 %v32, 1e-05
    %v34 = vrsqrt.pop %v33
    %v35 = vmul.f32 %v27, %v34
    %v36 = vld [vmem:[%s2] sm:$0x1]
    %v38 = vlaneseq
    %v39 = vshrl.u32 %v38, 7
    %v40 = vsub.s32 0, %v39
    %v41 = vrot.slane %v36, %v40
    %v43 = vmul.f32 %v35, %v41
    %v44 = vld [vmem:[%s3] sm:$0x1]
    %v46 = vlaneseq
    %v47 = vshrl.u32 %v46, 7
    %v48 = vsub.s32 0, %v47
    %v49 = vrot.slane %v44, %v48
    %v51 = vadd.f32 %v43, %v49
    %v52 = vpack.c.bf16 %v51, %v51
    %v53 = vld [vmem:[%s1] sm:$0xf]
    %v54 = vld [vmem:[%s1 + $0x4] sm:$0xf]
    %v55 = vld [vmem:[%s1 + $0x8] sm:$0xf]
    %v56 = vld [vmem:[%s1 + $0xc] sm:$0xf]
    %v61 = vunpack.c.l.b16 %v53
    %v62 = vunpack.c.l.b16 %v54
    %v63 = vunpack.c.l.b16 %v55
    %v64 = vunpack.c.l.b16 %v56
    %v65 = vpack.c.b16 %v62, %v61
    %v66 = vpack.c.b16 %v64, %v63
    %vm69 = vcmask 261120
    %v71 = vsel %vm69, %v52, 0
    %73 = vmatprep.subr.bf16.mxu0 0
    %74 = vmatpush1.bf16.msra.mxu0 0
    %75 = vmatprep.subr.bf16.mxu0 0
    %76 = vmatpush1.bf16.msra.mxu0 0
    %77 = vmatprep.subr.bf16.mxu0 0
    %78 = vmatpush1.bf16.msra.mxu0 0
    %79 = vmatprep.subr.bf16.mxu0 0
    %80 = vmatpush1.bf16.msra.mxu0 0
    %81 = vmatprep.subr.bf16.mxu0 0
    %82 = vmatpush1.bf16.msra.mxu0 0
    %83 = vmatprep.subr.bf16.mxu0 0
    %84 = vmatpush1.bf16.msra.mxu0 0
    %85 = vmatprep.subr.bf16.mxu0 0
    %86 = vmatpush1.bf16.msra.mxu0 %v66
    %87 = vmatprep.subr.bf16.mxu0 0
    %88 = vmatpush1.bf16.msra.mxu0 %v65
    %89 = vmatprep.subr.bf16.mxu0 0
    %90 = vmatpush2.bf16.msra.mxu0 0
    %91 = vmatprep.subr.bf16.mxu0 0
    %92 = vmatpush2.bf16.msra.mxu0 0
    %93 = vmatprep.subr.bf16.mxu0 0
    %94 = vmatpush2.bf16.msra.mxu0 0
    %95 = vmatprep.subr.bf16.mxu0 0
    %96 = vmatpush2.bf16.msra.mxu0 0
    %97 = vmatprep.subr.bf16.mxu0 0
    %98 = vmatpush2.bf16.msra.mxu0 0
    %99 = vmatprep.subr.bf16.mxu0 0
    %100 = vmatpush2.bf16.msra.mxu0 0
    %101 = vmatprep.subr.bf16.mxu0 0
    %102 = vmatpush2.bf16.msra.mxu0 0
    %103 = vmatprep.subr.bf16.mxu0 0
    %104 = vmatpush2.bf16.msra.mxu0 0
    %105 = vmatprep.mubr.bf16.mxu0 0
    %106 = vmatmul.mubr.bf16.gmra.mxu0 %v71
    %v107 = vpop.f32.mrf.mxu0
    %v108 = vadd.f32 0.0, %v107
    %v109 = vpop.f32.mrf.mxu0
    %v110 = vpop.f32.mrf.mxu0
    %v111 = vpop.f32.mrf.mxu0
    %112 = vdwg.mxu0
    %vm113 = vcmask 123904
    %114 = vst.msk [vmem:[#allocation2] sm:$0x3] %vm113, %v108
    // Predicated region
    $region18: #{vit_forward.25} parent=1 // pred_check
      _
    $region19: #{vit_forward.25} parent=1 // pred_check_branch
      %116 = sbr.rel (0) target = $region21
    $region20: #{vit_forward.25} parent=1 // pred_region
      %s118 = ssub.s32 32, 32
      %119 = vsyncadd [#allocation3], %s118
      %s121 = sshll.u32 [#allocation2], 4
      %s122 = int_to_ptr.vmem [resolvable:$true] %s121
      %124 = dma.vmem_to_hbm [thread:$0]  %s122, 32, %s4, [#allocation3]
    $region21: #{vit_forward.25} parent=1 // pred_fallthru
      _
    // Predicated region
    $region22: #{vit_forward.25} parent=1 // pred_check
      _
    $region23: #{vit_forward.25} parent=1 // pred_check_branch
      %126 = sbr.rel (0) target = $region25
    $region24: #{vit_forward.25} parent=1 // pred_region
      %127 = dma.done [#allocation3], 32
    $region25: #{vit_forward.25} parent=1 // pred_fallthru
      _
    %128 = vsyncpa [#allocation3], 1

</llo_original>
